<compile_context>
chip_gen: v7x
topology: tpu7x:2x2x1
jax: 0.10.0
libtpu: 0.0.40
codegen_flags: <defaults>
</compile_context>

<pallas_src>
import math
from functools import partial

import jax
import jax.numpy as jnp
import numpy as np
from jax.experimental import pallas as pl
from jax.experimental.pallas import tpu as pltpu

STRIDE = 64
KSIZE = 1024
PAD = 480
TAPS = KSIZE // STRIDE            # 16
CPAD12 = 128                      # padded Cin for layers 1/2 (Cin = 100)
CPAD3 = 16                        # padded Cin for layer 3 (Cin = 10)
GROUP = 8                         # layer-3 output rows produced per LHS row
NSLAB3 = 3                        # packed 128-lane input rows per layer-3 LHS row
K3 = NSLAB3 * GROUP * CPAD3       # 384


# ----------------------------- tiling helpers --------------------------------
def _round_up(x, m):
    return -(-x // m) * m


def _pick_rows(m_rows, cap):
    """Row tile tm (multiple of 16, <= cap) and padded row count Mp (multiple of tm)."""
    mp = _round_up(m_rows, 16)
    if mp <= cap:
        return mp, mp
    return cap, _round_up(m_rows, cap)


def _n_chunks(tm, tn):
    """Split output columns so each f32 result chunk is <= 128 KiB (32 vregs),
    keeping chunk widths 128-lane aligned."""
    n = 1
    while tm * (tn // n) * 4 > 128 * 1024 and (tn // (2 * n)) % 128 == 0:
        n *= 2
    return n


# ------------------------------ Pallas kernel ---------------------------------
def _mm_act_kernel(x_ref, w_ref, o_ref, *, activation, n_chunks):
    # x_ref : (1, tm, K)   bf16 im2col'd input rows
    # w_ref : (K, tn)      bf16 weight slab for this column tile
    # o_ref : (1, tm, tn)  activated output tile
    tn = o_ref.shape[-1]
    cw = tn // n_chunks
    for s in range(n_chunks):                       # static unroll (1 or 2)
        w_blk = w_ref[...] if n_chunks == 1 else w_ref[:, s * cw:(s + 1) * cw]
        acc = jnp.dot(x_ref[0], w_blk, preferred_element_type=jnp.float32)
        if activation == "relu":
            acc = jnp.maximum(acc, 0.0)
        elif activation == "tanh":
            acc = jnp.tanh(acc)
        o_ref[0, :, s * cw:(s + 1) * cw] = acc.astype(o_ref.dtype)


def _run_layer(lhs, w, activation, out_dtype, tm, tn):
    """lhs: (N, Mp, K) bf16, w: (K, ncol) bf16 -> act(lhs @ w): (N, Mp, ncol)."""
    n_batch, m_rows, k_dim = lhs.shape
    k_dim_w, ncol = w.shape
    assert k_dim == k_dim_w and m_rows % tm == 0 and ncol % tn == 0
    n_chunks = _n_chunks(tm, tn)
    # Column axis is the slowest grid axis: each weight tile is DMA'd once and
    # reused across all (batch, row) steps; 10 column tiles on layer 1 split the
    # weight streaming evenly across a v7x megacore.
    grid = (ncol // tn, n_batch, m_rows // tm)
    return pl.pallas_call(
        partial(_mm_act_kernel, activation=activation, n_chunks=n_chunks),
        out_shape=jax.ShapeDtypeStruct((n_batch, m_rows, ncol), out_dtype),
        grid_spec=pltpu.PrefetchScalarGridSpec(
            num_scalar_prefetch=0,
            grid=grid,
            in_specs=[
                pl.BlockSpec((1, tm, k_dim), lambda c, n, i: (n, i, 0)),
                pl.BlockSpec((k_dim, tn), lambda c, n, i: (0, c)),
            ],
            out_specs=pl.BlockSpec((1, tm, tn), lambda c, n, i: (n, i, c)),
        ),
        compiler_params=pltpu.CompilerParams(
            dimension_semantics=("parallel", "parallel", "parallel"),
            vmem_limit_bytes=24 * 1024 * 1024,
        ),
    )(lhs, w)


# ------------------------------ JAX glue --------------------------------------
def _im2col_wide(x_cl, mp):
    """Channel-last (N, Lin, Cin<=128) -> im2col LHS (N, mp, 16*128) bf16.
    Row j holds [x[j-0], x[j-1], ..., x[j-15]], each zero-padded to 128 channels."""
    n, lin, cin = x_cl.shape
    xp = jnp.pad(x_cl.astype(jnp.bfloat16),
                 ((0, 0), (TAPS - 1, mp - lin), (0, CPAD12 - cin)))
    cols = [xp[:, TAPS - 1 - m: TAPS - 1 - m + mp, :] for m in range(TAPS)]
    return jnp.concatenate(cols, axis=2)


def _build_lhs3(x_cl, mp):
    """Channel-last layer-3 input (N, L3, 10) -> grouped LHS (N, mp, 384) bf16.
    LHS row J covers zero-padded input rows 8J .. 8J+23 (16 channels each)."""
    n, l3, cin = x_cl.shape
    lpad = GROUP * (mp + NSLAB3)
    xp = jnp.pad(x_cl.astype(jnp.bfloat16),
                 ((0, 0), (TAPS - 1, lpad - (TAPS - 1) - l3), (0, CPAD3 - cin)))
    xr = xp.reshape(n, mp + NSLAB3, GROUP * CPAD3)           # (N, mp+3, 128)
    return jnp.concatenate([xr[:, 0:mp], xr[:, 1:mp + 1], xr[:, 2:mp + 2]], axis=2)


def _crop(y, cout, l_next):
    """Kernel output (N, Mp, 64*cout) (columns ordered (t, co) / (g, t)) ->
    channel-last (N, l_next, cout), cropped by the transposed-conv padding (480)."""
    n = y.shape[0]
    y_lin = y.reshape(n, -1, cout)
    return y_lin[:, PAD:PAD + l_next, :]


# ------------------------------ model ------------------------------------------
def init_params(key):
    """Synthetic ConvTranspose1d weights in PyTorch layout (Cin, Cout, K), f32."""
    shapes = [(100, 100, KSIZE), (100, 10, KSIZE), (10, 1, KSIZE)]
    params = []
    for shp in shapes:
        key, sub = jax.random.split(key)
        bound = 1.0 / math.sqrt(shp[0] * KSIZE)
        params.append(jax.random.uniform(sub, shp, jnp.float32, -bound, bound))
    return params


def prepare_params(raw_params):
    """One-time weight prepack (outside the per-step forward).

    Layers 1/2: (Cin, Cout, 1024) -> (16*128, 64*Cout) bf16; K ordered (tap, ci),
    columns ordered (t, co) so the kernel output reshapes straight into the next
    layer's channel-last input.
    Layer 3:    (10, 1, 1024) -> (384, 512) bf16 grouped slab: row r*16+ci, column
    g*64+t holds w[ci, 0, 64*(g+15-r)+t] (zero outside the tap range), matching the
    super-row LHS built by _build_lhs3.
    """
    prepped = []
    for w in raw_params[:2]:
        w = np.asarray(w, np.float32)
        cin, cout, _ = w.shape
        wt = w.reshape(cin, cout, TAPS, STRIDE).transpose(2, 0, 3, 1)  # (m, ci, t, co)
        wt = np.pad(wt, ((0, 0), (0, CPAD12 - cin), (0, 0), (0, 0)))
        prepped.append(jnp.asarray(wt.reshape(TAPS * CPAD12, STRIDE * cout),
                                   jnp.bfloat16))
    w3 = np.asarray(raw_params[2], np.float32)
    cin3 = w3.shape[0]
    wm = w3.reshape(cin3, TAPS, STRIDE)                      # wm[ci, m, t]
    wme = np.zeros((cin3, 2 * TAPS, STRIDE), np.float32)
    wme[:, GROUP:GROUP + TAPS, :] = wm                       # stored at index m + 8
    r = np.arange(NSLAB3 * GROUP)
    g = np.arange(GROUP)
    idx = g[None, :] + (TAPS - 1 + GROUP) - r[:, None]       # = (g + 15 - r) + 8
    wg = np.transpose(wme[:, idx, :], (1, 0, 2, 3))          # (r, ci, g, t)
    wg = np.pad(wg, ((0, 0), (0, CPAD3 - cin3), (0, 0), (0, 0)))
    prepped.append(jnp.asarray(wg.reshape(K3, GROUP * STRIDE), jnp.bfloat16))
    return prepped


def generator_forward(prepared_weights, x):
    """x: (N, 100, Lin) f32 -> (N, 1, 64**3 * Lin) f32  (== Generator.forward)."""
    w1, w2, w3 = prepared_weights
    _, _, l1 = x.shape

    # layer 1: ConvTranspose1d(100 -> 100) + relu; K = 2048, tn = 640 (10 col tiles)
    tm1, m1p = _pick_rows(l1 + TAPS - 1, 48)
    lhs1 = _im2col_wide(jnp.transpose(x, (0, 2, 1)), m1p)
    y1 = _run_layer(lhs1, w1, "relu", jnp.bfloat16, tm1, 640)

    # layer 2: ConvTranspose1d(100 -> 10) + relu; K = 2048, tn = 640 (resident)
    l2 = STRIDE * l1
    tm2, m2p = _pick_rows(l2 + TAPS - 1, 48)
    lhs2 = _im2col_wide(_crop(y1, 100, l2), m2p)
    y2 = _run_layer(lhs2, w2, "relu", jnp.bfloat16, tm2, 640)

    # layer 3: ConvTranspose1d(10 -> 1) + tanh; 8 output rows per LHS row,
    # K = 384, 512 lane-dense output columns.
    l3 = STRIDE * l2
    m3 = -(-(l3 + TAPS - 1) // GROUP)
    tm3, m3p = _pick_rows(m3, 128)
    lhs3 = _build_lhs3(_crop(y2, 10, l3), m3p)
    y3 = _run_layer(lhs3, w3, "tanh", jnp.float32, tm3, 512)

    out = _crop(y3, 1, STRIDE * l3)
    return jnp.transpose(out, (0, 2, 1))


# --------------------- references (correctness checks) -------------------------
def _ref_conv_transpose1d(x, w, activation):
    """Brute-force f32 reference with PyTorch ConvTranspose1d semantics."""
    n, cin, lin = x.shape
    _, cout, k = w.shape
    full = jnp.zeros((n, cout, (lin - 1) * STRIDE + k), jnp.float32)
    for i in range(lin):
        full = full.at[:, :, i * STRIDE:i * STRIDE + k].add(
            jnp.einsum('nc,cok->nok', x[:, :, i], w,
                       precision=jax.lax.Precision.HIGHEST))
    lout = (lin - 1) * STRIDE - 2 * PAD + k
    y = full[:, :, PAD:PAD + lout]
    return jnp.maximum(y, 0.0) if activation == "relu" else jnp.tanh(y)


def _ref_layer_f32(x, w, activation):
    """f32 polyphase reference for one layer (NCW in / NCW out)."""
    n, cin, lin = x.shape
    cout = w.shape[1]
    j_rows = lin + TAPS - 1
    xp = jnp.pad(jnp.transpose(x, (0, 2, 1)),
                 ((0, 0), (TAPS - 1, TAPS - 1), (0, 0)))
    cols = jnp.concatenate(
        [xp[:, TAPS - 1 - m: TAPS - 1 - m + j_rows, :] for m in range(TAPS)], axis=2)
    w_mat = jnp.transpose(w.reshape(cin, cout, TAPS, STRIDE),
                          (2, 0, 3, 1)).reshape(TAPS * cin, STRIDE * cout)
    y = jnp.einsum('njk,kc->njc', cols, w_mat, precision=jax.lax.Precision.HIGHEST)
    y = y.reshape(n, j_rows * STRIDE, cout)[:, PAD:PAD + STRIDE * lin, :]
    y = jnp.transpose(y, (0, 2, 1))
    return jnp.maximum(y, 0.0) if activation == "relu" else jnp.tanh(y)


def _ref_forward(raw_params, x):
    y = _ref_layer_f32(x, raw_params[0], "relu")
    y = _ref_layer_f32(y, raw_params[1], "relu")
    return _ref_layer_f32(y, raw_params[2], "tanh")


if __name__ == "__main__":
    key = jax.random.PRNGKey(0)
    kx, kp = jax.random.split(key)
    # Input implied by the module: (batch, 100 channels, small length)
    x = jax.random.normal(kx, (2, 100, 2), jnp.float32)
    raw_params = init_params(kp)
    params = prepare_params(raw_params)       # bf16, reshaped once outside forward

    # 1) polyphase math == PyTorch ConvTranspose1d semantics (pure f32, layer 1).
    np.testing.assert_allclose(
        np.asarray(_ref_layer_f32(x, raw_params[0], "relu")),
        np.asarray(_ref_conv_transpose1d(x, raw_params[0], "relu")),
        rtol=2e-5, atol=1e-6)

    # 2) fused Pallas chain vs f32 reference chain (bf16 weights/activations).
    out = jax.block_until_ready(jax.jit(generator_forward)(params, x))
    assert out.shape == (2, 1, 64 ** 3 * 2), out.shape
    ref = _ref_forward(raw_params, x)
    np.testing.assert_allclose(np.asarray(out), np.asarray(ref), rtol=0.1, atol=5e-5)
    assert bool(jnp.all(jnp.isfinite(out)))
    print("KERNEL_OK")
</pallas_src>

<mosaic_0001>
module attributes {stable_mosaic.version = 11 : i64} {
  func.func @_mm_act_kernel(%arg0: i32, %arg1: i32, %arg2: i32, %arg3: memref<1x32x2048xbf16, #tpu.memory_space<vmem>>, %arg4: memref<2048x640xbf16, #tpu.memory_space<vmem>>, %arg5: memref<1x32x640xbf16, #tpu.memory_space<vmem>>) attributes {dimension_semantics = [#tpu.dimension_semantics<parallel>, #tpu.dimension_semantics<parallel>, #tpu.dimension_semantics<parallel>], iteration_bounds = array<i64: 10, 2, 1>, scalar_prefetch = 0 : i64, scratch_operands = 0 : i64, tpu.core_type = #tpu.core_type<tc>, window_params = [{transform_indices = @transform_0, window_bounds = array<i64: 1, 32, 2048>}, {transform_indices = @transform_1, window_bounds = array<i64: 2048, 640>}, {transform_indices = @transform_2, window_bounds = array<i64: 1, 32, 640>}]} {
    %c0 = arith.constant 0 : index
    %c0_0 = arith.constant 0 : index
    %0 = vector.load %arg4[%c0, %c0_0] : memref<2048x640xbf16, #tpu.memory_space<vmem>>, vector<2048x640xbf16>
    %c0_1 = arith.constant 0 : index
    %c0_2 = arith.constant 0 : index
    %c0_3 = arith.constant 0 : index
    %1 = vector.load %arg3[%c0_1, %c0_2, %c0_3] : memref<1x32x2048xbf16, #tpu.memory_space<vmem>>, vector<1x32x2048xbf16>
    %2 = vector.shape_cast %1 : vector<1x32x2048xbf16> to vector<32x2048xbf16>
    %cst = arith.constant dense<0.000000e+00> : vector<32x640xf32>
    %3 = tpu.matmul %2, %0, %cst {dimension_numbers = #tpu.dot_dimension_numbers<[1], [0], [0], [1], [0, 0, 1, 1], [], []>} : vector<32x2048xbf16>, vector<2048x640xbf16>, vector<32x640xf32> -> vector<32x640xf32>
    %cst_4 = arith.constant 0.000000e+00 : f32
    %4 = vector.broadcast %cst_4 : f32 to vector<32x640xf32>
    %5 = arith.maximumf %3, %4 : vector<32x640xf32>
    %6 = arith.truncf %5 : vector<32x640xf32> to vector<32x640xbf16>
    %c0_5 = arith.constant 0 : index
    %c0_6 = arith.constant 0 : index
    %c0_7 = arith.constant 0 : index
    %7 = vector.load %arg5[%c0_5, %c0_6, %c0_7] : memref<1x32x640xbf16, #tpu.memory_space<vmem>>, vector<1x32x640xbf16>
    %8 = vector.shape_cast %7 : vector<1x32x640xbf16> to vector<32x640xbf16>
    %9 = vector.shape_cast %6 : vector<32x640xbf16> to vector<1x32x640xbf16>
    tpu.vector_store %arg5[%c0_5, %c0_6, %c0_7], %9 {strides = array<i32>} : memref<1x32x640xbf16, #tpu.memory_space<vmem>>, vector<1x32x640xbf16>,
    return
  }
  func.func @transform_0(%arg0: i32, %arg1: i32, %arg2: i32) -> (i32, i32, i32) {
    %c0_i32 = arith.constant 0 : i32
    %c0_i32_0 = arith.constant 0 : i32
    return %arg1, %arg2, %c0_i32 : i32, i32, i32
  }
  func.func @transform_1(%arg0: i32, %arg1: i32, %arg2: i32) -> (i32, i32) {
    %c0_i32 = arith.constant 0 : i32
    %c0_i32_0 = arith.constant 0 : i32
    return %c0_i32, %arg0 : i32, i32
  }
  func.func @transform_2(%arg0: i32, %arg1: i32, %arg2: i32) -> (i32, i32, i32) {
    %c0_i32 = arith.constant 0 : i32
    return %arg1, %arg2, %arg0 : i32, i32, i32
  }
}

module attributes {stable_mosaic.version = 11 : i64} {
  func.func @_mm_act_kernel(%arg0: i32, %arg1: i32, %arg2: i32, %arg3: memref<1x48x2048xbf16, #tpu.memory_space<vmem>>, %arg4: memref<2048x640xbf16, #tpu.memory_space<vmem>>, %arg5: memref<1x48x640xbf16, #tpu.memory_space<vmem>>) attributes {dimension_semantics = [#tpu.dimension_semantics<parallel>, #tpu.dimension_semantics<parallel>, #tpu.dimension_semantics<parallel>], iteration_bounds = array<i64: 1, 2, 3>, scalar_prefetch = 0 : i64, scratch_operands = 0 : i64, tpu.core_type = #tpu.core_type<tc>, window_params = [{transform_indices = @transform_0, window_bounds = array<i64: 1, 48, 2048>}, {transform_indices = @transform_1, window_bounds = array<i64: 2048, 640>}, {transform_indices = @transform_2, window_bounds = array<i64: 1, 48, 640>}]} {
    %c0 = arith.constant 0 : index
    %c0_0 = arith.constant 0 : index
    %0 = vector.load %arg4[%c0, %c0_0] : memref<2048x640xbf16, #tpu.memory_space<vmem>>, vector<2048x640xbf16>
    %c0_1 = arith.constant 0 : index
    %c0_2 = arith.constant 0 : index
    %c0_3 = arith.constant 0 : index
    %1 = vector.load %arg3[%c0_1, %c0_2, %c0_3] : memref<1x48x2048xbf16, #tpu.memory_space<vmem>>, vector<1x48x2048xbf16>
    %2 = vector.shape_cast %1 : vector<1x48x2048xbf16> to vector<48x2048xbf16>
    %cst = arith.constant dense<0.000000e+00> : vector<48x640xf32>
    %3 = tpu.matmul %2, %0, %cst {dimension_numbers = #tpu.dot_dimension_numbers<[1], [0], [0], [1], [0, 0, 1, 1], [], []>} : vector<48x2048xbf16>, vector<2048x640xbf16>, vector<48x640xf32> -> vector<48x640xf32>
    %cst_4 = arith.constant 0.000000e+00 : f32
    %4 = vector.broadcast %cst_4 : f32 to vector<48x640xf32>
    %5 = arith.maximumf %3, %4 : vector<48x640xf32>
    %6 = arith.truncf %5 : vector<48x640xf32> to vector<48x640xbf16>
    %c0_5 = arith.constant 0 : index
    %c0_6 = arith.constant 0 : index
    %c0_7 = arith.constant 0 : index
    %7 = vector.load %arg5[%c0_5, %c0_6, %c0_7] : memref<1x48x640xbf16, #tpu.memory_space<vmem>>, vector<1x48x640xbf16>
    %8 = vector.shape_cast %7 : vector<1x48x640xbf16> to vector<48x640xbf16>
    %9 = vector.shape_cast %6 : vector<48x640xbf16> to vector<1x48x640xbf16>
    tpu.vector_store %arg5[%c0_5, %c0_6, %c0_7], %9 {strides = array<i32>} : memref<1x48x640xbf16, #tpu.memory_space<vmem>>, vector<1x48x640xbf16>,
    return
  }
  func.func @transform_0(%arg0: i32, %arg1: i32, %arg2: i32) -> (i32, i32, i32) {
    %c0_i32 = arith.constant 0 : i32
    %c0_i32_0 = arith.constant 0 : i32
    return %arg1, %arg2, %c0_i32 : i32, i32, i32
  }
  func.func @transform_1(%arg0: i32, %arg1: i32, %arg2: i32) -> (i32, i32) {
    %c0_i32 = arith.constant 0 : i32
    %c0_i32_0 = arith.constant 0 : i32
    return %c0_i32, %arg0 : i32, i32
  }
  func.func @transform_2(%arg0: i32, %arg1: i32, %arg2: i32) -> (i32, i32, i32) {
    %c0_i32 = arith.constant 0 : i32
    return %arg1, %arg2, %arg0 : i32, i32, i32
  }
}

module attributes {stable_mosaic.version = 11 : i64} {
  func.func @_mm_act_kernel(%arg0: i32, %arg1: i32, %arg2: i32, %arg3: memref<1x128x384xbf16, #tpu.memory_space<vmem>>, %arg4: memref<384x512xbf16, #tpu.memory_space<vmem>>, %arg5: memref<1x128x512xf32, #tpu.memory_space<vmem>>) attributes {dimension_semantics = [#tpu.dimension_semantics<parallel>, #tpu.dimension_semantics<parallel>, #tpu.dimension_semantics<parallel>], iteration_bounds = array<i64: 1, 2, 9>, scalar_prefetch = 0 : i64, scratch_operands = 0 : i64, tpu.core_type = #tpu.core_type<tc>, window_params = [{transform_indices = @transform_0, window_bounds = array<i64: 1, 128, 384>}, {transform_indices = @transform_1, window_bounds = array<i64: 384, 512>}, {transform_indices = @transform_2, window_bounds = array<i64: 1, 128, 512>}]} {
    %c0 = arith.constant 0 : index
    %c0_0 = arith.constant 0 : index
    %0 = vector.load %arg4[%c0, %c0_0] : memref<384x512xbf16, #tpu.memory_space<vmem>>, vector<384x256xbf16>
    %c0_1 = arith.constant 0 : index
    %c0_2 = arith.constant 0 : index
    %c0_3 = arith.constant 0 : index
    %1 = vector.load %arg3[%c0_1, %c0_2, %c0_3] : memref<1x128x384xbf16, #tpu.memory_space<vmem>>, vector<1x128x384xbf16>
    %2 = vector.shape_cast %1 : vector<1x128x384xbf16> to vector<128x384xbf16>
    %cst = arith.constant dense<0.000000e+00> : vector<128x256xf32>
    %3 = tpu.matmul %2, %0, %cst {dimension_numbers = #tpu.dot_dimension_numbers<[1], [0], [0], [1], [0, 0, 1, 1], [], []>} : vector<128x384xbf16>, vector<384x256xbf16>, vector<128x256xf32> -> vector<128x256xf32>
    %4 = math.tanh %3 : vector<128x256xf32>
    %c0_4 = arith.constant 0 : index
    %c0_5 = arith.constant 0 : index
    %c0_6 = arith.constant 0 : index
    %5 = vector.load %arg5[%c0_4, %c0_5, %c0_6] : memref<1x128x512xf32, #tpu.memory_space<vmem>>, vector<1x128x256xf32>
    %6 = vector.shape_cast %5 : vector<1x128x256xf32> to vector<128x256xf32>
    %7 = vector.shape_cast %4 : vector<128x256xf32> to vector<1x128x256xf32>
    tpu.vector_store %arg5[%c0_4, %c0_5, %c0_6], %7 {strides = array<i32>} : memref<1x128x512xf32, #tpu.memory_space<vmem>>, vector<1x128x256xf32>,
    %c0_7 = arith.constant 0 : index
    %c256 = arith.constant 256 : index
    %8 = vector.load %arg4[%c0_7, %c256] : memref<384x512xbf16, #tpu.memory_space<vmem>>, vector<384x256xbf16>
    %c0_8 = arith.constant 0 : index
    %c0_9 = arith.constant 0 : index
    %c0_10 = arith.constant 0 : index
    %9 = vector.load %arg3[%c0_8, %c0_9, %c0_10] : memref<1x128x384xbf16, #tpu.memory_space<vmem>>, vector<1x128x384xbf16>
    %10 = vector.shape_cast %9 : vector<1x128x384xbf16> to vector<128x384xbf16>
    %cst_11 = arith.constant dense<0.000000e+00> : vector<128x256xf32>
    %11 = tpu.matmul %10, %8, %cst_11 {dimension_numbers = #tpu.dot_dimension_numbers<[1], [0], [0], [1], [0, 0, 1, 1], [], []>} : vector<128x384xbf16>, vector<384x256xbf16>, vector<128x256xf32> -> vector<128x256xf32>
    %12 = math.tanh %11 : vector<128x256xf32>
    %c0_12 = arith.constant 0 : index
    %c0_13 = arith.constant 0 : index
    %c256_14 = arith.constant 256 : index
    %13 = vector.load %arg5[%c0_12, %c0_13, %c256_14] : memref<1x128x512xf32, #tpu.memory_space<vmem>>, vector<1x128x256xf32>
    %14 = vector.shape_cast %13 : vector<1x128x256xf32> to vector<128x256xf32>
    %15 = vector.shape_cast %12 : vector<128x256xf32> to vector<1x128x256xf32>
    tpu.vector_store %arg5[%c0_12, %c0_13, %c256_14], %15 {strides = array<i32>} : memref<1x128x512xf32, #tpu.memory_space<vmem>>, vector<1x128x256xf32>,
    return
  }
  func.func @transform_0(%arg0: i32, %arg1: i32, %arg2: i32) -> (i32, i32, i32) {
    %c0_i32 = arith.constant 0 : i32
    %c0_i32_0 = arith.constant 0 : i32
    return %arg1, %arg2, %c0_i32 : i32, i32, i32
  }
  func.func @transform_1(%arg0: i32, %arg1: i32, %arg2: i32) -> (i32, i32) {
    %c0_i32 = arith.constant 0 : i32
    %c0_i32_0 = arith.constant 0 : i32
    return %c0_i32, %arg0 : i32, i32
  }
  func.func @transform_2(%arg0: i32, %arg1: i32, %arg2: i32) -> (i32, i32, i32) {
    %c0_i32 = arith.constant 0 : i32
    return %arg1, %arg2, %arg0 : i32, i32, i32
  }
}

</mosaic_0001>

<llo_original>
// kernel: generator_forward.3
$region0: #{generator_forward.3}
  #allocation0 [shape = 'u32[]', space=smem, size = 0x4, offset = 0x4, fixed_abs, tag = 'smem constant byte address 0x4 - core index']
  #allocation1 [shape = 'u32[144,128]{1,0:T(1,128)}', space=vmem, size = 0x12000, scoped, tag = 'internal scratch']
  %s0 = inlined_call_operand.vmem [shape: bf16[2,32,2048], index: 0, kind: input, shape index: {}]
  %s1 = inlined_call_operand.hbm [shape: bf16[2048,6400], index: 1, kind: input, shape index: {}]
  %s2 = inlined_call_operand.vmem [shape: bf16[2,32,6400], index: 2, kind: output, shape index: {}]
  %s3 = sld [smem:[#allocation0]]
  $region67: #{generator_forward.3} parent=0
    _
  %s5 = ssub.s32 1, %s3
  %s6 = scalar_select 0, %s5, %s3
  $region1: #{generator_forward.3} parent=0
    #allocation2 [shape = 'u8[5242880]{0}', space=vmem, size = 0x500000, scoped, tag = 'input window, operand 1']
    #allocation3 [shape = 's32[2]{0}', space=sflag, size = 0x8, scoped, tag = 'scoped memory for generator_forward.3']
    #allocation4 [shape = 'u8[81920]{0}', space=vmem, size = 0x14000, scoped, tag = 'output window, operand 0']
    %7 = vsyncpa [#allocation3], 0
    %s8 = scalar_lea.sflag [#allocation3], 1
    %9 = vsyncpa %s8, 0
    loop: start=0, step=1, limit=22
    $region2: #{generator_forward.3} parent=1 // loop_pre_header
      _
    $region3: #{generator_forward.3} parent=1 // loop_header
      %s11 = sphi 0, %s15
      %p12 = scmp.ge.s32.totalorder %s11, 22
      %s18 = sphi 0, %s37
      %s19 = sphi 0, %s33
      %s20 = sphi 0, %s29
      %s21 = sphi 0, %s18
      %s22 = sphi 0, %s19
      %s23 = sphi 0, %s20
      %s24 = sphi 0, %s21
      %s25 = sphi 0, %s22
      %s26 = sphi 0, %s23
      %s42 = sphi 0, %s44
      %s45 = sphi 0, %s42
      %s46 = sphi 0, %s45
      %s62 = sphi 0, %s46
      %s68 = sphi 0, %s70
      %s71 = sphi 0, %s68
      %s72 = sphi 0, %s71
      %s88 = sphi 0, %s72
      %s98 = sphi 0, %s100
      %s101 = sphi 0, %s98
      %s102 = sphi 0, %s101
      %s118 = sphi 0, %s102
    $region4: #{generator_forward.3} parent=1 // loop_header_branch
      %14 = sbr.rel (%p12) target = $region8
    $region5: #{generator_forward.3} parent=1 // loop_body
      %s16 = ssub.s32 %s11, 1
      %s17 = ssub.s32 %s11, 2
      %s27 = sadd.s32 1, %s20
      %p28 = scmp.ge.s32.totalorder %s27, 1
      %s29 = scalar_select %p28, 0, %s27
      %s30 = sadd.s32 1, %s19
      %s31 = scalar_select %p28, %s30, %s19
      %p32 = scmp.ge.s32.totalorder %s31, 2
      %s33 = scalar_select %p32, 0, %s31
      %s34 = sadd.s32 1, %s18
      %s35 = scalar_select %p32, %s34, %s18
      %p36 = scmp.ge.s32.totalorder %s35, 10
      %s37 = scalar_select %p36, 0, %s35
      %s38 = ssub.s32 %s19, %s33
      %s39 = ssub.s32 %s20, %s29
      %s40 = sor.u32 %s38, %s39
      %p41 = scmp.eq.s32.totalorder %s40, 0
      %s43 = sadd.s32 %s42, 1
      %s44 = scalar_select %p41, %s42, %s43
      %p47 = pneg %p41
      %p48 = scmp.eq.s32.totalorder %s11, 19
      %p49 = por %p47, %p48
      %p50 = scmp.ne.s32.totalorder %s42, %s45
      %p51 = scmp.eq.s32.totalorder %s11, 0
      %p52 = por %p50, %p51
      %p53 = scmp.ne.s32.totalorder %s42, %s45
      %p54 = scmp.eq.s32.totalorder %s16, 19
      %p55 = por %p53, %p54
      %p56 = scmp.ne.s32.totalorder %s45, %s46
      %p57 = scmp.eq.s32.totalorder %s16, 0
      %p58 = por %p56, %p57
      %p59 = scmp.ne.s32.totalorder %s45, %s46
      %p60 = scmp.eq.s32.totalorder %s17, 19
      %p61 = por %p59, %p60
      %p63 = scmp.ne.s32.totalorder %s46, %s62
      %p64 = scmp.eq.s32.totalorder %s17, 0
      %p65 = por %p63, %p64
      %s66 = ssub.s32 %s18, %s37
      %p67 = scmp.eq.s32.totalorder %s66, 0
      %s69 = sadd.s32 %s68, 1
      %s70 = scalar_select %p67, %s68, %s69
      %p73 = pneg %p67
      %p74 = scmp.eq.s32.totalorder %s11, 19
      %p75 = por %p73, %p74
      %p76 = scmp.ne.s32.totalorder %s68, %s71
      %p77 = scmp.eq.s32.totalorder %s11, 0
      %p78 = por %p76, %p77
      %p79 = scmp.ne.s32.totalorder %s68, %s71
      %p80 = scmp.eq.s32.totalorder %s16, 19
      %p81 = por %p79, %p80
      %p82 = scmp.ne.s32.totalorder %s71, %s72
      %p83 = scmp.eq.s32.totalorder %s16, 0
      %p84 = por %p82, %p83
      %p85 = scmp.ne.s32.totalorder %s71, %s72
      %p86 = scmp.eq.s32.totalorder %s17, 19
      %p87 = por %p85, %p86
      %p89 = scmp.ne.s32.totalorder %s72, %s88
      %p90 = scmp.eq.s32.totalorder %s17, 0
      %p91 = por %p89, %p90
      %s92 = ssub.s32 %s19, %s33
      %s93 = ssub.s32 %s20, %s29
      %s94 = sor.u32 %s92, %s93
      %s95 = ssub.s32 %s18, %s37
      %s96 = sor.u32 %s94, %s95
      %p97 = scmp.eq.s32.totalorder %s96, 0
      %s99 = sadd.s32 %s98, 1
      %s100 = scalar_select %p97, %s98, %s99
      %p103 = pneg %p97
      %p104 = scmp.eq.s32.totalorder %s11, 19
      %p105 = por %p103, %p104
      %p106 = scmp.ne.s32.totalorder %s98, %s101
      %p107 = scmp.eq.s32.totalorder %s11, 0
      %p108 = por %p106, %p107
      %p109 = scmp.ne.s32.totalorder %s98, %s101
      %p110 = scmp.eq.s32.totalorder %s16, 19
      %p111 = por %p109, %p110
      %p112 = scmp.ne.s32.totalorder %s101, %s102
      %p113 = scmp.eq.s32.totalorder %s16, 0
      %p114 = por %p112, %p113
      %p115 = scmp.ne.s32.totalorder %s101, %s102
      %p116 = scmp.eq.s32.totalorder %s17, 19
      %p117 = por %p115, %p116
      %p119 = scmp.ne.s32.totalorder %s102, %s118
      %p120 = scmp.eq.s32.totalorder %s17, 0
      %p121 = por %p119, %p120
      %p122 = scmp.le.s32.totalorder 1, %s11
      %p123 = scmp.lt.s32.totalorder %s11, 21
      %p124 = pnand %p122, %p123
      %p125 = pneg %p124
      // Predicated region
      $region9: #{generator_forward.3} parent=5 // pred_check
        _
      $region10: #{generator_forward.3} parent=5 // pred_check_branch
        %127 = sbr.rel (%p124) target = $region12
      $region11: #{generator_forward.3} parent=5 // pred_region
        %s128 = ssub.s32 %s11, 1
      $region12: #{generator_forward.3} parent=5 // pred_fallthru
        _
      %p129 = scmp.lt.s32.totalorder %s11, 20
      // Predicated region
      $region13: #{generator_forward.3} parent=5 // pred_check
        %p130 = pneg %p129
      $region14: #{generator_forward.3} parent=5 // pred_check_branch
        %132 = sbr.rel (%p130) target = $region16
      $region15: #{generator_forward.3} parent=5 // pred_region
        // Predicated region
        $region17: #{generator_forward.3} parent=15 // pred_check
          %p133 = pneg %p52
        $region18: #{generator_forward.3} parent=15 // pred_check_branch
          %135 = sbr.rel (%p133) target = $region20
        $region19: #{generator_forward.3} parent=15 // pred_region
          %s136 = smul.u32 4, %s20
          %p137 = scmp.lt.s32.totalorder %s19, 1
          %s138 = scalar_select %p137, %s19, 1
          %p139 = scmp.lt.s32.totalorder %s136, 3
          %s140 = scalar_select %p139, %s136, 3
          %s141 = smul.addr %s140, 16
          %s142 = smul.addr %s138, 64
          %s143 = sadd.s32 %s141, %s142
          %s144 = smul.addr %s143, 4
          %s145 = scalar_lea.vmem %s0, %s144
          %s146 = smul.u32 4, %s20
        $region20: #{generator_forward.3} parent=15 // pred_fallthru
          _
        // Predicated region
        $region21: #{generator_forward.3} parent=15 // pred_check
          %p147 = pneg %p78
        $region22: #{generator_forward.3} parent=15 // pred_check_branch
          %149 = sbr.rel (%p147) target = $region24
        $region23: #{generator_forward.3} parent=15 // pred_region
          %s150 = sand.u32 %s68, 1
          %s151 = scalar_lea.sflag [#allocation3], %s150
          %s152 = sand.u32 %s68, 1
          %s153 = smul.addr %s152, 5120
          %s154 = scalar_lea.vmem [#allocation2], %s153
          %s155 = smul.u32 5, %s18
          %s157 = ssub.s32 81920, 81920
          %158 = vsyncadd %s151, %s157
          %s159 = smul.addr %s155, 64
          %s160 = scalar_lea.hbm %s1, %s159
          %s161 = sshll.u32 %s154, 4
          %s162 = int_to_ptr.vmem [resolvable:$true] %s161
          %167 = dma.hbm_to_vmem [thread:$0]  %s160, 81920, %s162, %s151, 3200, 320, 20
        $region24: #{generator_forward.3} parent=15 // pred_fallthru
          _
      $region16: #{generator_forward.3} parent=5 // pred_fallthru
        _
      %p168 = scmp.le.s32.totalorder 1, %s11
      %p169 = scmp.lt.s32.totalorder %s11, 21
      %p170 = pnand %p168, %p169
      %p171 = pneg %p170
      // Predicated region
      $region25: #{generator_forward.3} parent=5 // pred_check
        _
      $region26: #{generator_forward.3} parent=5 // pred_check_branch
        %173 = sbr.rel (%p170) target = $region28
      $region27: #{generator_forward.3} parent=5 // pred_region
        %s174 = ssub.s32 %s11, 1
        %s175 = sand.u32 %s71, 1
        %s176 = scalar_lea.sflag [#allocation3], %s175
        %s177 = sand.u32 %s71, 1
        %s178 = smul.addr %s177, 5120
        %s179 = scalar_lea.vmem [#allocation2], %s178
        // Predicated region
        $region29: #{generator_forward.3} parent=27 // pred_check
          %p180 = pneg %p84
        $region30: #{generator_forward.3} parent=27 // pred_check_branch
          %182 = sbr.rel (%p180) target = $region32
        $region31: #{generator_forward.3} parent=27 // pred_region
          %183 = dma.done %s176, 81920
        $region32: #{generator_forward.3} parent=27 // pred_fallthru
          _
        %s184 = smul.u32 4, %s23
        %p185 = scmp.lt.s32.totalorder %s22, 1
        %s186 = scalar_select %p185, %s22, 1
        %p187 = scmp.lt.s32.totalorder %s184, 3
        %s188 = scalar_select %p187, %s184, 3
        %s189 = smul.addr %s188, 16
        %s190 = smul.addr %s186, 64
        %s191 = sadd.s32 %s189, %s190
        %s192 = smul.addr %s191, 4
        %s193 = scalar_lea.vmem %s0, %s192
        %p194 = pneg %p58
        %p195 = pneg %p55
        %s196 = sand.u32 %s71, 1
        %s197 = scalar_lea.sflag [#allocation3], %s196
        %s198 = sand.u32 %s71, 1
        %s199 = smul.addr %s198, 5120
        %s200 = scalar_lea.vmem [#allocation2], %s199
        %p201 = pneg %p84
        %p202 = pneg %p81
        %p203 = pneg %p114
        %p204 = pneg %p111
        %s205 = sand.u32 %s101, 1
        %s206 = sand.u32 %s101, 1
        %s207 = smul.addr %s206, 80
        %s208 = scalar_lea.vmem [#allocation4], %s207
        %s209 = smul.u32 4, %s23
        %p210 = scmp.lt.s32.totalorder %s22, 1
        %s211 = scalar_select %p210, %s22, 1
        %p212 = scmp.lt.s32.totalorder %s209, 3
        %s213 = scalar_select %p212, %s209, 3
        %s214 = smul.addr %s213, 16
        %s215 = smul.addr %s211, 64
        %s216 = sadd.s32 %s214, %s215
        %s217 = smul.addr %s216, 4
        %s218 = scalar_lea.vmem %s0, %s217
        %s219 = smul.u32 4, %s23
        %s220 = smul.u32 5, %s21
        %s221 = smul.u32 4, %s23
        %s222 = smul.u32 5, %s21
        %v224 = vld [vmem:[%s179] sm:$0xff]
        %v225 = vld [vmem:[%s179 + $0x8] sm:$0xff]
        %v226 = vld [vmem:[%s179 + $0x10] sm:$0xf]
        %v227 = vld [vmem:[%s179 + $0x14] sm:$0xff]
        %v228 = vld [vmem:[%s179 + $0x1c] sm:$0xff]
        %v229 = vld [vmem:[%s179 + $0x24] sm:$0xf]
        %v230 = vld [vmem:[%s179 + $0x28] sm:$0xff]
        %v231 = vld [vmem:[%s179 + $0x30] sm:$0xff]
        %v232 = vld [vmem:[%s179 + $0x38] sm:$0xf]
        %v233 = vld [vmem:[%s179 + $0x3c] sm:$0xff]
        %v234 = vld [vmem:[%s179 + $0x44] sm:$0xff]
        %v235 = vld [vmem:[%s179 + $0x4c] sm:$0xf]
        %v236 = vld [vmem:[%s179 + $0x50] sm:$0xff]
        %v237 = vld [vmem:[%s179 + $0x58] sm:$0xff]
        %v238 = vld [vmem:[%s179 + $0x60] sm:$0xf]
        %v239 = vld [vmem:[%s179 + $0x64] sm:$0xff]
        %v240 = vld [vmem:[%s179 + $0x6c] sm:$0xff]
        %v241 = vld [vmem:[%s179 + $0x74] sm:$0xf]
        %v242 = vld [vmem:[%s179 + $0x78] sm:$0xff]
        %v243 = vld [vmem:[%s179 + $0x80] sm:$0xff]
        %v244 = vld [vmem:[%s179 + $0x88] sm:$0xf]
        %v245 = vld [vmem:[%s179 + $0x8c] sm:$0xff]
        %v246 = vld [vmem:[%s179 + $0x94] sm:$0xff]
        %v247 = vld [vmem:[%s179 + $0x9c] sm:$0xf]
        %v248 = vld [vmem:[%s179 + $0xa0] sm:$0xff]
        %v249 = vld [vmem:[%s179 + $0xa8] sm:$0xff]
        %v250 = vld [vmem:[%s179 + $0xb0] sm:$0xf]
        %v251 = vld [vmem:[%s179 + $0xb4] sm:$0xff]
        %v252 = vld [vmem:[%s179 + $0xbc] sm:$0xff]
        %v253 = vld [vmem:[%s179 + $0xc4] sm:$0xf]
        %v254 = vld [vmem:[%s179 + $0xc8] sm:$0xff]
        %v255 = vld [vmem:[%s179 + $0xd0] sm:$0xff]
        %v256 = vld [vmem:[%s179 + $0xd8] sm:$0xf]
        %v257 = vld [vmem:[%s179 + $0xdc] sm:$0xff]
        %v258 = vld [vmem:[%s179 + $0xe4] sm:$0xff]
        %v259 = vld [vmem:[%s179 + $0xec] sm:$0xf]
        %v260 = vld [vmem:[%s179 + $0xf0] sm:$0xff]
        %v261 = vld [vmem:[%s179 + $0xf8] sm:$0xff]
        %v262 = vld [vmem:[%s179 + $0x100] sm:$0xf]
        %v263 = vld [vmem:[%s179 + $0x104] sm:$0xff]
        %v264 = vld [vmem:[%s179 + $0x10c] sm:$0xff]
        %v265 = vld [vmem:[%s179 + $0x114] sm:$0xf]
        %v266 = vld [vmem:[%s179 + $0x118] sm:$0xff]
        %v267 = vld [vmem:[%s179 + $0x120] sm:$0xff]
        %v268 = vld [vmem:[%s179 + $0x128] sm:$0xf]
        %v269 = vld [vmem:[%s179 + $0x12c] sm:$0xff]
        %v270 = vld [vmem:[%s179 + $0x134] sm:$0xff]
        %v271 = vld [vmem:[%s179 + $0x13c] sm:$0xf]
        %v272 = vld [vmem:[%s179 + $0x140] sm:$0xff]
        %v273 = vld [vmem:[%s179 + $0x148] sm:$0xff]
        %v274 = vld [vmem:[%s179 + $0x150] sm:$0xf]
        %v275 = vld [vmem:[%s179 + $0x154] sm:$0xff]
        %v276 = vld [vmem:[%s179 + $0x15c] sm:$0xff]
        %v277 = vld [vmem:[%s179 + $0x164] sm:$0xf]
        %v278 = vld [vmem:[%s179 + $0x168] sm:$0xff]
        %v279 = vld [vmem:[%s179 + $0x170] sm:$0xff]
        %v280 = vld [vmem:[%s179 + $0x178] sm:$0xf]
        %v281 = vld [vmem:[%s179 + $0x17c] sm:$0xff]
        %v282 = vld [vmem:[%s179 + $0x184] sm:$0xff]
        %v283 = vld [vmem:[%s179 + $0x18c] sm:$0xf]
        %v284 = vld [vmem:[%s179 + $0x190] sm:$0xff]
        %v285 = vld [vmem:[%s179 + $0x198] sm:$0xff]
        %v286 = vld [vmem:[%s179 + $0x1a0] sm:$0xf]
        %v287 = vld [vmem:[%s179 + $0x1a4] sm:$0xff]
        %v288 = vld [vmem:[%s179 + $0x1ac] sm:$0xff]
        %v289 = vld [vmem:[%s179 + $0x1b4] sm:$0xf]
        %v290 = vld [vmem:[%s179 + $0x1b8] sm:$0xff]
        %v291 = vld [vmem:[%s179 + $0x1c0] sm:$0xff]
        %v292 = vld [vmem:[%s179 + $0x1c8] sm:$0xf]
        %v293 = vld [vmem:[%s179 + $0x1cc] sm:$0xff]
        %v294 = vld [vmem:[%s179 + $0x1d4] sm:$0xff]
        %v295 = vld [vmem:[%s179 + $0x1dc] sm:$0xf]
        %v296 = vld [vmem:[%s179 + $0x1e0] sm:$0xff]
        %v297 = vld [vmem:[%s179 + $0x1e8] sm:$0xff]
        %v298 = vld [vmem:[%s179 + $0x1f0] sm:$0xf]
        %v299 = vld [vmem:[%s179 + $0x1f4] sm:$0xff]
        %v300 = vld [vmem:[%s179 + $0x1fc] sm:$0xff]
        %v301 = vld [vmem:[%s179 + $0x204] sm:$0xf]
        %v302 = vld [vmem:[%s179 + $0x208] sm:$0xff]
        %v303 = vld [vmem:[%s179 + $0x210] sm:$0xff]
        %v304 = vld [vmem:[%s179 + $0x218] sm:$0xf]
        %v305 = vld [vmem:[%s179 + $0x21c] sm:$0xff]
        %v306 = vld [vmem:[%s179 + $0x224] sm:$0xff]
        %v307 = vld [vmem:[%s179 + $0x22c] sm:$0xf]
        %v308 = vld [vmem:[%s179 + $0x230] sm:$0xff]
        %v309 = vld [vmem:[%s179 + $0x238] sm:$0xff]
        %v310 = vld [vmem:[%s179 + $0x240] sm:$0xf]
        %v311 = vld [vmem:[%s179 + $0x244] sm:$0xff]
        %v312 = vld [vmem:[%s179 + $0x24c] sm:$0xff]
        %v313 = vld [vmem:[%s179 + $0x254] sm:$0xf]
        %v314 = vld [vmem:[%s179 + $0x258] sm:$0xff]
        %v315 = vld [vmem:[%s179 + $0x260] sm:$0xff]
        %v316 = vld [vmem:[%s179 + $0x268] sm:$0xf]
        %v317 = vld [vmem:[%s179 + $0x26c] sm:$0xff]
        %v318 = vld [vmem:[%s179 + $0x274] sm:$0xff]
        %v319 = vld [vmem:[%s179 + $0x27c] sm:$0xf]
        %v320 = vld [vmem:[%s179 + $0x280] sm:$0xff]
        %v321 = vld [vmem:[%s179 + $0x288] sm:$0xff]
        %v322 = vld [vmem:[%s179 + $0x290] sm:$0xf]
        %v323 = vld [vmem:[%s179 + $0x294] sm:$0xff]
        %v324 = vld [vmem:[%s179 + $0x29c] sm:$0xff]
        %v325 = vld [vmem:[%s179 + $0x2a4] sm:$0xf]
        %v326 = vld [vmem:[%s179 + $0x2a8] sm:$0xff]
        %v327 = vld [vmem:[%s179 + $0x2b0] sm:$0xff]
        %v328 = vld [vmem:[%s179 + $0x2b8] sm:$0xf]
        %v329 = vld [vmem:[%s179 + $0x2bc] sm:$0xff]
        %v330 = vld [vmem:[%s179 + $0x2c4] sm:$0xff]
        %v331 = vld [vmem:[%s179 + $0x2cc] sm:$0xf]
        %v332 = vld [vmem:[%s179 + $0x2d0] sm:$0xff]
        %v333 = vld [vmem:[%s179 + $0x2d8] sm:$0xff]
        %v334 = vld [vmem:[%s179 + $0x2e0] sm:$0xf]
        %v335 = vld [vmem:[%s179 + $0x2e4] sm:$0xff]
        %v336 = vld [vmem:[%s179 + $0x2ec] sm:$0xff]
        %v337 = vld [vmem:[%s179 + $0x2f4] sm:$0xf]
        %v338 = vld [vmem:[%s179 + $0x2f8] sm:$0xff]
        %v339 = vld [vmem:[%s179 + $0x300] sm:$0xff]
        %v340 = vld [vmem:[%s179 + $0x308] sm:$0xf]
        %v341 = vld [vmem:[%s179 + $0x30c] sm:$0xff]
        %v342 = vld [vmem:[%s179 + $0x314] sm:$0xff]
        %v343 = vld [vmem:[%s179 + $0x31c] sm:$0xf]
        %v344 = vld [vmem:[%s179 + $0x320] sm:$0xff]
        %v345 = vld [vmem:[%s179 + $0x328] sm:$0xff]
        %v346 = vld [vmem:[%s179 + $0x330] sm:$0xf]
        %v347 = vld [vmem:[%s179 + $0x334] sm:$0xff]
        %v348 = vld [vmem:[%s179 + $0x33c] sm:$0xff]
        %v349 = vld [vmem:[%s179 + $0x344] sm:$0xf]
        %v350 = vld [vmem:[%s179 + $0x348] sm:$0xff]
        %v351 = vld [vmem:[%s179 + $0x350] sm:$0xff]
        %v352 = vld [vmem:[%s179 + $0x358] sm:$0xf]
        %v353 = vld [vmem:[%s179 + $0x35c] sm:$0xff]
        %v354 = vld [vmem:[%s179 + $0x364] sm:$0xff]
        %v355 = vld [vmem:[%s179 + $0x36c] sm:$0xf]
        %v356 = vld [vmem:[%s179 + $0x370] sm:$0xff]
        %v357 = vld [vmem:[%s179 + $0x378] sm:$0xff]
        %v358 = vld [vmem:[%s179 + $0x380] sm:$0xf]
        %v359 = vld [vmem:[%s179 + $0x384] sm:$0xff]
        %v360 = vld [vmem:[%s179 + $0x38c] sm:$0xff]
        %v361 = vld [vmem:[%s179 + $0x394] sm:$0xf]
        %v362 = vld [vmem:[%s179 + $0x398] sm:$0xff]
        %v363 = vld [vmem:[%s179 + $0x3a0] sm:$0xff]
        %v364 = vld [vmem:[%s179 + $0x3a8] sm:$0xf]
        %v365 = vld [vmem:[%s179 + $0x3ac] sm:$0xff]
        %v366 = vld [vmem:[%s179 + $0x3b4] sm:$0xff]
        %v367 = vld [vmem:[%s179 + $0x3bc] sm:$0xf]
        %v368 = vld [vmem:[%s179 + $0x3c0] sm:$0xff]
        %v369 = vld [vmem:[%s179 + $0x3c8] sm:$0xff]
        %v370 = vld [vmem:[%s179 + $0x3d0] sm:$0xf]
        %v371 = vld [vmem:[%s179 + $0x3d4] sm:$0xff]
        %v372 = vld [vmem:[%s179 + $0x3dc] sm:$0xff]
        %v373 = vld [vmem:[%s179 + $0x3e4] sm:$0xf]
        %v374 = vld [vmem:[%s179 + $0x3e8] sm:$0xff]
        %v375 = vld [vmem:[%s179 + $0x3f0] sm:$0xff]
        %v376 = vld [vmem:[%s179 + $0x3f8] sm:$0xf]
        %v377 = vld [vmem:[%s179 + $0x3fc] sm:$0xff]
        %v378 = vld [vmem:[%s179 + $0x404] sm:$0xff]
        %v379 = vld [vmem:[%s179 + $0x40c] sm:$0xf]
        %v380 = vld [vmem:[%s179 + $0x410] sm:$0xff]
        %v381 = vld [vmem:[%s179 + $0x418] sm:$0xff]
        %v382 = vld [vmem:[%s179 + $0x420] sm:$0xf]
        %v383 = vld [vmem:[%s179 + $0x424] sm:$0xff]
        %v384 = vld [vmem:[%s179 + $0x42c] sm:$0xff]
        %v385 = vld [vmem:[%s179 + $0x434] sm:$0xf]
        %v386 = vld [vmem:[%s179 + $0x438] sm:$0xff]
        %v387 = vld [vmem:[%s179 + $0x440] sm:$0xff]
        %v388 = vld [vmem:[%s179 + $0x448] sm:$0xf]
        %v389 = vld [vmem:[%s179 + $0x44c] sm:$0xff]
        %v390 = vld [vmem:[%s179 + $0x454] sm:$0xff]
        %v391 = vld [vmem:[%s179 + $0x45c] sm:$0xf]
        %v392 = vld [vmem:[%s179 + $0x460] sm:$0xff]
        %v393 = vld [vmem:[%s179 + $0x468] sm:$0xff]
        %v394 = vld [vmem:[%s179 + $0x470] sm:$0xf]
        %v395 = vld [vmem:[%s179 + $0x474] sm:$0xff]
        %v396 = vld [vmem:[%s179 + $0x47c] sm:$0xff]
        %v397 = vld [vmem:[%s179 + $0x484] sm:$0xf]
        %v398 = vld [vmem:[%s179 + $0x488] sm:$0xff]
        %v399 = vld [vmem:[%s179 + $0x490] sm:$0xff]
        %v400 = vld [vmem:[%s179 + $0x498] sm:$0xf]
        %v401 = vld [vmem:[%s179 + $0x49c] sm:$0xff]
        %v402 = vld [vmem:[%s179 + $0x4a4] sm:$0xff]
        %v403 = vld [vmem:[%s179 + $0x4ac] sm:$0xf]
        %v404 = vld [vmem:[%s179 + $0x4b0] sm:$0xff]
        %v405 = vld [vmem:[%s179 + $0x4b8] sm:$0xff]
        %v406 = vld [vmem:[%s179 + $0x4c0] sm:$0xf]
        %v407 = vld [vmem:[%s179 + $0x4c4] sm:$0xff]
        %v408 = vld [vmem:[%s179 + $0x4cc] sm:$0xff]
        %v409 = vld [vmem:[%s179 + $0x4d4] sm:$0xf]
        %v410 = vld [vmem:[%s179 + $0x4d8] sm:$0xff]
        %v411 = vld [vmem:[%s179 + $0x4e0] sm:$0xff]
        %v412 = vld [vmem:[%s179 + $0x4e8] sm:$0xf]
        %v413 = vld [vmem:[%s179 + $0x4ec] sm:$0xff]
        %v414 = vld [vmem:[%s179 + $0x4f4] sm:$0xff]
        %v415 = vld [vmem:[%s179 + $0x4fc] sm:$0xf]
        %v416 = vld [vmem:[%s179 + $0x500] sm:$0xff]
        %v417 = vld [vmem:[%s179 + $0x508] sm:$0xff]
        %v418 = vld [vmem:[%s179 + $0x510] sm:$0xf]
        %v419 = vld [vmem:[%s179 + $0x514] sm:$0xff]
        %v420 = vld [vmem:[%s179 + $0x51c] sm:$0xff]
        %v421 = vld [vmem:[%s179 + $0x524] sm:$0xf]
        %v422 = vld [vmem:[%s179 + $0x528] sm:$0xff]
        %v423 = vld [vmem:[%s179 + $0x530] sm:$0xff]
        %v424 = vld [vmem:[%s179 + $0x538] sm:$0xf]
        %v425 = vld [vmem:[%s179 + $0x53c] sm:$0xff]
        %v426 = vld [vmem:[%s179 + $0x544] sm:$0xff]
        %v427 = vld [vmem:[%s179 + $0x54c] sm:$0xf]
        %v428 = vld [vmem:[%s179 + $0x550] sm:$0xff]
        %v429 = vld [vmem:[%s179 + $0x558] sm:$0xff]
        %v430 = vld [vmem:[%s179 + $0x560] sm:$0xf]
        %v431 = vld [vmem:[%s179 + $0x564] sm:$0xff]
        %v432 = vld [vmem:[%s179 + $0x56c] sm:$0xff]
        %v433 = vld [vmem:[%s179 + $0x574] sm:$0xf]
        %v434 = vld [vmem:[%s179 + $0x578] sm:$0xff]
        %v435 = vld [vmem:[%s179 + $0x580] sm:$0xff]
        %v436 = vld [vmem:[%s179 + $0x588] sm:$0xf]
        %v437 = vld [vmem:[%s179 + $0x58c] sm:$0xff]
        %v438 = vld [vmem:[%s179 + $0x594] sm:$0xff]
        %v439 = vld [vmem:[%s179 + $0x59c] sm:$0xf]
        %v440 = vld [vmem:[%s179 + $0x5a0] sm:$0xff]
        %v441 = vld [vmem:[%s179 + $0x5a8] sm:$0xff]
        %v442 = vld [vmem:[%s179 + $0x5b0] sm:$0xf]
        %v443 = vld [vmem:[%s179 + $0x5b4] sm:$0xff]
        %v444 = vld [vmem:[%s179 + $0x5bc] sm:$0xff]
        %v445 = vld [vmem:[%s179 + $0x5c4] sm:$0xf]
        %v446 = vld [vmem:[%s179 + $0x5c8] sm:$0xff]
        %v447 = vld [vmem:[%s179 + $0x5d0] sm:$0xff]
        %v448 = vld [vmem:[%s179 + $0x5d8] sm:$0xf]
        %v449 = vld [vmem:[%s179 + $0x5dc] sm:$0xff]
        %v450 = vld [vmem:[%s179 + $0x5e4] sm:$0xff]
        %v451 = vld [vmem:[%s179 + $0x5ec] sm:$0xf]
        %v452 = vld [vmem:[%s179 + $0x5f0] sm:$0xff]
        %v453 = vld [vmem:[%s179 + $0x5f8] sm:$0xff]
        %v454 = vld [vmem:[%s179 + $0x600] sm:$0xf]
        %v455 = vld [vmem:[%s179 + $0x604] sm:$0xff]
        %v456 = vld [vmem:[%s179 + $0x60c] sm:$0xff]
        %v457 = vld [vmem:[%s179 + $0x614] sm:$0xf]
        %v458 = vld [vmem:[%s179 + $0x618] sm:$0xff]
        %v459 = vld [vmem:[%s179 + $0x620] sm:$0xff]
        %v460 = vld [vmem:[%s179 + $0x628] sm:$0xf]
        %v461 = vld [vmem:[%s179 + $0x62c] sm:$0xff]
        %v462 = vld [vmem:[%s179 + $0x634] sm:$0xff]
        %v463 = vld [vmem:[%s179 + $0x63c] sm:$0xf]
        %v464 = vld [vmem:[%s179 + $0x640] sm:$0xff]
        %v465 = vld [vmem:[%s179 + $0x648] sm:$0xff]
        %v466 = vld [vmem:[%s179 + $0x650] sm:$0xf]
        %v467 = vld [vmem:[%s179 + $0x654] sm:$0xff]
        %v468 = vld [vmem:[%s179 + $0x65c] sm:$0xff]
        %v469 = vld [vmem:[%s179 + $0x664] sm:$0xf]
        %v470 = vld [vmem:[%s179 + $0x668] sm:$0xff]
        %v471 = vld [vmem:[%s179 + $0x670] sm:$0xff]
        %v472 = vld [vmem:[%s179 + $0x678] sm:$0xf]
        %v473 = vld [vmem:[%s179 + $0x67c] sm:$0xff]
        %v474 = vld [vmem:[%s179 + $0x684] sm:$0xff]
        %v475 = vld [vmem:[%s179 + $0x68c] sm:$0xf]
        %v476 = vld [vmem:[%s179 + $0x690] sm:$0xff]
        %v477 = vld [vmem:[%s179 + $0x698] sm:$0xff]
        %v478 = vld [vmem:[%s179 + $0x6a0] sm:$0xf]
        %v479 = vld [vmem:[%s179 + $0x6a4] sm:$0xff]
        %v480 = vld [vmem:[%s179 + $0x6ac] sm:$0xff]
        %v481 = vld [vmem:[%s179 + $0x6b4] sm:$0xf]
        %v482 = vld [vmem:[%s179 + $0x6b8] sm:$0xff]
        %v483 = vld [vmem:[%s179 + $0x6c0] sm:$0xff]
        %v484 = vld [vmem:[%s179 + $0x6c8] sm:$0xf]
        %v485 = vld [vmem:[%s179 + $0x6cc] sm:$0xff]
        %v486 = vld [vmem:[%s179 + $0x6d4] sm:$0xff]
        %v487 = vld [vmem:[%s179 + $0x6dc] sm:$0xf]
        %v488 = vld [vmem:[%s179 + $0x6e0] sm:$0xff]
        %v489 = vld [vmem:[%s179 + $0x6e8] sm:$0xff]
        %v490 = vld [vmem:[%s179 + $0x6f0] sm:$0xf]
        %v491 = vld [vmem:[%s179 + $0x6f4] sm:$0xff]
        %v492 = vld [vmem:[%s179 + $0x6fc] sm:$0xff]
        %v493 = vld [vmem:[%s179 + $0x704] sm:$0xf]
        %v494 = vld [vmem:[%s179 + $0x708] sm:$0xff]
        %v495 = vld [vmem:[%s179 + $0x710] sm:$0xff]
        %v496 = vld [vmem:[%s179 + $0x718] sm:$0xf]
        %v497 = vld [vmem:[%s179 + $0x71c] sm:$0xff]
        %v498 = vld [vmem:[%s179 + $0x724] sm:$0xff]
        %v499 = vld [vmem:[%s179 + $0x72c] sm:$0xf]
        %v500 = vld [vmem:[%s179 + $0x730] sm:$0xff]
        %v501 = vld [vmem:[%s179 + $0x738] sm:$0xff]
        %v502 = vld [vmem:[%s179 + $0x740] sm:$0xf]
        %v503 = vld [vmem:[%s179 + $0x744] sm:$0xff]
        %v504 = vld [vmem:[%s179 + $0x74c] sm:$0xff]
        %v505 = vld [vmem:[%s179 + $0x754] sm:$0xf]
        %v506 = vld [vmem:[%s179 + $0x758] sm:$0xff]
        %v507 = vld [vmem:[%s179 + $0x760] sm:$0xff]
        %v508 = vld [vmem:[%s179 + $0x768] sm:$0xf]
        %v509 = vld [vmem:[%s179 + $0x76c] sm:$0xff]
        %v510 = vld [vmem:[%s179 + $0x774] sm:$0xff]
        %v511 = vld [vmem:[%s179 + $0x77c] sm:$0xf]
        %v512 = vld [vmem:[%s179 + $0x780] sm:$0xff]
        %v513 = vld [vmem:[%s179 + $0x788] sm:$0xff]
        %v514 = vld [vmem:[%s179 + $0x790] sm:$0xf]
        %v515 = vld [vmem:[%s179 + $0x794] sm:$0xff]
        %v516 = vld [vmem:[%s179 + $0x79c] sm:$0xff]
        %v517 = vld [vmem:[%s179 + $0x7a4] sm:$0xf]
        %v518 = vld [vmem:[%s179 + $0x7a8] sm:$0xff]
        %v519 = vld [vmem:[%s179 + $0x7b0] sm:$0xff]
        %v520 = vld [vmem:[%s179 + $0x7b8] sm:$0xf]
        %v521 = vld [vmem:[%s179 + $0x7bc] sm:$0xff]
        %v522 = vld [vmem:[%s179 + $0x7c4] sm:$0xff]
        %v523 = vld [vmem:[%s179 + $0x7cc] sm:$0xf]
        %v524 = vld [vmem:[%s179 + $0x7d0] sm:$0xff]
        %v525 = vld [vmem:[%s179 + $0x7d8] sm:$0xff]
        %v526 = vld [vmem:[%s179 + $0x7e0] sm:$0xf]
        %v527 = vld [vmem:[%s179 + $0x7e4] sm:$0xff]
        %v528 = vld [vmem:[%s179 + $0x7ec] sm:$0xff]
        %v529 = vld [vmem:[%s179 + $0x7f4] sm:$0xf]
        %v530 = vld [vmem:[%s179 + $0x7f8] sm:$0xff]
        %v531 = vld [vmem:[%s179 + $0x800] sm:$0xff]
        %v532 = vld [vmem:[%s179 + $0x808] sm:$0xf]
        %v533 = vld [vmem:[%s179 + $0x80c] sm:$0xff]
        %v534 = vld [vmem:[%s179 + $0x814] sm:$0xff]
        %v535 = vld [vmem:[%s179 + $0x81c] sm:$0xf]
        %v536 = vld [vmem:[%s179 + $0x820] sm:$0xff]
        %v537 = vld [vmem:[%s179 + $0x828] sm:$0xff]
        %v538 = vld [vmem:[%s179 + $0x830] sm:$0xf]
        %v539 = vld [vmem:[%s179 + $0x834] sm:$0xff]
        %v540 = vld [vmem:[%s179 + $0x83c] sm:$0xff]
        %v541 = vld [vmem:[%s179 + $0x844] sm:$0xf]
        %v542 = vld [vmem:[%s179 + $0x848] sm:$0xff]
        %v543 = vld [vmem:[%s179 + $0x850] sm:$0xff]
        %v544 = vld [vmem:[%s179 + $0x858] sm:$0xf]
        %v545 = vld [vmem:[%s179 + $0x85c] sm:$0xff]
        %v546 = vld [vmem:[%s179 + $0x864] sm:$0xff]
        %v547 = vld [vmem:[%s179 + $0x86c] sm:$0xf]
        %v548 = vld [vmem:[%s179 + $0x870] sm:$0xff]
        %v549 = vld [vmem:[%s179 + $0x878] sm:$0xff]
        %v550 = vld [vmem:[%s179 + $0x880] sm:$0xf]
        %v551 = vld [vmem:[%s179 + $0x884] sm:$0xff]
        %v552 = vld [vmem:[%s179 + $0x88c] sm:$0xff]
        %v553 = vld [vmem:[%s179 + $0x894] sm:$0xf]
        %v554 = vld [vmem:[%s179 + $0x898] sm:$0xff]
        %v555 = vld [vmem:[%s179 + $0x8a0] sm:$0xff]
        %v556 = vld [vmem:[%s179 + $0x8a8] sm:$0xf]
        %v557 = vld [vmem:[%s179 + $0x8ac] sm:$0xff]
        %v558 = vld [vmem:[%s179 + $0x8b4] sm:$0xff]
        %v559 = vld [vmem:[%s179 + $0x8bc] sm:$0xf]
        %v560 = vld [vmem:[%s179 + $0x8c0] sm:$0xff]
        %v561 = vld [vmem:[%s179 + $0x8c8] sm:$0xff]
        %v562 = vld [vmem:[%s179 + $0x8d0] sm:$0xf]
        %v563 = vld [vmem:[%s179 + $0x8d4] sm:$0xff]
        %v564 = vld [vmem:[%s179 + $0x8dc] sm:$0xff]
        %v565 = vld [vmem:[%s179 + $0x8e4] sm:$0xf]
        %v566 = vld [vmem:[%s179 + $0x8e8] sm:$0xff]
        %v567 = vld [vmem:[%s179 + $0x8f0] sm:$0xff]
        %v568 = vld [vmem:[%s179 + $0x8f8] sm:$0xf]
        %v569 = vld [vmem:[%s179 + $0x8fc] sm:$0xff]
        %v570 = vld [vmem:[%s179 + $0x904] sm:$0xff]
        %v571 = vld [vmem:[%s179 + $0x90c] sm:$0xf]
        %v572 = vld [vmem:[%s179 + $0x910] sm:$0xff]
        %v573 = vld [vmem:[%s179 + $0x918] sm:$0xff]
        %v574 = vld [vmem:[%s179 + $0x920] sm:$0xf]
        %v575 = vld [vmem:[%s179 + $0x924] sm:$0xff]
        %v576 = vld [vmem:[%s179 + $0x92c] sm:$0xff]
        %v577 = vld [vmem:[%s179 + $0x934] sm:$0xf]
        %v578 = vld [vmem:[%s179 + $0x938] sm:$0xff]
        %v579 = vld [vmem:[%s179 + $0x940] sm:$0xff]
        %v580 = vld [vmem:[%s179 + $0x948] sm:$0xf]
        %v581 = vld [vmem:[%s179 + $0x94c] sm:$0xff]
        %v582 = vld [vmem:[%s179 + $0x954] sm:$0xff]
        %v583 = vld [vmem:[%s179 + $0x95c] sm:$0xf]
        %v584 = vld [vmem:[%s179 + $0x960] sm:$0xff]
        %v585 = vld [vmem:[%s179 + $0x968] sm:$0xff]
        %v586 = vld [vmem:[%s179 + $0x970] sm:$0xf]
        %v587 = vld [vmem:[%s179 + $0x974] sm:$0xff]
        %v588 = vld [vmem:[%s179 + $0x97c] sm:$0xff]
        %v589 = vld [vmem:[%s179 + $0x984] sm:$0xf]
        %v590 = vld [vmem:[%s179 + $0x988] sm:$0xff]
        %v591 = vld [vmem:[%s179 + $0x990] sm:$0xff]
        %v592 = vld [vmem:[%s179 + $0x998] sm:$0xf]
        %v593 = vld [vmem:[%s179 + $0x99c] sm:$0xff]
        %v594 = vld [vmem:[%s179 + $0x9a4] sm:$0xff]
        %v595 = vld [vmem:[%s179 + $0x9ac] sm:$0xf]
        %v596 = vld [vmem:[%s179 + $0x9b0] sm:$0xff]
        %v597 = vld [vmem:[%s179 + $0x9b8] sm:$0xff]
        %v598 = vld [vmem:[%s179 + $0x9c0] sm:$0xf]
        %v599 = vld [vmem:[%s179 + $0x9c4] sm:$0xff]
        %v600 = vld [vmem:[%s179 + $0x9cc] sm:$0xff]
        %v601 = vld [vmem:[%s179 + $0x9d4] sm:$0xf]
        %v602 = vld [vmem:[%s179 + $0x9d8] sm:$0xff]
        %v603 = vld [vmem:[%s179 + $0x9e0] sm:$0xff]
        %v604 = vld [vmem:[%s179 + $0x9e8] sm:$0xf]
        %v605 = vld [vmem:[%s179 + $0x9ec] sm:$0xff]
        %v606 = vld [vmem:[%s179 + $0x9f4] sm:$0xff]
        %v607 = vld [vmem:[%s179 + $0x9fc] sm:$0xf]
        %v608 = vld [vmem:[%s179 + $0xa00] sm:$0xff]
        %v609 = vld [vmem:[%s179 + $0xa08] sm:$0xff]
        %v610 = vld [vmem:[%s179 + $0xa10] sm:$0xf]
        %v611 = vld [vmem:[%s179 + $0xa14] sm:$0xff]
        %v612 = vld [vmem:[%s179 + $0xa1c] sm:$0xff]
        %v613 = vld [vmem:[%s179 + $0xa24] sm:$0xf]
        %v614 = vld [vmem:[%s179 + $0xa28] sm:$0xff]
        %v615 = vld [vmem:[%s179 + $0xa30] sm:$0xff]
        %v616 = vld [vmem:[%s179 + $0xa38] sm:$0xf]
        %v617 = vld [vmem:[%s179 + $0xa3c] sm:$0xff]
        %v618 = vld [vmem:[%s179 + $0xa44] sm:$0xff]
        %v619 = vld [vmem:[%s179 + $0xa4c] sm:$0xf]
        %v620 = vld [vmem:[%s179 + $0xa50] sm:$0xff]
        %v621 = vld [vmem:[%s179 + $0xa58] sm:$0xff]
        %v622 = vld [vmem:[%s179 + $0xa60] sm:$0xf]
        %v623 = vld [vmem:[%s179 + $0xa64] sm:$0xff]
        %v624 = vld [vmem:[%s179 + $0xa6c] sm:$0xff]
        %v625 = vld [vmem:[%s179 + $0xa74] sm:$0xf]
        %v626 = vld [vmem:[%s179 + $0xa78] sm:$0xff]
        %v627 = vld [vmem:[%s179 + $0xa80] sm:$0xff]
        %v628 = vld [vmem:[%s179 + $0xa88] sm:$0xf]
        %v629 = vld [vmem:[%s179 + $0xa8c] sm:$0xff]
        %v630 = vld [vmem:[%s179 + $0xa94] sm:$0xff]
        %v631 = vld [vmem:[%s179 + $0xa9c] sm:$0xf]
        %v632 = vld [vmem:[%s179 + $0xaa0] sm:$0xff]
        %v633 = vld [vmem:[%s179 + $0xaa8] sm:$0xff]
        %v634 = vld [vmem:[%s179 + $0xab0] sm:$0xf]
        %v635 = vld [vmem:[%s179 + $0xab4] sm:$0xff]
        %v636 = vld [vmem:[%s179 + $0xabc] sm:$0xff]
        %v637 = vld [vmem:[%s179 + $0xac4] sm:$0xf]
        %v638 = vld [vmem:[%s179 + $0xac8] sm:$0xff]
        %v639 = vld [vmem:[%s179 + $0xad0] sm:$0xff]
        %v640 = vld [vmem:[%s179 + $0xad8] sm:$0xf]
        %v641 = vld [vmem:[%s179 + $0xadc] sm:$0xff]
        %v642 = vld [vmem:[%s179 + $0xae4] sm:$0xff]
        %v643 = vld [vmem:[%s179 + $0xaec] sm:$0xf]
        %v644 = vld [vmem:[%s179 + $0xaf0] sm:$0xff]
        %v645 = vld [vmem:[%s179 + $0xaf8] sm:$0xff]
        %v646 = vld [vmem:[%s179 + $0xb00] sm:$0xf]
        %v647 = vld [vmem:[%s179 + $0xb04] sm:$0xff]
        %v648 = vld [vmem:[%s179 + $0xb0c] sm:$0xff]
        %v649 = vld [vmem:[%s179 + $0xb14] sm:$0xf]
        %v650 = vld [vmem:[%s179 + $0xb18] sm:$0xff]
        %v651 = vld [vmem:[%s179 + $0xb20] sm:$0xff]
        %v652 = vld [vmem:[%s179 + $0xb28] sm:$0xf]
        %v653 = vld [vmem:[%s179 + $0xb2c] sm:$0xff]
        %v654 = vld [vmem:[%s179 + $0xb34] sm:$0xff]
        %v655 = vld [vmem:[%s179 + $0xb3c] sm:$0xf]
        %v656 = vld [vmem:[%s179 + $0xb40] sm:$0xff]
        %v657 = vld [vmem:[%s179 + $0xb48] sm:$0xff]
        %v658 = vld [vmem:[%s179 + $0xb50] sm:$0xf]
        %v659 = vld [vmem:[%s179 + $0xb54] sm:$0xff]
        %v660 = vld [vmem:[%s179 + $0xb5c] sm:$0xff]
        %v661 = vld [vmem:[%s179 + $0xb64] sm:$0xf]
        %v662 = vld [vmem:[%s179 + $0xb68] sm:$0xff]
        %v663 = vld [vmem:[%s179 + $0xb70] sm:$0xff]
        %v664 = vld [vmem:[%s179 + $0xb78] sm:$0xf]
        %v665 = vld [vmem:[%s179 + $0xb7c] sm:$0xff]
        %v666 = vld [vmem:[%s179 + $0xb84] sm:$0xff]
        %v667 = vld [vmem:[%s179 + $0xb8c] sm:$0xf]
        %v668 = vld [vmem:[%s179 + $0xb90] sm:$0xff]
        %v669 = vld [vmem:[%s179 + $0xb98] sm:$0xff]
        %v670 = vld [vmem:[%s179 + $0xba0] sm:$0xf]
        %v671 = vld [vmem:[%s179 + $0xba4] sm:$0xff]
        %v672 = vld [vmem:[%s179 + $0xbac] sm:$0xff]
        %v673 = vld [vmem:[%s179 + $0xbb4] sm:$0xf]
        %v674 = vld [vmem:[%s179 + $0xbb8] sm:$0xff]
        %v675 = vld [vmem:[%s179 + $0xbc0] sm:$0xff]
        %v676 = vld [vmem:[%s179 + $0xbc8] sm:$0xf]
        %v677 = vld [vmem:[%s179 + $0xbcc] sm:$0xff]
        %v678 = vld [vmem:[%s179 + $0xbd4] sm:$0xff]
        %v679 = vld [vmem:[%s179 + $0xbdc] sm:$0xf]
        %v680 = vld [vmem:[%s179 + $0xbe0] sm:$0xff]
        %v681 = vld [vmem:[%s179 + $0xbe8] sm:$0xff]
        %v682 = vld [vmem:[%s179 + $0xbf0] sm:$0xf]
        %v683 = vld [vmem:[%s179 + $0xbf4] sm:$0xff]
        %v684 = vld [vmem:[%s179 + $0xbfc] sm:$0xff]
        %v685 = vld [vmem:[%s179 + $0xc04] sm:$0xf]
        %v686 = vld [vmem:[%s179 + $0xc08] sm:$0xff]
        %v687 = vld [vmem:[%s179 + $0xc10] sm:$0xff]
        %v688 = vld [vmem:[%s179 + $0xc18] sm:$0xf]
        %v689 = vld [vmem:[%s179 + $0xc1c] sm:$0xff]
        %v690 = vld [vmem:[%s179 + $0xc24] sm:$0xff]
        %v691 = vld [vmem:[%s179 + $0xc2c] sm:$0xf]
        %v692 = vld [vmem:[%s179 + $0xc30] sm:$0xff]
        %v693 = vld [vmem:[%s179 + $0xc38] sm:$0xff]
        %v694 = vld [vmem:[%s179 + $0xc40] sm:$0xf]
        %v695 = vld [vmem:[%s179 + $0xc44] sm:$0xff]
        %v696 = vld [vmem:[%s179 + $0xc4c] sm:$0xff]
        %v697 = vld [vmem:[%s179 + $0xc54] sm:$0xf]
        %v698 = vld [vmem:[%s179 + $0xc58] sm:$0xff]
        %v699 = vld [vmem:[%s179 + $0xc60] sm:$0xff]
        %v700 = vld [vmem:[%s179 + $0xc68] sm:$0xf]
        %v701 = vld [vmem:[%s179 + $0xc6c] sm:$0xff]
        %v702 = vld [vmem:[%s179 + $0xc74] sm:$0xff]
        %v703 = vld [vmem:[%s179 + $0xc7c] sm:$0xf]
        %v704 = vld [vmem:[%s179 + $0xc80] sm:$0xff]
        %v705 = vld [vmem:[%s179 + $0xc88] sm:$0xff]
        %v706 = vld [vmem:[%s179 + $0xc90] sm:$0xf]
        %v707 = vld [vmem:[%s179 + $0xc94] sm:$0xff]
        %v708 = vld [vmem:[%s179 + $0xc9c] sm:$0xff]
        %v709 = vld [vmem:[%s179 + $0xca4] sm:$0xf]
        %v710 = vld [vmem:[%s179 + $0xca8] sm:$0xff]
        %v711 = vld [vmem:[%s179 + $0xcb0] sm:$0xff]
        %v712 = vld [vmem:[%s179 + $0xcb8] sm:$0xf]
        %v713 = vld [vmem:[%s179 + $0xcbc] sm:$0xff]
        %v714 = vld [vmem:[%s179 + $0xcc4] sm:$0xff]
        %v715 = vld [vmem:[%s179 + $0xccc] sm:$0xf]
        %v716 = vld [vmem:[%s179 + $0xcd0] sm:$0xff]
        %v717 = vld [vmem:[%s179 + $0xcd8] sm:$0xff]
        %v718 = vld [vmem:[%s179 + $0xce0] sm:$0xf]
        %v719 = vld [vmem:[%s179 + $0xce4] sm:$0xff]
        %v720 = vld [vmem:[%s179 + $0xcec] sm:$0xff]
        %v721 = vld [vmem:[%s179 + $0xcf4] sm:$0xf]
        %v722 = vld [vmem:[%s179 + $0xcf8] sm:$0xff]
        %v723 = vld [vmem:[%s179 + $0xd00] sm:$0xff]
        %v724 = vld [vmem:[%s179 + $0xd08] sm:$0xf]
        %v725 = vld [vmem:[%s179 + $0xd0c] sm:$0xff]
        %v726 = vld [vmem:[%s179 + $0xd14] sm:$0xff]
        %v727 = vld [vmem:[%s179 + $0xd1c] sm:$0xf]
        %v728 = vld [vmem:[%s179 + $0xd20] sm:$0xff]
        %v729 = vld [vmem:[%s179 + $0xd28] sm:$0xff]
        %v730 = vld [vmem:[%s179 + $0xd30] sm:$0xf]
        %v731 = vld [vmem:[%s179 + $0xd34] sm:$0xff]
        %v732 = vld [vmem:[%s179 + $0xd3c] sm:$0xff]
        %v733 = vld [vmem:[%s179 + $0xd44] sm:$0xf]
        %v734 = vld [vmem:[%s179 + $0xd48] sm:$0xff]
        %v735 = vld [vmem:[%s179 + $0xd50] sm:$0xff]
        %v736 = vld [vmem:[%s179 + $0xd58] sm:$0xf]
        %v737 = vld [vmem:[%s179 + $0xd5c] sm:$0xff]
        %v738 = vld [vmem:[%s179 + $0xd64] sm:$0xff]
        %v739 = vld [vmem:[%s179 + $0xd6c] sm:$0xf]
        %v740 = vld [vmem:[%s179 + $0xd70] sm:$0xff]
        %v741 = vld [vmem:[%s179 + $0xd78] sm:$0xff]
        %v742 = vld [vmem:[%s179 + $0xd80] sm:$0xf]
        %v743 = vld [vmem:[%s179 + $0xd84] sm:$0xff]
        %v744 = vld [vmem:[%s179 + $0xd8c] sm:$0xff]
        %v745 = vld [vmem:[%s179 + $0xd94] sm:$0xf]
        %v746 = vld [vmem:[%s179 + $0xd98] sm:$0xff]
        %v747 = vld [vmem:[%s179 + $0xda0] sm:$0xff]
        %v748 = vld [vmem:[%s179 + $0xda8] sm:$0xf]
        %v749 = vld [vmem:[%s179 + $0xdac] sm:$0xff]
        %v750 = vld [vmem:[%s179 + $0xdb4] sm:$0xff]
        %v751 = vld [vmem:[%s179 + $0xdbc] sm:$0xf]
        %v752 = vld [vmem:[%s179 + $0xdc0] sm:$0xff]
        %v753 = vld [vmem:[%s179 + $0xdc8] sm:$0xff]
        %v754 = vld [vmem:[%s179 + $0xdd0] sm:$0xf]
        %v755 = vld [vmem:[%s179 + $0xdd4] sm:$0xff]
        %v756 = vld [vmem:[%s179 + $0xddc] sm:$0xff]
        %v757 = vld [vmem:[%s179 + $0xde4] sm:$0xf]
        %v758 = vld [vmem:[%s179 + $0xde8] sm:$0xff]
        %v759 = vld [vmem:[%s179 + $0xdf0] sm:$0xff]
        %v760 = vld [vmem:[%s179 + $0xdf8] sm:$0xf]
        %v761 = vld [vmem:[%s179 + $0xdfc] sm:$0xff]
        %v762 = vld [vmem:[%s179 + $0xe04] sm:$0xff]
        %v763 = vld [vmem:[%s179 + $0xe0c] sm:$0xf]
        %v764 = vld [vmem:[%s179 + $0xe10] sm:$0xff]
        %v765 = vld [vmem:[%s179 + $0xe18] sm:$0xff]
        %v766 = vld [vmem:[%s179 + $0xe20] sm:$0xf]
        %v767 = vld [vmem:[%s179 + $0xe24] sm:$0xff]
        %v768 = vld [vmem:[%s179 + $0xe2c] sm:$0xff]
        %v769 = vld [vmem:[%s179 + $0xe34] sm:$0xf]
        %v770 = vld [vmem:[%s179 + $0xe38] sm:$0xff]
        %v771 = vld [vmem:[%s179 + $0xe40] sm:$0xff]
        %v772 = vld [vmem:[%s179 + $0xe48] sm:$0xf]
        %v773 = vld [vmem:[%s179 + $0xe4c] sm:$0xff]
        %v774 = vld [vmem:[%s179 + $0xe54] sm:$0xff]
        %v775 = vld [vmem:[%s179 + $0xe5c] sm:$0xf]
        %v776 = vld [vmem:[%s179 + $0xe60] sm:$0xff]
        %v777 = vld [vmem:[%s179 + $0xe68] sm:$0xff]
        %v778 = vld [vmem:[%s179 + $0xe70] sm:$0xf]
        %v779 = vld [vmem:[%s179 + $0xe74] sm:$0xff]
        %v780 = vld [vmem:[%s179 + $0xe7c] sm:$0xff]
        %v781 = vld [vmem:[%s179 + $0xe84] sm:$0xf]
        %v782 = vld [vmem:[%s179 + $0xe88] sm:$0xff]
        %v783 = vld [vmem:[%s179 + $0xe90] sm:$0xff]
        %v784 = vld [vmem:[%s179 + $0xe98] sm:$0xf]
        %v785 = vld [vmem:[%s179 + $0xe9c] sm:$0xff]
        %v786 = vld [vmem:[%s179 + $0xea4] sm:$0xff]
        %v787 = vld [vmem:[%s179 + $0xeac] sm:$0xf]
        %v788 = vld [vmem:[%s179 + $0xeb0] sm:$0xff]
        %v789 = vld [vmem:[%s179 + $0xeb8] sm:$0xff]
        %v790 = vld [vmem:[%s179 + $0xec0] sm:$0xf]
        %v791 = vld [vmem:[%s179 + $0xec4] sm:$0xff]
        %v792 = vld [vmem:[%s179 + $0xecc] sm:$0xff]
        %v793 = vld [vmem:[%s179 + $0xed4] sm:$0xf]
        %v794 = vld [vmem:[%s179 + $0xed8] sm:$0xff]
        %v795 = vld [vmem:[%s179 + $0xee0] sm:$0xff]
        %v796 = vld [vmem:[%s179 + $0xee8] sm:$0xf]
        %v797 = vld [vmem:[%s179 + $0xeec] sm:$0xff]
        %v798 = vld [vmem:[%s179 + $0xef4] sm:$0xff]
        %v799 = vld [vmem:[%s179 + $0xefc] sm:$0xf]
        %v800 = vld [vmem:[%s179 + $0xf00] sm:$0xff]
        %v801 = vld [vmem:[%s179 + $0xf08] sm:$0xff]
        %v802 = vld [vmem:[%s179 + $0xf10] sm:$0xf]
        %v803 = vld [vmem:[%s179 + $0xf14] sm:$0xff]
        %v804 = vld [vmem:[%s179 + $0xf1c] sm:$0xff]
        %v805 = vld [vmem:[%s179 + $0xf24] sm:$0xf]
        %v806 = vld [vmem:[%s179 + $0xf28] sm:$0xff]
        %v807 = vld [vmem:[%s179 + $0xf30] sm:$0xff]
        %v808 = vld [vmem:[%s179 + $0xf38] sm:$0xf]
        %v809 = vld [vmem:[%s179 + $0xf3c] sm:$0xff]
        %v810 = vld [vmem:[%s179 + $0xf44] sm:$0xff]
        %v811 = vld [vmem:[%s179 + $0xf4c] sm:$0xf]
        %v812 = vld [vmem:[%s179 + $0xf50] sm:$0xff]
        %v813 = vld [vmem:[%s179 + $0xf58] sm:$0xff]
        %v814 = vld [vmem:[%s179 + $0xf60] sm:$0xf]
        %v815 = vld [vmem:[%s179 + $0xf64] sm:$0xff]
        %v816 = vld [vmem:[%s179 + $0xf6c] sm:$0xff]
        %v817 = vld [vmem:[%s179 + $0xf74] sm:$0xf]
        %v818 = vld [vmem:[%s179 + $0xf78] sm:$0xff]
        %v819 = vld [vmem:[%s179 + $0xf80] sm:$0xff]
        %v820 = vld [vmem:[%s179 + $0xf88] sm:$0xf]
        %v821 = vld [vmem:[%s179 + $0xf8c] sm:$0xff]
        %v822 = vld [vmem:[%s179 + $0xf94] sm:$0xff]
        %v823 = vld [vmem:[%s179 + $0xf9c] sm:$0xf]
        %v824 = vld [vmem:[%s179 + $0xfa0] sm:$0xff]
        %v825 = vld [vmem:[%s179 + $0xfa8] sm:$0xff]
        %v826 = vld [vmem:[%s179 + $0xfb0] sm:$0xf]
        %v827 = vld [vmem:[%s179 + $0xfb4] sm:$0xff]
        %v828 = vld [vmem:[%s179 + $0xfbc] sm:$0xff]
        %v829 = vld [vmem:[%s179 + $0xfc4] sm:$0xf]
        %v830 = vld [vmem:[%s179 + $0xfc8] sm:$0xff]
        %v831 = vld [vmem:[%s179 + $0xfd0] sm:$0xff]
        %v832 = vld [vmem:[%s179 + $0xfd8] sm:$0xf]
        %v833 = vld [vmem:[%s179 + $0xfdc] sm:$0xff]
        %v834 = vld [vmem:[%s179 + $0xfe4] sm:$0xff]
        %v835 = vld [vmem:[%s179 + $0xfec] sm:$0xf]
        %v836 = vld [vmem:[%s179 + $0xff0] sm:$0xff]
        %v837 = vld [vmem:[%s179 + $0xff8] sm:$0xff]
        %v838 = vld [vmem:[%s179 + $0x1000] sm:$0xf]
        %v839 = vld [vmem:[%s179 + $0x1004] sm:$0xff]
        %v840 = vld [vmem:[%s179 + $0x100c] sm:$0xff]
        %v841 = vld [vmem:[%s179 + $0x1014] sm:$0xf]
        %v842 = vld [vmem:[%s179 + $0x1018] sm:$0xff]
        %v843 = vld [vmem:[%s179 + $0x1020] sm:$0xff]
        %v844 = vld [vmem:[%s179 + $0x1028] sm:$0xf]
        %v845 = vld [vmem:[%s179 + $0x102c] sm:$0xff]
        %v846 = vld [vmem:[%s179 + $0x1034] sm:$0xff]
        %v847 = vld [vmem:[%s179 + $0x103c] sm:$0xf]
        %v848 = vld [vmem:[%s179 + $0x1040] sm:$0xff]
        %v849 = vld [vmem:[%s179 + $0x1048] sm:$0xff]
        %v850 = vld [vmem:[%s179 + $0x1050] sm:$0xf]
        %v851 = vld [vmem:[%s179 + $0x1054] sm:$0xff]
        %v852 = vld [vmem:[%s179 + $0x105c] sm:$0xff]
        %v853 = vld [vmem:[%s179 + $0x1064] sm:$0xf]
        %v854 = vld [vmem:[%s179 + $0x1068] sm:$0xff]
        %v855 = vld [vmem:[%s179 + $0x1070] sm:$0xff]
        %v856 = vld [vmem:[%s179 + $0x1078] sm:$0xf]
        %v857 = vld [vmem:[%s179 + $0x107c] sm:$0xff]
        %v858 = vld [vmem:[%s179 + $0x1084] sm:$0xff]
        %v859 = vld [vmem:[%s179 + $0x108c] sm:$0xf]
        %v860 = vld [vmem:[%s179 + $0x1090] sm:$0xff]
        %v861 = vld [vmem:[%s179 + $0x1098] sm:$0xff]
        %v862 = vld [vmem:[%s179 + $0x10a0] sm:$0xf]
        %v863 = vld [vmem:[%s179 + $0x10a4] sm:$0xff]
        %v864 = vld [vmem:[%s179 + $0x10ac] sm:$0xff]
        %v865 = vld [vmem:[%s179 + $0x10b4] sm:$0xf]
        %v866 = vld [vmem:[%s179 + $0x10b8] sm:$0xff]
        %v867 = vld [vmem:[%s179 + $0x10c0] sm:$0xff]
        %v868 = vld [vmem:[%s179 + $0x10c8] sm:$0xf]
        %v869 = vld [vmem:[%s179 + $0x10cc] sm:$0xff]
        %v870 = vld [vmem:[%s179 + $0x10d4] sm:$0xff]
        %v871 = vld [vmem:[%s179 + $0x10dc] sm:$0xf]
        %v872 = vld [vmem:[%s179 + $0x10e0] sm:$0xff]
        %v873 = vld [vmem:[%s179 + $0x10e8] sm:$0xff]
        %v874 = vld [vmem:[%s179 + $0x10f0] sm:$0xf]
        %v875 = vld [vmem:[%s179 + $0x10f4] sm:$0xff]
        %v876 = vld [vmem:[%s179 + $0x10fc] sm:$0xff]
        %v877 = vld [vmem:[%s179 + $0x1104] sm:$0xf]
        %v878 = vld [vmem:[%s179 + $0x1108] sm:$0xff]
        %v879 = vld [vmem:[%s179 + $0x1110] sm:$0xff]
        %v880 = vld [vmem:[%s179 + $0x1118] sm:$0xf]
        %v881 = vld [vmem:[%s179 + $0x111c] sm:$0xff]
        %v882 = vld [vmem:[%s179 + $0x1124] sm:$0xff]
        %v883 = vld [vmem:[%s179 + $0x112c] sm:$0xf]
        %v884 = vld [vmem:[%s179 + $0x1130] sm:$0xff]
        %v885 = vld [vmem:[%s179 + $0x1138] sm:$0xff]
        %v886 = vld [vmem:[%s179 + $0x1140] sm:$0xf]
        %v887 = vld [vmem:[%s179 + $0x1144] sm:$0xff]
        %v888 = vld [vmem:[%s179 + $0x114c] sm:$0xff]
        %v889 = vld [vmem:[%s179 + $0x1154] sm:$0xf]
        %v890 = vld [vmem:[%s179 + $0x1158] sm:$0xff]
        %v891 = vld [vmem:[%s179 + $0x1160] sm:$0xff]
        %v892 = vld [vmem:[%s179 + $0x1168] sm:$0xf]
        %v893 = vld [vmem:[%s179 + $0x116c] sm:$0xff]
        %v894 = vld [vmem:[%s179 + $0x1174] sm:$0xff]
        %v895 = vld [vmem:[%s179 + $0x117c] sm:$0xf]
        %v896 = vld [vmem:[%s179 + $0x1180] sm:$0xff]
        %v897 = vld [vmem:[%s179 + $0x1188] sm:$0xff]
        %v898 = vld [vmem:[%s179 + $0x1190] sm:$0xf]
        %v899 = vld [vmem:[%s179 + $0x1194] sm:$0xff]
        %v900 = vld [vmem:[%s179 + $0x119c] sm:$0xff]
        %v901 = vld [vmem:[%s179 + $0x11a4] sm:$0xf]
        %v902 = vld [vmem:[%s179 + $0x11a8] sm:$0xff]
        %v903 = vld [vmem:[%s179 + $0x11b0] sm:$0xff]
        %v904 = vld [vmem:[%s179 + $0x11b8] sm:$0xf]
        %v905 = vld [vmem:[%s179 + $0x11bc] sm:$0xff]
        %v906 = vld [vmem:[%s179 + $0x11c4] sm:$0xff]
        %v907 = vld [vmem:[%s179 + $0x11cc] sm:$0xf]
        %v908 = vld [vmem:[%s179 + $0x11d0] sm:$0xff]
        %v909 = vld [vmem:[%s179 + $0x11d8] sm:$0xff]
        %v910 = vld [vmem:[%s179 + $0x11e0] sm:$0xf]
        %v911 = vld [vmem:[%s179 + $0x11e4] sm:$0xff]
        %v912 = vld [vmem:[%s179 + $0x11ec] sm:$0xff]
        %v913 = vld [vmem:[%s179 + $0x11f4] sm:$0xf]
        %v914 = vld [vmem:[%s179 + $0x11f8] sm:$0xff]
        %v915 = vld [vmem:[%s179 + $0x1200] sm:$0xff]
        %v916 = vld [vmem:[%s179 + $0x1208] sm:$0xf]
        %v917 = vld [vmem:[%s179 + $0x120c] sm:$0xff]
        %v918 = vld [vmem:[%s179 + $0x1214] sm:$0xff]
        %v919 = vld [vmem:[%s179 + $0x121c] sm:$0xf]
        %v920 = vld [vmem:[%s179 + $0x1220] sm:$0xff]
        %v921 = vld [vmem:[%s179 + $0x1228] sm:$0xff]
        %v922 = vld [vmem:[%s179 + $0x1230] sm:$0xf]
        %v923 = vld [vmem:[%s179 + $0x1234] sm:$0xff]
        %v924 = vld [vmem:[%s179 + $0x123c] sm:$0xff]
        %v925 = vld [vmem:[%s179 + $0x1244] sm:$0xf]
        %v926 = vld [vmem:[%s179 + $0x1248] sm:$0xff]
        %v927 = vld [vmem:[%s179 + $0x1250] sm:$0xff]
        %v928 = vld [vmem:[%s179 + $0x1258] sm:$0xf]
        %v929 = vld [vmem:[%s179 + $0x125c] sm:$0xff]
        %v930 = vld [vmem:[%s179 + $0x1264] sm:$0xff]
        %v931 = vld [vmem:[%s179 + $0x126c] sm:$0xf]
        %v932 = vld [vmem:[%s179 + $0x1270] sm:$0xff]
        %v933 = vld [vmem:[%s179 + $0x1278] sm:$0xff]
        %v934 = vld [vmem:[%s179 + $0x1280] sm:$0xf]
        %v935 = vld [vmem:[%s179 + $0x1284] sm:$0xff]
        %v936 = vld [vmem:[%s179 + $0x128c] sm:$0xff]
        %v937 = vld [vmem:[%s179 + $0x1294] sm:$0xf]
        %v938 = vld [vmem:[%s179 + $0x1298] sm:$0xff]
        %v939 = vld [vmem:[%s179 + $0x12a0] sm:$0xff]
        %v940 = vld [vmem:[%s179 + $0x12a8] sm:$0xf]
        %v941 = vld [vmem:[%s179 + $0x12ac] sm:$0xff]
        %v942 = vld [vmem:[%s179 + $0x12b4] sm:$0xff]
        %v943 = vld [vmem:[%s179 + $0x12bc] sm:$0xf]
        %v944 = vld [vmem:[%s179 + $0x12c0] sm:$0xff]
        %v945 = vld [vmem:[%s179 + $0x12c8] sm:$0xff]
        %v946 = vld [vmem:[%s179 + $0x12d0] sm:$0xf]
        %v947 = vld [vmem:[%s179 + $0x12d4] sm:$0xff]
        %v948 = vld [vmem:[%s179 + $0x12dc] sm:$0xff]
        %v949 = vld [vmem:[%s179 + $0x12e4] sm:$0xf]
        %v950 = vld [vmem:[%s179 + $0x12e8] sm:$0xff]
        %v951 = vld [vmem:[%s179 + $0x12f0] sm:$0xff]
        %v952 = vld [vmem:[%s179 + $0x12f8] sm:$0xf]
        %v953 = vld [vmem:[%s179 + $0x12fc] sm:$0xff]
        %v954 = vld [vmem:[%s179 + $0x1304] sm:$0xff]
        %v955 = vld [vmem:[%s179 + $0x130c] sm:$0xf]
        %v956 = vld [vmem:[%s179 + $0x1310] sm:$0xff]
        %v957 = vld [vmem:[%s179 + $0x1318] sm:$0xff]
        %v958 = vld [vmem:[%s179 + $0x1320] sm:$0xf]
        %v959 = vld [vmem:[%s179 + $0x1324] sm:$0xff]
        %v960 = vld [vmem:[%s179 + $0x132c] sm:$0xff]
        %v961 = vld [vmem:[%s179 + $0x1334] sm:$0xf]
        %v962 = vld [vmem:[%s179 + $0x1338] sm:$0xff]
        %v963 = vld [vmem:[%s179 + $0x1340] sm:$0xff]
        %v964 = vld [vmem:[%s179 + $0x1348] sm:$0xf]
        %v965 = vld [vmem:[%s179 + $0x134c] sm:$0xff]
        %v966 = vld [vmem:[%s179 + $0x1354] sm:$0xff]
        %v967 = vld [vmem:[%s179 + $0x135c] sm:$0xf]
        %v968 = vld [vmem:[%s179 + $0x1360] sm:$0xff]
        %v969 = vld [vmem:[%s179 + $0x1368] sm:$0xff]
        %v970 = vld [vmem:[%s179 + $0x1370] sm:$0xf]
        %v971 = vld [vmem:[%s179 + $0x1374] sm:$0xff]
        %v972 = vld [vmem:[%s179 + $0x137c] sm:$0xff]
        %v973 = vld [vmem:[%s179 + $0x1384] sm:$0xf]
        %v974 = vld [vmem:[%s179 + $0x1388] sm:$0xff]
        %v975 = vld [vmem:[%s179 + $0x1390] sm:$0xff]
        %v976 = vld [vmem:[%s179 + $0x1398] sm:$0xf]
        %v977 = vld [vmem:[%s179 + $0x139c] sm:$0xff]
        %v978 = vld [vmem:[%s179 + $0x13a4] sm:$0xff]
        %v979 = vld [vmem:[%s179 + $0x13ac] sm:$0xf]
        %v980 = vld [vmem:[%s179 + $0x13b0] sm:$0xff]
        %v981 = vld [vmem:[%s179 + $0x13b8] sm:$0xff]
        %v982 = vld [vmem:[%s179 + $0x13c0] sm:$0xf]
        %v983 = vld [vmem:[%s179 + $0x13c4] sm:$0xff]
        %v984 = vld [vmem:[%s179 + $0x13cc] sm:$0xff]
        %v985 = vld [vmem:[%s179 + $0x13d4] sm:$0xf]
        %v986 = vld [vmem:[%s179 + $0x13d8] sm:$0xff]
        %v987 = vld [vmem:[%s179 + $0x13e0] sm:$0xff]
        %v988 = vld [vmem:[%s179 + $0x13e8] sm:$0xf]
        %v989 = vld [vmem:[%s179 + $0x13ec] sm:$0xff]
        %v990 = vld [vmem:[%s179 + $0x13f4] sm:$0xff]
        %v991 = vld [vmem:[%s179 + $0x13fc] sm:$0xf]
        %v992 = vld [vmem:[%s218] sm:$0xff]
        %v993 = vld [vmem:[%s218 + $0x8] sm:$0xff]
        %v994 = vld [vmem:[%s218 + $0x10] sm:$0xff]
        %v995 = vld [vmem:[%s218 + $0x18] sm:$0xff]
        %v996 = vld [vmem:[%s218 + $0x20] sm:$0xff]
        %v997 = vld [vmem:[%s218 + $0x28] sm:$0xff]
        %v998 = vld [vmem:[%s218 + $0x30] sm:$0xff]
        %v999 = vld [vmem:[%s218 + $0x38] sm:$0xff]
        %v1000 = vld [vmem:[%s218 + $0x40] sm:$0xff]
        %v1001 = vld [vmem:[%s218 + $0x48] sm:$0xff]
        %v1002 = vld [vmem:[%s218 + $0x50] sm:$0xff]
        %v1003 = vld [vmem:[%s218 + $0x58] sm:$0xff]
        %v1004 = vld [vmem:[%s218 + $0x60] sm:$0xff]
        %v1005 = vld [vmem:[%s218 + $0x68] sm:$0xff]
        %v1006 = vld [vmem:[%s218 + $0x70] sm:$0xff]
        %v1007 = vld [vmem:[%s218 + $0x78] sm:$0xff]
        %v1008 = vld [vmem:[%s218 + $0x80] sm:$0xff]
        %v1009 = vld [vmem:[%s218 + $0x88] sm:$0xff]
        %v1010 = vld [vmem:[%s218 + $0x90] sm:$0xff]
        %v1011 = vld [vmem:[%s218 + $0x98] sm:$0xff]
        %v1012 = vld [vmem:[%s218 + $0xa0] sm:$0xff]
        %v1013 = vld [vmem:[%s218 + $0xa8] sm:$0xff]
        %v1014 = vld [vmem:[%s218 + $0xb0] sm:$0xff]
        %v1015 = vld [vmem:[%s218 + $0xb8] sm:$0xff]
        %v1016 = vld [vmem:[%s218 + $0xc0] sm:$0xff]
        %v1017 = vld [vmem:[%s218 + $0xc8] sm:$0xff]
        %v1018 = vld [vmem:[%s218 + $0xd0] sm:$0xff]
        %v1019 = vld [vmem:[%s218 + $0xd8] sm:$0xff]
        %v1020 = vld [vmem:[%s218 + $0xe0] sm:$0xff]
        %v1021 = vld [vmem:[%s218 + $0xe8] sm:$0xff]
        %v1022 = vld [vmem:[%s218 + $0xf0] sm:$0xff]
        %v1023 = vld [vmem:[%s218 + $0xf8] sm:$0xff]
        %v1056 = vunpack.c.l.b16 %v992
        %v1057 = vunpack.c.h.b16 %v992
        %v1058 = vunpack.c.l.b16 %v993
        %v1059 = vunpack.c.h.b16 %v993
        %v1060 = vunpack.c.l.b16 %v994
        %v1061 = vunpack.c.h.b16 %v994
        %v1062 = vunpack.c.l.b16 %v995
        %v1063 = vunpack.c.h.b16 %v995
        %v1064 = vunpack.c.l.b16 %v996
        %v1065 = vunpack.c.h.b16 %v996
        %v1066 = vunpack.c.l.b16 %v997
        %v1067 = vunpack.c.h.b16 %v997
        %v1068 = vunpack.c.l.b16 %v998
        %v1069 = vunpack.c.h.b16 %v998
        %v1070 = vunpack.c.l.b16 %v999
        %v1071 = vunpack.c.h.b16 %v999
        %v1072 = vunpack.c.l.b16 %v1000
        %v1073 = vunpack.c.h.b16 %v1000
        %v1074 = vunpack.c.l.b16 %v1001
        %v1075 = vunpack.c.h.b16 %v1001
        %v1076 = vunpack.c.l.b16 %v1002
        %v1077 = vunpack.c.h.b16 %v1002
        %v1078 = vunpack.c.l.b16 %v1003
        %v1079 = vunpack.c.h.b16 %v1003
        %v1080 = vunpack.c.l.b16 %v1004
        %v1081 = vunpack.c.h.b16 %v1004
        %v1082 = vunpack.c.l.b16 %v1005
        %v1083 = vunpack.c.h.b16 %v1005
        %v1084 = vunpack.c.l.b16 %v1006
        %v1085 = vunpack.c.h.b16 %v1006
        %v1086 = vunpack.c.l.b16 %v1007
        %v1087 = vunpack.c.h.b16 %v1007
        %v1088 = vunpack.c.l.b16 %v1008
        %v1089 = vunpack.c.h.b16 %v1008
        %v1090 = vunpack.c.l.b16 %v1009
        %v1091 = vunpack.c.h.b16 %v1009
        %v1092 = vunpack.c.l.b16 %v1010
        %v1093 = vunpack.c.h.b16 %v1010
        %v1094 = vunpack.c.l.b16 %v1011
        %v1095 = vunpack.c.h.b16 %v1011
        %v1096 = vunpack.c.l.b16 %v1012
        %v1097 = vunpack.c.h.b16 %v1012
        %v1098 = vunpack.c.l.b16 %v1013
        %v1099 = vunpack.c.h.b16 %v1013
        %v1100 = vunpack.c.l.b16 %v1014
        %v1101 = vunpack.c.h.b16 %v1014
        %v1102 = vunpack.c.l.b16 %v1015
        %v1103 = vunpack.c.h.b16 %v1015
        %v1104 = vunpack.c.l.b16 %v1016
        %v1105 = vunpack.c.h.b16 %v1016
        %v1106 = vunpack.c.l.b16 %v1017
        %v1107 = vunpack.c.h.b16 %v1017
        %v1108 = vunpack.c.l.b16 %v1018
        %v1109 = vunpack.c.h.b16 %v1018
        %v1110 = vunpack.c.l.b16 %v1019
        %v1111 = vunpack.c.h.b16 %v1019
        %v1112 = vunpack.c.l.b16 %v1020
        %v1113 = vunpack.c.h.b16 %v1020
        %v1114 = vunpack.c.l.b16 %v1021
        %v1115 = vunpack.c.h.b16 %v1021
        %v1116 = vunpack.c.l.b16 %v1022
        %v1117 = vunpack.c.h.b16 %v1022
        %v1118 = vunpack.c.l.b16 %v1023
        %v1119 = vunpack.c.h.b16 %v1023
        %v1120 = vpack.c.b16 %v1072, %v1056
        %v1121 = vpack.c.b16 %v1073, %v1057
        %v1122 = vpack.c.b16 %v1074, %v1058
        %v1123 = vpack.c.b16 %v1075, %v1059
        %v1124 = vpack.c.b16 %v1076, %v1060
        %v1125 = vpack.c.b16 %v1077, %v1061
        %v1126 = vpack.c.b16 %v1078, %v1062
        %v1127 = vpack.c.b16 %v1079, %v1063
        %v1128 = vpack.c.b16 %v1080, %v1064
        %v1129 = vpack.c.b16 %v1081, %v1065
        %v1130 = vpack.c.b16 %v1082, %v1066
        %v1131 = vpack.c.b16 %v1083, %v1067
        %v1132 = vpack.c.b16 %v1084, %v1068
        %v1133 = vpack.c.b16 %v1085, %v1069
        %v1134 = vpack.c.b16 %v1086, %v1070
        %v1135 = vpack.c.b16 %v1087, %v1071
        %v1136 = vpack.c.b16 %v1104, %v1088
        %v1137 = vpack.c.b16 %v1105, %v1089
        %v1138 = vpack.c.b16 %v1106, %v1090
        %v1139 = vpack.c.b16 %v1107, %v1091
        %v1140 = vpack.c.b16 %v1108, %v1092
        %v1141 = vpack.c.b16 %v1109, %v1093
        %v1142 = vpack.c.b16 %v1110, %v1094
        %v1143 = vpack.c.b16 %v1111, %v1095
        %v1144 = vpack.c.b16 %v1112, %v1096
        %v1145 = vpack.c.b16 %v1113, %v1097
        %v1146 = vpack.c.b16 %v1114, %v1098
        %v1147 = vpack.c.b16 %v1115, %v1099
        %v1148 = vpack.c.b16 %v1116, %v1100
        %v1149 = vpack.c.b16 %v1117, %v1101
        %v1150 = vpack.c.b16 %v1118, %v1102
        %v1151 = vpack.c.b16 %v1119, %v1103
        %v1952 = vunpack.c.l.b16 %v224
        %v1953 = vunpack.c.h.b16 %v224
        %v1954 = vunpack.c.l.b16 %v225
        %v1955 = vunpack.c.h.b16 %v225
        %v1956 = vunpack.c.l.b16 %v226
        %v1957 = vunpack.c.l.b16 %v227
        %v1958 = vunpack.c.h.b16 %v227
        %v1959 = vunpack.c.l.b16 %v228
        %v1960 = vunpack.c.h.b16 %v228
        %v1961 = vunpack.c.l.b16 %v229
        %v1962 = vunpack.c.l.b16 %v230
        %v1963 = vunpack.c.h.b16 %v230
        %v1964 = vunpack.c.l.b16 %v231
        %v1965 = vunpack.c.h.b16 %v231
        %v1966 = vunpack.c.l.b16 %v232
        %v1967 = vunpack.c.l.b16 %v233
        %v1968 = vunpack.c.h.b16 %v233
        %v1969 = vunpack.c.l.b16 %v234
        %v1970 = vunpack.c.h.b16 %v234
        %v1971 = vunpack.c.l.b16 %v235
        %v1972 = vunpack.c.l.b16 %v236
        %v1973 = vunpack.c.h.b16 %v236
        %v1974 = vunpack.c.l.b16 %v237
        %v1975 = vunpack.c.h.b16 %v237
        %v1976 = vunpack.c.l.b16 %v238
        %v1977 = vunpack.c.l.b16 %v239
        %v1978 = vunpack.c.h.b16 %v239
        %v1979 = vunpack.c.l.b16 %v240
        %v1980 = vunpack.c.h.b16 %v240
        %v1981 = vunpack.c.l.b16 %v241
        %v1982 = vunpack.c.l.b16 %v242
        %v1983 = vunpack.c.h.b16 %v242
        %v1984 = vunpack.c.l.b16 %v243
        %v1985 = vunpack.c.h.b16 %v243
        %v1986 = vunpack.c.l.b16 %v244
        %v1987 = vunpack.c.l.b16 %v245
        %v1988 = vunpack.c.h.b16 %v245
        %v1989 = vunpack.c.l.b16 %v246
        %v1990 = vunpack.c.h.b16 %v246
        %v1991 = vunpack.c.l.b16 %v247
        %v1992 = vunpack.c.l.b16 %v248
        %v1993 = vunpack.c.h.b16 %v248
        %v1994 = vunpack.c.l.b16 %v249
        %v1995 = vunpack.c.h.b16 %v249
        %v1996 = vunpack.c.l.b16 %v250
        %v1997 = vunpack.c.l.b16 %v251
        %v1998 = vunpack.c.h.b16 %v251
        %v1999 = vunpack.c.l.b16 %v252
        %v2000 = vunpack.c.h.b16 %v252
        %v2001 = vunpack.c.l.b16 %v253
        %v2002 = vunpack.c.l.b16 %v254
        %v2003 = vunpack.c.h.b16 %v254
        %v2004 = vunpack.c.l.b16 %v255
        %v2005 = vunpack.c.h.b16 %v255
        %v2006 = vunpack.c.l.b16 %v256
        %v2007 = vunpack.c.l.b16 %v257
        %v2008 = vunpack.c.h.b16 %v257
        %v2009 = vunpack.c.l.b16 %v258
        %v2010 = vunpack.c.h.b16 %v258
        %v2011 = vunpack.c.l.b16 %v259
        %v2012 = vunpack.c.l.b16 %v260
        %v2013 = vunpack.c.h.b16 %v260
        %v2014 = vunpack.c.l.b16 %v261
        %v2015 = vunpack.c.h.b16 %v261
        %v2016 = vunpack.c.l.b16 %v262
        %v2017 = vunpack.c.l.b16 %v263
        %v2018 = vunpack.c.h.b16 %v263
        %v2019 = vunpack.c.l.b16 %v264
        %v2020 = vunpack.c.h.b16 %v264
        %v2021 = vunpack.c.l.b16 %v265
        %v2022 = vunpack.c.l.b16 %v266
        %v2023 = vunpack.c.h.b16 %v266
        %v2024 = vunpack.c.l.b16 %v267
        %v2025 = vunpack.c.h.b16 %v267
        %v2026 = vunpack.c.l.b16 %v268
        %v2027 = vunpack.c.l.b16 %v269
        %v2028 = vunpack.c.h.b16 %v269
        %v2029 = vunpack.c.l.b16 %v270
        %v2030 = vunpack.c.h.b16 %v270
        %v2031 = vunpack.c.l.b16 %v271
        %v2032 = vunpack.c.l.b16 %v272
        %v2033 = vunpack.c.h.b16 %v272
        %v2034 = vunpack.c.l.b16 %v273
        %v2035 = vunpack.c.h.b16 %v273
        %v2036 = vunpack.c.l.b16 %v274
        %v2037 = vunpack.c.l.b16 %v275
        %v2038 = vunpack.c.h.b16 %v275
        %v2039 = vunpack.c.l.b16 %v276
        %v2040 = vunpack.c.h.b16 %v276
        %v2041 = vunpack.c.l.b16 %v277
        %v2042 = vunpack.c.l.b16 %v278
        %v2043 = vunpack.c.h.b16 %v278
        %v2044 = vunpack.c.l.b16 %v279
        %v2045 = vunpack.c.h.b16 %v279
        %v2046 = vunpack.c.l.b16 %v280
        %v2047 = vunpack.c.l.b16 %v281
        %v2048 = vunpack.c.h.b16 %v281
        %v2049 = vunpack.c.l.b16 %v282
        %v2050 = vunpack.c.h.b16 %v282
        %v2051 = vunpack.c.l.b16 %v283
        %v2052 = vunpack.c.l.b16 %v284
        %v2053 = vunpack.c.h.b16 %v284
        %v2054 = vunpack.c.l.b16 %v285
        %v2055 = vunpack.c.h.b16 %v285
        %v2056 = vunpack.c.l.b16 %v286
        %v2057 = vunpack.c.l.b16 %v287
        %v2058 = vunpack.c.h.b16 %v287
        %v2059 = vunpack.c.l.b16 %v288
        %v2060 = vunpack.c.h.b16 %v288
        %v2061 = vunpack.c.l.b16 %v289
        %v2062 = vunpack.c.l.b16 %v290
        %v2063 = vunpack.c.h.b16 %v290
        %v2064 = vunpack.c.l.b16 %v291
        %v2065 = vunpack.c.h.b16 %v291
        %v2066 = vunpack.c.l.b16 %v292
        %v2067 = vunpack.c.l.b16 %v293
        %v2068 = vunpack.c.h.b16 %v293
        %v2069 = vunpack.c.l.b16 %v294
        %v2070 = vunpack.c.h.b16 %v294
        %v2071 = vunpack.c.l.b16 %v295
        %v2072 = vunpack.c.l.b16 %v296
        %v2073 = vunpack.c.h.b16 %v296
        %v2074 = vunpack.c.l.b16 %v297
        %v2075 = vunpack.c.h.b16 %v297
        %v2076 = vunpack.c.l.b16 %v298
        %v2077 = vunpack.c.l.b16 %v299
        %v2078 = vunpack.c.h.b16 %v299
        %v2079 = vunpack.c.l.b16 %v300
        %v2080 = vunpack.c.h.b16 %v300
        %v2081 = vunpack.c.l.b16 %v301
        %v2082 = vunpack.c.l.b16 %v302
        %v2083 = vunpack.c.h.b16 %v302
        %v2084 = vunpack.c.l.b16 %v303
        %v2085 = vunpack.c.h.b16 %v303
        %v2086 = vunpack.c.l.b16 %v304
        %v2087 = vunpack.c.l.b16 %v305
        %v2088 = vunpack.c.h.b16 %v305
        %v2089 = vunpack.c.l.b16 %v306
        %v2090 = vunpack.c.h.b16 %v306
        %v2091 = vunpack.c.l.b16 %v307
        %v2092 = vunpack.c.l.b16 %v308
        %v2093 = vunpack.c.h.b16 %v308
        %v2094 = vunpack.c.l.b16 %v309
        %v2095 = vunpack.c.h.b16 %v309
        %v2096 = vunpack.c.l.b16 %v310
        %v2097 = vunpack.c.l.b16 %v311
        %v2098 = vunpack.c.h.b16 %v311
        %v2099 = vunpack.c.l.b16 %v312
        %v2100 = vunpack.c.h.b16 %v312
        %v2101 = vunpack.c.l.b16 %v313
        %v2102 = vunpack.c.l.b16 %v314
        %v2103 = vunpack.c.h.b16 %v314
        %v2104 = vunpack.c.l.b16 %v315
        %v2105 = vunpack.c.h.b16 %v315
        %v2106 = vunpack.c.l.b16 %v316
        %v2107 = vunpack.c.l.b16 %v317
        %v2108 = vunpack.c.h.b16 %v317
        %v2109 = vunpack.c.l.b16 %v318
        %v2110 = vunpack.c.h.b16 %v318
        %v2111 = vunpack.c.l.b16 %v319
        %v2112 = vunpack.c.l.b16 %v320
        %v2113 = vunpack.c.h.b16 %v320
        %v2114 = vunpack.c.l.b16 %v321
        %v2115 = vunpack.c.h.b16 %v321
        %v2116 = vunpack.c.l.b16 %v322
        %v2117 = vunpack.c.l.b16 %v323
        %v2118 = vunpack.c.h.b16 %v323
        %v2119 = vunpack.c.l.b16 %v324
        %v2120 = vunpack.c.h.b16 %v324
        %v2121 = vunpack.c.l.b16 %v325
        %v2122 = vunpack.c.l.b16 %v326
        %v2123 = vunpack.c.h.b16 %v326
        %v2124 = vunpack.c.l.b16 %v327
        %v2125 = vunpack.c.h.b16 %v327
        %v2126 = vunpack.c.l.b16 %v328
        %v2127 = vunpack.c.l.b16 %v329
        %v2128 = vunpack.c.h.b16 %v329
        %v2129 = vunpack.c.l.b16 %v330
        %v2130 = vunpack.c.h.b16 %v330
        %v2131 = vunpack.c.l.b16 %v331
        %v2132 = vunpack.c.l.b16 %v332
        %v2133 = vunpack.c.h.b16 %v332
        %v2134 = vunpack.c.l.b16 %v333
        %v2135 = vunpack.c.h.b16 %v333
        %v2136 = vunpack.c.l.b16 %v334
        %v2137 = vunpack.c.l.b16 %v335
        %v2138 = vunpack.c.h.b16 %v335
        %v2139 = vunpack.c.l.b16 %v336
        %v2140 = vunpack.c.h.b16 %v336
        %v2141 = vunpack.c.l.b16 %v337
        %v2142 = vunpack.c.l.b16 %v338
        %v2143 = vunpack.c.h.b16 %v338
        %v2144 = vunpack.c.l.b16 %v339
        %v2145 = vunpack.c.h.b16 %v339
        %v2146 = vunpack.c.l.b16 %v340
        %v2147 = vunpack.c.l.b16 %v341
        %v2148 = vunpack.c.h.b16 %v341
        %v2149 = vunpack.c.l.b16 %v342
        %v2150 = vunpack.c.h.b16 %v342
        %v2151 = vunpack.c.l.b16 %v343
        %v2152 = vunpack.c.l.b16 %v344
        %v2153 = vunpack.c.h.b16 %v344
        %v2154 = vunpack.c.l.b16 %v345
        %v2155 = vunpack.c.h.b16 %v345
        %v2156 = vunpack.c.l.b16 %v346
        %v2157 = vunpack.c.l.b16 %v347
        %v2158 = vunpack.c.h.b16 %v347
        %v2159 = vunpack.c.l.b16 %v348
        %v2160 = vunpack.c.h.b16 %v348
        %v2161 = vunpack.c.l.b16 %v349
        %v2162 = vunpack.c.l.b16 %v350
        %v2163 = vunpack.c.h.b16 %v350
        %v2164 = vunpack.c.l.b16 %v351
        %v2165 = vunpack.c.h.b16 %v351
        %v2166 = vunpack.c.l.b16 %v352
        %v2167 = vunpack.c.l.b16 %v353
        %v2168 = vunpack.c.h.b16 %v353
        %v2169 = vunpack.c.l.b16 %v354
        %v2170 = vunpack.c.h.b16 %v354
        %v2171 = vunpack.c.l.b16 %v355
        %v2172 = vunpack.c.l.b16 %v356
        %v2173 = vunpack.c.h.b16 %v356
        %v2174 = vunpack.c.l.b16 %v357
        %v2175 = vunpack.c.h.b16 %v357
        %v2176 = vunpack.c.l.b16 %v358
        %v2177 = vunpack.c.l.b16 %v359
        %v2178 = vunpack.c.h.b16 %v359
        %v2179 = vunpack.c.l.b16 %v360
        %v2180 = vunpack.c.h.b16 %v360
        %v2181 = vunpack.c.l.b16 %v361
        %v2182 = vunpack.c.l.b16 %v362
        %v2183 = vunpack.c.h.b16 %v362
        %v2184 = vunpack.c.l.b16 %v363
        %v2185 = vunpack.c.h.b16 %v363
        %v2186 = vunpack.c.l.b16 %v364
        %v2187 = vunpack.c.l.b16 %v365
        %v2188 = vunpack.c.h.b16 %v365
        %v2189 = vunpack.c.l.b16 %v366
        %v2190 = vunpack.c.h.b16 %v366
        %v2191 = vunpack.c.l.b16 %v367
        %v2192 = vunpack.c.l.b16 %v368
        %v2193 = vunpack.c.h.b16 %v368
        %v2194 = vunpack.c.l.b16 %v369
        %v2195 = vunpack.c.h.b16 %v369
        %v2196 = vunpack.c.l.b16 %v370
        %v2197 = vunpack.c.l.b16 %v371
        %v2198 = vunpack.c.h.b16 %v371
        %v2199 = vunpack.c.l.b16 %v372
        %v2200 = vunpack.c.h.b16 %v372
        %v2201 = vunpack.c.l.b16 %v373
        %v2202 = vunpack.c.l.b16 %v374
        %v2203 = vunpack.c.h.b16 %v374
        %v2204 = vunpack.c.l.b16 %v375
        %v2205 = vunpack.c.h.b16 %v375
        %v2206 = vunpack.c.l.b16 %v376
        %v2207 = vunpack.c.l.b16 %v377
        %v2208 = vunpack.c.h.b16 %v377
        %v2209 = vunpack.c.l.b16 %v378
        %v2210 = vunpack.c.h.b16 %v378
        %v2211 = vunpack.c.l.b16 %v379
        %v2212 = vunpack.c.l.b16 %v380
        %v2213 = vunpack.c.h.b16 %v380
        %v2214 = vunpack.c.l.b16 %v381
        %v2215 = vunpack.c.h.b16 %v381
        %v2216 = vunpack.c.l.b16 %v382
        %v2217 = vunpack.c.l.b16 %v383
        %v2218 = vunpack.c.h.b16 %v383
        %v2219 = vunpack.c.l.b16 %v384
        %v2220 = vunpack.c.h.b16 %v384
        %v2221 = vunpack.c.l.b16 %v385
        %v2222 = vunpack.c.l.b16 %v386
        %v2223 = vunpack.c.h.b16 %v386
        %v2224 = vunpack.c.l.b16 %v387
        %v2225 = vunpack.c.h.b16 %v387
        %v2226 = vunpack.c.l.b16 %v388
        %v2227 = vunpack.c.l.b16 %v389
        %v2228 = vunpack.c.h.b16 %v389
        %v2229 = vunpack.c.l.b16 %v390
        %v2230 = vunpack.c.h.b16 %v390
        %v2231 = vunpack.c.l.b16 %v391
        %v2232 = vunpack.c.l.b16 %v392
        %v2233 = vunpack.c.h.b16 %v392
        %v2234 = vunpack.c.l.b16 %v393
        %v2235 = vunpack.c.h.b16 %v393
        %v2236 = vunpack.c.l.b16 %v394
        %v2237 = vunpack.c.l.b16 %v395
        %v2238 = vunpack.c.h.b16 %v395
        %v2239 = vunpack.c.l.b16 %v396
        %v2240 = vunpack.c.h.b16 %v396
        %v2241 = vunpack.c.l.b16 %v397
        %v2242 = vunpack.c.l.b16 %v398
        %v2243 = vunpack.c.h.b16 %v398
        %v2244 = vunpack.c.l.b16 %v399
        %v2245 = vunpack.c.h.b16 %v399
        %v2246 = vunpack.c.l.b16 %v400
        %v2247 = vunpack.c.l.b16 %v401
        %v2248 = vunpack.c.h.b16 %v401
        %v2249 = vunpack.c.l.b16 %v402
        %v2250 = vunpack.c.h.b16 %v402
        %v2251 = vunpack.c.l.b16 %v403
        %v2252 = vunpack.c.l.b16 %v404
        %v2253 = vunpack.c.h.b16 %v404
        %v2254 = vunpack.c.l.b16 %v405
        %v2255 = vunpack.c.h.b16 %v405
        %v2256 = vunpack.c.l.b16 %v406
        %v2257 = vunpack.c.l.b16 %v407
        %v2258 = vunpack.c.h.b16 %v407
        %v2259 = vunpack.c.l.b16 %v408
        %v2260 = vunpack.c.h.b16 %v408
        %v2261 = vunpack.c.l.b16 %v409
        %v2262 = vunpack.c.l.b16 %v410
        %v2263 = vunpack.c.h.b16 %v410
        %v2264 = vunpack.c.l.b16 %v411
        %v2265 = vunpack.c.h.b16 %v411
        %v2266 = vunpack.c.l.b16 %v412
        %v2267 = vunpack.c.l.b16 %v413
        %v2268 = vunpack.c.h.b16 %v413
        %v2269 = vunpack.c.l.b16 %v414
        %v2270 = vunpack.c.h.b16 %v414
        %v2271 = vunpack.c.l.b16 %v415
        %v2272 = vunpack.c.l.b16 %v416
        %v2273 = vunpack.c.h.b16 %v416
        %v2274 = vunpack.c.l.b16 %v417
        %v2275 = vunpack.c.h.b16 %v417
        %v2276 = vunpack.c.l.b16 %v418
        %v2277 = vunpack.c.l.b16 %v419
        %v2278 = vunpack.c.h.b16 %v419
        %v2279 = vunpack.c.l.b16 %v420
        %v2280 = vunpack.c.h.b16 %v420
        %v2281 = vunpack.c.l.b16 %v421
        %v2282 = vunpack.c.l.b16 %v422
        %v2283 = vunpack.c.h.b16 %v422
        %v2284 = vunpack.c.l.b16 %v423
        %v2285 = vunpack.c.h.b16 %v423
        %v2286 = vunpack.c.l.b16 %v424
        %v2287 = vunpack.c.l.b16 %v425
        %v2288 = vunpack.c.h.b16 %v425
        %v2289 = vunpack.c.l.b16 %v426
        %v2290 = vunpack.c.h.b16 %v426
        %v2291 = vunpack.c.l.b16 %v427
        %v2292 = vunpack.c.l.b16 %v428
        %v2293 = vunpack.c.h.b16 %v428
        %v2294 = vunpack.c.l.b16 %v429
        %v2295 = vunpack.c.h.b16 %v429
        %v2296 = vunpack.c.l.b16 %v430
        %v2297 = vunpack.c.l.b16 %v431
        %v2298 = vunpack.c.h.b16 %v431
        %v2299 = vunpack.c.l.b16 %v432
        %v2300 = vunpack.c.h.b16 %v432
        %v2301 = vunpack.c.l.b16 %v433
        %v2302 = vunpack.c.l.b16 %v434
        %v2303 = vunpack.c.h.b16 %v434
        %v2304 = vunpack.c.l.b16 %v435
        %v2305 = vunpack.c.h.b16 %v435
        %v2306 = vunpack.c.l.b16 %v436
        %v2307 = vunpack.c.l.b16 %v437
        %v2308 = vunpack.c.h.b16 %v437
        %v2309 = vunpack.c.l.b16 %v438
        %v2310 = vunpack.c.h.b16 %v438
        %v2311 = vunpack.c.l.b16 %v439
        %v2312 = vunpack.c.l.b16 %v440
        %v2313 = vunpack.c.h.b16 %v440
        %v2314 = vunpack.c.l.b16 %v441
        %v2315 = vunpack.c.h.b16 %v441
        %v2316 = vunpack.c.l.b16 %v442
        %v2317 = vunpack.c.l.b16 %v443
        %v2318 = vunpack.c.h.b16 %v443
        %v2319 = vunpack.c.l.b16 %v444
        %v2320 = vunpack.c.h.b16 %v444
        %v2321 = vunpack.c.l.b16 %v445
        %v2322 = vunpack.c.l.b16 %v446
        %v2323 = vunpack.c.h.b16 %v446
        %v2324 = vunpack.c.l.b16 %v447
        %v2325 = vunpack.c.h.b16 %v447
        %v2326 = vunpack.c.l.b16 %v448
        %v2327 = vunpack.c.l.b16 %v449
        %v2328 = vunpack.c.h.b16 %v449
        %v2329 = vunpack.c.l.b16 %v450
        %v2330 = vunpack.c.h.b16 %v450
        %v2331 = vunpack.c.l.b16 %v451
        %v2332 = vunpack.c.l.b16 %v452
        %v2333 = vunpack.c.h.b16 %v452
        %v2334 = vunpack.c.l.b16 %v453
        %v2335 = vunpack.c.h.b16 %v453
        %v2336 = vunpack.c.l.b16 %v454
        %v2337 = vunpack.c.l.b16 %v455
        %v2338 = vunpack.c.h.b16 %v455
        %v2339 = vunpack.c.l.b16 %v456
        %v2340 = vunpack.c.h.b16 %v456
        %v2341 = vunpack.c.l.b16 %v457
        %v2342 = vunpack.c.l.b16 %v458
        %v2343 = vunpack.c.h.b16 %v458
        %v2344 = vunpack.c.l.b16 %v459
        %v2345 = vunpack.c.h.b16 %v459
        %v2346 = vunpack.c.l.b16 %v460
        %v2347 = vunpack.c.l.b16 %v461
        %v2348 = vunpack.c.h.b16 %v461
        %v2349 = vunpack.c.l.b16 %v462
        %v2350 = vunpack.c.h.b16 %v462
        %v2351 = vunpack.c.l.b16 %v463
        %v2352 = vunpack.c.l.b16 %v464
        %v2353 = vunpack.c.h.b16 %v464
        %v2354 = vunpack.c.l.b16 %v465
        %v2355 = vunpack.c.h.b16 %v465
        %v2356 = vunpack.c.l.b16 %v466
        %v2357 = vunpack.c.l.b16 %v467
        %v2358 = vunpack.c.h.b16 %v467
        %v2359 = vunpack.c.l.b16 %v468
        %v2360 = vunpack.c.h.b16 %v468
        %v2361 = vunpack.c.l.b16 %v469
        %v2362 = vunpack.c.l.b16 %v470
        %v2363 = vunpack.c.h.b16 %v470
        %v2364 = vunpack.c.l.b16 %v471
        %v2365 = vunpack.c.h.b16 %v471
        %v2366 = vunpack.c.l.b16 %v472
        %v2367 = vunpack.c.l.b16 %v473
        %v2368 = vunpack.c.h.b16 %v473
        %v2369 = vunpack.c.l.b16 %v474
        %v2370 = vunpack.c.h.b16 %v474
        %v2371 = vunpack.c.l.b16 %v475
        %v2372 = vunpack.c.l.b16 %v476
        %v2373 = vunpack.c.h.b16 %v476
        %v2374 = vunpack.c.l.b16 %v477
        %v2375 = vunpack.c.h.b16 %v477
        %v2376 = vunpack.c.l.b16 %v478
        %v2377 = vunpack.c.l.b16 %v479
        %v2378 = vunpack.c.h.b16 %v479
        %v2379 = vunpack.c.l.b16 %v480
        %v2380 = vunpack.c.h.b16 %v480
        %v2381 = vunpack.c.l.b16 %v481
        %v2382 = vunpack.c.l.b16 %v482
        %v2383 = vunpack.c.h.b16 %v482
        %v2384 = vunpack.c.l.b16 %v483
        %v2385 = vunpack.c.h.b16 %v483
        %v2386 = vunpack.c.l.b16 %v484
        %v2387 = vunpack.c.l.b16 %v485
        %v2388 = vunpack.c.h.b16 %v485
        %v2389 = vunpack.c.l.b16 %v486
        %v2390 = vunpack.c.h.b16 %v486
        %v2391 = vunpack.c.l.b16 %v487
        %v2392 = vunpack.c.l.b16 %v488
        %v2393 = vunpack.c.h.b16 %v488
        %v2394 = vunpack.c.l.b16 %v489
        %v2395 = vunpack.c.h.b16 %v489
        %v2396 = vunpack.c.l.b16 %v490
        %v2397 = vunpack.c.l.b16 %v491
        %v2398 = vunpack.c.h.b16 %v491
        %v2399 = vunpack.c.l.b16 %v492
        %v2400 = vunpack.c.h.b16 %v492
        %v2401 = vunpack.c.l.b16 %v493
        %v2402 = vunpack.c.l.b16 %v494
        %v2403 = vunpack.c.h.b16 %v494
        %v2404 = vunpack.c.l.b16 %v495
        %v2405 = vunpack.c.h.b16 %v495
        %v2406 = vunpack.c.l.b16 %v496
        %v2407 = vunpack.c.l.b16 %v497
        %v2408 = vunpack.c.h.b16 %v497
        %v2409 = vunpack.c.l.b16 %v498
        %v2410 = vunpack.c.h.b16 %v498
        %v2411 = vunpack.c.l.b16 %v499
        %v2412 = vunpack.c.l.b16 %v500
        %v2413 = vunpack.c.h.b16 %v500
        %v2414 = vunpack.c.l.b16 %v501
        %v2415 = vunpack.c.h.b16 %v501
        %v2416 = vunpack.c.l.b16 %v502
        %v2417 = vunpack.c.l.b16 %v503
        %v2418 = vunpack.c.h.b16 %v503
        %v2419 = vunpack.c.l.b16 %v504
        %v2420 = vunpack.c.h.b16 %v504
        %v2421 = vunpack.c.l.b16 %v505
        %v2422 = vunpack.c.l.b16 %v506
        %v2423 = vunpack.c.h.b16 %v506
        %v2424 = vunpack.c.l.b16 %v507
        %v2425 = vunpack.c.h.b16 %v507
        %v2426 = vunpack.c.l.b16 %v508
        %v2427 = vunpack.c.l.b16 %v509
        %v2428 = vunpack.c.h.b16 %v509
        %v2429 = vunpack.c.l.b16 %v510
        %v2430 = vunpack.c.h.b16 %v510
        %v2431 = vunpack.c.l.b16 %v511
        %v2432 = vunpack.c.l.b16 %v512
        %v2433 = vunpack.c.h.b16 %v512
        %v2434 = vunpack.c.l.b16 %v513
        %v2435 = vunpack.c.h.b16 %v513
        %v2436 = vunpack.c.l.b16 %v514
        %v2437 = vunpack.c.l.b16 %v515
        %v2438 = vunpack.c.h.b16 %v515
        %v2439 = vunpack.c.l.b16 %v516
        %v2440 = vunpack.c.h.b16 %v516
        %v2441 = vunpack.c.l.b16 %v517
        %v2442 = vunpack.c.l.b16 %v518
        %v2443 = vunpack.c.h.b16 %v518
        %v2444 = vunpack.c.l.b16 %v519
        %v2445 = vunpack.c.h.b16 %v519
        %v2446 = vunpack.c.l.b16 %v520
        %v2447 = vunpack.c.l.b16 %v521
        %v2448 = vunpack.c.h.b16 %v521
        %v2449 = vunpack.c.l.b16 %v522
        %v2450 = vunpack.c.h.b16 %v522
        %v2451 = vunpack.c.l.b16 %v523
        %v2452 = vunpack.c.l.b16 %v524
        %v2453 = vunpack.c.h.b16 %v524
        %v2454 = vunpack.c.l.b16 %v525
        %v2455 = vunpack.c.h.b16 %v525
        %v2456 = vunpack.c.l.b16 %v526
        %v2457 = vunpack.c.l.b16 %v527
        %v2458 = vunpack.c.h.b16 %v527
        %v2459 = vunpack.c.l.b16 %v528
        %v2460 = vunpack.c.h.b16 %v528
        %v2461 = vunpack.c.l.b16 %v529
        %v2462 = vunpack.c.l.b16 %v530
        %v2463 = vunpack.c.h.b16 %v530
        %v2464 = vunpack.c.l.b16 %v531
        %v2465 = vunpack.c.h.b16 %v531
        %v2466 = vunpack.c.l.b16 %v532
        %v2467 = vunpack.c.l.b16 %v533
        %v2468 = vunpack.c.h.b16 %v533
        %v2469 = vunpack.c.l.b16 %v534
        %v2470 = vunpack.c.h.b16 %v534
        %v2471 = vunpack.c.l.b16 %v535
        %v2472 = vunpack.c.l.b16 %v536
        %v2473 = vunpack.c.h.b16 %v536
        %v2474 = vunpack.c.l.b16 %v537
        %v2475 = vunpack.c.h.b16 %v537
        %v2476 = vunpack.c.l.b16 %v538
        %v2477 = vunpack.c.l.b16 %v539
        %v2478 = vunpack.c.h.b16 %v539
        %v2479 = vunpack.c.l.b16 %v540
        %v2480 = vunpack.c.h.b16 %v540
        %v2481 = vunpack.c.l.b16 %v541
        %v2482 = vunpack.c.l.b16 %v542
        %v2483 = vunpack.c.h.b16 %v542
        %v2484 = vunpack.c.l.b16 %v543
        %v2485 = vunpack.c.h.b16 %v543
        %v2486 = vunpack.c.l.b16 %v544
        %v2487 = vunpack.c.l.b16 %v545
        %v2488 = vunpack.c.h.b16 %v545
        %v2489 = vunpack.c.l.b16 %v546
        %v2490 = vunpack.c.h.b16 %v546
        %v2491 = vunpack.c.l.b16 %v547
        %v2492 = vunpack.c.l.b16 %v548
        %v2493 = vunpack.c.h.b16 %v548
        %v2494 = vunpack.c.l.b16 %v549
        %v2495 = vunpack.c.h.b16 %v549
        %v2496 = vunpack.c.l.b16 %v550
        %v2497 = vunpack.c.l.b16 %v551
        %v2498 = vunpack.c.h.b16 %v551
        %v2499 = vunpack.c.l.b16 %v552
        %v2500 = vunpack.c.h.b16 %v552
        %v2501 = vunpack.c.l.b16 %v553
        %v2502 = vunpack.c.l.b16 %v554
        %v2503 = vunpack.c.h.b16 %v554
        %v2504 = vunpack.c.l.b16 %v555
        %v2505 = vunpack.c.h.b16 %v555
        %v2506 = vunpack.c.l.b16 %v556
        %v2507 = vunpack.c.l.b16 %v557
        %v2508 = vunpack.c.h.b16 %v557
        %v2509 = vunpack.c.l.b16 %v558
        %v2510 = vunpack.c.h.b16 %v558
        %v2511 = vunpack.c.l.b16 %v559
        %v2512 = vunpack.c.l.b16 %v560
        %v2513 = vunpack.c.h.b16 %v560
        %v2514 = vunpack.c.l.b16 %v561
        %v2515 = vunpack.c.h.b16 %v561
        %v2516 = vunpack.c.l.b16 %v562
        %v2517 = vunpack.c.l.b16 %v563
        %v2518 = vunpack.c.h.b16 %v563
        %v2519 = vunpack.c.l.b16 %v564
        %v2520 = vunpack.c.h.b16 %v564
        %v2521 = vunpack.c.l.b16 %v565
        %v2522 = vunpack.c.l.b16 %v566
        %v2523 = vunpack.c.h.b16 %v566
        %v2524 = vunpack.c.l.b16 %v567
        %v2525 = vunpack.c.h.b16 %v567
        %v2526 = vunpack.c.l.b16 %v568
        %v2527 = vunpack.c.l.b16 %v569
        %v2528 = vunpack.c.h.b16 %v569
        %v2529 = vunpack.c.l.b16 %v570
        %v2530 = vunpack.c.h.b16 %v570
        %v2531 = vunpack.c.l.b16 %v571
        %v2532 = vunpack.c.l.b16 %v572
        %v2533 = vunpack.c.h.b16 %v572
        %v2534 = vunpack.c.l.b16 %v573
        %v2535 = vunpack.c.h.b16 %v573
        %v2536 = vunpack.c.l.b16 %v574
        %v2537 = vunpack.c.l.b16 %v575
        %v2538 = vunpack.c.h.b16 %v575
        %v2539 = vunpack.c.l.b16 %v576
        %v2540 = vunpack.c.h.b16 %v576
        %v2541 = vunpack.c.l.b16 %v577
        %v2542 = vunpack.c.l.b16 %v578
        %v2543 = vunpack.c.h.b16 %v578
        %v2544 = vunpack.c.l.b16 %v579
        %v2545 = vunpack.c.h.b16 %v579
        %v2546 = vunpack.c.l.b16 %v580
        %v2547 = vunpack.c.l.b16 %v581
        %v2548 = vunpack.c.h.b16 %v581
        %v2549 = vunpack.c.l.b16 %v582
        %v2550 = vunpack.c.h.b16 %v582
        %v2551 = vunpack.c.l.b16 %v583
        %v2552 = vunpack.c.l.b16 %v584
        %v2553 = vunpack.c.h.b16 %v584
        %v2554 = vunpack.c.l.b16 %v585
        %v2555 = vunpack.c.h.b16 %v585
        %v2556 = vunpack.c.l.b16 %v586
        %v2557 = vunpack.c.l.b16 %v587
        %v2558 = vunpack.c.h.b16 %v587
        %v2559 = vunpack.c.l.b16 %v588
        %v2560 = vunpack.c.h.b16 %v588
        %v2561 = vunpack.c.l.b16 %v589
        %v2562 = vunpack.c.l.b16 %v590
        %v2563 = vunpack.c.h.b16 %v590
        %v2564 = vunpack.c.l.b16 %v591
        %v2565 = vunpack.c.h.b16 %v591
        %v2566 = vunpack.c.l.b16 %v592
        %v2567 = vunpack.c.l.b16 %v593
        %v2568 = vunpack.c.h.b16 %v593
        %v2569 = vunpack.c.l.b16 %v594
        %v2570 = vunpack.c.h.b16 %v594
        %v2571 = vunpack.c.l.b16 %v595
        %v2572 = vunpack.c.l.b16 %v596
        %v2573 = vunpack.c.h.b16 %v596
        %v2574 = vunpack.c.l.b16 %v597
        %v2575 = vunpack.c.h.b16 %v597
        %v2576 = vunpack.c.l.b16 %v598
        %v2577 = vunpack.c.l.b16 %v599
        %v2578 = vunpack.c.h.b16 %v599
        %v2579 = vunpack.c.l.b16 %v600
        %v2580 = vunpack.c.h.b16 %v600
        %v2581 = vunpack.c.l.b16 %v601
        %v2582 = vunpack.c.l.b16 %v602
        %v2583 = vunpack.c.h.b16 %v602
        %v2584 = vunpack.c.l.b16 %v603
        %v2585 = vunpack.c.h.b16 %v603
        %v2586 = vunpack.c.l.b16 %v604
        %v2587 = vunpack.c.l.b16 %v605
        %v2588 = vunpack.c.h.b16 %v605
        %v2589 = vunpack.c.l.b16 %v606
        %v2590 = vunpack.c.h.b16 %v606
        %v2591 = vunpack.c.l.b16 %v607
        %v2592 = vunpack.c.l.b16 %v608
        %v2593 = vunpack.c.h.b16 %v608
        %v2594 = vunpack.c.l.b16 %v609
        %v2595 = vunpack.c.h.b16 %v609
        %v2596 = vunpack.c.l.b16 %v610
        %v2597 = vunpack.c.l.b16 %v611
        %v2598 = vunpack.c.h.b16 %v611
        %v2599 = vunpack.c.l.b16 %v612
        %v2600 = vunpack.c.h.b16 %v612
        %v2601 = vunpack.c.l.b16 %v613
        %v2602 = vunpack.c.l.b16 %v614
        %v2603 = vunpack.c.h.b16 %v614
        %v2604 = vunpack.c.l.b16 %v615
        %v2605 = vunpack.c.h.b16 %v615
        %v2606 = vunpack.c.l.b16 %v616
        %v2607 = vunpack.c.l.b16 %v617
        %v2608 = vunpack.c.h.b16 %v617
        %v2609 = vunpack.c.l.b16 %v618
        %v2610 = vunpack.c.h.b16 %v618
        %v2611 = vunpack.c.l.b16 %v619
        %v2612 = vunpack.c.l.b16 %v620
        %v2613 = vunpack.c.h.b16 %v620
        %v2614 = vunpack.c.l.b16 %v621
        %v2615 = vunpack.c.h.b16 %v621
        %v2616 = vunpack.c.l.b16 %v622
        %v2617 = vunpack.c.l.b16 %v623
        %v2618 = vunpack.c.h.b16 %v623
        %v2619 = vunpack.c.l.b16 %v624
        %v2620 = vunpack.c.h.b16 %v624
        %v2621 = vunpack.c.l.b16 %v625
        %v2622 = vunpack.c.l.b16 %v626
        %v2623 = vunpack.c.h.b16 %v626
        %v2624 = vunpack.c.l.b16 %v627
        %v2625 = vunpack.c.h.b16 %v627
        %v2626 = vunpack.c.l.b16 %v628
        %v2627 = vunpack.c.l.b16 %v629
        %v2628 = vunpack.c.h.b16 %v629
        %v2629 = vunpack.c.l.b16 %v630
        %v2630 = vunpack.c.h.b16 %v630
        %v2631 = vunpack.c.l.b16 %v631
        %v2632 = vunpack.c.l.b16 %v632
        %v2633 = vunpack.c.h.b16 %v632
        %v2634 = vunpack.c.l.b16 %v633
        %v2635 = vunpack.c.h.b16 %v633
        %v2636 = vunpack.c.l.b16 %v634
        %v2637 = vunpack.c.l.b16 %v635
        %v2638 = vunpack.c.h.b16 %v635
        %v2639 = vunpack.c.l.b16 %v636
        %v2640 = vunpack.c.h.b16 %v636
        %v2641 = vunpack.c.l.b16 %v637
        %v2642 = vunpack.c.l.b16 %v638
        %v2643 = vunpack.c.h.b16 %v638
        %v2644 = vunpack.c.l.b16 %v639
        %v2645 = vunpack.c.h.b16 %v639
        %v2646 = vunpack.c.l.b16 %v640
        %v2647 = vunpack.c.l.b16 %v641
        %v2648 = vunpack.c.h.b16 %v641
        %v2649 = vunpack.c.l.b16 %v642
        %v2650 = vunpack.c.h.b16 %v642
        %v2651 = vunpack.c.l.b16 %v643
        %v2652 = vunpack.c.l.b16 %v644
        %v2653 = vunpack.c.h.b16 %v644
        %v2654 = vunpack.c.l.b16 %v645
        %v2655 = vunpack.c.h.b16 %v645
        %v2656 = vunpack.c.l.b16 %v646
        %v2657 = vunpack.c.l.b16 %v647
        %v2658 = vunpack.c.h.b16 %v647
        %v2659 = vunpack.c.l.b16 %v648
        %v2660 = vunpack.c.h.b16 %v648
        %v2661 = vunpack.c.l.b16 %v649
        %v2662 = vunpack.c.l.b16 %v650
        %v2663 = vunpack.c.h.b16 %v650
        %v2664 = vunpack.c.l.b16 %v651
        %v2665 = vunpack.c.h.b16 %v651
        %v2666 = vunpack.c.l.b16 %v652
        %v2667 = vunpack.c.l.b16 %v653
        %v2668 = vunpack.c.h.b16 %v653
        %v2669 = vunpack.c.l.b16 %v654
        %v2670 = vunpack.c.h.b16 %v654
        %v2671 = vunpack.c.l.b16 %v655
        %v2672 = vunpack.c.l.b16 %v656
        %v2673 = vunpack.c.h.b16 %v656
        %v2674 = vunpack.c.l.b16 %v657
        %v2675 = vunpack.c.h.b16 %v657
        %v2676 = vunpack.c.l.b16 %v658
        %v2677 = vunpack.c.l.b16 %v659
        %v2678 = vunpack.c.h.b16 %v659
        %v2679 = vunpack.c.l.b16 %v660
        %v2680 = vunpack.c.h.b16 %v660
        %v2681 = vunpack.c.l.b16 %v661
        %v2682 = vunpack.c.l.b16 %v662
        %v2683 = vunpack.c.h.b16 %v662
        %v2684 = vunpack.c.l.b16 %v663
        %v2685 = vunpack.c.h.b16 %v663
        %v2686 = vunpack.c.l.b16 %v664
        %v2687 = vunpack.c.l.b16 %v665
        %v2688 = vunpack.c.h.b16 %v665
        %v2689 = vunpack.c.l.b16 %v666
        %v2690 = vunpack.c.h.b16 %v666
        %v2691 = vunpack.c.l.b16 %v667
        %v2692 = vunpack.c.l.b16 %v668
        %v2693 = vunpack.c.h.b16 %v668
        %v2694 = vunpack.c.l.b16 %v669
        %v2695 = vunpack.c.h.b16 %v669
        %v2696 = vunpack.c.l.b16 %v670
        %v2697 = vunpack.c.l.b16 %v671
        %v2698 = vunpack.c.h.b16 %v671
        %v2699 = vunpack.c.l.b16 %v672
        %v2700 = vunpack.c.h.b16 %v672
        %v2701 = vunpack.c.l.b16 %v673
        %v2702 = vunpack.c.l.b16 %v674
        %v2703 = vunpack.c.h.b16 %v674
        %v2704 = vunpack.c.l.b16 %v675
        %v2705 = vunpack.c.h.b16 %v675
        %v2706 = vunpack.c.l.b16 %v676
        %v2707 = vunpack.c.l.b16 %v677
        %v2708 = vunpack.c.h.b16 %v677
        %v2709 = vunpack.c.l.b16 %v678
        %v2710 = vunpack.c.h.b16 %v678
        %v2711 = vunpack.c.l.b16 %v679
        %v2712 = vunpack.c.l.b16 %v680
        %v2713 = vunpack.c.h.b16 %v680
        %v2714 = vunpack.c.l.b16 %v681
        %v2715 = vunpack.c.h.b16 %v681
        %v2716 = vunpack.c.l.b16 %v682
        %v2717 = vunpack.c.l.b16 %v683
        %v2718 = vunpack.c.h.b16 %v683
        %v2719 = vunpack.c.l.b16 %v684
        %v2720 = vunpack.c.h.b16 %v684
        %v2721 = vunpack.c.l.b16 %v685
        %v2722 = vunpack.c.l.b16 %v686
        %v2723 = vunpack.c.h.b16 %v686
        %v2724 = vunpack.c.l.b16 %v687
        %v2725 = vunpack.c.h.b16 %v687
        %v2726 = vunpack.c.l.b16 %v688
        %v2727 = vunpack.c.l.b16 %v689
        %v2728 = vunpack.c.h.b16 %v689
        %v2729 = vunpack.c.l.b16 %v690
        %v2730 = vunpack.c.h.b16 %v690
        %v2731 = vunpack.c.l.b16 %v691
        %v2732 = vunpack.c.l.b16 %v692
        %v2733 = vunpack.c.h.b16 %v692
        %v2734 = vunpack.c.l.b16 %v693
        %v2735 = vunpack.c.h.b16 %v693
        %v2736 = vunpack.c.l.b16 %v694
        %v2737 = vunpack.c.l.b16 %v695
        %v2738 = vunpack.c.h.b16 %v695
        %v2739 = vunpack.c.l.b16 %v696
        %v2740 = vunpack.c.h.b16 %v696
        %v2741 = vunpack.c.l.b16 %v697
        %v2742 = vunpack.c.l.b16 %v698
        %v2743 = vunpack.c.h.b16 %v698
        %v2744 = vunpack.c.l.b16 %v699
        %v2745 = vunpack.c.h.b16 %v699
        %v2746 = vunpack.c.l.b16 %v700
        %v2747 = vunpack.c.l.b16 %v701
        %v2748 = vunpack.c.h.b16 %v701
        %v2749 = vunpack.c.l.b16 %v702
        %v2750 = vunpack.c.h.b16 %v702
        %v2751 = vunpack.c.l.b16 %v703
        %v2752 = vunpack.c.l.b16 %v704
        %v2753 = vunpack.c.h.b16 %v704
        %v2754 = vunpack.c.l.b16 %v705
        %v2755 = vunpack.c.h.b16 %v705
        %v2756 = vunpack.c.l.b16 %v706
        %v2757 = vunpack.c.l.b16 %v707
        %v2758 = vunpack.c.h.b16 %v707
        %v2759 = vunpack.c.l.b16 %v708
        %v2760 = vunpack.c.h.b16 %v708
        %v2761 = vunpack.c.l.b16 %v709
        %v2762 = vunpack.c.l.b16 %v710
        %v2763 = vunpack.c.h.b16 %v710
        %v2764 = vunpack.c.l.b16 %v711
        %v2765 = vunpack.c.h.b16 %v711
        %v2766 = vunpack.c.l.b16 %v712
        %v2767 = vunpack.c.l.b16 %v713
        %v2768 = vunpack.c.h.b16 %v713
        %v2769 = vunpack.c.l.b16 %v714
        %v2770 = vunpack.c.h.b16 %v714
        %v2771 = vunpack.c.l.b16 %v715
        %v2772 = vunpack.c.l.b16 %v716
        %v2773 = vunpack.c.h.b16 %v716
        %v2774 = vunpack.c.l.b16 %v717
        %v2775 = vunpack.c.h.b16 %v717
        %v2776 = vunpack.c.l.b16 %v718
        %v2777 = vunpack.c.l.b16 %v719
        %v2778 = vunpack.c.h.b16 %v719
        %v2779 = vunpack.c.l.b16 %v720
        %v2780 = vunpack.c.h.b16 %v720
        %v2781 = vunpack.c.l.b16 %v721
        %v2782 = vunpack.c.l.b16 %v722
        %v2783 = vunpack.c.h.b16 %v722
        %v2784 = vunpack.c.l.b16 %v723
        %v2785 = vunpack.c.h.b16 %v723
        %v2786 = vunpack.c.l.b16 %v724
        %v2787 = vunpack.c.l.b16 %v725
        %v2788 = vunpack.c.h.b16 %v725
        %v2789 = vunpack.c.l.b16 %v726
        %v2790 = vunpack.c.h.b16 %v726
        %v2791 = vunpack.c.l.b16 %v727
        %v2792 = vunpack.c.l.b16 %v728
        %v2793 = vunpack.c.h.b16 %v728
        %v2794 = vunpack.c.l.b16 %v729
        %v2795 = vunpack.c.h.b16 %v729
        %v2796 = vunpack.c.l.b16 %v730
        %v2797 = vunpack.c.l.b16 %v731
        %v2798 = vunpack.c.h.b16 %v731
        %v2799 = vunpack.c.l.b16 %v732
        %v2800 = vunpack.c.h.b16 %v732
        %v2801 = vunpack.c.l.b16 %v733
        %v2802 = vunpack.c.l.b16 %v734
        %v2803 = vunpack.c.h.b16 %v734
        %v2804 = vunpack.c.l.b16 %v735
        %v2805 = vunpack.c.h.b16 %v735
        %v2806 = vunpack.c.l.b16 %v736
        %v2807 = vunpack.c.l.b16 %v737
        %v2808 = vunpack.c.h.b16 %v737
        %v2809 = vunpack.c.l.b16 %v738
        %v2810 = vunpack.c.h.b16 %v738
        %v2811 = vunpack.c.l.b16 %v739
        %v2812 = vunpack.c.l.b16 %v740
        %v2813 = vunpack.c.h.b16 %v740
        %v2814 = vunpack.c.l.b16 %v741
        %v2815 = vunpack.c.h.b16 %v741
        %v2816 = vunpack.c.l.b16 %v742
        %v2817 = vunpack.c.l.b16 %v743
        %v2818 = vunpack.c.h.b16 %v743
        %v2819 = vunpack.c.l.b16 %v744
        %v2820 = vunpack.c.h.b16 %v744
        %v2821 = vunpack.c.l.b16 %v745
        %v2822 = vunpack.c.l.b16 %v746
        %v2823 = vunpack.c.h.b16 %v746
        %v2824 = vunpack.c.l.b16 %v747
        %v2825 = vunpack.c.h.b16 %v747
        %v2826 = vunpack.c.l.b16 %v748
        %v2827 = vunpack.c.l.b16 %v749
        %v2828 = vunpack.c.h.b16 %v749
        %v2829 = vunpack.c.l.b16 %v750
        %v2830 = vunpack.c.h.b16 %v750
        %v2831 = vunpack.c.l.b16 %v751
        %v2832 = vunpack.c.l.b16 %v752
        %v2833 = vunpack.c.h.b16 %v752
        %v2834 = vunpack.c.l.b16 %v753
        %v2835 = vunpack.c.h.b16 %v753
        %v2836 = vunpack.c.l.b16 %v754
        %v2837 = vunpack.c.l.b16 %v755
        %v2838 = vunpack.c.h.b16 %v755
        %v2839 = vunpack.c.l.b16 %v756
        %v2840 = vunpack.c.h.b16 %v756
        %v2841 = vunpack.c.l.b16 %v757
        %v2842 = vunpack.c.l.b16 %v758
        %v2843 = vunpack.c.h.b16 %v758
        %v2844 = vunpack.c.l.b16 %v759
        %v2845 = vunpack.c.h.b16 %v759
        %v2846 = vunpack.c.l.b16 %v760
        %v2847 = vunpack.c.l.b16 %v761
        %v2848 = vunpack.c.h.b16 %v761
        %v2849 = vunpack.c.l.b16 %v762
        %v2850 = vunpack.c.h.b16 %v762
        %v2851 = vunpack.c.l.b16 %v763
        %v2852 = vunpack.c.l.b16 %v764
        %v2853 = vunpack.c.h.b16 %v764
        %v2854 = vunpack.c.l.b16 %v765
        %v2855 = vunpack.c.h.b16 %v765
        %v2856 = vunpack.c.l.b16 %v766
        %v2857 = vunpack.c.l.b16 %v767
        %v2858 = vunpack.c.h.b16 %v767
        %v2859 = vunpack.c.l.b16 %v768
        %v2860 = vunpack.c.h.b16 %v768
        %v2861 = vunpack.c.l.b16 %v769
        %v2862 = vunpack.c.l.b16 %v770
        %v2863 = vunpack.c.h.b16 %v770
        %v2864 = vunpack.c.l.b16 %v771
        %v2865 = vunpack.c.h.b16 %v771
        %v2866 = vunpack.c.l.b16 %v772
        %v2867 = vunpack.c.l.b16 %v773
        %v2868 = vunpack.c.h.b16 %v773
        %v2869 = vunpack.c.l.b16 %v774
        %v2870 = vunpack.c.h.b16 %v774
        %v2871 = vunpack.c.l.b16 %v775
        %v2872 = vunpack.c.l.b16 %v776
        %v2873 = vunpack.c.h.b16 %v776
        %v2874 = vunpack.c.l.b16 %v777
        %v2875 = vunpack.c.h.b16 %v777
        %v2876 = vunpack.c.l.b16 %v778
        %v2877 = vunpack.c.l.b16 %v779
        %v2878 = vunpack.c.h.b16 %v779
        %v2879 = vunpack.c.l.b16 %v780
        %v2880 = vunpack.c.h.b16 %v780
        %v2881 = vunpack.c.l.b16 %v781
        %v2882 = vunpack.c.l.b16 %v782
        %v2883 = vunpack.c.h.b16 %v782
        %v2884 = vunpack.c.l.b16 %v783
        %v2885 = vunpack.c.h.b16 %v783
        %v2886 = vunpack.c.l.b16 %v784
        %v2887 = vunpack.c.l.b16 %v785
        %v2888 = vunpack.c.h.b16 %v785
        %v2889 = vunpack.c.l.b16 %v786
        %v2890 = vunpack.c.h.b16 %v786
        %v2891 = vunpack.c.l.b16 %v787
        %v2892 = vunpack.c.l.b16 %v788
        %v2893 = vunpack.c.h.b16 %v788
        %v2894 = vunpack.c.l.b16 %v789
        %v2895 = vunpack.c.h.b16 %v789
        %v2896 = vunpack.c.l.b16 %v790
        %v2897 = vunpack.c.l.b16 %v791
        %v2898 = vunpack.c.h.b16 %v791
        %v2899 = vunpack.c.l.b16 %v792
        %v2900 = vunpack.c.h.b16 %v792
        %v2901 = vunpack.c.l.b16 %v793
        %v2902 = vunpack.c.l.b16 %v794
        %v2903 = vunpack.c.h.b16 %v794
        %v2904 = vunpack.c.l.b16 %v795
        %v2905 = vunpack.c.h.b16 %v795
        %v2906 = vunpack.c.l.b16 %v796
        %v2907 = vunpack.c.l.b16 %v797
        %v2908 = vunpack.c.h.b16 %v797
        %v2909 = vunpack.c.l.b16 %v798
        %v2910 = vunpack.c.h.b16 %v798
        %v2911 = vunpack.c.l.b16 %v799
        %v2912 = vunpack.c.l.b16 %v800
        %v2913 = vunpack.c.h.b16 %v800
        %v2914 = vunpack.c.l.b16 %v801
        %v2915 = vunpack.c.h.b16 %v801
        %v2916 = vunpack.c.l.b16 %v802
        %v2917 = vunpack.c.l.b16 %v803
        %v2918 = vunpack.c.h.b16 %v803
        %v2919 = vunpack.c.l.b16 %v804
        %v2920 = vunpack.c.h.b16 %v804
        %v2921 = vunpack.c.l.b16 %v805
        %v2922 = vunpack.c.l.b16 %v806
        %v2923 = vunpack.c.h.b16 %v806
        %v2924 = vunpack.c.l.b16 %v807
        %v2925 = vunpack.c.h.b16 %v807
        %v2926 = vunpack.c.l.b16 %v808
        %v2927 = vunpack.c.l.b16 %v809
        %v2928 = vunpack.c.h.b16 %v809
        %v2929 = vunpack.c.l.b16 %v810
        %v2930 = vunpack.c.h.b16 %v810
        %v2931 = vunpack.c.l.b16 %v811
        %v2932 = vunpack.c.l.b16 %v812
        %v2933 = vunpack.c.h.b16 %v812
        %v2934 = vunpack.c.l.b16 %v813
        %v2935 = vunpack.c.h.b16 %v813
        %v2936 = vunpack.c.l.b16 %v814
        %v2937 = vunpack.c.l.b16 %v815
        %v2938 = vunpack.c.h.b16 %v815
        %v2939 = vunpack.c.l.b16 %v816
        %v2940 = vunpack.c.h.b16 %v816
        %v2941 = vunpack.c.l.b16 %v817
        %v2942 = vunpack.c.l.b16 %v818
        %v2943 = vunpack.c.h.b16 %v818
        %v2944 = vunpack.c.l.b16 %v819
        %v2945 = vunpack.c.h.b16 %v819
        %v2946 = vunpack.c.l.b16 %v820
        %v2947 = vunpack.c.l.b16 %v821
        %v2948 = vunpack.c.h.b16 %v821
        %v2949 = vunpack.c.l.b16 %v822
        %v2950 = vunpack.c.h.b16 %v822
        %v2951 = vunpack.c.l.b16 %v823
        %v2952 = vunpack.c.l.b16 %v824
        %v2953 = vunpack.c.h.b16 %v824
        %v2954 = vunpack.c.l.b16 %v825
        %v2955 = vunpack.c.h.b16 %v825
        %v2956 = vunpack.c.l.b16 %v826
        %v2957 = vunpack.c.l.b16 %v827
        %v2958 = vunpack.c.h.b16 %v827
        %v2959 = vunpack.c.l.b16 %v828
        %v2960 = vunpack.c.h.b16 %v828
        %v2961 = vunpack.c.l.b16 %v829
        %v2962 = vunpack.c.l.b16 %v830
        %v2963 = vunpack.c.h.b16 %v830
        %v2964 = vunpack.c.l.b16 %v831
        %v2965 = vunpack.c.h.b16 %v831
        %v2966 = vunpack.c.l.b16 %v832
        %v2967 = vunpack.c.l.b16 %v833
        %v2968 = vunpack.c.h.b16 %v833
        %v2969 = vunpack.c.l.b16 %v834
        %v2970 = vunpack.c.h.b16 %v834
        %v2971 = vunpack.c.l.b16 %v835
        %v2972 = vunpack.c.l.b16 %v836
        %v2973 = vunpack.c.h.b16 %v836
        %v2974 = vunpack.c.l.b16 %v837
        %v2975 = vunpack.c.h.b16 %v837
        %v2976 = vunpack.c.l.b16 %v838
        %v2977 = vunpack.c.l.b16 %v839
        %v2978 = vunpack.c.h.b16 %v839
        %v2979 = vunpack.c.l.b16 %v840
        %v2980 = vunpack.c.h.b16 %v840
        %v2981 = vunpack.c.l.b16 %v841
        %v2982 = vunpack.c.l.b16 %v842
        %v2983 = vunpack.c.h.b16 %v842
        %v2984 = vunpack.c.l.b16 %v843
        %v2985 = vunpack.c.h.b16 %v843
        %v2986 = vunpack.c.l.b16 %v844
        %v2987 = vunpack.c.l.b16 %v845
        %v2988 = vunpack.c.h.b16 %v845
        %v2989 = vunpack.c.l.b16 %v846
        %v2990 = vunpack.c.h.b16 %v846
        %v2991 = vunpack.c.l.b16 %v847
        %v2992 = vunpack.c.l.b16 %v848
        %v2993 = vunpack.c.h.b16 %v848
        %v2994 = vunpack.c.l.b16 %v849
        %v2995 = vunpack.c.h.b16 %v849
        %v2996 = vunpack.c.l.b16 %v850
        %v2997 = vunpack.c.l.b16 %v851
        %v2998 = vunpack.c.h.b16 %v851
        %v2999 = vunpack.c.l.b16 %v852
        %v3000 = vunpack.c.h.b16 %v852
        %v3001 = vunpack.c.l.b16 %v853
        %v3002 = vunpack.c.l.b16 %v854
        %v3003 = vunpack.c.h.b16 %v854
        %v3004 = vunpack.c.l.b16 %v855
        %v3005 = vunpack.c.h.b16 %v855
        %v3006 = vunpack.c.l.b16 %v856
        %v3007 = vunpack.c.l.b16 %v857
        %v3008 = vunpack.c.h.b16 %v857
        %v3009 = vunpack.c.l.b16 %v858
        %v3010 = vunpack.c.h.b16 %v858
        %v3011 = vunpack.c.l.b16 %v859
        %v3012 = vunpack.c.l.b16 %v860
        %v3013 = vunpack.c.h.b16 %v860
        %v3014 = vunpack.c.l.b16 %v861
        %v3015 = vunpack.c.h.b16 %v861
        %v3016 = vunpack.c.l.b16 %v862
        %v3017 = vunpack.c.l.b16 %v863
        %v3018 = vunpack.c.h.b16 %v863
        %v3019 = vunpack.c.l.b16 %v864
        %v3020 = vunpack.c.h.b16 %v864
        %v3021 = vunpack.c.l.b16 %v865
        %v3022 = vunpack.c.l.b16 %v866
        %v3023 = vunpack.c.h.b16 %v866
        %v3024 = vunpack.c.l.b16 %v867
        %v3025 = vunpack.c.h.b16 %v867
        %v3026 = vunpack.c.l.b16 %v868
        %v3027 = vunpack.c.l.b16 %v869
        %v3028 = vunpack.c.h.b16 %v869
        %v3029 = vunpack.c.l.b16 %v870
        %v3030 = vunpack.c.h.b16 %v870
        %v3031 = vunpack.c.l.b16 %v871
        %v3032 = vunpack.c.l.b16 %v872
        %v3033 = vunpack.c.h.b16 %v872
        %v3034 = vunpack.c.l.b16 %v873
        %v3035 = vunpack.c.h.b16 %v873
        %v3036 = vunpack.c.l.b16 %v874
        %v3037 = vunpack.c.l.b16 %v875
        %v3038 = vunpack.c.h.b16 %v875
        %v3039 = vunpack.c.l.b16 %v876
        %v3040 = vunpack.c.h.b16 %v876
        %v3041 = vunpack.c.l.b16 %v877
        %v3042 = vunpack.c.l.b16 %v878
        %v3043 = vunpack.c.h.b16 %v878
        %v3044 = vunpack.c.l.b16 %v879
        %v3045 = vunpack.c.h.b16 %v879
        %v3046 = vunpack.c.l.b16 %v880
        %v3047 = vunpack.c.l.b16 %v881
        %v3048 = vunpack.c.h.b16 %v881
        %v3049 = vunpack.c.l.b16 %v882
        %v3050 = vunpack.c.h.b16 %v882
        %v3051 = vunpack.c.l.b16 %v883
        %v3052 = vunpack.c.l.b16 %v884
        %v3053 = vunpack.c.h.b16 %v884
        %v3054 = vunpack.c.l.b16 %v885
        %v3055 = vunpack.c.h.b16 %v885
        %v3056 = vunpack.c.l.b16 %v886
        %v3057 = vunpack.c.l.b16 %v887
        %v3058 = vunpack.c.h.b16 %v887
        %v3059 = vunpack.c.l.b16 %v888
        %v3060 = vunpack.c.h.b16 %v888
        %v3061 = vunpack.c.l.b16 %v889
        %v3062 = vunpack.c.l.b16 %v890
        %v3063 = vunpack.c.h.b16 %v890
        %v3064 = vunpack.c.l.b16 %v891
        %v3065 = vunpack.c.h.b16 %v891
        %v3066 = vunpack.c.l.b16 %v892
        %v3067 = vunpack.c.l.b16 %v893
        %v3068 = vunpack.c.h.b16 %v893
        %v3069 = vunpack.c.l.b16 %v894
        %v3070 = vunpack.c.h.b16 %v894
        %v3071 = vunpack.c.l.b16 %v895
        %v3072 = vunpack.c.l.b16 %v896
        %v3073 = vunpack.c.h.b16 %v896
        %v3074 = vunpack.c.l.b16 %v897
        %v3075 = vunpack.c.h.b16 %v897
        %v3076 = vunpack.c.l.b16 %v898
        %v3077 = vunpack.c.l.b16 %v899
        %v3078 = vunpack.c.h.b16 %v899
        %v3079 = vunpack.c.l.b16 %v900
        %v3080 = vunpack.c.h.b16 %v900
        %v3081 = vunpack.c.l.b16 %v901
        %v3082 = vunpack.c.l.b16 %v902
        %v3083 = vunpack.c.h.b16 %v902
        %v3084 = vunpack.c.l.b16 %v903
        %v3085 = vunpack.c.h.b16 %v903
        %v3086 = vunpack.c.l.b16 %v904
        %v3087 = vunpack.c.l.b16 %v905
        %v3088 = vunpack.c.h.b16 %v905
        %v3089 = vunpack.c.l.b16 %v906
        %v3090 = vunpack.c.h.b16 %v906
        %v3091 = vunpack.c.l.b16 %v907
        %v3092 = vunpack.c.l.b16 %v908
        %v3093 = vunpack.c.h.b16 %v908
        %v3094 = vunpack.c.l.b16 %v909
        %v3095 = vunpack.c.h.b16 %v909
        %v3096 = vunpack.c.l.b16 %v910
        %v3097 = vunpack.c.l.b16 %v911
        %v3098 = vunpack.c.h.b16 %v911
        %v3099 = vunpack.c.l.b16 %v912
        %v3100 = vunpack.c.h.b16 %v912
        %v3101 = vunpack.c.l.b16 %v913
        %v3102 = vunpack.c.l.b16 %v914
        %v3103 = vunpack.c.h.b16 %v914
        %v3104 = vunpack.c.l.b16 %v915
        %v3105 = vunpack.c.h.b16 %v915
        %v3106 = vunpack.c.l.b16 %v916
        %v3107 = vunpack.c.l.b16 %v917
        %v3108 = vunpack.c.h.b16 %v917
        %v3109 = vunpack.c.l.b16 %v918
        %v3110 = vunpack.c.h.b16 %v918
        %v3111 = vunpack.c.l.b16 %v919
        %v3112 = vunpack.c.l.b16 %v920
        %v3113 = vunpack.c.h.b16 %v920
        %v3114 = vunpack.c.l.b16 %v921
        %v3115 = vunpack.c.h.b16 %v921
        %v3116 = vunpack.c.l.b16 %v922
        %v3117 = vunpack.c.l.b16 %v923
        %v3118 = vunpack.c.h.b16 %v923
        %v3119 = vunpack.c.l.b16 %v924
        %v3120 = vunpack.c.h.b16 %v924
        %v3121 = vunpack.c.l.b16 %v925
        %v3122 = vunpack.c.l.b16 %v926
        %v3123 = vunpack.c.h.b16 %v926
        %v3124 = vunpack.c.l.b16 %v927
        %v3125 = vunpack.c.h.b16 %v927
        %v3126 = vunpack.c.l.b16 %v928
        %v3127 = vunpack.c.l.b16 %v929
        %v3128 = vunpack.c.h.b16 %v929
        %v3129 = vunpack.c.l.b16 %v930
        %v3130 = vunpack.c.h.b16 %v930
        %v3131 = vunpack.c.l.b16 %v931
        %v3132 = vunpack.c.l.b16 %v932
        %v3133 = vunpack.c.h.b16 %v932
        %v3134 = vunpack.c.l.b16 %v933
        %v3135 = vunpack.c.h.b16 %v933
        %v3136 = vunpack.c.l.b16 %v934
        %v3137 = vunpack.c.l.b16 %v935
        %v3138 = vunpack.c.h.b16 %v935
        %v3139 = vunpack.c.l.b16 %v936
        %v3140 = vunpack.c.h.b16 %v936
        %v3141 = vunpack.c.l.b16 %v937
        %v3142 = vunpack.c.l.b16 %v938
        %v3143 = vunpack.c.h.b16 %v938
        %v3144 = vunpack.c.l.b16 %v939
        %v3145 = vunpack.c.h.b16 %v939
        %v3146 = vunpack.c.l.b16 %v940
        %v3147 = vunpack.c.l.b16 %v941
        %v3148 = vunpack.c.h.b16 %v941
        %v3149 = vunpack.c.l.b16 %v942
        %v3150 = vunpack.c.h.b16 %v942
        %v3151 = vunpack.c.l.b16 %v943
        %v3152 = vunpack.c.l.b16 %v944
        %v3153 = vunpack.c.h.b16 %v944
        %v3154 = vunpack.c.l.b16 %v945
        %v3155 = vunpack.c.h.b16 %v945
        %v3156 = vunpack.c.l.b16 %v946
        %v3157 = vunpack.c.l.b16 %v947
        %v3158 = vunpack.c.h.b16 %v947
        %v3159 = vunpack.c.l.b16 %v948
        %v3160 = vunpack.c.h.b16 %v948
        %v3161 = vunpack.c.l.b16 %v949
        %v3162 = vunpack.c.l.b16 %v950
        %v3163 = vunpack.c.h.b16 %v950
        %v3164 = vunpack.c.l.b16 %v951
        %v3165 = vunpack.c.h.b16 %v951
        %v3166 = vunpack.c.l.b16 %v952
        %v3167 = vunpack.c.l.b16 %v953
        %v3168 = vunpack.c.h.b16 %v953
        %v3169 = vunpack.c.l.b16 %v954
        %v3170 = vunpack.c.h.b16 %v954
        %v3171 = vunpack.c.l.b16 %v955
        %v3172 = vunpack.c.l.b16 %v956
        %v3173 = vunpack.c.h.b16 %v956
        %v3174 = vunpack.c.l.b16 %v957
        %v3175 = vunpack.c.h.b16 %v957
        %v3176 = vunpack.c.l.b16 %v958
        %v3177 = vunpack.c.l.b16 %v959
        %v3178 = vunpack.c.h.b16 %v959
        %v3179 = vunpack.c.l.b16 %v960
        %v3180 = vunpack.c.h.b16 %v960
        %v3181 = vunpack.c.l.b16 %v961
        %v3182 = vunpack.c.l.b16 %v962
        %v3183 = vunpack.c.h.b16 %v962
        %v3184 = vunpack.c.l.b16 %v963
        %v3185 = vunpack.c.h.b16 %v963
        %v3186 = vunpack.c.l.b16 %v964
        %v3187 = vunpack.c.l.b16 %v965
        %v3188 = vunpack.c.h.b16 %v965
        %v3189 = vunpack.c.l.b16 %v966
        %v3190 = vunpack.c.h.b16 %v966
        %v3191 = vunpack.c.l.b16 %v967
        %v3192 = vunpack.c.l.b16 %v968
        %v3193 = vunpack.c.h.b16 %v968
        %v3194 = vunpack.c.l.b16 %v969
        %v3195 = vunpack.c.h.b16 %v969
        %v3196 = vunpack.c.l.b16 %v970
        %v3197 = vunpack.c.l.b16 %v971
        %v3198 = vunpack.c.h.b16 %v971
        %v3199 = vunpack.c.l.b16 %v972
        %v3200 = vunpack.c.h.b16 %v972
        %v3201 = vunpack.c.l.b16 %v973
        %v3202 = vunpack.c.l.b16 %v974
        %v3203 = vunpack.c.h.b16 %v974
        %v3204 = vunpack.c.l.b16 %v975
        %v3205 = vunpack.c.h.b16 %v975
        %v3206 = vunpack.c.l.b16 %v976
        %v3207 = vunpack.c.l.b16 %v977
        %v3208 = vunpack.c.h.b16 %v977
        %v3209 = vunpack.c.l.b16 %v978
        %v3210 = vunpack.c.h.b16 %v978
        %v3211 = vunpack.c.l.b16 %v979
        %v3212 = vunpack.c.l.b16 %v980
        %v3213 = vunpack.c.h.b16 %v980
        %v3214 = vunpack.c.l.b16 %v981
        %v3215 = vunpack.c.h.b16 %v981
        %v3216 = vunpack.c.l.b16 %v982
        %v3217 = vunpack.c.l.b16 %v983
        %v3218 = vunpack.c.h.b16 %v983
        %v3219 = vunpack.c.l.b16 %v984
        %v3220 = vunpack.c.h.b16 %v984
        %v3221 = vunpack.c.l.b16 %v985
        %v3222 = vunpack.c.l.b16 %v986
        %v3223 = vunpack.c.h.b16 %v986
        %v3224 = vunpack.c.l.b16 %v987
        %v3225 = vunpack.c.h.b16 %v987
        %v3226 = vunpack.c.l.b16 %v988
        %v3227 = vunpack.c.l.b16 %v989
        %v3228 = vunpack.c.h.b16 %v989
        %v3229 = vunpack.c.l.b16 %v990
        %v3230 = vunpack.c.h.b16 %v990
        %v3231 = vunpack.c.l.b16 %v991
        %v3232 = vpack.c.b16 %v1957, %v1952
        %v3233 = vpack.c.b16 %v1958, %v1953
        %v3234 = vpack.c.b16 %v1959, %v1954
        %v3235 = vpack.c.b16 %v1960, %v1955
        %v3236 = vpack.c.b16 %v1961, %v1956
        %v3237 = vpack.c.b16 %v1967, %v1962
        %v3238 = vpack.c.b16 %v1968, %v1963
        %v3239 = vpack.c.b16 %v1969, %v1964
        %v3240 = vpack.c.b16 %v1970, %v1965
        %v3241 = vpack.c.b16 %v1971, %v1966
        %v3242 = vpack.c.b16 %v1977, %v1972
        %v3243 = vpack.c.b16 %v1978, %v1973
        %v3244 = vpack.c.b16 %v1979, %v1974
        %v3245 = vpack.c.b16 %v1980, %v1975
        %v3246 = vpack.c.b16 %v1981, %v1976
        %v3247 = vpack.c.b16 %v1987, %v1982
        %v3248 = vpack.c.b16 %v1988, %v1983
        %v3249 = vpack.c.b16 %v1989, %v1984
        %v3250 = vpack.c.b16 %v1990, %v1985
        %v3251 = vpack.c.b16 %v1991, %v1986
        %v3252 = vpack.c.b16 %v1997, %v1992
        %v3253 = vpack.c.b16 %v1998, %v1993
        %v3254 = vpack.c.b16 %v1999, %v1994
        %v3255 = vpack.c.b16 %v2000, %v1995
        %v3256 = vpack.c.b16 %v2001, %v1996
        %v3257 = vpack.c.b16 %v2007, %v2002
        %v3258 = vpack.c.b16 %v2008, %v2003
        %v3259 = vpack.c.b16 %v2009, %v2004
        %v3260 = vpack.c.b16 %v2010, %v2005
        %v3261 = vpack.c.b16 %v2011, %v2006
        %v3262 = vpack.c.b16 %v2017, %v2012
        %v3263 = vpack.c.b16 %v2018, %v2013
        %v3264 = vpack.c.b16 %v2019, %v2014
        %v3265 = vpack.c.b16 %v2020, %v2015
        %v3266 = vpack.c.b16 %v2021, %v2016
        %v3267 = vpack.c.b16 %v2027, %v2022
        %v3268 = vpack.c.b16 %v2028, %v2023
        %v3269 = vpack.c.b16 %v2029, %v2024
        %v3270 = vpack.c.b16 %v2030, %v2025
        %v3271 = vpack.c.b16 %v2031, %v2026
        %v3272 = vpack.c.b16 %v2037, %v2032
        %v3273 = vpack.c.b16 %v2038, %v2033
        %v3274 = vpack.c.b16 %v2039, %v2034
        %v3275 = vpack.c.b16 %v2040, %v2035
        %v3276 = vpack.c.b16 %v2041, %v2036
        %v3277 = vpack.c.b16 %v2047, %v2042
        %v3278 = vpack.c.b16 %v2048, %v2043
        %v3279 = vpack.c.b16 %v2049, %v2044
        %v3280 = vpack.c.b16 %v2050, %v2045
        %v3281 = vpack.c.b16 %v2051, %v2046
        %v3282 = vpack.c.b16 %v2057, %v2052
        %v3283 = vpack.c.b16 %v2058, %v2053
        %v3284 = vpack.c.b16 %v2059, %v2054
        %v3285 = vpack.c.b16 %v2060, %v2055
        %v3286 = vpack.c.b16 %v2061, %v2056
        %v3287 = vpack.c.b16 %v2067, %v2062
        %v3288 = vpack.c.b16 %v2068, %v2063
        %v3289 = vpack.c.b16 %v2069, %v2064
        %v3290 = vpack.c.b16 %v2070, %v2065
        %v3291 = vpack.c.b16 %v2071, %v2066
        %v3292 = vpack.c.b16 %v2077, %v2072
        %v3293 = vpack.c.b16 %v2078, %v2073
        %v3294 = vpack.c.b16 %v2079, %v2074
        %v3295 = vpack.c.b16 %v2080, %v2075
        %v3296 = vpack.c.b16 %v2081, %v2076
        %v3297 = vpack.c.b16 %v2087, %v2082
        %v3298 = vpack.c.b16 %v2088, %v2083
        %v3299 = vpack.c.b16 %v2089, %v2084
        %v3300 = vpack.c.b16 %v2090, %v2085
        %v3301 = vpack.c.b16 %v2091, %v2086
        %v3302 = vpack.c.b16 %v2097, %v2092
        %v3303 = vpack.c.b16 %v2098, %v2093
        %v3304 = vpack.c.b16 %v2099, %v2094
        %v3305 = vpack.c.b16 %v2100, %v2095
        %v3306 = vpack.c.b16 %v2101, %v2096
        %v3307 = vpack.c.b16 %v2107, %v2102
        %v3308 = vpack.c.b16 %v2108, %v2103
        %v3309 = vpack.c.b16 %v2109, %v2104
        %v3310 = vpack.c.b16 %v2110, %v2105
        %v3311 = vpack.c.b16 %v2111, %v2106
        %v3312 = vpack.c.b16 %v2117, %v2112
        %v3313 = vpack.c.b16 %v2118, %v2113
        %v3314 = vpack.c.b16 %v2119, %v2114
        %v3315 = vpack.c.b16 %v2120, %v2115
        %v3316 = vpack.c.b16 %v2121, %v2116
        %v3317 = vpack.c.b16 %v2127, %v2122
        %v3318 = vpack.c.b16 %v2128, %v2123
        %v3319 = vpack.c.b16 %v2129, %v2124
        %v3320 = vpack.c.b16 %v2130, %v2125
        %v3321 = vpack.c.b16 %v2131, %v2126
        %v3322 = vpack.c.b16 %v2137, %v2132
        %v3323 = vpack.c.b16 %v2138, %v2133
        %v3324 = vpack.c.b16 %v2139, %v2134
        %v3325 = vpack.c.b16 %v2140, %v2135
        %v3326 = vpack.c.b16 %v2141, %v2136
        %v3327 = vpack.c.b16 %v2147, %v2142
        %v3328 = vpack.c.b16 %v2148, %v2143
        %v3329 = vpack.c.b16 %v2149, %v2144
        %v3330 = vpack.c.b16 %v2150, %v2145
        %v3331 = vpack.c.b16 %v2151, %v2146
        %v3332 = vpack.c.b16 %v2157, %v2152
        %v3333 = vpack.c.b16 %v2158, %v2153
        %v3334 = vpack.c.b16 %v2159, %v2154
        %v3335 = vpack.c.b16 %v2160, %v2155
        %v3336 = vpack.c.b16 %v2161, %v2156
        %v3337 = vpack.c.b16 %v2167, %v2162
        %v3338 = vpack.c.b16 %v2168, %v2163
        %v3339 = vpack.c.b16 %v2169, %v2164
        %v3340 = vpack.c.b16 %v2170, %v2165
        %v3341 = vpack.c.b16 %v2171, %v2166
        %v3342 = vpack.c.b16 %v2177, %v2172
        %v3343 = vpack.c.b16 %v2178, %v2173
        %v3344 = vpack.c.b16 %v2179, %v2174
        %v3345 = vpack.c.b16 %v2180, %v2175
        %v3346 = vpack.c.b16 %v2181, %v2176
        %v3347 = vpack.c.b16 %v2187, %v2182
        %v3348 = vpack.c.b16 %v2188, %v2183
        %v3349 = vpack.c.b16 %v2189, %v2184
        %v3350 = vpack.c.b16 %v2190, %v2185
        %v3351 = vpack.c.b16 %v2191, %v2186
        %v3352 = vpack.c.b16 %v2197, %v2192
        %v3353 = vpack.c.b16 %v2198, %v2193
        %v3354 = vpack.c.b16 %v2199, %v2194
        %v3355 = vpack.c.b16 %v2200, %v2195
        %v3356 = vpack.c.b16 %v2201, %v2196
        %v3357 = vpack.c.b16 %v2207, %v2202
        %v3358 = vpack.c.b16 %v2208, %v2203
        %v3359 = vpack.c.b16 %v2209, %v2204
        %v3360 = vpack.c.b16 %v2210, %v2205
        %v3361 = vpack.c.b16 %v2211, %v2206
        %v3362 = vpack.c.b16 %v2217, %v2212
        %v3363 = vpack.c.b16 %v2218, %v2213
        %v3364 = vpack.c.b16 %v2219, %v2214
        %v3365 = vpack.c.b16 %v2220, %v2215
        %v3366 = vpack.c.b16 %v2221, %v2216
        %v3367 = vpack.c.b16 %v2227, %v2222
        %v3368 = vpack.c.b16 %v2228, %v2223
        %v3369 = vpack.c.b16 %v2229, %v2224
        %v3370 = vpack.c.b16 %v2230, %v2225
        %v3371 = vpack.c.b16 %v2231, %v2226
        %v3372 = vpack.c.b16 %v2237, %v2232
        %v3373 = vpack.c.b16 %v2238, %v2233
        %v3374 = vpack.c.b16 %v2239, %v2234
        %v3375 = vpack.c.b16 %v2240, %v2235
        %v3376 = vpack.c.b16 %v2241, %v2236
        %v3377 = vpack.c.b16 %v2247, %v2242
        %v3378 = vpack.c.b16 %v2248, %v2243
        %v3379 = vpack.c.b16 %v2249, %v2244
        %v3380 = vpack.c.b16 %v2250, %v2245
        %v3381 = vpack.c.b16 %v2251, %v2246
        %v3382 = vpack.c.b16 %v2257, %v2252
        %v3383 = vpack.c.b16 %v2258, %v2253
        %v3384 = vpack.c.b16 %v2259, %v2254
        %v3385 = vpack.c.b16 %v2260, %v2255
        %v3386 = vpack.c.b16 %v2261, %v2256
        %v3387 = vpack.c.b16 %v2267, %v2262
        %v3388 = vpack.c.b16 %v2268, %v2263
        %v3389 = vpack.c.b16 %v2269, %v2264
        %v3390 = vpack.c.b16 %v2270, %v2265
        %v3391 = vpack.c.b16 %v2271, %v2266
        %v3392 = vpack.c.b16 %v2277, %v2272
        %v3393 = vpack.c.b16 %v2278, %v2273
        %v3394 = vpack.c.b16 %v2279, %v2274
        %v3395 = vpack.c.b16 %v2280, %v2275
        %v3396 = vpack.c.b16 %v2281, %v2276
        %v3397 = vpack.c.b16 %v2287, %v2282
        %v3398 = vpack.c.b16 %v2288, %v2283
        %v3399 = vpack.c.b16 %v2289, %v2284
        %v3400 = vpack.c.b16 %v2290, %v2285
        %v3401 = vpack.c.b16 %v2291, %v2286
        %v3402 = vpack.c.b16 %v2297, %v2292
        %v3403 = vpack.c.b16 %v2298, %v2293
        %v3404 = vpack.c.b16 %v2299, %v2294
        %v3405 = vpack.c.b16 %v2300, %v2295
        %v3406 = vpack.c.b16 %v2301, %v2296
        %v3407 = vpack.c.b16 %v2307, %v2302
        %v3408 = vpack.c.b16 %v2308, %v2303
        %v3409 = vpack.c.b16 %v2309, %v2304
        %v3410 = vpack.c.b16 %v2310, %v2305
        %v3411 = vpack.c.b16 %v2311, %v2306
        %v3412 = vpack.c.b16 %v2317, %v2312
        %v3413 = vpack.c.b16 %v2318, %v2313
        %v3414 = vpack.c.b16 %v2319, %v2314
        %v3415 = vpack.c.b16 %v2320, %v2315
        %v3416 = vpack.c.b16 %v2321, %v2316
        %v3417 = vpack.c.b16 %v2327, %v2322
        %v3418 = vpack.c.b16 %v2328, %v2323
        %v3419 = vpack.c.b16 %v2329, %v2324
        %v3420 = vpack.c.b16 %v2330, %v2325
        %v3421 = vpack.c.b16 %v2331, %v2326
        %v3422 = vpack.c.b16 %v2337, %v2332
        %v3423 = vpack.c.b16 %v2338, %v2333
        %v3424 = vpack.c.b16 %v2339, %v2334
        %v3425 = vpack.c.b16 %v2340, %v2335
        %v3426 = vpack.c.b16 %v2341, %v2336
        %v3427 = vpack.c.b16 %v2347, %v2342
        %v3428 = vpack.c.b16 %v2348, %v2343
        %v3429 = vpack.c.b16 %v2349, %v2344
        %v3430 = vpack.c.b16 %v2350, %v2345
        %v3431 = vpack.c.b16 %v2351, %v2346
        %v3432 = vpack.c.b16 %v2357, %v2352
        %v3433 = vpack.c.b16 %v2358, %v2353
        %v3434 = vpack.c.b16 %v2359, %v2354
        %v3435 = vpack.c.b16 %v2360, %v2355
        %v3436 = vpack.c.b16 %v2361, %v2356
        %v3437 = vpack.c.b16 %v2367, %v2362
        %v3438 = vpack.c.b16 %v2368, %v2363
        %v3439 = vpack.c.b16 %v2369, %v2364
        %v3440 = vpack.c.b16 %v2370, %v2365
        %v3441 = vpack.c.b16 %v2371, %v2366
        %v3442 = vpack.c.b16 %v2377, %v2372
        %v3443 = vpack.c.b16 %v2378, %v2373
        %v3444 = vpack.c.b16 %v2379, %v2374
        %v3445 = vpack.c.b16 %v2380, %v2375
        %v3446 = vpack.c.b16 %v2381, %v2376
        %v3447 = vpack.c.b16 %v2387, %v2382
        %v3448 = vpack.c.b16 %v2388, %v2383
        %v3449 = vpack.c.b16 %v2389, %v2384
        %v3450 = vpack.c.b16 %v2390, %v2385
        %v3451 = vpack.c.b16 %v2391, %v2386
        %v3452 = vpack.c.b16 %v2397, %v2392
        %v3453 = vpack.c.b16 %v2398, %v2393
        %v3454 = vpack.c.b16 %v2399, %v2394
        %v3455 = vpack.c.b16 %v2400, %v2395
        %v3456 = vpack.c.b16 %v2401, %v2396
        %v3457 = vpack.c.b16 %v2407, %v2402
        %v3458 = vpack.c.b16 %v2408, %v2403
        %v3459 = vpack.c.b16 %v2409, %v2404
        %v3460 = vpack.c.b16 %v2410, %v2405
        %v3461 = vpack.c.b16 %v2411, %v2406
        %v3462 = vpack.c.b16 %v2417, %v2412
        %v3463 = vpack.c.b16 %v2418, %v2413
        %v3464 = vpack.c.b16 %v2419, %v2414
        %v3465 = vpack.c.b16 %v2420, %v2415
        %v3466 = vpack.c.b16 %v2421, %v2416
        %v3467 = vpack.c.b16 %v2427, %v2422
        %v3468 = vpack.c.b16 %v2428, %v2423
        %v3469 = vpack.c.b16 %v2429, %v2424
        %v3470 = vpack.c.b16 %v2430, %v2425
        %v3471 = vpack.c.b16 %v2431, %v2426
        %v3472 = vpack.c.b16 %v2437, %v2432
        %v3473 = vpack.c.b16 %v2438, %v2433
        %v3474 = vpack.c.b16 %v2439, %v2434
        %v3475 = vpack.c.b16 %v2440, %v2435
        %v3476 = vpack.c.b16 %v2441, %v2436
        %v3477 = vpack.c.b16 %v2447, %v2442
        %v3478 = vpack.c.b16 %v2448, %v2443
        %v3479 = vpack.c.b16 %v2449, %v2444
        %v3480 = vpack.c.b16 %v2450, %v2445
        %v3481 = vpack.c.b16 %v2451, %v2446
        %v3482 = vpack.c.b16 %v2457, %v2452
        %v3483 = vpack.c.b16 %v2458, %v2453
        %v3484 = vpack.c.b16 %v2459, %v2454
        %v3485 = vpack.c.b16 %v2460, %v2455
        %v3486 = vpack.c.b16 %v2461, %v2456
        %v3487 = vpack.c.b16 %v2467, %v2462
        %v3488 = vpack.c.b16 %v2468, %v2463
        %v3489 = vpack.c.b16 %v2469, %v2464
        %v3490 = vpack.c.b16 %v2470, %v2465
        %v3491 = vpack.c.b16 %v2471, %v2466
        %v3492 = vpack.c.b16 %v2477, %v2472
        %v3493 = vpack.c.b16 %v2478, %v2473
        %v3494 = vpack.c.b16 %v2479, %v2474
        %v3495 = vpack.c.b16 %v2480, %v2475
        %v3496 = vpack.c.b16 %v2481, %v2476
        %v3497 = vpack.c.b16 %v2487, %v2482
        %v3498 = vpack.c.b16 %v2488, %v2483
        %v3499 = vpack.c.b16 %v2489, %v2484
        %v3500 = vpack.c.b16 %v2490, %v2485
        %v3501 = vpack.c.b16 %v2491, %v2486
        %v3502 = vpack.c.b16 %v2497, %v2492
        %v3503 = vpack.c.b16 %v2498, %v2493
        %v3504 = vpack.c.b16 %v2499, %v2494
        %v3505 = vpack.c.b16 %v2500, %v2495
        %v3506 = vpack.c.b16 %v2501, %v2496
        %v3507 = vpack.c.b16 %v2507, %v2502
        %v3508 = vpack.c.b16 %v2508, %v2503
        %v3509 = vpack.c.b16 %v2509, %v2504
        %v3510 = vpack.c.b16 %v2510, %v2505
        %v3511 = vpack.c.b16 %v2511, %v2506
        %v3512 = vpack.c.b16 %v2517, %v2512
        %v3513 = vpack.c.b16 %v2518, %v2513
        %v3514 = vpack.c.b16 %v2519, %v2514
        %v3515 = vpack.c.b16 %v2520, %v2515
        %v3516 = vpack.c.b16 %v2521, %v2516
        %v3517 = vpack.c.b16 %v2527, %v2522
        %v3518 = vpack.c.b16 %v2528, %v2523
        %v3519 = vpack.c.b16 %v2529, %v2524
        %v3520 = vpack.c.b16 %v2530, %v2525
        %v3521 = vpack.c.b16 %v2531, %v2526
        %v3522 = vpack.c.b16 %v2537, %v2532
        %v3523 = vpack.c.b16 %v2538, %v2533
        %v3524 = vpack.c.b16 %v2539, %v2534
        %v3525 = vpack.c.b16 %v2540, %v2535
        %v3526 = vpack.c.b16 %v2541, %v2536
        %v3527 = vpack.c.b16 %v2547, %v2542
        %v3528 = vpack.c.b16 %v2548, %v2543
        %v3529 = vpack.c.b16 %v2549, %v2544
        %v3530 = vpack.c.b16 %v2550, %v2545
        %v3531 = vpack.c.b16 %v2551, %v2546
        %v3532 = vpack.c.b16 %v2557, %v2552
        %v3533 = vpack.c.b16 %v2558, %v2553
        %v3534 = vpack.c.b16 %v2559, %v2554
        %v3535 = vpack.c.b16 %v2560, %v2555
        %v3536 = vpack.c.b16 %v2561, %v2556
        %v3537 = vpack.c.b16 %v2567, %v2562
        %v3538 = vpack.c.b16 %v2568, %v2563
        %v3539 = vpack.c.b16 %v2569, %v2564
        %v3540 = vpack.c.b16 %v2570, %v2565
        %v3541 = vpack.c.b16 %v2571, %v2566
        %v3542 = vpack.c.b16 %v2577, %v2572
        %v3543 = vpack.c.b16 %v2578, %v2573
        %v3544 = vpack.c.b16 %v2579, %v2574
        %v3545 = vpack.c.b16 %v2580, %v2575
        %v3546 = vpack.c.b16 %v2581, %v2576
        %v3547 = vpack.c.b16 %v2587, %v2582
        %v3548 = vpack.c.b16 %v2588, %v2583
        %v3549 = vpack.c.b16 %v2589, %v2584
        %v3550 = vpack.c.b16 %v2590, %v2585
        %v3551 = vpack.c.b16 %v2591, %v2586
        %v3552 = vpack.c.b16 %v2597, %v2592
        %v3553 = vpack.c.b16 %v2598, %v2593
        %v3554 = vpack.c.b16 %v2599, %v2594
        %v3555 = vpack.c.b16 %v2600, %v2595
        %v3556 = vpack.c.b16 %v2601, %v2596
        %v3557 = vpack.c.b16 %v2607, %v2602
        %v3558 = vpack.c.b16 %v2608, %v2603
        %v3559 = vpack.c.b16 %v2609, %v2604
        %v3560 = vpack.c.b16 %v2610, %v2605
        %v3561 = vpack.c.b16 %v2611, %v2606
        %v3562 = vpack.c.b16 %v2617, %v2612
        %v3563 = vpack.c.b16 %v2618, %v2613
        %v3564 = vpack.c.b16 %v2619, %v2614
        %v3565 = vpack.c.b16 %v2620, %v2615
        %v3566 = vpack.c.b16 %v2621, %v2616
        %v3567 = vpack.c.b16 %v2627, %v2622
        %v3568 = vpack.c.b16 %v2628, %v2623
        %v3569 = vpack.c.b16 %v2629, %v2624
        %v3570 = vpack.c.b16 %v2630, %v2625
        %v3571 = vpack.c.b16 %v2631, %v2626
        %v3572 = vpack.c.b16 %v2637, %v2632
        %v3573 = vpack.c.b16 %v2638, %v2633
        %v3574 = vpack.c.b16 %v2639, %v2634
        %v3575 = vpack.c.b16 %v2640, %v2635
        %v3576 = vpack.c.b16 %v2641, %v2636
        %v3577 = vpack.c.b16 %v2647, %v2642
        %v3578 = vpack.c.b16 %v2648, %v2643
        %v3579 = vpack.c.b16 %v2649, %v2644
        %v3580 = vpack.c.b16 %v2650, %v2645
        %v3581 = vpack.c.b16 %v2651, %v2646
        %v3582 = vpack.c.b16 %v2657, %v2652
        %v3583 = vpack.c.b16 %v2658, %v2653
        %v3584 = vpack.c.b16 %v2659, %v2654
        %v3585 = vpack.c.b16 %v2660, %v2655
        %v3586 = vpack.c.b16 %v2661, %v2656
        %v3587 = vpack.c.b16 %v2667, %v2662
        %v3588 = vpack.c.b16 %v2668, %v2663
        %v3589 = vpack.c.b16 %v2669, %v2664
        %v3590 = vpack.c.b16 %v2670, %v2665
        %v3591 = vpack.c.b16 %v2671, %v2666
        %v3592 = vpack.c.b16 %v2677, %v2672
        %v3593 = vpack.c.b16 %v2678, %v2673
        %v3594 = vpack.c.b16 %v2679, %v2674
        %v3595 = vpack.c.b16 %v2680, %v2675
        %v3596 = vpack.c.b16 %v2681, %v2676
        %v3597 = vpack.c.b16 %v2687, %v2682
        %v3598 = vpack.c.b16 %v2688, %v2683
        %v3599 = vpack.c.b16 %v2689, %v2684
        %v3600 = vpack.c.b16 %v2690, %v2685
        %v3601 = vpack.c.b16 %v2691, %v2686
        %v3602 = vpack.c.b16 %v2697, %v2692
        %v3603 = vpack.c.b16 %v2698, %v2693
        %v3604 = vpack.c.b16 %v2699, %v2694
        %v3605 = vpack.c.b16 %v2700, %v2695
        %v3606 = vpack.c.b16 %v2701, %v2696
        %v3607 = vpack.c.b16 %v2707, %v2702
        %v3608 = vpack.c.b16 %v2708, %v2703
        %v3609 = vpack.c.b16 %v2709, %v2704
        %v3610 = vpack.c.b16 %v2710, %v2705
        %v3611 = vpack.c.b16 %v2711, %v2706
        %v3612 = vpack.c.b16 %v2717, %v2712
        %v3613 = vpack.c.b16 %v2718, %v2713
        %v3614 = vpack.c.b16 %v2719, %v2714
        %v3615 = vpack.c.b16 %v2720, %v2715
        %v3616 = vpack.c.b16 %v2721, %v2716
        %v3617 = vpack.c.b16 %v2727, %v2722
        %v3618 = vpack.c.b16 %v2728, %v2723
        %v3619 = vpack.c.b16 %v2729, %v2724
        %v3620 = vpack.c.b16 %v2730, %v2725
        %v3621 = vpack.c.b16 %v2731, %v2726
        %v3622 = vpack.c.b16 %v2737, %v2732
        %v3623 = vpack.c.b16 %v2738, %v2733
        %v3624 = vpack.c.b16 %v2739, %v2734
        %v3625 = vpack.c.b16 %v2740, %v2735
        %v3626 = vpack.c.b16 %v2741, %v2736
        %v3627 = vpack.c.b16 %v2747, %v2742
        %v3628 = vpack.c.b16 %v2748, %v2743
        %v3629 = vpack.c.b16 %v2749, %v2744
        %v3630 = vpack.c.b16 %v2750, %v2745
        %v3631 = vpack.c.b16 %v2751, %v2746
        %v3632 = vpack.c.b16 %v2757, %v2752
        %v3633 = vpack.c.b16 %v2758, %v2753
        %v3634 = vpack.c.b16 %v2759, %v2754
        %v3635 = vpack.c.b16 %v2760, %v2755
        %v3636 = vpack.c.b16 %v2761, %v2756
        %v3637 = vpack.c.b16 %v2767, %v2762
        %v3638 = vpack.c.b16 %v2768, %v2763
        %v3639 = vpack.c.b16 %v2769, %v2764
        %v3640 = vpack.c.b16 %v2770, %v2765
        %v3641 = vpack.c.b16 %v2771, %v2766
        %v3642 = vpack.c.b16 %v2777, %v2772
        %v3643 = vpack.c.b16 %v2778, %v2773
        %v3644 = vpack.c.b16 %v2779, %v2774
        %v3645 = vpack.c.b16 %v2780, %v2775
        %v3646 = vpack.c.b16 %v2781, %v2776
        %v3647 = vpack.c.b16 %v2787, %v2782
        %v3648 = vpack.c.b16 %v2788, %v2783
        %v3649 = vpack.c.b16 %v2789, %v2784
        %v3650 = vpack.c.b16 %v2790, %v2785
        %v3651 = vpack.c.b16 %v2791, %v2786
        %v3652 = vpack.c.b16 %v2797, %v2792
        %v3653 = vpack.c.b16 %v2798, %v2793
        %v3654 = vpack.c.b16 %v2799, %v2794
        %v3655 = vpack.c.b16 %v2800, %v2795
        %v3656 = vpack.c.b16 %v2801, %v2796
        %v3657 = vpack.c.b16 %v2807, %v2802
        %v3658 = vpack.c.b16 %v2808, %v2803
        %v3659 = vpack.c.b16 %v2809, %v2804
        %v3660 = vpack.c.b16 %v2810, %v2805
        %v3661 = vpack.c.b16 %v2811, %v2806
        %v3662 = vpack.c.b16 %v2817, %v2812
        %v3663 = vpack.c.b16 %v2818, %v2813
        %v3664 = vpack.c.b16 %v2819, %v2814
        %v3665 = vpack.c.b16 %v2820, %v2815
        %v3666 = vpack.c.b16 %v2821, %v2816
        %v3667 = vpack.c.b16 %v2827, %v2822
        %v3668 = vpack.c.b16 %v2828, %v2823
        %v3669 = vpack.c.b16 %v2829, %v2824
        %v3670 = vpack.c.b16 %v2830, %v2825
        %v3671 = vpack.c.b16 %v2831, %v2826
        %v3672 = vpack.c.b16 %v2837, %v2832
        %v3673 = vpack.c.b16 %v2838, %v2833
        %v3674 = vpack.c.b16 %v2839, %v2834
        %v3675 = vpack.c.b16 %v2840, %v2835
        %v3676 = vpack.c.b16 %v2841, %v2836
        %v3677 = vpack.c.b16 %v2847, %v2842
        %v3678 = vpack.c.b16 %v2848, %v2843
        %v3679 = vpack.c.b16 %v2849, %v2844
        %v3680 = vpack.c.b16 %v2850, %v2845
        %v3681 = vpack.c.b16 %v2851, %v2846
        %v3682 = vpack.c.b16 %v2857, %v2852
        %v3683 = vpack.c.b16 %v2858, %v2853
        %v3684 = vpack.c.b16 %v2859, %v2854
        %v3685 = vpack.c.b16 %v2860, %v2855
        %v3686 = vpack.c.b16 %v2861, %v2856
        %v3687 = vpack.c.b16 %v2867, %v2862
        %v3688 = vpack.c.b16 %v2868, %v2863
        %v3689 = vpack.c.b16 %v2869, %v2864
        %v3690 = vpack.c.b16 %v2870, %v2865
        %v3691 = vpack.c.b16 %v2871, %v2866
        %v3692 = vpack.c.b16 %v2877, %v2872
        %v3693 = vpack.c.b16 %v2878, %v2873
        %v3694 = vpack.c.b16 %v2879, %v2874
        %v3695 = vpack.c.b16 %v2880, %v2875
        %v3696 = vpack.c.b16 %v2881, %v2876
        %v3697 = vpack.c.b16 %v2887, %v2882
        %v3698 = vpack.c.b16 %v2888, %v2883
        %v3699 = vpack.c.b16 %v2889, %v2884
        %v3700 = vpack.c.b16 %v2890, %v2885
        %v3701 = vpack.c.b16 %v2891, %v2886
        %v3702 = vpack.c.b16 %v2897, %v2892
        %v3703 = vpack.c.b16 %v2898, %v2893
        %v3704 = vpack.c.b16 %v2899, %v2894
        %v3705 = vpack.c.b16 %v2900, %v2895
        %v3706 = vpack.c.b16 %v2901, %v2896
        %v3707 = vpack.c.b16 %v2907, %v2902
        %v3708 = vpack.c.b16 %v2908, %v2903
        %v3709 = vpack.c.b16 %v2909, %v2904
        %v3710 = vpack.c.b16 %v2910, %v2905
        %v3711 = vpack.c.b16 %v2911, %v2906
        %v3712 = vpack.c.b16 %v2917, %v2912
        %v3713 = vpack.c.b16 %v2918, %v2913
        %v3714 = vpack.c.b16 %v2919, %v2914
        %v3715 = vpack.c.b16 %v2920, %v2915
        %v3716 = vpack.c.b16 %v2921, %v2916
        %v3717 = vpack.c.b16 %v2927, %v2922
        %v3718 = vpack.c.b16 %v2928, %v2923
        %v3719 = vpack.c.b16 %v2929, %v2924
        %v3720 = vpack.c.b16 %v2930, %v2925
        %v3721 = vpack.c.b16 %v2931, %v2926
        %v3722 = vpack.c.b16 %v2937, %v2932
        %v3723 = vpack.c.b16 %v2938, %v2933
        %v3724 = vpack.c.b16 %v2939, %v2934
        %v3725 = vpack.c.b16 %v2940, %v2935
        %v3726 = vpack.c.b16 %v2941, %v2936
        %v3727 = vpack.c.b16 %v2947, %v2942
        %v3728 = vpack.c.b16 %v2948, %v2943
        %v3729 = vpack.c.b16 %v2949, %v2944
        %v3730 = vpack.c.b16 %v2950, %v2945
        %v3731 = vpack.c.b16 %v2951, %v2946
        %v3732 = vpack.c.b16 %v2957, %v2952
        %v3733 = vpack.c.b16 %v2958, %v2953
        %v3734 = vpack.c.b16 %v2959, %v2954
        %v3735 = vpack.c.b16 %v2960, %v2955
        %v3736 = vpack.c.b16 %v2961, %v2956
        %v3737 = vpack.c.b16 %v2967, %v2962
        %v3738 = vpack.c.b16 %v2968, %v2963
        %v3739 = vpack.c.b16 %v2969, %v2964
        %v3740 = vpack.c.b16 %v2970, %v2965
        %v3741 = vpack.c.b16 %v2971, %v2966
        %v3742 = vpack.c.b16 %v2977, %v2972
        %v3743 = vpack.c.b16 %v2978, %v2973
        %v3744 = vpack.c.b16 %v2979, %v2974
        %v3745 = vpack.c.b16 %v2980, %v2975
        %v3746 = vpack.c.b16 %v2981, %v2976
        %v3747 = vpack.c.b16 %v2987, %v2982
        %v3748 = vpack.c.b16 %v2988, %v2983
        %v3749 = vpack.c.b16 %v2989, %v2984
        %v3750 = vpack.c.b16 %v2990, %v2985
        %v3751 = vpack.c.b16 %v2991, %v2986
        %v3752 = vpack.c.b16 %v2997, %v2992
        %v3753 = vpack.c.b16 %v2998, %v2993
        %v3754 = vpack.c.b16 %v2999, %v2994
        %v3755 = vpack.c.b16 %v3000, %v2995
        %v3756 = vpack.c.b16 %v3001, %v2996
        %v3757 = vpack.c.b16 %v3007, %v3002
        %v3758 = vpack.c.b16 %v3008, %v3003
        %v3759 = vpack.c.b16 %v3009, %v3004
        %v3760 = vpack.c.b16 %v3010, %v3005
        %v3761 = vpack.c.b16 %v3011, %v3006
        %v3762 = vpack.c.b16 %v3017, %v3012
        %v3763 = vpack.c.b16 %v3018, %v3013
        %v3764 = vpack.c.b16 %v3019, %v3014
        %v3765 = vpack.c.b16 %v3020, %v3015
        %v3766 = vpack.c.b16 %v3021, %v3016
        %v3767 = vpack.c.b16 %v3027, %v3022
        %v3768 = vpack.c.b16 %v3028, %v3023
        %v3769 = vpack.c.b16 %v3029, %v3024
        %v3770 = vpack.c.b16 %v3030, %v3025
        %v3771 = vpack.c.b16 %v3031, %v3026
        %v3772 = vpack.c.b16 %v3037, %v3032
        %v3773 = vpack.c.b16 %v3038, %v3033
        %v3774 = vpack.c.b16 %v3039, %v3034
        %v3775 = vpack.c.b16 %v3040, %v3035
        %v3776 = vpack.c.b16 %v3041, %v3036
        %v3777 = vpack.c.b16 %v3047, %v3042
        %v3778 = vpack.c.b16 %v3048, %v3043
        %v3779 = vpack.c.b16 %v3049, %v3044
        %v3780 = vpack.c.b16 %v3050, %v3045
        %v3781 = vpack.c.b16 %v3051, %v3046
        %v3782 = vpack.c.b16 %v3057, %v3052
        %v3783 = vpack.c.b16 %v3058, %v3053
        %v3784 = vpack.c.b16 %v3059, %v3054
        %v3785 = vpack.c.b16 %v3060, %v3055
        %v3786 = vpack.c.b16 %v3061, %v3056
        %v3787 = vpack.c.b16 %v3067, %v3062
        %v3788 = vpack.c.b16 %v3068, %v3063
        %v3789 = vpack.c.b16 %v3069, %v3064
        %v3790 = vpack.c.b16 %v3070, %v3065
        %v3791 = vpack.c.b16 %v3071, %v3066
        %v3792 = vpack.c.b16 %v3077, %v3072
        %v3793 = vpack.c.b16 %v3078, %v3073
        %v3794 = vpack.c.b16 %v3079, %v3074
        %v3795 = vpack.c.b16 %v3080, %v3075
        %v3796 = vpack.c.b16 %v3081, %v3076
        %v3797 = vpack.c.b16 %v3087, %v3082
        %v3798 = vpack.c.b16 %v3088, %v3083
        %v3799 = vpack.c.b16 %v3089, %v3084
        %v3800 = vpack.c.b16 %v3090, %v3085
        %v3801 = vpack.c.b16 %v3091, %v3086
        %v3802 = vpack.c.b16 %v3097, %v3092
        %v3803 = vpack.c.b16 %v3098, %v3093
        %v3804 = vpack.c.b16 %v3099, %v3094
        %v3805 = vpack.c.b16 %v3100, %v3095
        %v3806 = vpack.c.b16 %v3101, %v3096
        %v3807 = vpack.c.b16 %v3107, %v3102
        %v3808 = vpack.c.b16 %v3108, %v3103
        %v3809 = vpack.c.b16 %v3109, %v3104
        %v3810 = vpack.c.b16 %v3110, %v3105
        %v3811 = vpack.c.b16 %v3111, %v3106
        %v3812 = vpack.c.b16 %v3117, %v3112
        %v3813 = vpack.c.b16 %v3118, %v3113
        %v3814 = vpack.c.b16 %v3119, %v3114
        %v3815 = vpack.c.b16 %v3120, %v3115
        %v3816 = vpack.c.b16 %v3121, %v3116
        %v3817 = vpack.c.b16 %v3127, %v3122
        %v3818 = vpack.c.b16 %v3128, %v3123
        %v3819 = vpack.c.b16 %v3129, %v3124
        %v3820 = vpack.c.b16 %v3130, %v3125
        %v3821 = vpack.c.b16 %v3131, %v3126
        %v3822 = vpack.c.b16 %v3137, %v3132
        %v3823 = vpack.c.b16 %v3138, %v3133
        %v3824 = vpack.c.b16 %v3139, %v3134
        %v3825 = vpack.c.b16 %v3140, %v3135
        %v3826 = vpack.c.b16 %v3141, %v3136
        %v3827 = vpack.c.b16 %v3147, %v3142
        %v3828 = vpack.c.b16 %v3148, %v3143
        %v3829 = vpack.c.b16 %v3149, %v3144
        %v3830 = vpack.c.b16 %v3150, %v3145
        %v3831 = vpack.c.b16 %v3151, %v3146
        %v3832 = vpack.c.b16 %v3157, %v3152
        %v3833 = vpack.c.b16 %v3158, %v3153
        %v3834 = vpack.c.b16 %v3159, %v3154
        %v3835 = vpack.c.b16 %v3160, %v3155
        %v3836 = vpack.c.b16 %v3161, %v3156
        %v3837 = vpack.c.b16 %v3167, %v3162
        %v3838 = vpack.c.b16 %v3168, %v3163
        %v3839 = vpack.c.b16 %v3169, %v3164
        %v3840 = vpack.c.b16 %v3170, %v3165
        %v3841 = vpack.c.b16 %v3171, %v3166
        %v3842 = vpack.c.b16 %v3177, %v3172
        %v3843 = vpack.c.b16 %v3178, %v3173
        %v3844 = vpack.c.b16 %v3179, %v3174
        %v3845 = vpack.c.b16 %v3180, %v3175
        %v3846 = vpack.c.b16 %v3181, %v3176
        %v3847 = vpack.c.b16 %v3187, %v3182
        %v3848 = vpack.c.b16 %v3188, %v3183
        %v3849 = vpack.c.b16 %v3189, %v3184
        %v3850 = vpack.c.b16 %v3190, %v3185
        %v3851 = vpack.c.b16 %v3191, %v3186
        %v3852 = vpack.c.b16 %v3197, %v3192
        %v3853 = vpack.c.b16 %v3198, %v3193
        %v3854 = vpack.c.b16 %v3199, %v3194
        %v3855 = vpack.c.b16 %v3200, %v3195
        %v3856 = vpack.c.b16 %v3201, %v3196
        %v3857 = vpack.c.b16 %v3207, %v3202
        %v3858 = vpack.c.b16 %v3208, %v3203
        %v3859 = vpack.c.b16 %v3209, %v3204
        %v3860 = vpack.c.b16 %v3210, %v3205
        %v3861 = vpack.c.b16 %v3211, %v3206
        %v3862 = vpack.c.b16 %v3217, %v3212
        %v3863 = vpack.c.b16 %v3218, %v3213
        %v3864 = vpack.c.b16 %v3219, %v3214
        %v3865 = vpack.c.b16 %v3220, %v3215
        %v3866 = vpack.c.b16 %v3221, %v3216
        %v3867 = vpack.c.b16 %v3227, %v3222
        %v3868 = vpack.c.b16 %v3228, %v3223
        %v3869 = vpack.c.b16 %v3229, %v3224
        %v3870 = vpack.c.b16 %v3230, %v3225
        %v3871 = vpack.c.b16 %v3231, %v3226
        %4512 = vmatprep.subr.bf16.mxu0 %v3233
        %4513 = vmatpush1.bf16.msra.mxu0 %v3232
        %4514 = vmatprep.subr.bf16.mxu0 %v3238
        %4515 = vmatpush1.bf16.msra.mxu0 %v3237
        %4516 = vmatprep.subr.bf16.mxu0 %v3243
        %4517 = vmatpush1.bf16.msra.mxu0 %v3242
        %4518 = vmatprep.subr.bf16.mxu0 %v3248
        %4519 = vmatpush1.bf16.msra.mxu0 %v3247
        %4520 = vmatprep.subr.bf16.mxu0 %v3253
        %4521 = vmatpush1.bf16.msra.mxu0 %v3252
        %4522 = vmatprep.subr.bf16.mxu0 %v3258
        %4523 = vmatpush1.bf16.msra.mxu0 %v3257
        %4524 = vmatprep.subr.bf16.mxu0 %v3263
        %4525 = vmatpush1.bf16.msra.mxu0 %v3262
        %4526 = vmatprep.subr.bf16.mxu0 %v3268
        %4527 = vmatpush1.bf16.msra.mxu0 %v3267
        %4528 = vmatprep.subr.bf16.mxu0 %v3273
        %4529 = vmatpush1.bf16.msra.mxu0 %v3272
        %4530 = vmatprep.subr.bf16.mxu0 %v3278
        %4531 = vmatpush1.bf16.msra.mxu0 %v3277
        %4532 = vmatprep.subr.bf16.mxu0 %v3283
        %4533 = vmatpush1.bf16.msra.mxu0 %v3282
        %4534 = vmatprep.subr.bf16.mxu0 %v3288
        %4535 = vmatpush1.bf16.msra.mxu0 %v3287
        %4536 = vmatprep.subr.bf16.mxu0 %v3293
        %4537 = vmatpush1.bf16.msra.mxu0 %v3292
        %4538 = vmatprep.subr.bf16.mxu0 %v3298
        %4539 = vmatpush1.bf16.msra.mxu0 %v3297
        %4540 = vmatprep.subr.bf16.mxu0 %v3303
        %4541 = vmatpush1.bf16.msra.mxu0 %v3302
        %4542 = vmatprep.subr.bf16.mxu0 %v3308
        %4543 = vmatpush1.bf16.msra.mxu0 %v3307
        %4544 = vmatprep.mubr.bf16.mxu0 %v1121
        %4545 = vmatmul.mubr.bf16.gmra.mrb[0].mxu0 %v1120
        %v4546 = vpop.f32.mrb[0].mxu0
        %v4547 = vadd.f32 0.0, %v4546
        %v4548 = vpop.f32.mrb[0].mxu0
        %v4549 = vadd.f32 0.0, %v4548
        %v4550 = vpop.f32.mrb[0].mxu0
        %v4551 = vadd.f32 0.0, %v4550
        %v4552 = vpop.f32.mrb[0].mxu0
        %v4553 = vadd.f32 0.0, %v4552
        %4554 = vmatprep.mubr.bf16.mxu0 %v1137
        %4555 = vmatmul.mubr.bf16.gmra.mrb[0].mxu0 %v1136
        %v4556 = vpop.f32.mrb[0].mxu0
        %v4557 = vadd.f32 0.0, %v4556
        %v4558 = vpop.f32.mrb[0].mxu0
        %v4559 = vadd.f32 0.0, %v4558
        %v4560 = vpop.f32.mrb[0].mxu0
        %v4561 = vadd.f32 0.0, %v4560
        %v4562 = vpop.f32.mrb[0].mxu0
        %v4563 = vadd.f32 0.0, %v4562
        %4564 = vdwg.mxu0
        %4565 = vmatprep.subr.bf16.mxu0 %v3313
        %4566 = vmatpush1.bf16.msra.mxu0 %v3312
        %4567 = vmatprep.subr.bf16.mxu0 %v3318
        %4568 = vmatpush1.bf16.msra.mxu0 %v3317
        %4569 = vmatprep.subr.bf16.mxu0 %v3323
        %4570 = vmatpush1.bf16.msra.mxu0 %v3322
        %4571 = vmatprep.subr.bf16.mxu0 %v3328
        %4572 = vmatpush1.bf16.msra.mxu0 %v3327
        %4573 = vmatprep.subr.bf16.mxu0 %v3333
        %4574 = vmatpush1.bf16.msra.mxu0 %v3332
        %4575 = vmatprep.subr.bf16.mxu0 %v3338
        %4576 = vmatpush1.bf16.msra.mxu0 %v3337
        %4577 = vmatprep.subr.bf16.mxu0 %v3343
        %4578 = vmatpush1.bf16.msra.mxu0 %v3342
        %4579 = vmatprep.subr.bf16.mxu0 %v3348
        %4580 = vmatpush1.bf16.msra.mxu0 %v3347
        %4581 = vmatprep.subr.bf16.mxu0 %v3353
        %4582 = vmatpush1.bf16.msra.mxu0 %v3352
        %4583 = vmatprep.subr.bf16.mxu0 %v3358
        %4584 = vmatpush1.bf16.msra.mxu0 %v3357
        %4585 = vmatprep.subr.bf16.mxu0 %v3363
        %4586 = vmatpush1.bf16.msra.mxu0 %v3362
        %4587 = vmatprep.subr.bf16.mxu0 %v3368
        %4588 = vmatpush1.bf16.msra.mxu0 %v3367
        %4589 = vmatprep.subr.bf16.mxu0 %v3373
        %4590 = vmatpush1.bf16.msra.mxu0 %v3372
        %4591 = vmatprep.subr.bf16.mxu0 %v3378
        %4592 = vmatpush1.bf16.msra.mxu0 %v3377
        %4593 = vmatprep.subr.bf16.mxu0 %v3383
        %4594 = vmatpush1.bf16.msra.mxu0 %v3382
        %4595 = vmatprep.subr.bf16.mxu0 %v3388
        %4596 = vmatpush1.bf16.msra.mxu0 %v3387
        %4597 = vmatprep.mubr.bf16.mxu0 %v1123
        %4598 = vmatmul.mubr.bf16.gmra.mrb[0].mxu0 %v1122
        %v4599 = vpop.f32.mrb[0].mxu0
        %v4600 = vadd.f32 %v4547, %v4599
        %v4601 = vpop.f32.mrb[0].mxu0
        %v4602 = vadd.f32 %v4549, %v4601
        %v4603 = vpop.f32.mrb[0].mxu0
        %v4604 = vadd.f32 %v4551, %v4603
        %v4605 = vpop.f32.mrb[0].mxu0
        %v4606 = vadd.f32 %v4553, %v4605
        %4607 = vmatprep.mubr.bf16.mxu0 %v1139
        %4608 = vmatmul.mubr.bf16.gmra.mrb[0].mxu0 %v1138
        %v4609 = vpop.f32.mrb[0].mxu0
        %v4610 = vadd.f32 %v4557, %v4609
        %v4611 = vpop.f32.mrb[0].mxu0
        %v4612 = vadd.f32 %v4559, %v4611
        %v4613 = vpop.f32.mrb[0].mxu0
        %v4614 = vadd.f32 %v4561, %v4613
        %v4615 = vpop.f32.mrb[0].mxu0
        %v4616 = vadd.f32 %v4563, %v4615
        %4617 = vdwg.mxu0
        %4618 = vmatprep.subr.bf16.mxu0 %v3393
        %4619 = vmatpush1.bf16.msra.mxu0 %v3392
        %4620 = vmatprep.subr.bf16.mxu0 %v3398
        %4621 = vmatpush1.bf16.msra.mxu0 %v3397
        %4622 = vmatprep.subr.bf16.mxu0 %v3403
        %4623 = vmatpush1.bf16.msra.mxu0 %v3402
        %4624 = vmatprep.subr.bf16.mxu0 %v3408
        %4625 = vmatpush1.bf16.msra.mxu0 %v3407
        %4626 = vmatprep.subr.bf16.mxu0 %v3413
        %4627 = vmatpush1.bf16.msra.mxu0 %v3412
        %4628 = vmatprep.subr.bf16.mxu0 %v3418
        %4629 = vmatpush1.bf16.msra.mxu0 %v3417
        %4630 = vmatprep.subr.bf16.mxu0 %v3423
        %4631 = vmatpush1.bf16.msra.mxu0 %v3422
        %4632 = vmatprep.subr.bf16.mxu0 %v3428
        %4633 = vmatpush1.bf16.msra.mxu0 %v3427
        %4634 = vmatprep.subr.bf16.mxu0 %v3433
        %4635 = vmatpush1.bf16.msra.mxu0 %v3432
        %4636 = vmatprep.subr.bf16.mxu0 %v3438
        %4637 = vmatpush1.bf16.msra.mxu0 %v3437
        %4638 = vmatprep.subr.bf16.mxu0 %v3443
        %4639 = vmatpush1.bf16.msra.mxu0 %v3442
        %4640 = vmatprep.subr.bf16.mxu0 %v3448
        %4641 = vmatpush1.bf16.msra.mxu0 %v3447
        %4642 = vmatprep.subr.bf16.mxu0 %v3453
        %4643 = vmatpush1.bf16.msra.mxu0 %v3452
        %4644 = vmatprep.subr.bf16.mxu0 %v3458
        %4645 = vmatpush1.bf16.msra.mxu0 %v3457
        %4646 = vmatprep.subr.bf16.mxu0 %v3463
        %4647 = vmatpush1.bf16.msra.mxu0 %v3462
        %4648 = vmatprep.subr.bf16.mxu0 %v3468
        %4649 = vmatpush1.bf16.msra.mxu0 %v3467
        %4650 = vmatprep.mubr.bf16.mxu0 %v1125
        %4651 = vmatmul.mubr.bf16.gmra.mrb[0].mxu0 %v1124
        %v4652 = vpop.f32.mrb[0].mxu0
        %v4653 = vadd.f32 %v4600, %v4652
        %v4654 = vpop.f32.mrb[0].mxu0
        %v4655 = vadd.f32 %v4602, %v4654
        %v4656 = vpop.f32.mrb[0].mxu0
        %v4657 = vadd.f32 %v4604, %v4656
        %v4658 = vpop.f32.mrb[0].mxu0
        %v4659 = vadd.f32 %v4606, %v4658
        %4660 = vmatprep.mubr.bf16.mxu0 %v1141
        %4661 = vmatmul.mubr.bf16.gmra.mrb[0].mxu0 %v1140
        %v4662 = vpop.f32.mrb[0].mxu0
        %v4663 = vadd.f32 %v4610, %v4662
        %v4664 = vpop.f32.mrb[0].mxu0
        %v4665 = vadd.f32 %v4612, %v4664
        %v4666 = vpop.f32.mrb[0].mxu0
        %v4667 = vadd.f32 %v4614, %v4666
        %v4668 = vpop.f32.mrb[0].mxu0
        %v4669 = vadd.f32 %v4616, %v4668
        %4670 = vdwg.mxu0
        %4671 = vmatprep.subr.bf16.mxu0 %v3473
        %4672 = vmatpush1.bf16.msra.mxu0 %v3472
        %4673 = vmatprep.subr.bf16.mxu0 %v3478
        %4674 = vmatpush1.bf16.msra.mxu0 %v3477
        %4675 = vmatprep.subr.bf16.mxu0 %v3483
        %4676 = vmatpush1.bf16.msra.mxu0 %v3482
        %4677 = vmatprep.subr.bf16.mxu0 %v3488
        %4678 = vmatpush1.bf16.msra.mxu0 %v3487
        %4679 = vmatprep.subr.bf16.mxu0 %v3493
        %4680 = vmatpush1.bf16.msra.mxu0 %v3492
        %4681 = vmatprep.subr.bf16.mxu0 %v3498
        %4682 = vmatpush1.bf16.msra.mxu0 %v3497
        %4683 = vmatprep.subr.bf16.mxu0 %v3503
        %4684 = vmatpush1.bf16.msra.mxu0 %v3502
        %4685 = vmatprep.subr.bf16.mxu0 %v3508
        %4686 = vmatpush1.bf16.msra.mxu0 %v3507
        %4687 = vmatprep.subr.bf16.mxu0 %v3513
        %4688 = vmatpush1.bf16.msra.mxu0 %v3512
        %4689 = vmatprep.subr.bf16.mxu0 %v3518
        %4690 = vmatpush1.bf16.msra.mxu0 %v3517
        %4691 = vmatprep.subr.bf16.mxu0 %v3523
        %4692 = vmatpush1.bf16.msra.mxu0 %v3522
        %4693 = vmatprep.subr.bf16.mxu0 %v3528
        %4694 = vmatpush1.bf16.msra.mxu0 %v3527
        %4695 = vmatprep.subr.bf16.mxu0 %v3533
        %4696 = vmatpush1.bf16.msra.mxu0 %v3532
        %4697 = vmatprep.subr.bf16.mxu0 %v3538
        %4698 = vmatpush1.bf16.msra.mxu0 %v3537
        %4699 = vmatprep.subr.bf16.mxu0 %v3543
        %4700 = vmatpush1.bf16.msra.mxu0 %v3542
        %4701 = vmatprep.subr.bf16.mxu0 %v3548
        %4702 = vmatpush1.bf16.msra.mxu0 %v3547
        %4703 = vmatprep.mubr.bf16.mxu0 %v1127
        %4704 = vmatmul.mubr.bf16.gmra.mrb[0].mxu0 %v1126
        %v4705 = vpop.f32.mrb[0].mxu0
        %v4706 = vadd.f32 %v4653, %v4705
        %v4707 = vpop.f32.mrb[0].mxu0
        %v4708 = vadd.f32 %v4655, %v4707
        %v4709 = vpop.f32.mrb[0].mxu0
        %v4710 = vadd.f32 %v4657, %v4709
        %v4711 = vpop.f32.mrb[0].mxu0
        %v4712 = vadd.f32 %v4659, %v4711
        %4713 = vmatprep.mubr.bf16.mxu0 %v1143
        %4714 = vmatmul.mubr.bf16.gmra.mrb[0].mxu0 %v1142
        %v4715 = vpop.f32.mrb[0].mxu0
        %v4716 = vadd.f32 %v4663, %v4715
        %v4717 = vpop.f32.mrb[0].mxu0
        %v4718 = vadd.f32 %v4665, %v4717
        %v4719 = vpop.f32.mrb[0].mxu0
        %v4720 = vadd.f32 %v4667, %v4719
        %v4721 = vpop.f32.mrb[0].mxu0
        %v4722 = vadd.f32 %v4669, %v4721
        %4723 = vdwg.mxu0
        %4724 = vmatprep.subr.bf16.mxu0 %v3553
        %4725 = vmatpush1.bf16.msra.mxu0 %v3552
        %4726 = vmatprep.subr.bf16.mxu0 %v3558
        %4727 = vmatpush1.bf16.msra.mxu0 %v3557
        %4728 = vmatprep.subr.bf16.mxu0 %v3563
        %4729 = vmatpush1.bf16.msra.mxu0 %v3562
        %4730 = vmatprep.subr.bf16.mxu0 %v3568
        %4731 = vmatpush1.bf16.msra.mxu0 %v3567
        %4732 = vmatprep.subr.bf16.mxu0 %v3573
        %4733 = vmatpush1.bf16.msra.mxu0 %v3572
        %4734 = vmatprep.subr.bf16.mxu0 %v3578
        %4735 = vmatpush1.bf16.msra.mxu0 %v3577
        %4736 = vmatprep.subr.bf16.mxu0 %v3583
        %4737 = vmatpush1.bf16.msra.mxu0 %v3582
        %4738 = vmatprep.subr.bf16.mxu0 %v3588
        %4739 = vmatpush1.bf16.msra.mxu0 %v3587
        %4740 = vmatprep.subr.bf16.mxu0 %v3593
        %4741 = vmatpush1.bf16.msra.mxu0 %v3592
        %4742 = vmatprep.subr.bf16.mxu0 %v3598
        %4743 = vmatpush1.bf16.msra.mxu0 %v3597
        %4744 = vmatprep.subr.bf16.mxu0 %v3603
        %4745 = vmatpush1.bf16.msra.mxu0 %v3602
        %4746 = vmatprep.subr.bf16.mxu0 %v3608
        %4747 = vmatpush1.bf16.msra.mxu0 %v3607
        %4748 = vmatprep.subr.bf16.mxu0 %v3613
        %4749 = vmatpush1.bf16.msra.mxu0 %v3612
        %4750 = vmatprep.subr.bf16.mxu0 %v3618
        %4751 = vmatpush1.bf16.msra.mxu0 %v3617
        %4752 = vmatprep.subr.bf16.mxu0 %v3623
        %4753 = vmatpush1.bf16.msra.mxu0 %v3622
        %4754 = vmatprep.subr.bf16.mxu0 %v3628
        %4755 = vmatpush1.bf16.msra.mxu0 %v3627
        %4756 = vmatprep.mubr.bf16.mxu0 %v1129
        %4757 = vmatmul.mubr.bf16.gmra.mrb[0].mxu0 %v1128
        %v4758 = vpop.f32.mrb[0].mxu0
        %v4759 = vadd.f32 %v4706, %v4758
        %v4760 = vpop.f32.mrb[0].mxu0
        %v4761 = vadd.f32 %v4708, %v4760
        %v4762 = vpop.f32.mrb[0].mxu0
        %v4763 = vadd.f32 %v4710, %v4762
        %v4764 = vpop.f32.mrb[0].mxu0
        %v4765 = vadd.f32 %v4712, %v4764
        %4766 = vmatprep.mubr.bf16.mxu0 %v1145
        %4767 = vmatmul.mubr.bf16.gmra.mrb[0].mxu0 %v1144
        %v4768 = vpop.f32.mrb[0].mxu0
        %v4769 = vadd.f32 %v4716, %v4768
        %v4770 = vpop.f32.mrb[0].mxu0
        %v4771 = vadd.f32 %v4718, %v4770
        %v4772 = vpop.f32.mrb[0].mxu0
        %v4773 = vadd.f32 %v4720, %v4772
        %v4774 = vpop.f32.mrb[0].mxu0
        %v4775 = vadd.f32 %v4722, %v4774
        %4776 = vdwg.mxu0
        %4777 = vmatprep.subr.bf16.mxu0 %v3633
        %4778 = vmatpush1.bf16.msra.mxu0 %v3632
        %4779 = vmatprep.subr.bf16.mxu0 %v3638
        %4780 = vmatpush1.bf16.msra.mxu0 %v3637
        %4781 = vmatprep.subr.bf16.mxu0 %v3643
        %4782 = vmatpush1.bf16.msra.mxu0 %v3642
        %4783 = vmatprep.subr.bf16.mxu0 %v3648
        %4784 = vmatpush1.bf16.msra.mxu0 %v3647
        %4785 = vmatprep.subr.bf16.mxu0 %v3653
        %4786 = vmatpush1.bf16.msra.mxu0 %v3652
        %4787 = vmatprep.subr.bf16.mxu0 %v3658
        %4788 = vmatpush1.bf16.msra.mxu0 %v3657
        %4789 = vmatprep.subr.bf16.mxu0 %v3663
        %4790 = vmatpush1.bf16.msra.mxu0 %v3662
        %4791 = vmatprep.subr.bf16.mxu0 %v3668
        %4792 = vmatpush1.bf16.msra.mxu0 %v3667
        %4793 = vmatprep.subr.bf16.mxu0 %v3673
        %4794 = vmatpush1.bf16.msra.mxu0 %v3672
        %4795 = vmatprep.subr.bf16.mxu0 %v3678
        %4796 = vmatpush1.bf16.msra.mxu0 %v3677
        %4797 = vmatprep.subr.bf16.mxu0 %v3683
        %4798 = vmatpush1.bf16.msra.mxu0 %v3682
        %4799 = vmatprep.subr.bf16.mxu0 %v3688
        %4800 = vmatpush1.bf16.msra.mxu0 %v3687
        %4801 = vmatprep.subr.bf16.mxu0 %v3693
        %4802 = vmatpush1.bf16.msra.mxu0 %v3692
        %4803 = vmatprep.subr.bf16.mxu0 %v3698
        %4804 = vmatpush1.bf16.msra.mxu0 %v3697
        %4805 = vmatprep.subr.bf16.mxu0 %v3703
        %4806 = vmatpush1.bf16.msra.mxu0 %v3702
        %4807 = vmatprep.subr.bf16.mxu0 %v3708
        %4808 = vmatpush1.bf16.msra.mxu0 %v3707
        %4809 = vmatprep.mubr.bf16.mxu0 %v1131
        %4810 = vmatmul.mubr.bf16.gmra.mrb[0].mxu0 %v1130
        %v4811 = vpop.f32.mrb[0].mxu0
        %v4812 = vadd.f32 %v4759, %v4811
        %v4813 = vpop.f32.mrb[0].mxu0
        %v4814 = vadd.f32 %v4761, %v4813
        %v4815 = vpop.f32.mrb[0].mxu0
        %v4816 = vadd.f32 %v4763, %v4815
        %v4817 = vpop.f32.mrb[0].mxu0
        %v4818 = vadd.f32 %v4765, %v4817
        %4819 = vmatprep.mubr.bf16.mxu0 %v1147
        %4820 = vmatmul.mubr.bf16.gmra.mrb[0].mxu0 %v1146
        %v4821 = vpop.f32.mrb[0].mxu0
        %v4822 = vadd.f32 %v4769, %v4821
        %v4823 = vpop.f32.mrb[0].mxu0
        %v4824 = vadd.f32 %v4771, %v4823
        %v4825 = vpop.f32.mrb[0].mxu0
        %v4826 = vadd.f32 %v4773, %v4825
        %v4827 = vpop.f32.mrb[0].mxu0
        %v4828 = vadd.f32 %v4775, %v4827
        %4829 = vdwg.mxu0
        %4830 = vmatprep.subr.bf16.mxu0 %v3713
        %4831 = vmatpush1.bf16.msra.mxu0 %v3712
        %4832 = vmatprep.subr.bf16.mxu0 %v3718
        %4833 = vmatpush1.bf16.msra.mxu0 %v3717
        %4834 = vmatprep.subr.bf16.mxu0 %v3723
        %4835 = vmatpush1.bf16.msra.mxu0 %v3722
        %4836 = vmatprep.subr.bf16.mxu0 %v3728
        %4837 = vmatpush1.bf16.msra.mxu0 %v3727
        %4838 = vmatprep.subr.bf16.mxu0 %v3733
        %4839 = vmatpush1.bf16.msra.mxu0 %v3732
        %4840 = vmatprep.subr.bf16.mxu0 %v3738
        %4841 = vmatpush1.bf16.msra.mxu0 %v3737
        %4842 = vmatprep.subr.bf16.mxu0 %v3743
        %4843 = vmatpush1.bf16.msra.mxu0 %v3742
        %4844 = vmatprep.subr.bf16.mxu0 %v3748
        %4845 = vmatpush1.bf16.msra.mxu0 %v3747
        %4846 = vmatprep.subr.bf16.mxu0 %v3753
        %4847 = vmatpush1.bf16.msra.mxu0 %v3752
        %4848 = vmatprep.subr.bf16.mxu0 %v3758
        %4849 = vmatpush1.bf16.msra.mxu0 %v3757
        %4850 = vmatprep.subr.bf16.mxu0 %v3763
        %4851 = vmatpush1.bf16.msra.mxu0 %v3762
        %4852 = vmatprep.subr.bf16.mxu0 %v3768
        %4853 = vmatpush1.bf16.msra.mxu0 %v3767
        %4854 = vmatprep.subr.bf16.mxu0 %v3773
        %4855 = vmatpush1.bf16.msra.mxu0 %v3772
        %4856 = vmatprep.subr.bf16.mxu0 %v3778
        %4857 = vmatpush1.bf16.msra.mxu0 %v3777
        %4858 = vmatprep.subr.bf16.mxu0 %v3783
        %4859 = vmatpush1.bf16.msra.mxu0 %v3782
        %4860 = vmatprep.subr.bf16.mxu0 %v3788
        %4861 = vmatpush1.bf16.msra.mxu0 %v3787
        %4862 = vmatprep.mubr.bf16.mxu0 %v1133
        %4863 = vmatmul.mubr.bf16.gmra.mrb[0].mxu0 %v1132
        %v4864 = vpop.f32.mrb[0].mxu0
        %v4865 = vadd.f32 %v4812, %v4864
        %v4866 = vpop.f32.mrb[0].mxu0
        %v4867 = vadd.f32 %v4814, %v4866
        %v4868 = vpop.f32.mrb[0].mxu0
        %v4869 = vadd.f32 %v4816, %v4868
        %v4870 = vpop.f32.mrb[0].mxu0
        %v4871 = vadd.f32 %v4818, %v4870
        %4872 = vmatprep.mubr.bf16.mxu0 %v1149
        %4873 = vmatmul.mubr.bf16.gmra.mrb[0].mxu0 %v1148
        %v4874 = vpop.f32.mrb[0].mxu0
        %v4875 = vadd.f32 %v4822, %v4874
        %v4876 = vpop.f32.mrb[0].mxu0
        %v4877 = vadd.f32 %v4824, %v4876
        %v4878 = vpop.f32.mrb[0].mxu0
        %v4879 = vadd.f32 %v4826, %v4878
        %v4880 = vpop.f32.mrb[0].mxu0
        %v4881 = vadd.f32 %v4828, %v4880
        %4882 = vdwg.mxu0
        %4883 = vmatprep.subr.bf16.mxu0 %v3793
        %4884 = vmatpush1.bf16.msra.mxu0 %v3792
        %4885 = vmatprep.subr.bf16.mxu0 %v3798
        %4886 = vmatpush1.bf16.msra.mxu0 %v3797
        %4887 = vmatprep.subr.bf16.mxu0 %v3803
        %4888 = vmatpush1.bf16.msra.mxu0 %v3802
        %4889 = vmatprep.subr.bf16.mxu0 %v3808
        %4890 = vmatpush1.bf16.msra.mxu0 %v3807
        %4891 = vmatprep.subr.bf16.mxu0 %v3813
        %4892 = vmatpush1.bf16.msra.mxu0 %v3812
        %4893 = vmatprep.subr.bf16.mxu0 %v3818
        %4894 = vmatpush1.bf16.msra.mxu0 %v3817
        %4895 = vmatprep.subr.bf16.mxu0 %v3823
        %4896 = vmatpush1.bf16.msra.mxu0 %v3822
        %4897 = vmatprep.subr.bf16.mxu0 %v3828
        %4898 = vmatpush1.bf16.msra.mxu0 %v3827
        %4899 = vmatprep.subr.bf16.mxu0 %v3833
        %4900 = vmatpush1.bf16.msra.mxu0 %v3832
        %4901 = vmatprep.subr.bf16.mxu0 %v3838
        %4902 = vmatpush1.bf16.msra.mxu0 %v3837
        %4903 = vmatprep.subr.bf16.mxu0 %v3843
        %4904 = vmatpush1.bf16.msra.mxu0 %v3842
        %4905 = vmatprep.subr.bf16.mxu0 %v3848
        %4906 = vmatpush1.bf16.msra.mxu0 %v3847
        %4907 = vmatprep.subr.bf16.mxu0 %v3853
        %4908 = vmatpush1.bf16.msra.mxu0 %v3852
        %4909 = vmatprep.subr.bf16.mxu0 %v3858
        %4910 = vmatpush1.bf16.msra.mxu0 %v3857
        %4911 = vmatprep.subr.bf16.mxu0 %v3863
        %4912 = vmatpush1.bf16.msra.mxu0 %v3862
        %4913 = vmatprep.subr.bf16.mxu0 %v3868
        %4914 = vmatpush1.bf16.msra.mxu0 %v3867
        %4915 = vmatprep.mubr.bf16.mxu0 %v1135
        %4916 = vmatmul.mubr.bf16.gmra.mrb[0].mxu0 %v1134
        %v4917 = vpop.f32.mrb[0].mxu0
        %v4918 = vadd.f32 %v4865, %v4917
        %v4919 = vpop.f32.mrb[0].mxu0
        %v4920 = vadd.f32 %v4867, %v4919
        %v4921 = vpop.f32.mrb[0].mxu0
        %v4922 = vadd.f32 %v4869, %v4921
        %v4923 = vpop.f32.mrb[0].mxu0
        %v4924 = vadd.f32 %v4871, %v4923
        %4925 = vmatprep.mubr.bf16.mxu0 %v1151
        %4926 = vmatmul.mubr.bf16.gmra.mrb[0].mxu0 %v1150
        %v4927 = vpop.f32.mrb[0].mxu0
        %v4928 = vadd.f32 %v4875, %v4927
        %v4929 = vpop.f32.mrb[0].mxu0
        %v4930 = vadd.f32 %v4877, %v4929
        %v4931 = vpop.f32.mrb[0].mxu0
        %v4932 = vadd.f32 %v4879, %v4931
        %v4933 = vpop.f32.mrb[0].mxu0
        %v4934 = vadd.f32 %v4881, %v4933
        %4935 = vdwg.mxu0
        %4936 = vmatprep.subr.bf16.mxu0 %v3235
        %4937 = vmatpush1.bf16.msra.mxu0 %v3234
        %4938 = vmatprep.subr.bf16.mxu0 %v3240
        %4939 = vmatpush1.bf16.msra.mxu0 %v3239
        %4940 = vmatprep.subr.bf16.mxu0 %v3245
        %4941 = vmatpush1.bf16.msra.mxu0 %v3244
        %4942 = vmatprep.subr.bf16.mxu0 %v3250
        %4943 = vmatpush1.bf16.msra.mxu0 %v3249
        %4944 = vmatprep.subr.bf16.mxu0 %v3255
        %4945 = vmatpush1.bf16.msra.mxu0 %v3254
        %4946 = vmatprep.subr.bf16.mxu0 %v3260
        %4947 = vmatpush1.bf16.msra.mxu0 %v3259
        %4948 = vmatprep.subr.bf16.mxu0 %v3265
        %4949 = vmatpush1.bf16.msra.mxu0 %v3264
        %4950 = vmatprep.subr.bf16.mxu0 %v3270
        %4951 = vmatpush1.bf16.msra.mxu0 %v3269
        %4952 = vmatprep.subr.bf16.mxu0 %v3275
        %4953 = vmatpush1.bf16.msra.mxu0 %v3274
        %4954 = vmatprep.subr.bf16.mxu0 %v3280
        %4955 = vmatpush1.bf16.msra.mxu0 %v3279
        %4956 = vmatprep.subr.bf16.mxu0 %v3285
        %4957 = vmatpush1.bf16.msra.mxu0 %v3284
        %4958 = vmatprep.subr.bf16.mxu0 %v3290
        %4959 = vmatpush1.bf16.msra.mxu0 %v3289
        %4960 = vmatprep.subr.bf16.mxu0 %v3295
        %4961 = vmatpush1.bf16.msra.mxu0 %v3294
        %4962 = vmatprep.subr.bf16.mxu0 %v3300
        %4963 = vmatpush1.bf16.msra.mxu0 %v3299
        %4964 = vmatprep.subr.bf16.mxu0 %v3305
        %4965 = vmatpush1.bf16.msra.mxu0 %v3304
        %4966 = vmatprep.subr.bf16.mxu0 %v3310
        %4967 = vmatpush1.bf16.msra.mxu0 %v3309
        %4968 = vmatprep.mubr.bf16.mxu0 %v1121
        %4969 = vmatmul.mubr.bf16.gmra.mrb[0].mxu0 %v1120
        %v4970 = vpop.f32.mrb[0].mxu0
        %v4971 = vadd.f32 0.0, %v4970
        %v4972 = vpop.f32.mrb[0].mxu0
        %v4973 = vadd.f32 0.0, %v4972
        %v4974 = vpop.f32.mrb[0].mxu0
        %v4975 = vadd.f32 0.0, %v4974
        %v4976 = vpop.f32.mrb[0].mxu0
        %v4977 = vadd.f32 0.0, %v4976
        %4978 = vmatprep.mubr.bf16.mxu0 %v1137
        %4979 = vmatmul.mubr.bf16.gmra.mrb[0].mxu0 %v1136
        %v4980 = vpop.f32.mrb[0].mxu0
        %v4981 = vadd.f32 0.0, %v4980
        %v4982 = vpop.f32.mrb[0].mxu0
        %v4983 = vadd.f32 0.0, %v4982
        %v4984 = vpop.f32.mrb[0].mxu0
        %v4985 = vadd.f32 0.0, %v4984
        %v4986 = vpop.f32.mrb[0].mxu0
        %v4987 = vadd.f32 0.0, %v4986
        %4988 = vdwg.mxu0
        %4989 = vmatprep.subr.bf16.mxu0 %v3315
        %4990 = vmatpush1.bf16.msra.mxu0 %v3314
        %4991 = vmatprep.subr.bf16.mxu0 %v3320
        %4992 = vmatpush1.bf16.msra.mxu0 %v3319
        %4993 = vmatprep.subr.bf16.mxu0 %v3325
        %4994 = vmatpush1.bf16.msra.mxu0 %v3324
        %4995 = vmatprep.subr.bf16.mxu0 %v3330
        %4996 = vmatpush1.bf16.msra.mxu0 %v3329
        %4997 = vmatprep.subr.bf16.mxu0 %v3335
        %4998 = vmatpush1.bf16.msra.mxu0 %v3334
        %4999 = vmatprep.subr.bf16.mxu0 %v3340
        %5000 = vmatpush1.bf16.msra.mxu0 %v3339
        %5001 = vmatprep.subr.bf16.mxu0 %v3345
        %5002 = vmatpush1.bf16.msra.mxu0 %v3344
        %5003 = vmatprep.subr.bf16.mxu0 %v3350
        %5004 = vmatpush1.bf16.msra.mxu0 %v3349
        %5005 = vmatprep.subr.bf16.mxu0 %v3355
        %5006 = vmatpush1.bf16.msra.mxu0 %v3354
        %5007 = vmatprep.subr.bf16.mxu0 %v3360
        %5008 = vmatpush1.bf16.msra.mxu0 %v3359
        %5009 = vmatprep.subr.bf16.mxu0 %v3365
        %5010 = vmatpush1.bf16.msra.mxu0 %v3364
        %5011 = vmatprep.subr.bf16.mxu0 %v3370
        %5012 = vmatpush1.bf16.msra.mxu0 %v3369
        %5013 = vmatprep.subr.bf16.mxu0 %v3375
        %5014 = vmatpush1.bf16.msra.mxu0 %v3374
        %5015 = vmatprep.subr.bf16.mxu0 %v3380
        %5016 = vmatpush1.bf16.msra.mxu0 %v3379
        %5017 = vmatprep.subr.bf16.mxu0 %v3385
        %5018 = vmatpush1.bf16.msra.mxu0 %v3384
        %5019 = vmatprep.subr.bf16.mxu0 %v3390
        %5020 = vmatpush1.bf16.msra.mxu0 %v3389
        %5021 = vmatprep.mubr.bf16.mxu0 %v1123
        %5022 = vmatmul.mubr.bf16.gmra.mrb[0].mxu0 %v1122
        %v5023 = vpop.f32.mrb[0].mxu0
        %v5024 = vadd.f32 %v4971, %v5023
        %v5025 = vpop.f32.mrb[0].mxu0
        %v5026 = vadd.f32 %v4973, %v5025
        %v5027 = vpop.f32.mrb[0].mxu0
        %v5028 = vadd.f32 %v4975, %v5027
        %v5029 = vpop.f32.mrb[0].mxu0
        %v5030 = vadd.f32 %v4977, %v5029
        %5031 = vmatprep.mubr.bf16.mxu0 %v1139
        %5032 = vmatmul.mubr.bf16.gmra.mrb[0].mxu0 %v1138
        %v5033 = vpop.f32.mrb[0].mxu0
        %v5034 = vadd.f32 %v4981, %v5033
        %v5035 = vpop.f32.mrb[0].mxu0
        %v5036 = vadd.f32 %v4983, %v5035
        %v5037 = vpop.f32.mrb[0].mxu0
        %v5038 = vadd.f32 %v4985, %v5037
        %v5039 = vpop.f32.mrb[0].mxu0
        %v5040 = vadd.f32 %v4987, %v5039
        %5041 = vdwg.mxu0
        %5042 = vmatprep.subr.bf16.mxu0 %v3395
        %5043 = vmatpush1.bf16.msra.mxu0 %v3394
        %5044 = vmatprep.subr.bf16.mxu0 %v3400
        %5045 = vmatpush1.bf16.msra.mxu0 %v3399
        %5046 = vmatprep.subr.bf16.mxu0 %v3405
        %5047 = vmatpush1.bf16.msra.mxu0 %v3404
        %5048 = vmatprep.subr.bf16.mxu0 %v3410
        %5049 = vmatpush1.bf16.msra.mxu0 %v3409
        %5050 = vmatprep.subr.bf16.mxu0 %v3415
        %5051 = vmatpush1.bf16.msra.mxu0 %v3414
        %5052 = vmatprep.subr.bf16.mxu0 %v3420
        %5053 = vmatpush1.bf16.msra.mxu0 %v3419
        %5054 = vmatprep.subr.bf16.mxu0 %v3425
        %5055 = vmatpush1.bf16.msra.mxu0 %v3424
        %5056 = vmatprep.subr.bf16.mxu0 %v3430
        %5057 = vmatpush1.bf16.msra.mxu0 %v3429
        %5058 = vmatprep.subr.bf16.mxu0 %v3435
        %5059 = vmatpush1.bf16.msra.mxu0 %v3434
        %5060 = vmatprep.subr.bf16.mxu0 %v3440
        %5061 = vmatpush1.bf16.msra.mxu0 %v3439
        %5062 = vmatprep.subr.bf16.mxu0 %v3445
        %5063 = vmatpush1.bf16.msra.mxu0 %v3444
        %5064 = vmatprep.subr.bf16.mxu0 %v3450
        %5065 = vmatpush1.bf16.msra.mxu0 %v3449
        %5066 = vmatprep.subr.bf16.mxu0 %v3455
        %5067 = vmatpush1.bf16.msra.mxu0 %v3454
        %5068 = vmatprep.subr.bf16.mxu0 %v3460
        %5069 = vmatpush1.bf16.msra.mxu0 %v3459
        %5070 = vmatprep.subr.bf16.mxu0 %v3465
        %5071 = vmatpush1.bf16.msra.mxu0 %v3464
        %5072 = vmatprep.subr.bf16.mxu0 %v3470
        %5073 = vmatpush1.bf16.msra.mxu0 %v3469
        %5074 = vmatprep.mubr.bf16.mxu0 %v1125
        %5075 = vmatmul.mubr.bf16.gmra.mrb[0].mxu0 %v1124
        %v5076 = vpop.f32.mrb[0].mxu0
        %v5077 = vadd.f32 %v5024, %v5076
        %v5078 = vpop.f32.mrb[0].mxu0
        %v5079 = vadd.f32 %v5026, %v5078
        %v5080 = vpop.f32.mrb[0].mxu0
        %v5081 = vadd.f32 %v5028, %v5080
        %v5082 = vpop.f32.mrb[0].mxu0
        %v5083 = vadd.f32 %v5030, %v5082
        %5084 = vmatprep.mubr.bf16.mxu0 %v1141
        %5085 = vmatmul.mubr.bf16.gmra.mrb[0].mxu0 %v1140
        %v5086 = vpop.f32.mrb[0].mxu0
        %v5087 = vadd.f32 %v5034, %v5086
        %v5088 = vpop.f32.mrb[0].mxu0
        %v5089 = vadd.f32 %v5036, %v5088
        %v5090 = vpop.f32.mrb[0].mxu0
        %v5091 = vadd.f32 %v5038, %v5090
        %v5092 = vpop.f32.mrb[0].mxu0
        %v5093 = vadd.f32 %v5040, %v5092
        %5094 = vdwg.mxu0
        %5095 = vmatprep.subr.bf16.mxu0 %v3475
        %5096 = vmatpush1.bf16.msra.mxu0 %v3474
        %5097 = vmatprep.subr.bf16.mxu0 %v3480
        %5098 = vmatpush1.bf16.msra.mxu0 %v3479
        %5099 = vmatprep.subr.bf16.mxu0 %v3485
        %5100 = vmatpush1.bf16.msra.mxu0 %v3484
        %5101 = vmatprep.subr.bf16.mxu0 %v3490
        %5102 = vmatpush1.bf16.msra.mxu0 %v3489
        %5103 = vmatprep.subr.bf16.mxu0 %v3495
        %5104 = vmatpush1.bf16.msra.mxu0 %v3494
        %5105 = vmatprep.subr.bf16.mxu0 %v3500
        %5106 = vmatpush1.bf16.msra.mxu0 %v3499
        %5107 = vmatprep.subr.bf16.mxu0 %v3505
        %5108 = vmatpush1.bf16.msra.mxu0 %v3504
        %5109 = vmatprep.subr.bf16.mxu0 %v3510
        %5110 = vmatpush1.bf16.msra.mxu0 %v3509
        %5111 = vmatprep.subr.bf16.mxu0 %v3515
        %5112 = vmatpush1.bf16.msra.mxu0 %v3514
        %5113 = vmatprep.subr.bf16.mxu0 %v3520
        %5114 = vmatpush1.bf16.msra.mxu0 %v3519
        %5115 = vmatprep.subr.bf16.mxu0 %v3525
        %5116 = vmatpush1.bf16.msra.mxu0 %v3524
        %5117 = vmatprep.subr.bf16.mxu0 %v3530
        %5118 = vmatpush1.bf16.msra.mxu0 %v3529
        %5119 = vmatprep.subr.bf16.mxu0 %v3535
        %5120 = vmatpush1.bf16.msra.mxu0 %v3534
        %5121 = vmatprep.subr.bf16.mxu0 %v3540
        %5122 = vmatpush1.bf16.msra.mxu0 %v3539
        %5123 = vmatprep.subr.bf16.mxu0 %v3545
        %5124 = vmatpush1.bf16.msra.mxu0 %v3544
        %5125 = vmatprep.subr.bf16.mxu0 %v3550
        %5126 = vmatpush1.bf16.msra.mxu0 %v3549
        %5127 = vmatprep.mubr.bf16.mxu0 %v1127
        %5128 = vmatmul.mubr.bf16.gmra.mrb[0].mxu0 %v1126
        %v5129 = vpop.f32.mrb[0].mxu0
        %v5130 = vadd.f32 %v5077, %v5129
        %v5131 = vpop.f32.mrb[0].mxu0
        %v5132 = vadd.f32 %v5079, %v5131
        %v5133 = vpop.f32.mrb[0].mxu0
        %v5134 = vadd.f32 %v5081, %v5133
        %v5135 = vpop.f32.mrb[0].mxu0
        %v5136 = vadd.f32 %v5083, %v5135
        %5137 = vmatprep.mubr.bf16.mxu0 %v1143
        %5138 = vmatmul.mubr.bf16.gmra.mrb[0].mxu0 %v1142
        %v5139 = vpop.f32.mrb[0].mxu0
        %v5140 = vadd.f32 %v5087, %v5139
        %v5141 = vpop.f32.mrb[0].mxu0
        %v5142 = vadd.f32 %v5089, %v5141
        %v5143 = vpop.f32.mrb[0].mxu0
        %v5144 = vadd.f32 %v5091, %v5143
        %v5145 = vpop.f32.mrb[0].mxu0
        %v5146 = vadd.f32 %v5093, %v5145
        %5147 = vdwg.mxu0
        %5148 = vmatprep.subr.bf16.mxu0 %v3555
        %5149 = vmatpush1.bf16.msra.mxu0 %v3554
        %5150 = vmatprep.subr.bf16.mxu0 %v3560
        %5151 = vmatpush1.bf16.msra.mxu0 %v3559
        %5152 = vmatprep.subr.bf16.mxu0 %v3565
        %5153 = vmatpush1.bf16.msra.mxu0 %v3564
        %5154 = vmatprep.subr.bf16.mxu0 %v3570
        %5155 = vmatpush1.bf16.msra.mxu0 %v3569
        %5156 = vmatprep.subr.bf16.mxu0 %v3575
        %5157 = vmatpush1.bf16.msra.mxu0 %v3574
        %5158 = vmatprep.subr.bf16.mxu0 %v3580
        %5159 = vmatpush1.bf16.msra.mxu0 %v3579
        %5160 = vmatprep.subr.bf16.mxu0 %v3585
        %5161 = vmatpush1.bf16.msra.mxu0 %v3584
        %5162 = vmatprep.subr.bf16.mxu0 %v3590
        %5163 = vmatpush1.bf16.msra.mxu0 %v3589
        %5164 = vmatprep.subr.bf16.mxu0 %v3595
        %5165 = vmatpush1.bf16.msra.mxu0 %v3594
        %5166 = vmatprep.subr.bf16.mxu0 %v3600
        %5167 = vmatpush1.bf16.msra.mxu0 %v3599
        %5168 = vmatprep.subr.bf16.mxu0 %v3605
        %5169 = vmatpush1.bf16.msra.mxu0 %v3604
        %5170 = vmatprep.subr.bf16.mxu0 %v3610
        %5171 = vmatpush1.bf16.msra.mxu0 %v3609
        %5172 = vmatprep.subr.bf16.mxu0 %v3615
        %5173 = vmatpush1.bf16.msra.mxu0 %v3614
        %5174 = vmatprep.subr.bf16.mxu0 %v3620
        %5175 = vmatpush1.bf16.msra.mxu0 %v3619
        %5176 = vmatprep.subr.bf16.mxu0 %v3625
        %5177 = vmatpush1.bf16.msra.mxu0 %v3624
        %5178 = vmatprep.subr.bf16.mxu0 %v3630
        %5179 = vmatpush1.bf16.msra.mxu0 %v3629
        %5180 = vmatprep.mubr.bf16.mxu0 %v1129
        %5181 = vmatmul.mubr.bf16.gmra.mrb[0].mxu0 %v1128
        %v5182 = vpop.f32.mrb[0].mxu0
        %v5183 = vadd.f32 %v5130, %v5182
        %v5184 = vpop.f32.mrb[0].mxu0
        %v5185 = vadd.f32 %v5132, %v5184
        %v5186 = vpop.f32.mrb[0].mxu0
        %v5187 = vadd.f32 %v5134, %v5186
        %v5188 = vpop.f32.mrb[0].mxu0
        %v5189 = vadd.f32 %v5136, %v5188
        %5190 = vmatprep.mubr.bf16.mxu0 %v1145
        %5191 = vmatmul.mubr.bf16.gmra.mrb[0].mxu0 %v1144
        %v5192 = vpop.f32.mrb[0].mxu0
        %v5193 = vadd.f32 %v5140, %v5192
        %v5194 = vpop.f32.mrb[0].mxu0
        %v5195 = vadd.f32 %v5142, %v5194
        %v5196 = vpop.f32.mrb[0].mxu0
        %v5197 = vadd.f32 %v5144, %v5196
        %v5198 = vpop.f32.mrb[0].mxu0
        %v5199 = vadd.f32 %v5146, %v5198
        %5200 = vdwg.mxu0
        %5201 = vmatprep.subr.bf16.mxu0 %v3635
        %5202 = vmatpush1.bf16.msra.mxu0 %v3634
        %5203 = vmatprep.subr.bf16.mxu0 %v3640
        %5204 = vmatpush1.bf16.msra.mxu0 %v3639
        %5205 = vmatprep.subr.bf16.mxu0 %v3645
        %5206 = vmatpush1.bf16.msra.mxu0 %v3644
        %5207 = vmatprep.subr.bf16.mxu0 %v3650
        %5208 = vmatpush1.bf16.msra.mxu0 %v3649
        %5209 = vmatprep.subr.bf16.mxu0 %v3655
        %5210 = vmatpush1.bf16.msra.mxu0 %v3654
        %5211 = vmatprep.subr.bf16.mxu0 %v3660
        %5212 = vmatpush1.bf16.msra.mxu0 %v3659
        %5213 = vmatprep.subr.bf16.mxu0 %v3665
        %5214 = vmatpush1.bf16.msra.mxu0 %v3664
        %5215 = vmatprep.subr.bf16.mxu0 %v3670
        %5216 = vmatpush1.bf16.msra.mxu0 %v3669
        %5217 = vmatprep.subr.bf16.mxu0 %v3675
        %5218 = vmatpush1.bf16.msra.mxu0 %v3674
        %5219 = vmatprep.subr.bf16.mxu0 %v3680
        %5220 = vmatpush1.bf16.msra.mxu0 %v3679
        %5221 = vmatprep.subr.bf16.mxu0 %v3685
        %5222 = vmatpush1.bf16.msra.mxu0 %v3684
        %5223 = vmatprep.subr.bf16.mxu0 %v3690
        %5224 = vmatpush1.bf16.msra.mxu0 %v3689
        %5225 = vmatprep.subr.bf16.mxu0 %v3695
        %5226 = vmatpush1.bf16.msra.mxu0 %v3694
        %5227 = vmatprep.subr.bf16.mxu0 %v3700
        %5228 = vmatpush1.bf16.msra.mxu0 %v3699
        %5229 = vmatprep.subr.bf16.mxu0 %v3705
        %5230 = vmatpush1.bf16.msra.mxu0 %v3704
        %5231 = vmatprep.subr.bf16.mxu0 %v3710
        %5232 = vmatpush1.bf16.msra.mxu0 %v3709
        %5233 = vmatprep.mubr.bf16.mxu0 %v1131
        %5234 = vmatmul.mubr.bf16.gmra.mrb[0].mxu0 %v1130
        %v5235 = vpop.f32.mrb[0].mxu0
        %v5236 = vadd.f32 %v5183, %v5235
        %v5237 = vpop.f32.mrb[0].mxu0
        %v5238 = vadd.f32 %v5185, %v5237
        %v5239 = vpop.f32.mrb[0].mxu0
        %v5240 = vadd.f32 %v5187, %v5239
        %v5241 = vpop.f32.mrb[0].mxu0
        %v5242 = vadd.f32 %v5189, %v5241
        %5243 = vmatprep.mubr.bf16.mxu0 %v1147
        %5244 = vmatmul.mubr.bf16.gmra.mrb[0].mxu0 %v1146
        %v5245 = vpop.f32.mrb[0].mxu0
        %v5246 = vadd.f32 %v5193, %v5245
        %v5247 = vpop.f32.mrb[0].mxu0
        %v5248 = vadd.f32 %v5195, %v5247
        %v5249 = vpop.f32.mrb[0].mxu0
        %v5250 = vadd.f32 %v5197, %v5249
        %v5251 = vpop.f32.mrb[0].mxu0
        %v5252 = vadd.f32 %v5199, %v5251
        %5253 = vdwg.mxu0
        %5254 = vmatprep.subr.bf16.mxu0 %v3715
        %5255 = vmatpush1.bf16.msra.mxu0 %v3714
        %5256 = vmatprep.subr.bf16.mxu0 %v3720
        %5257 = vmatpush1.bf16.msra.mxu0 %v3719
        %5258 = vmatprep.subr.bf16.mxu0 %v3725
        %5259 = vmatpush1.bf16.msra.mxu0 %v3724
        %5260 = vmatprep.subr.bf16.mxu0 %v3730
        %5261 = vmatpush1.bf16.msra.mxu0 %v3729
        %5262 = vmatprep.subr.bf16.mxu0 %v3735
        %5263 = vmatpush1.bf16.msra.mxu0 %v3734
        %5264 = vmatprep.subr.bf16.mxu0 %v3740
        %5265 = vmatpush1.bf16.msra.mxu0 %v3739
        %5266 = vmatprep.subr.bf16.mxu0 %v3745
        %5267 = vmatpush1.bf16.msra.mxu0 %v3744
        %5268 = vmatprep.subr.bf16.mxu0 %v3750
        %5269 = vmatpush1.bf16.msra.mxu0 %v3749
        %5270 = vmatprep.subr.bf16.mxu0 %v3755
        %5271 = vmatpush1.bf16.msra.mxu0 %v3754
        %5272 = vmatprep.subr.bf16.mxu0 %v3760
        %5273 = vmatpush1.bf16.msra.mxu0 %v3759
        %5274 = vmatprep.subr.bf16.mxu0 %v3765
        %5275 = vmatpush1.bf16.msra.mxu0 %v3764
        %5276 = vmatprep.subr.bf16.mxu0 %v3770
        %5277 = vmatpush1.bf16.msra.mxu0 %v3769
        %5278 = vmatprep.subr.bf16.mxu0 %v3775
        %5279 = vmatpush1.bf16.msra.mxu0 %v3774
        %5280 = vmatprep.subr.bf16.mxu0 %v3780
        %5281 = vmatpush1.bf16.msra.mxu0 %v3779
        %5282 = vmatprep.subr.bf16.mxu0 %v3785
        %5283 = vmatpush1.bf16.msra.mxu0 %v3784
        %5284 = vmatprep.subr.bf16.mxu0 %v3790
        %5285 = vmatpush1.bf16.msra.mxu0 %v3789
        %5286 = vmatprep.mubr.bf16.mxu0 %v1133
        %5287 = vmatmul.mubr.bf16.gmra.mrb[0].mxu0 %v1132
        %v5288 = vpop.f32.mrb[0].mxu0
        %v5289 = vadd.f32 %v5236, %v5288
        %v5290 = vpop.f32.mrb[0].mxu0
        %v5291 = vadd.f32 %v5238, %v5290
        %v5292 = vpop.f32.mrb[0].mxu0
        %v5293 = vadd.f32 %v5240, %v5292
        %v5294 = vpop.f32.mrb[0].mxu0
        %v5295 = vadd.f32 %v5242, %v5294
        %5296 = vmatprep.mubr.bf16.mxu0 %v1149
        %5297 = vmatmul.mubr.bf16.gmra.mrb[0].mxu0 %v1148
        %v5298 = vpop.f32.mrb[0].mxu0
        %v5299 = vadd.f32 %v5246, %v5298
        %v5300 = vpop.f32.mrb[0].mxu0
        %v5301 = vadd.f32 %v5248, %v5300
        %v5302 = vpop.f32.mrb[0].mxu0
        %v5303 = vadd.f32 %v5250, %v5302
        %v5304 = vpop.f32.mrb[0].mxu0
        %v5305 = vadd.f32 %v5252, %v5304
        %5306 = vdwg.mxu0
        %5307 = vmatprep.subr.bf16.mxu0 %v3795
        %5308 = vmatpush1.bf16.msra.mxu0 %v3794
        %5309 = vmatprep.subr.bf16.mxu0 %v3800
        %5310 = vmatpush1.bf16.msra.mxu0 %v3799
        %5311 = vmatprep.subr.bf16.mxu0 %v3805
        %5312 = vmatpush1.bf16.msra.mxu0 %v3804
        %5313 = vmatprep.subr.bf16.mxu0 %v3810
        %5314 = vmatpush1.bf16.msra.mxu0 %v3809
        %5315 = vmatprep.subr.bf16.mxu0 %v3815
        %5316 = vmatpush1.bf16.msra.mxu0 %v3814
        %5317 = vmatprep.subr.bf16.mxu0 %v3820
        %5318 = vmatpush1.bf16.msra.mxu0 %v3819
        %5319 = vmatprep.subr.bf16.mxu0 %v3825
        %5320 = vmatpush1.bf16.msra.mxu0 %v3824
        %5321 = vmatprep.subr.bf16.mxu0 %v3830
        %5322 = vmatpush1.bf16.msra.mxu0 %v3829
        %5323 = vmatprep.subr.bf16.mxu0 %v3835
        %5324 = vmatpush1.bf16.msra.mxu0 %v3834
        %5325 = vmatprep.subr.bf16.mxu0 %v3840
        %5326 = vmatpush1.bf16.msra.mxu0 %v3839
        %5327 = vmatprep.subr.bf16.mxu0 %v3845
        %5328 = vmatpush1.bf16.msra.mxu0 %v3844
        %5329 = vmatprep.subr.bf16.mxu0 %v3850
        %5330 = vmatpush1.bf16.msra.mxu0 %v3849
        %5331 = vmatprep.subr.bf16.mxu0 %v3855
        %5332 = vmatpush1.bf16.msra.mxu0 %v3854
        %5333 = vmatprep.subr.bf16.mxu0 %v3860
        %5334 = vmatpush1.bf16.msra.mxu0 %v3859
        %5335 = vmatprep.subr.bf16.mxu0 %v3865
        %5336 = vmatpush1.bf16.msra.mxu0 %v3864
        %5337 = vmatprep.subr.bf16.mxu0 %v3870
        %5338 = vmatpush1.bf16.msra.mxu0 %v3869
        %5339 = vmatprep.mubr.bf16.mxu0 %v1135
        %5340 = vmatmul.mubr.bf16.gmra.mrb[0].mxu0 %v1134
        %v5341 = vpop.f32.mrb[0].mxu0
        %v5342 = vadd.f32 %v5289, %v5341
        %v5343 = vpop.f32.mrb[0].mxu0
        %v5344 = vadd.f32 %v5291, %v5343
        %v5345 = vpop.f32.mrb[0].mxu0
        %v5346 = vadd.f32 %v5293, %v5345
        %v5347 = vpop.f32.mrb[0].mxu0
        %v5348 = vadd.f32 %v5295, %v5347
        %5349 = vmatprep.mubr.bf16.mxu0 %v1151
        %5350 = vmatmul.mubr.bf16.gmra.mrb[0].mxu0 %v1150
        %v5351 = vpop.f32.mrb[0].mxu0
        %v5352 = vadd.f32 %v5299, %v5351
        %v5353 = vpop.f32.mrb[0].mxu0
        %v5354 = vadd.f32 %v5301, %v5353
        %v5355 = vpop.f32.mrb[0].mxu0
        %v5356 = vadd.f32 %v5303, %v5355
        %v5357 = vpop.f32.mrb[0].mxu0
        %v5358 = vadd.f32 %v5305, %v5357
        %5359 = vdwg.mxu0
        %5360 = vmatprep.subr.bf16.mxu0 0
        %5361 = vmatpush1.bf16.msra.mxu0 %v3236
        %5362 = vmatprep.subr.bf16.mxu0 0
        %5363 = vmatpush1.bf16.msra.mxu0 %v3241
        %5364 = vmatprep.subr.bf16.mxu0 0
        %5365 = vmatpush1.bf16.msra.mxu0 %v3246
        %5366 = vmatprep.subr.bf16.mxu0 0
        %5367 = vmatpush1.bf16.msra.mxu0 %v3251
        %5368 = vmatprep.subr.bf16.mxu0 0
        %5369 = vmatpush1.bf16.msra.mxu0 %v3256
        %5370 = vmatprep.subr.bf16.mxu0 0
        %5371 = vmatpush1.bf16.msra.mxu0 %v3261
        %5372 = vmatprep.subr.bf16.mxu0 0
        %5373 = vmatpush1.bf16.msra.mxu0 %v3266
        %5374 = vmatprep.subr.bf16.mxu0 0
        %5375 = vmatpush1.bf16.msra.mxu0 %v3271
        %5376 = vmatprep.subr.bf16.mxu0 0
        %5377 = vmatpush1.bf16.msra.mxu0 %v3276
        %5378 = vmatprep.subr.bf16.mxu0 0
        %5379 = vmatpush1.bf16.msra.mxu0 %v3281
        %5380 = vmatprep.subr.bf16.mxu0 0
        %5381 = vmatpush1.bf16.msra.mxu0 %v3286
        %5382 = vmatprep.subr.bf16.mxu0 0
        %5383 = vmatpush1.bf16.msra.mxu0 %v3291
        %5384 = vmatprep.subr.bf16.mxu0 0
        %5385 = vmatpush1.bf16.msra.mxu0 %v3296
        %5386 = vmatprep.subr.bf16.mxu0 0
        %5387 = vmatpush1.bf16.msra.mxu0 %v3301
        %5388 = vmatprep.subr.bf16.mxu0 0
        %5389 = vmatpush1.bf16.msra.mxu0 %v3306
        %5390 = vmatprep.subr.bf16.mxu0 0
        %5391 = vmatpush1.bf16.msra.mxu0 %v3311
        %5392 = vmatprep.mubr.bf16.mxu0 %v1121
        %5393 = vmatmul.mubr.bf16.gmra.mrb[0].mxu0 %v1120
        %v5394 = vpop.f32.mrb[0].mxu0
        %v5395 = vadd.f32 0.0, %v5394
        %v5396 = vpop.f32.mrb[0].mxu0
        %v5397 = vpop.f32.mrb[0].mxu0
        %v5398 = vadd.f32 0.0, %v5397
        %v5399 = vpop.f32.mrb[0].mxu0
        %5400 = vmatprep.mubr.bf16.mxu0 %v1137
        %5401 = vmatmul.mubr.bf16.gmra.mrb[0].mxu0 %v1136
        %v5402 = vpop.f32.mrb[0].mxu0
        %v5403 = vadd.f32 0.0, %v5402
        %v5404 = vpop.f32.mrb[0].mxu0
        %v5405 = vpop.f32.mrb[0].mxu0
        %v5406 = vadd.f32 0.0, %v5405
        %v5407 = vpop.f32.mrb[0].mxu0
        %5408 = vdwg.mxu0
        %5409 = vmatprep.subr.bf16.mxu0 0
        %5410 = vmatpush1.bf16.msra.mxu0 %v3316
        %5411 = vmatprep.subr.bf16.mxu0 0
        %5412 = vmatpush1.bf16.msra.mxu0 %v3321
        %5413 = vmatprep.subr.bf16.mxu0 0
        %5414 = vmatpush1.bf16.msra.mxu0 %v3326
        %5415 = vmatprep.subr.bf16.mxu0 0
        %5416 = vmatpush1.bf16.msra.mxu0 %v3331
        %5417 = vmatprep.subr.bf16.mxu0 0
        %5418 = vmatpush1.bf16.msra.mxu0 %v3336
        %5419 = vmatprep.subr.bf16.mxu0 0
        %5420 = vmatpush1.bf16.msra.mxu0 %v3341
        %5421 = vmatprep.subr.bf16.mxu0 0
        %5422 = vmatpush1.bf16.msra.mxu0 %v3346
        %5423 = vmatprep.subr.bf16.mxu0 0
        %5424 = vmatpush1.bf16.msra.mxu0 %v3351
        %5425 = vmatprep.subr.bf16.mxu0 0
        %5426 = vmatpush1.bf16.msra.mxu0 %v3356
        %5427 = vmatprep.subr.bf16.mxu0 0
        %5428 = vmatpush1.bf16.msra.mxu0 %v3361
        %5429 = vmatprep.subr.bf16.mxu0 0
        %5430 = vmatpush1.bf16.msra.mxu0 %v3366
        %5431 = vmatprep.subr.bf16.mxu0 0
        %5432 = vmatpush1.bf16.msra.mxu0 %v3371
        %5433 = vmatprep.subr.bf16.mxu0 0
        %5434 = vmatpush1.bf16.msra.mxu0 %v3376
        %5435 = vmatprep.subr.bf16.mxu0 0
        %5436 = vmatpush1.bf16.msra.mxu0 %v3381
        %5437 = vmatprep.subr.bf16.mxu0 0
        %5438 = vmatpush1.bf16.msra.mxu0 %v3386
        %5439 = vmatprep.subr.bf16.mxu0 0
        %5440 = vmatpush1.bf16.msra.mxu0 %v3391
        %5441 = vmatprep.mubr.bf16.mxu0 %v1123
        %5442 = vmatmul.mubr.bf16.gmra.mrb[0].mxu0 %v1122
        %v5443 = vpop.f32.mrb[0].mxu0
        %v5444 = vadd.f32 %v5395, %v5443
        %v5445 = vpop.f32.mrb[0].mxu0
        %v5446 = vpop.f32.mrb[0].mxu0
        %v5447 = vadd.f32 %v5398, %v5446
        %v5448 = vpop.f32.mrb[0].mxu0
        %5449 = vmatprep.mubr.bf16.mxu0 %v1139
        %5450 = vmatmul.mubr.bf16.gmra.mrb[0].mxu0 %v1138
        %v5451 = vpop.f32.mrb[0].mxu0
        %v5452 = vadd.f32 %v5403, %v5451
        %v5453 = vpop.f32.mrb[0].mxu0
        %v5454 = vpop.f32.mrb[0].mxu0
        %v5455 = vadd.f32 %v5406, %v5454
        %v5456 = vpop.f32.mrb[0].mxu0
        %5457 = vdwg.mxu0
        %5458 = vmatprep.subr.bf16.mxu0 0
        %5459 = vmatpush1.bf16.msra.mxu0 %v3396
        %5460 = vmatprep.subr.bf16.mxu0 0
        %5461 = vmatpush1.bf16.msra.mxu0 %v3401
        %5462 = vmatprep.subr.bf16.mxu0 0
        %5463 = vmatpush1.bf16.msra.mxu0 %v3406
        %5464 = vmatprep.subr.bf16.mxu0 0
        %5465 = vmatpush1.bf16.msra.mxu0 %v3411
        %5466 = vmatprep.subr.bf16.mxu0 0
        %5467 = vmatpush1.bf16.msra.mxu0 %v3416
        %5468 = vmatprep.subr.bf16.mxu0 0
        %5469 = vmatpush1.bf16.msra.mxu0 %v3421
        %5470 = vmatprep.subr.bf16.mxu0 0
        %5471 = vmatpush1.bf16.msra.mxu0 %v3426
        %5472 = vmatprep.subr.bf16.mxu0 0
        %5473 = vmatpush1.bf16.msra.mxu0 %v3431
        %5474 = vmatprep.subr.bf16.mxu0 0
        %5475 = vmatpush1.bf16.msra.mxu0 %v3436
        %5476 = vmatprep.subr.bf16.mxu0 0
        %5477 = vmatpush1.bf16.msra.mxu0 %v3441
        %5478 = vmatprep.subr.bf16.mxu0 0
        %5479 = vmatpush1.bf16.msra.mxu0 %v3446
        %5480 = vmatprep.subr.bf16.mxu0 0
        %5481 = vmatpush1.bf16.msra.mxu0 %v3451
        %5482 = vmatprep.subr.bf16.mxu0 0
        %5483 = vmatpush1.bf16.msra.mxu0 %v3456
        %5484 = vmatprep.subr.bf16.mxu0 0
        %5485 = vmatpush1.bf16.msra.mxu0 %v3461
        %5486 = vmatprep.subr.bf16.mxu0 0
        %5487 = vmatpush1.bf16.msra.mxu0 %v3466
        %5488 = vmatprep.subr.bf16.mxu0 0
        %5489 = vmatpush1.bf16.msra.mxu0 %v3471
        %5490 = vmatprep.mubr.bf16.mxu0 %v1125
        %5491 = vmatmul.mubr.bf16.gmra.mrb[0].mxu0 %v1124
        %v5492 = vpop.f32.mrb[0].mxu0
        %v5493 = vadd.f32 %v5444, %v5492
        %v5494 = vpop.f32.mrb[0].mxu0
        %v5495 = vpop.f32.mrb[0].mxu0
        %v5496 = vadd.f32 %v5447, %v5495
        %v5497 = vpop.f32.mrb[0].mxu0
        %5498 = vmatprep.mubr.bf16.mxu0 %v1141
        %5499 = vmatmul.mubr.bf16.gmra.mrb[0].mxu0 %v1140
        %v5500 = vpop.f32.mrb[0].mxu0
        %v5501 = vadd.f32 %v5452, %v5500
        %v5502 = vpop.f32.mrb[0].mxu0
        %v5503 = vpop.f32.mrb[0].mxu0
        %v5504 = vadd.f32 %v5455, %v5503
        %v5505 = vpop.f32.mrb[0].mxu0
        %5506 = vdwg.mxu0
        %5507 = vmatprep.subr.bf16.mxu0 0
        %5508 = vmatpush1.bf16.msra.mxu0 %v3476
        %5509 = vmatprep.subr.bf16.mxu0 0
        %5510 = vmatpush1.bf16.msra.mxu0 %v3481
        %5511 = vmatprep.subr.bf16.mxu0 0
        %5512 = vmatpush1.bf16.msra.mxu0 %v3486
        %5513 = vmatprep.subr.bf16.mxu0 0
        %5514 = vmatpush1.bf16.msra.mxu0 %v3491
        %5515 = vmatprep.subr.bf16.mxu0 0
        %5516 = vmatpush1.bf16.msra.mxu0 %v3496
        %5517 = vmatprep.subr.bf16.mxu0 0
        %5518 = vmatpush1.bf16.msra.mxu0 %v3501
        %5519 = vmatprep.subr.bf16.mxu0 0
        %5520 = vmatpush1.bf16.msra.mxu0 %v3506
        %5521 = vmatprep.subr.bf16.mxu0 0
        %5522 = vmatpush1.bf16.msra.mxu0 %v3511
        %5523 = vmatprep.subr.bf16.mxu0 0
        %5524 = vmatpush1.bf16.msra.mxu0 %v3516
        %5525 = vmatprep.subr.bf16.mxu0 0
        %5526 = vmatpush1.bf16.msra.mxu0 %v3521
        %5527 = vmatprep.subr.bf16.mxu0 0
        %5528 = vmatpush1.bf16.msra.mxu0 %v3526
        %5529 = vmatprep.subr.bf16.mxu0 0
        %5530 = vmatpush1.bf16.msra.mxu0 %v3531
        %5531 = vmatprep.subr.bf16.mxu0 0
        %5532 = vmatpush1.bf16.msra.mxu0 %v3536
        %5533 = vmatprep.subr.bf16.mxu0 0
        %5534 = vmatpush1.bf16.msra.mxu0 %v3541
        %5535 = vmatprep.subr.bf16.mxu0 0
        %5536 = vmatpush1.bf16.msra.mxu0 %v3546
        %5537 = vmatprep.subr.bf16.mxu0 0
        %5538 = vmatpush1.bf16.msra.mxu0 %v3551
        %5539 = vmatprep.mubr.bf16.mxu0 %v1127
        %5540 = vmatmul.mubr.bf16.gmra.mrb[0].mxu0 %v1126
        %v5541 = vpop.f32.mrb[0].mxu0
        %v5542 = vadd.f32 %v5493, %v5541
        %v5543 = vpop.f32.mrb[0].mxu0
        %v5544 = vpop.f32.mrb[0].mxu0
        %v5545 = vadd.f32 %v5496, %v5544
        %v5546 = vpop.f32.mrb[0].mxu0
        %5547 = vmatprep.mubr.bf16.mxu0 %v1143
        %5548 = vmatmul.mubr.bf16.gmra.mrb[0].mxu0 %v1142
        %v5549 = vpop.f32.mrb[0].mxu0
        %v5550 = vadd.f32 %v5501, %v5549
        %v5551 = vpop.f32.mrb[0].mxu0
        %v5552 = vpop.f32.mrb[0].mxu0
        %v5553 = vadd.f32 %v5504, %v5552
        %v5554 = vpop.f32.mrb[0].mxu0
        %5555 = vdwg.mxu0
        %5556 = vmatprep.subr.bf16.mxu0 0
        %5557 = vmatpush1.bf16.msra.mxu0 %v3556
        %5558 = vmatprep.subr.bf16.mxu0 0
        %5559 = vmatpush1.bf16.msra.mxu0 %v3561
        %5560 = vmatprep.subr.bf16.mxu0 0
        %5561 = vmatpush1.bf16.msra.mxu0 %v3566
        %5562 = vmatprep.subr.bf16.mxu0 0
        %5563 = vmatpush1.bf16.msra.mxu0 %v3571
        %5564 = vmatprep.subr.bf16.mxu0 0
        %5565 = vmatpush1.bf16.msra.mxu0 %v3576
        %5566 = vmatprep.subr.bf16.mxu0 0
        %5567 = vmatpush1.bf16.msra.mxu0 %v3581
        %5568 = vmatprep.subr.bf16.mxu0 0
        %5569 = vmatpush1.bf16.msra.mxu0 %v3586
        %5570 = vmatprep.subr.bf16.mxu0 0
        %5571 = vmatpush1.bf16.msra.mxu0 %v3591
        %5572 = vmatprep.subr.bf16.mxu0 0
        %5573 = vmatpush1.bf16.msra.mxu0 %v3596
        %5574 = vmatprep.subr.bf16.mxu0 0
        %5575 = vmatpush1.bf16.msra.mxu0 %v3601
        %5576 = vmatprep.subr.bf16.mxu0 0
        %5577 = vmatpush1.bf16.msra.mxu0 %v3606
        %5578 = vmatprep.subr.bf16.mxu0 0
        %5579 = vmatpush1.bf16.msra.mxu0 %v3611
        %5580 = vmatprep.subr.bf16.mxu0 0
        %5581 = vmatpush1.bf16.msra.mxu0 %v3616
        %5582 = vmatprep.subr.bf16.mxu0 0
        %5583 = vmatpush1.bf16.msra.mxu0 %v3621
        %5584 = vmatprep.subr.bf16.mxu0 0
        %5585 = vmatpush1.bf16.msra.mxu0 %v3626
        %5586 = vmatprep.subr.bf16.mxu0 0
        %5587 = vmatpush1.bf16.msra.mxu0 %v3631
        %5588 = vmatprep.mubr.bf16.mxu0 %v1129
        %5589 = vmatmul.mubr.bf16.gmra.mrb[0].mxu0 %v1128
        %v5590 = vpop.f32.mrb[0].mxu0
        %v5591 = vadd.f32 %v5542, %v5590
        %v5592 = vpop.f32.mrb[0].mxu0
        %v5593 = vpop.f32.mrb[0].mxu0
        %v5594 = vadd.f32 %v5545, %v5593
        %v5595 = vpop.f32.mrb[0].mxu0
        %5596 = vmatprep.mubr.bf16.mxu0 %v1145
        %5597 = vmatmul.mubr.bf16.gmra.mrb[0].mxu0 %v1144
        %v5598 = vpop.f32.mrb[0].mxu0
        %v5599 = vadd.f32 %v5550, %v5598
        %v5600 = vpop.f32.mrb[0].mxu0
        %v5601 = vpop.f32.mrb[0].mxu0
        %v5602 = vadd.f32 %v5553, %v5601
        %v5603 = vpop.f32.mrb[0].mxu0
        %5604 = vdwg.mxu0
        %5605 = vmatprep.subr.bf16.mxu0 0
        %5606 = vmatpush1.bf16.msra.mxu0 %v3636
        %5607 = vmatprep.subr.bf16.mxu0 0
        %5608 = vmatpush1.bf16.msra.mxu0 %v3641
        %5609 = vmatprep.subr.bf16.mxu0 0
        %5610 = vmatpush1.bf16.msra.mxu0 %v3646
        %5611 = vmatprep.subr.bf16.mxu0 0
        %5612 = vmatpush1.bf16.msra.mxu0 %v3651
        %5613 = vmatprep.subr.bf16.mxu0 0
        %5614 = vmatpush1.bf16.msra.mxu0 %v3656
        %5615 = vmatprep.subr.bf16.mxu0 0
        %5616 = vmatpush1.bf16.msra.mxu0 %v3661
        %5617 = vmatprep.subr.bf16.mxu0 0
        %5618 = vmatpush1.bf16.msra.mxu0 %v3666
        %5619 = vmatprep.subr.bf16.mxu0 0
        %5620 = vmatpush1.bf16.msra.mxu0 %v3671
        %5621 = vmatprep.subr.bf16.mxu0 0
        %5622 = vmatpush1.bf16.msra.mxu0 %v3676
        %5623 = vmatprep.subr.bf16.mxu0 0
        %5624 = vmatpush1.bf16.msra.mxu0 %v3681
        %5625 = vmatprep.subr.bf16.mxu0 0
        %5626 = vmatpush1.bf16.msra.mxu0 %v3686
        %5627 = vmatprep.subr.bf16.mxu0 0
        %5628 = vmatpush1.bf16.msra.mxu0 %v3691
        %5629 = vmatprep.subr.bf16.mxu0 0
        %5630 = vmatpush1.bf16.msra.mxu0 %v3696
        %5631 = vmatprep.subr.bf16.mxu0 0
        %5632 = vmatpush1.bf16.msra.mxu0 %v3701
        %5633 = vmatprep.subr.bf16.mxu0 0
        %5634 = vmatpush1.bf16.msra.mxu0 %v3706
        %5635 = vmatprep.subr.bf16.mxu0 0
        %5636 = vmatpush1.bf16.msra.mxu0 %v3711
        %5637 = vmatprep.mubr.bf16.mxu0 %v1131
        %5638 = vmatmul.mubr.bf16.gmra.mrb[0].mxu0 %v1130
        %v5639 = vpop.f32.mrb[0].mxu0
        %v5640 = vadd.f32 %v5591, %v5639
        %v5641 = vpop.f32.mrb[0].mxu0
        %v5642 = vpop.f32.mrb[0].mxu0
        %v5643 = vadd.f32 %v5594, %v5642
        %v5644 = vpop.f32.mrb[0].mxu0
        %5645 = vmatprep.mubr.bf16.mxu0 %v1147
        %5646 = vmatmul.mubr.bf16.gmra.mrb[0].mxu0 %v1146
        %v5647 = vpop.f32.mrb[0].mxu0
        %v5648 = vadd.f32 %v5599, %v5647
        %v5649 = vpop.f32.mrb[0].mxu0
        %v5650 = vpop.f32.mrb[0].mxu0
        %v5651 = vadd.f32 %v5602, %v5650
        %v5652 = vpop.f32.mrb[0].mxu0
        %5653 = vdwg.mxu0
        %5654 = vmatprep.subr.bf16.mxu0 0
        %5655 = vmatpush1.bf16.msra.mxu0 %v3716
        %5656 = vmatprep.subr.bf16.mxu0 0
        %5657 = vmatpush1.bf16.msra.mxu0 %v3721
        %5658 = vmatprep.subr.bf16.mxu0 0
        %5659 = vmatpush1.bf16.msra.mxu0 %v3726
        %5660 = vmatprep.subr.bf16.mxu0 0
        %5661 = vmatpush1.bf16.msra.mxu0 %v3731
        %5662 = vmatprep.subr.bf16.mxu0 0
        %5663 = vmatpush1.bf16.msra.mxu0 %v3736
        %5664 = vmatprep.subr.bf16.mxu0 0
        %5665 = vmatpush1.bf16.msra.mxu0 %v3741
        %5666 = vmatprep.subr.bf16.mxu0 0
        %5667 = vmatpush1.bf16.msra.mxu0 %v3746
        %5668 = vmatprep.subr.bf16.mxu0 0
        %5669 = vmatpush1.bf16.msra.mxu0 %v3751
        %5670 = vmatprep.subr.bf16.mxu0 0
        %5671 = vmatpush1.bf16.msra.mxu0 %v3756
        %5672 = vmatprep.subr.bf16.mxu0 0
        %5673 = vmatpush1.bf16.msra.mxu0 %v3761
        %5674 = vmatprep.subr.bf16.mxu0 0
        %5675 = vmatpush1.bf16.msra.mxu0 %v3766
        %5676 = vmatprep.subr.bf16.mxu0 0
        %5677 = vmatpush1.bf16.msra.mxu0 %v3771
        %5678 = vmatprep.subr.bf16.mxu0 0
        %5679 = vmatpush1.bf16.msra.mxu0 %v3776
        %5680 = vmatprep.subr.bf16.mxu0 0
        %5681 = vmatpush1.bf16.msra.mxu0 %v3781
        %5682 = vmatprep.subr.bf16.mxu0 0
        %5683 = vmatpush1.bf16.msra.mxu0 %v3786
        %5684 = vmatprep.subr.bf16.mxu0 0
        %5685 = vmatpush1.bf16.msra.mxu0 %v3791
        %5686 = vmatprep.mubr.bf16.mxu0 %v1133
        %5687 = vmatmul.mubr.bf16.gmra.mrb[0].mxu0 %v1132
        %v5688 = vpop.f32.mrb[0].mxu0
        %v5689 = vadd.f32 %v5640, %v5688
        %v5690 = vpop.f32.mrb[0].mxu0
        %v5691 = vpop.f32.mrb[0].mxu0
        %v5692 = vadd.f32 %v5643, %v5691
        %v5693 = vpop.f32.mrb[0].mxu0
        %5694 = vmatprep.mubr.bf16.mxu0 %v1149
        %5695 = vmatmul.mubr.bf16.gmra.mrb[0].mxu0 %v1148
        %v5696 = vpop.f32.mrb[0].mxu0
        %v5697 = vadd.f32 %v5648, %v5696
        %v5698 = vpop.f32.mrb[0].mxu0
        %v5699 = vpop.f32.mrb[0].mxu0
        %v5700 = vadd.f32 %v5651, %v5699
        %v5701 = vpop.f32.mrb[0].mxu0
        %5702 = vdwg.mxu0
        %5703 = vmatprep.subr.bf16.mxu0 0
        %5704 = vmatpush1.bf16.msra.mxu0 %v3796
        %5705 = vmatprep.subr.bf16.mxu0 0
        %5706 = vmatpush1.bf16.msra.mxu0 %v3801
        %5707 = vmatprep.subr.bf16.mxu0 0
        %5708 = vmatpush1.bf16.msra.mxu0 %v3806
        %5709 = vmatprep.subr.bf16.mxu0 0
        %5710 = vmatpush1.bf16.msra.mxu0 %v3811
        %5711 = vmatprep.subr.bf16.mxu0 0
        %5712 = vmatpush1.bf16.msra.mxu0 %v3816
        %5713 = vmatprep.subr.bf16.mxu0 0
        %5714 = vmatpush1.bf16.msra.mxu0 %v3821
        %5715 = vmatprep.subr.bf16.mxu0 0
        %5716 = vmatpush1.bf16.msra.mxu0 %v3826
        %5717 = vmatprep.subr.bf16.mxu0 0
        %5718 = vmatpush1.bf16.msra.mxu0 %v3831
        %5719 = vmatprep.subr.bf16.mxu0 0
        %5720 = vmatpush1.bf16.msra.mxu0 %v3836
        %5721 = vmatprep.subr.bf16.mxu0 0
        %5722 = vmatpush1.bf16.msra.mxu0 %v3841
        %5723 = vmatprep.subr.bf16.mxu0 0
        %5724 = vmatpush1.bf16.msra.mxu0 %v3846
        %5725 = vmatprep.subr.bf16.mxu0 0
        %5726 = vmatpush1.bf16.msra.mxu0 %v3851
        %5727 = vmatprep.subr.bf16.mxu0 0
        %5728 = vmatpush1.bf16.msra.mxu0 %v3856
        %5729 = vmatprep.subr.bf16.mxu0 0
        %5730 = vmatpush1.bf16.msra.mxu0 %v3861
        %5731 = vmatprep.subr.bf16.mxu0 0
        %5732 = vmatpush1.bf16.msra.mxu0 %v3866
        %5733 = vmatprep.subr.bf16.mxu0 0
        %5734 = vmatpush1.bf16.msra.mxu0 %v3871
        %5735 = vmatprep.mubr.bf16.mxu0 %v1135
        %5736 = vmatmul.mubr.bf16.gmra.mrb[0].mxu0 %v1134
        %v5737 = vpop.f32.mrb[0].mxu0
        %v5738 = vadd.f32 %v5689, %v5737
        %v5739 = vpop.f32.mrb[0].mxu0
        %v5740 = vpop.f32.mrb[0].mxu0
        %v5741 = vadd.f32 %v5692, %v5740
        %v5742 = vpop.f32.mrb[0].mxu0
        %5743 = vmatprep.mubr.bf16.mxu0 %v1151
        %5744 = vmatmul.mubr.bf16.gmra.mrb[0].mxu0 %v1150
        %v5745 = vpop.f32.mrb[0].mxu0
        %v5746 = vadd.f32 %v5697, %v5745
        %v5747 = vpop.f32.mrb[0].mxu0
        %v5748 = vpop.f32.mrb[0].mxu0
        %v5749 = vadd.f32 %v5700, %v5748
        %v5750 = vpop.f32.mrb[0].mxu0
        %5751 = vdwg.mxu0
        %v5752 = vmax.f32 %v4918, 0.0
        %v5753 = vmax.f32 %v4920, 0.0
        %v5754 = vmax.f32 %v5342, 0.0
        %v5755 = vmax.f32 %v5344, 0.0
        %v5756 = vmax.f32 %v5738, 0.0
        %v5757 = vmax.f32 %v4922, 0.0
        %v5758 = vmax.f32 %v4924, 0.0
        %v5759 = vmax.f32 %v5346, 0.0
        %v5760 = vmax.f32 %v5348, 0.0
        %v5761 = vmax.f32 %v5741, 0.0
        %v5762 = vmax.f32 %v4928, 0.0
        %v5763 = vmax.f32 %v4930, 0.0
        %v5764 = vmax.f32 %v5352, 0.0
        %v5765 = vmax.f32 %v5354, 0.0
        %v5766 = vmax.f32 %v5746, 0.0
        %v5767 = vmax.f32 %v4932, 0.0
        %v5768 = vmax.f32 %v4934, 0.0
        %v5769 = vmax.f32 %v5356, 0.0
        %v5770 = vmax.f32 %v5358, 0.0
        %v5771 = vmax.f32 %v5749, 0.0
        %v5772 = vpack.c.bf16 %v5757, %v5752
        %v5773 = vpack.c.bf16 %v5758, %v5753
        %v5774 = vpack.c.bf16 %v5759, %v5754
        %v5775 = vpack.c.bf16 %v5760, %v5755
        %v5776 = vpack.c.bf16 %v5761, %v5756
        %v5777 = vpack.c.bf16 %v5767, %v5762
        %v5778 = vpack.c.bf16 %v5768, %v5763
        %v5779 = vpack.c.bf16 %v5769, %v5764
        %v5780 = vpack.c.bf16 %v5770, %v5765
        %v5781 = vpack.c.bf16 %v5771, %v5766
        %v5792 = vunpack.c.l.b16 %v5772
        %v5793 = vunpack.c.l.b16 %v5773
        %v5794 = vunpack.c.l.b16 %v5774
        %v5795 = vunpack.c.l.b16 %v5775
        %v5796 = vunpack.c.l.b16 %v5776
        %v5797 = vunpack.c.h.b16 %v5772
        %v5798 = vunpack.c.h.b16 %v5773
        %v5799 = vunpack.c.h.b16 %v5774
        %v5800 = vunpack.c.h.b16 %v5775
        %v5801 = vunpack.c.h.b16 %v5776
        %v5802 = vunpack.c.l.b16 %v5777
        %v5803 = vunpack.c.l.b16 %v5778
        %v5804 = vunpack.c.l.b16 %v5779
        %v5805 = vunpack.c.l.b16 %v5780
        %v5806 = vunpack.c.l.b16 %v5781
        %v5807 = vunpack.c.h.b16 %v5777
        %v5808 = vunpack.c.h.b16 %v5778
        %v5809 = vunpack.c.h.b16 %v5779
        %v5810 = vunpack.c.h.b16 %v5780
        %v5811 = vunpack.c.h.b16 %v5781
        %v5812 = vpack.c.b16 %v5793, %v5792
        %v5813 = vpack.c.b16 %v5795, %v5794
        %v5814 = vpack.c.b16 %v5796, %v5796
        %v5815 = vpack.c.b16 %v5798, %v5797
        %v5816 = vpack.c.b16 %v5800, %v5799
        %v5817 = vpack.c.b16 %v5801, %v5801
        %v5818 = vpack.c.b16 %v5803, %v5802
        %v5819 = vpack.c.b16 %v5805, %v5804
        %v5820 = vpack.c.b16 %v5806, %v5806
        %v5821 = vpack.c.b16 %v5808, %v5807
        %v5822 = vpack.c.b16 %v5810, %v5809
        %v5823 = vpack.c.b16 %v5811, %v5811
        %5836 = vst [vmem:[%s208] sm:$0xff] %v5812
        %5837 = vst [vmem:[%s208 + $0x8] sm:$0xff] %v5813
        %5838 = vst [vmem:[%s208 + $0x10] sm:$0xf] %v5814
        %5839 = vst [vmem:[%s208 + $0x14] sm:$0xff] %v5815
        %5840 = vst [vmem:[%s208 + $0x1c] sm:$0xff] %v5816
        %5841 = vst [vmem:[%s208 + $0x24] sm:$0xf] %v5817
        %5842 = vst [vmem:[%s208 + $0x28] sm:$0xff] %v5818
        %5843 = vst [vmem:[%s208 + $0x30] sm:$0xff] %v5819
        %5844 = vst [vmem:[%s208 + $0x38] sm:$0xf] %v5820
        %5845 = vst [vmem:[%s208 + $0x3c] sm:$0xff] %v5821
        %5846 = vst [vmem:[%s208 + $0x44] sm:$0xff] %v5822
        %5847 = vst [vmem:[%s208 + $0x4c] sm:$0xf] %v5823
        %s5848 = sand.u32 %s101, 1
        %s5849 = sand.u32 %s101, 1
        %s5850 = smul.addr %s5849, 80
        %s5851 = scalar_lea.vmem [#allocation4], %s5850
        // Predicated region
        $region33: #{generator_forward.3} parent=27 // pred_check
          %p5852 = pneg %p111
        $region34: #{generator_forward.3} parent=27 // pred_check_branch
          %5854 = sbr.rel (%p5852) target = $region36
        $region35: #{generator_forward.3} parent=27 // pred_region
          %s5855 = smul.u32 4, %s23
          %s5856 = smul.u32 5, %s21
          %s5857 = smul.addr %s5855, 50
          %s5858 = sadd.s32 %s5856, %s5857
          %s5859 = smul.addr %s22, 200
          %s5860 = sadd.s32 %s5858, %s5859
          %s5861 = smul.addr %s5860, 4
          %s5862 = scalar_lea.vmem %s2, %s5861
          // Predicated region
          $region37: #{generator_forward.3} parent=35 // pred_check
            _
          $region38: #{generator_forward.3} parent=35 // pred_check_branch
            %5864 = sbr.rel (0) target = $region40
          $region39: #{generator_forward.3} parent=35 // pred_region
            // Predicated region
            $region41: #{generator_forward.3} parent=39 // pred_check
              _
            $region42: #{generator_forward.3} parent=39 // pred_check_branch
              %5866 = sbr.rel (0) target = $region44
            $region43: #{generator_forward.3} parent=39 // pred_region
              %s5867 = scalar_lea.vmem %s5851, 16 [#allocation4]
              %s5868 = scalar_lea.vmem %s5862, 16
              loop: start=0, step=1, limit=1
              $region45: #{generator_forward.3} parent=43 // loop_pre_header
                _
              $region46: #{generator_forward.3} parent=43 // loop_header
                %s5870 = sphi 0, %s5874
                %p5871 = scmp.ge.s32.totalorder %s5870, 1
                %s5875 = sphi %s5851, %s5851
                %s5876 = sphi %s5862, %s5862
              $region47: #{generator_forward.3} parent=43 // loop_header_branch
                %5873 = sbr.rel (%p5871) target = $region51
              $region48: #{generator_forward.3} parent=43 // loop_body
                %v5877 = vld [vmem:[%s5875] sm:$0xff]
                %5878 = vst [vmem:[%s5876] sm:$0xff] %v5877
                %v5879 = vld [vmem:[%s5875 + $0x8] sm:$0xff]
                %5880 = vst [vmem:[%s5876 + $0x8] sm:$0xff] %v5879
                %v5881 = vld [vmem:[%s5875 + $0x14] sm:$0xff]
                %5882 = vst [vmem:[%s5876 + $0xc8] sm:$0xff] %v5881
                %v5883 = vld [vmem:[%s5875 + $0x1c] sm:$0xff]
                %5884 = vst [vmem:[%s5876 + $0xd0] sm:$0xff] %v5883
                %v5885 = vld [vmem:[%s5875 + $0x28] sm:$0xff]
                %5886 = vst [vmem:[%s5876 + $0x190] sm:$0xff] %v5885
                %v5887 = vld [vmem:[%s5875 + $0x30] sm:$0xff]
                %5888 = vst [vmem:[%s5876 + $0x198] sm:$0xff] %v5887
                %v5889 = vld [vmem:[%s5875 + $0x3c] sm:$0xff]
                %5890 = vst [vmem:[%s5876 + $0x258] sm:$0xff] %v5889
                %v5891 = vld [vmem:[%s5875 + $0x44] sm:$0xff]
                %5892 = vst [vmem:[%s5876 + $0x260] sm:$0xff] %v5891
              $region49: #{generator_forward.3} parent=43 // loop_footer
                %s5874 = sadd.s32 1, %s5870
              $region50: #{generator_forward.3} parent=43 // loop_footer_branch
                %5869 = sbr.rel target = $region46
              $region51: #{generator_forward.3} parent=43 // loop_exit
                _
              loop: start=0, step=1, limit=1
              $region52: #{generator_forward.3} parent=43 // loop_pre_header
                _
              $region53: #{generator_forward.3} parent=43 // loop_header
                %s5895 = sphi 0, %s5899
                %p5896 = scmp.ge.s32.totalorder %s5895, 1
                %s5900 = sphi %s5867, %s5867
                %s5901 = sphi %s5868, %s5868
              $region54: #{generator_forward.3} parent=43 // loop_header_branch
                %5898 = sbr.rel (%p5896) target = $region58
              $region55: #{generator_forward.3} parent=43 // loop_body
                %v5902 = vld [vmem:[%s5900] sm:$0xf]
                %5903 = vst [vmem:[%s5901] sm:$0xf] %v5902
                %v5904 = vld [vmem:[%s5900 + $0x14] sm:$0xf]
                %5905 = vst [vmem:[%s5901 + $0xc8] sm:$0xf] %v5904
                %v5906 = vld [vmem:[%s5900 + $0x28] sm:$0xf]
                %5907 = vst [vmem:[%s5901 + $0x190] sm:$0xf] %v5906
                %v5908 = vld [vmem:[%s5900 + $0x3c] sm:$0xf]
                %5909 = vst [vmem:[%s5901 + $0x258] sm:$0xf] %v5908
              $region56: #{generator_forward.3} parent=43 // loop_footer
                %s5899 = sadd.s32 1, %s5895
              $region57: #{generator_forward.3} parent=43 // loop_footer_branch
                %5894 = sbr.rel target = $region53
              $region58: #{generator_forward.3} parent=43 // loop_exit
                _
            $region44: #{generator_forward.3} parent=39 // pred_fallthru
              _
          $region40: #{generator_forward.3} parent=35 // pred_fallthru
            _
          %5910 = vnop
        $region36: #{generator_forward.3} parent=27 // pred_fallthru
          _
      $region28: #{generator_forward.3} parent=5 // pred_fallthru
        _
      %p5911 = scmp.le.s32.totalorder 2, %s11
      // Predicated region
      $region59: #{generator_forward.3} parent=5 // pred_check
        %p5912 = pneg %p5911
      $region60: #{generator_forward.3} parent=5 // pred_check_branch
        %5914 = sbr.rel (%p5912) target = $region62
      $region61: #{generator_forward.3} parent=5 // pred_region
        %s5915 = ssub.s32 %s11, 2
        // Predicated region
        $region63: #{generator_forward.3} parent=61 // pred_check
          %p5916 = pneg %p117
        $region64: #{generator_forward.3} parent=61 // pred_check_branch
          %5918 = sbr.rel (%p5916) target = $region66
        $region65: #{generator_forward.3} parent=61 // pred_region
          %s5919 = sand.u32 %s102, 1
          %s5920 = sand.u32 %s102, 1
          %s5921 = smul.addr %s5920, 80
          %s5922 = scalar_lea.vmem [#allocation4], %s5921
        $region66: #{generator_forward.3} parent=61 // pred_fallthru
          _
      $region62: #{generator_forward.3} parent=5 // pred_fallthru
        _
    $region6: #{generator_forward.3} parent=1 // loop_footer
      %s15 = sadd.s32 1, %s11
    $region7: #{generator_forward.3} parent=1 // loop_footer_branch
      %10 = sbr.rel target = $region3
    $region8: #{generator_forward.3} parent=1 // loop_exit
      _
    %5923 = vsyncpa [#allocation3], 1
    %s5924 = scalar_lea.sflag [#allocation3], 1
    %5925 = vsyncpa %s5924, 1

// kernel: generator_forward.4
$region0: #{generator_forward.4}
  #allocation0 [shape = 'u32[]', space=smem, size = 0x4, offset = 0x4, fixed_abs, tag = 'smem constant byte address 0x4 - core index']
  #allocation1 [shape = 'u32[144,128]{1,0:T(1,128)}', space=vmem, size = 0x12000, scoped, tag = 'internal scratch']
  %s0 = inlined_call_operand.vmem [shape: bf16[2,144,2048], index: 0, kind: input, shape index: {}]
  %s1 = inlined_call_operand.vmem [shape: bf16[2048,640], index: 1, kind: input, shape index: {}]
  %s2 = inlined_call_operand.vmem [shape: bf16[2,144,640], index: 2, kind: output, shape index: {}]
  %s3 = sld [smem:[#allocation0]]
  $region41: #{generator_forward.4} parent=0
    _
  %s5 = ssub.s32 1, %s3
  %s6 = scalar_select 0, %s5, %s3
  loop: start=0, step=1, limit=8
  $region2: #{generator_forward.4} parent=0 // loop_pre_header
    _
  $region3: #{generator_forward.4} parent=0 // loop_header
    %s8 = sphi 0, %s12
    %p9 = scmp.ge.s32.totalorder %s8, 8
    %s15 = sphi 0, %s34
    %s16 = sphi 0, %s30
    %s17 = sphi 0, %s26
    %s18 = sphi 0, %s15
    %s19 = sphi 0, %s16
    %s20 = sphi 0, %s17
    %s21 = sphi 0, %s18
    %s22 = sphi 0, %s19
    %s23 = sphi 0, %s20
    %s39 = sphi 0, %s41
    %s42 = sphi 0, %s39
    %s43 = sphi 0, %s42
    %s59 = sphi 0, %s43
    %s65 = sphi 0, %s67
    %s68 = sphi 0, %s65
    %s69 = sphi 0, %s68
    %s85 = sphi 0, %s69
    %s95 = sphi 0, %s97
    %s98 = sphi 0, %s95
    %s99 = sphi 0, %s98
    %s115 = sphi 0, %s99
  $region4: #{generator_forward.4} parent=0 // loop_header_branch
    %11 = sbr.rel (%p9) target = $region8
  $region5: #{generator_forward.4} parent=0 // loop_body
    %s13 = ssub.s32 %s8, 1
    %s14 = ssub.s32 %s8, 2
    %s24 = sadd.s32 1, %s17
    %p25 = scmp.ge.s32.totalorder %s24, 3
    %s26 = scalar_select %p25, 0, %s24
    %s27 = sadd.s32 1, %s16
    %s28 = scalar_select %p25, %s27, %s16
    %p29 = scmp.ge.s32.totalorder %s28, 2
    %s30 = scalar_select %p29, 0, %s28
    %s31 = sadd.s32 1, %s15
    %s32 = scalar_select %p29, %s31, %s15
    %p33 = scmp.ge.s32.totalorder %s32, 1
    %s34 = scalar_select %p33, 0, %s32
    %s35 = ssub.s32 %s16, %s30
    %s36 = ssub.s32 %s17, %s26
    %s37 = sor.u32 %s35, %s36
    %p38 = scmp.eq.s32.totalorder %s37, 0
    %s40 = sadd.s32 %s39, 1
    %s41 = scalar_select %p38, %s39, %s40
    %p44 = pneg %p38
    %p45 = scmp.eq.s32.totalorder %s8, 5
    %p46 = por %p44, %p45
    %p47 = scmp.ne.s32.totalorder %s39, %s42
    %p48 = scmp.eq.s32.totalorder %s8, 0
    %p49 = por %p47, %p48
    %p50 = scmp.ne.s32.totalorder %s39, %s42
    %p51 = scmp.eq.s32.totalorder %s13, 5
    %p52 = por %p50, %p51
    %p53 = scmp.ne.s32.totalorder %s42, %s43
    %p54 = scmp.eq.s32.totalorder %s13, 0
    %p55 = por %p53, %p54
    %p56 = scmp.ne.s32.totalorder %s42, %s43
    %p57 = scmp.eq.s32.totalorder %s14, 5
    %p58 = por %p56, %p57
    %p60 = scmp.ne.s32.totalorder %s43, %s59
    %p61 = scmp.eq.s32.totalorder %s14, 0
    %p62 = por %p60, %p61
    %s63 = ssub.s32 %s15, %s34
    %p64 = scmp.eq.s32.totalorder %s63, 0
    %s66 = sadd.s32 %s65, 1
    %s67 = scalar_select %p64, %s65, %s66
    %p70 = pneg %p64
    %p71 = scmp.eq.s32.totalorder %s8, 5
    %p72 = por %p70, %p71
    %p73 = scmp.ne.s32.totalorder %s65, %s68
    %p74 = scmp.eq.s32.totalorder %s8, 0
    %p75 = por %p73, %p74
    %p76 = scmp.ne.s32.totalorder %s65, %s68
    %p77 = scmp.eq.s32.totalorder %s13, 5
    %p78 = por %p76, %p77
    %p79 = scmp.ne.s32.totalorder %s68, %s69
    %p80 = scmp.eq.s32.totalorder %s13, 0
    %p81 = por %p79, %p80
    %p82 = scmp.ne.s32.totalorder %s68, %s69
    %p83 = scmp.eq.s32.totalorder %s14, 5
    %p84 = por %p82, %p83
    %p86 = scmp.ne.s32.totalorder %s69, %s85
    %p87 = scmp.eq.s32.totalorder %s14, 0
    %p88 = por %p86, %p87
    %s89 = ssub.s32 %s16, %s30
    %s90 = ssub.s32 %s17, %s26
    %s91 = sor.u32 %s89, %s90
    %s92 = ssub.s32 %s15, %s34
    %s93 = sor.u32 %s91, %s92
    %p94 = scmp.eq.s32.totalorder %s93, 0
    %s96 = sadd.s32 %s95, 1
    %s97 = scalar_select %p94, %s95, %s96
    %p100 = pneg %p94
    %p101 = scmp.eq.s32.totalorder %s8, 5
    %p102 = por %p100, %p101
    %p103 = scmp.ne.s32.totalorder %s95, %s98
    %p104 = scmp.eq.s32.totalorder %s8, 0
    %p105 = por %p103, %p104
    %p106 = scmp.ne.s32.totalorder %s95, %s98
    %p107 = scmp.eq.s32.totalorder %s13, 5
    %p108 = por %p106, %p107
    %p109 = scmp.ne.s32.totalorder %s98, %s99
    %p110 = scmp.eq.s32.totalorder %s13, 0
    %p111 = por %p109, %p110
    %p112 = scmp.ne.s32.totalorder %s98, %s99
    %p113 = scmp.eq.s32.totalorder %s14, 5
    %p114 = por %p112, %p113
    %p116 = scmp.ne.s32.totalorder %s99, %s115
    %p117 = scmp.eq.s32.totalorder %s14, 0
    %p118 = por %p116, %p117
    %p119 = scmp.le.s32.totalorder 1, %s8
    %p120 = scmp.lt.s32.totalorder %s8, 7
    %p121 = pnand %p119, %p120
    %p122 = pneg %p121
    // Predicated region
    $region9: #{generator_forward.4} parent=5 // pred_check
      _
    $region10: #{generator_forward.4} parent=5 // pred_check_branch
      %124 = sbr.rel (%p121) target = $region12
    $region11: #{generator_forward.4} parent=5 // pred_region
      %s125 = ssub.s32 %s8, 1
      // Predicated region
      $region13: #{generator_forward.4} parent=11 // pred_check
        %p126 = pneg %p81
      $region14: #{generator_forward.4} parent=11 // pred_check_branch
        %128 = sbr.rel (%p126) target = $region16
      $region15: #{generator_forward.4} parent=11 // pred_region
        %s129 = smul.u32 5, %s18
        %p130 = scmp.lt.s32.totalorder %s129, 4
        %s131 = scalar_select %p130, %s129, 4
        %s132 = smul.addr %s131, 4
        %s133 = scalar_lea.vmem %s1, %s132
        %s134 = smul.u32 5, %s18
      $region16: #{generator_forward.4} parent=11 // pred_fallthru
        _
    $region12: #{generator_forward.4} parent=5 // pred_fallthru
      _
    %p135 = scmp.lt.s32.totalorder %s8, 6
    // Predicated region
    $region17: #{generator_forward.4} parent=5 // pred_check
      %p136 = pneg %p135
    $region18: #{generator_forward.4} parent=5 // pred_check_branch
      %138 = sbr.rel (%p136) target = $region20
    $region19: #{generator_forward.4} parent=5 // pred_region
      // Predicated region
      $region21: #{generator_forward.4} parent=19 // pred_check
        %p139 = pneg %p49
      $region22: #{generator_forward.4} parent=19 // pred_check_branch
        %141 = sbr.rel (%p139) target = $region24
      $region23: #{generator_forward.4} parent=19 // pred_region
        %s142 = smul.u32 6, %s17
        %p143 = scmp.lt.s32.totalorder %s16, 1
        %s144 = scalar_select %p143, %s16, 1
        %p145 = scmp.lt.s32.totalorder %s142, 17
        %s146 = scalar_select %p145, %s142, 17
        %s147 = smul.addr %s146, 16
        %s148 = smul.addr %s144, 288
        %s149 = sadd.s32 %s147, %s148
        %s150 = smul.addr %s149, 4
        %s151 = scalar_lea.vmem %s0, %s150
        %s152 = smul.u32 6, %s17
      $region24: #{generator_forward.4} parent=19 // pred_fallthru
        _
    $region20: #{generator_forward.4} parent=5 // pred_fallthru
      _
    %p153 = scmp.le.s32.totalorder 1, %s8
    %p154 = scmp.lt.s32.totalorder %s8, 7
    %p155 = pnand %p153, %p154
    %p156 = pneg %p155
    // Predicated region
    $region25: #{generator_forward.4} parent=5 // pred_check
      _
    $region26: #{generator_forward.4} parent=5 // pred_check_branch
      %158 = sbr.rel (%p155) target = $region28
    $region27: #{generator_forward.4} parent=5 // pred_region
      %s159 = ssub.s32 %s8, 1
      %s160 = smul.u32 6, %s20
      %p161 = scmp.lt.s32.totalorder %s19, 1
      %s162 = scalar_select %p161, %s19, 1
      %p163 = scmp.lt.s32.totalorder %s160, 17
      %s164 = scalar_select %p163, %s160, 17
      %s165 = smul.addr %s164, 16
      %s166 = smul.addr %s162, 288
      %s167 = sadd.s32 %s165, %s166
      %s168 = smul.addr %s167, 4
      %s169 = scalar_lea.vmem %s0, %s168
      %p170 = pneg %p55
      %p171 = pneg %p52
      %s172 = smul.u32 5, %s18
      %p173 = scmp.lt.s32.totalorder %s172, 4
      %s174 = scalar_select %p173, %s172, 4
      %s175 = smul.addr %s174, 4
      %s176 = scalar_lea.vmem %s1, %s175
      %p177 = pneg %p81
      %p178 = pneg %p78
      %p179 = pneg %p111
      %p180 = pneg %p108
      %s181 = smul.u32 6, %s20
      %s182 = smul.u32 5, %s18
      %p183 = scmp.lt.s32.totalorder %s19, 1
      %s184 = scalar_select %p183, %s19, 1
      %p185 = scmp.lt.s32.totalorder %s181, 17
      %s186 = scalar_select %p185, %s181, 17
      %p187 = scmp.lt.s32.totalorder %s182, 4
      %s188 = scalar_select %p187, %s182, 4
      %s189 = smul.addr %s186, 5
      %s190 = sadd.s32 %s188, %s189
      %s191 = smul.addr %s184, 90
      %s192 = sadd.s32 %s190, %s191
      %s193 = smul.addr %s192, 4
      %s194 = scalar_lea.vmem %s2, %s193
      %s195 = smul.u32 6, %s20
      %p196 = scmp.lt.s32.totalorder %s19, 1
      %s197 = scalar_select %p196, %s19, 1
      %p198 = scmp.lt.s32.totalorder %s195, 17
      %s199 = scalar_select %p198, %s195, 17
      %s200 = smul.addr %s199, 16
      %s201 = smul.addr %s197, 288
      %s202 = sadd.s32 %s200, %s201
      %s203 = smul.addr %s202, 4
      %s204 = scalar_lea.vmem %s0, %s203
      %s205 = smul.u32 6, %s20
      %s206 = smul.u32 5, %s18
      %p207 = scmp.lt.s32.totalorder %s206, 4
      %s208 = scalar_select %p207, %s206, 4
      %s209 = smul.addr %s208, 4
      %s210 = scalar_lea.vmem %s1, %s209
      %s211 = smul.u32 5, %s18
      %s212 = smul.u32 6, %s20
      %s213 = smul.u32 5, %s18
      %p214 = scmp.lt.s32.totalorder %s19, 1
      %s215 = scalar_select %p214, %s19, 1
      %p216 = scmp.lt.s32.totalorder %s212, 17
      %s217 = scalar_select %p216, %s212, 17
      %p218 = scmp.lt.s32.totalorder %s213, 4
      %s219 = scalar_select %p218, %s213, 4
      %s220 = smul.addr %s217, 5
      %s221 = sadd.s32 %s219, %s220
      %s222 = smul.addr %s215, 90
      %s223 = sadd.s32 %s221, %s222
      %s224 = smul.addr %s223, 4
      %s225 = scalar_lea.vmem %s2, %s224
      %s226 = smul.u32 6, %s20
      %s227 = smul.u32 5, %s18
      %v229 = vld [vmem:[%s210] sm:$0xff]
      %v230 = vld [vmem:[%s210 + $0x8] sm:$0xff]
      %v231 = vld [vmem:[%s210 + $0x10] sm:$0xf]
      %v232 = vld [vmem:[%s210 + $0x14] sm:$0xff]
      %v233 = vld [vmem:[%s210 + $0x1c] sm:$0xff]
      %v234 = vld [vmem:[%s210 + $0x24] sm:$0xf]
      %v235 = vld [vmem:[%s210 + $0x28] sm:$0xff]
      %v236 = vld [vmem:[%s210 + $0x30] sm:$0xff]
      %v237 = vld [vmem:[%s210 + $0x38] sm:$0xf]
      %v238 = vld [vmem:[%s210 + $0x3c] sm:$0xff]
      %v239 = vld [vmem:[%s210 + $0x44] sm:$0xff]
      %v240 = vld [vmem:[%s210 + $0x4c] sm:$0xf]
      %v241 = vld [vmem:[%s210 + $0x50] sm:$0xff]
      %v242 = vld [vmem:[%s210 + $0x58] sm:$0xff]
      %v243 = vld [vmem:[%s210 + $0x60] sm:$0xf]
      %v244 = vld [vmem:[%s210 + $0x64] sm:$0xff]
      %v245 = vld [vmem:[%s210 + $0x6c] sm:$0xff]
      %v246 = vld [vmem:[%s210 + $0x74] sm:$0xf]
      %v247 = vld [vmem:[%s210 + $0x78] sm:$0xff]
      %v248 = vld [vmem:[%s210 + $0x80] sm:$0xff]
      %v249 = vld [vmem:[%s210 + $0x88] sm:$0xf]
      %v250 = vld [vmem:[%s210 + $0x8c] sm:$0xff]
      %v251 = vld [vmem:[%s210 + $0x94] sm:$0xff]
      %v252 = vld [vmem:[%s210 + $0x9c] sm:$0xf]
      %v253 = vld [vmem:[%s210 + $0xa0] sm:$0xff]
      %v254 = vld [vmem:[%s210 + $0xa8] sm:$0xff]
      %v255 = vld [vmem:[%s210 + $0xb0] sm:$0xf]
      %v256 = vld [vmem:[%s210 + $0xb4] sm:$0xff]
      %v257 = vld [vmem:[%s210 + $0xbc] sm:$0xff]
      %v258 = vld [vmem:[%s210 + $0xc4] sm:$0xf]
      %v259 = vld [vmem:[%s210 + $0xc8] sm:$0xff]
      %v260 = vld [vmem:[%s210 + $0xd0] sm:$0xff]
      %v261 = vld [vmem:[%s210 + $0xd8] sm:$0xf]
      %v262 = vld [vmem:[%s210 + $0xdc] sm:$0xff]
      %v263 = vld [vmem:[%s210 + $0xe4] sm:$0xff]
      %v264 = vld [vmem:[%s210 + $0xec] sm:$0xf]
      %v265 = vld [vmem:[%s210 + $0xf0] sm:$0xff]
      %v266 = vld [vmem:[%s210 + $0xf8] sm:$0xff]
      %v267 = vld [vmem:[%s210 + $0x100] sm:$0xf]
      %v268 = vld [vmem:[%s210 + $0x104] sm:$0xff]
      %v269 = vld [vmem:[%s210 + $0x10c] sm:$0xff]
      %v270 = vld [vmem:[%s210 + $0x114] sm:$0xf]
      %v271 = vld [vmem:[%s210 + $0x118] sm:$0xff]
      %v272 = vld [vmem:[%s210 + $0x120] sm:$0xff]
      %v273 = vld [vmem:[%s210 + $0x128] sm:$0xf]
      %v274 = vld [vmem:[%s210 + $0x12c] sm:$0xff]
      %v275 = vld [vmem:[%s210 + $0x134] sm:$0xff]
      %v276 = vld [vmem:[%s210 + $0x13c] sm:$0xf]
      %v277 = vld [vmem:[%s210 + $0x140] sm:$0xff]
      %v278 = vld [vmem:[%s210 + $0x148] sm:$0xff]
      %v279 = vld [vmem:[%s210 + $0x150] sm:$0xf]
      %v280 = vld [vmem:[%s210 + $0x154] sm:$0xff]
      %v281 = vld [vmem:[%s210 + $0x15c] sm:$0xff]
      %v282 = vld [vmem:[%s210 + $0x164] sm:$0xf]
      %v283 = vld [vmem:[%s210 + $0x168] sm:$0xff]
      %v284 = vld [vmem:[%s210 + $0x170] sm:$0xff]
      %v285 = vld [vmem:[%s210 + $0x178] sm:$0xf]
      %v286 = vld [vmem:[%s210 + $0x17c] sm:$0xff]
      %v287 = vld [vmem:[%s210 + $0x184] sm:$0xff]
      %v288 = vld [vmem:[%s210 + $0x18c] sm:$0xf]
      %v289 = vld [vmem:[%s210 + $0x190] sm:$0xff]
      %v290 = vld [vmem:[%s210 + $0x198] sm:$0xff]
      %v291 = vld [vmem:[%s210 + $0x1a0] sm:$0xf]
      %v292 = vld [vmem:[%s210 + $0x1a4] sm:$0xff]
      %v293 = vld [vmem:[%s210 + $0x1ac] sm:$0xff]
      %v294 = vld [vmem:[%s210 + $0x1b4] sm:$0xf]
      %v295 = vld [vmem:[%s210 + $0x1b8] sm:$0xff]
      %v296 = vld [vmem:[%s210 + $0x1c0] sm:$0xff]
      %v297 = vld [vmem:[%s210 + $0x1c8] sm:$0xf]
      %v298 = vld [vmem:[%s210 + $0x1cc] sm:$0xff]
      %v299 = vld [vmem:[%s210 + $0x1d4] sm:$0xff]
      %v300 = vld [vmem:[%s210 + $0x1dc] sm:$0xf]
      %v301 = vld [vmem:[%s210 + $0x1e0] sm:$0xff]
      %v302 = vld [vmem:[%s210 + $0x1e8] sm:$0xff]
      %v303 = vld [vmem:[%s210 + $0x1f0] sm:$0xf]
      %v304 = vld [vmem:[%s210 + $0x1f4] sm:$0xff]
      %v305 = vld [vmem:[%s210 + $0x1fc] sm:$0xff]
      %v306 = vld [vmem:[%s210 + $0x204] sm:$0xf]
      %v307 = vld [vmem:[%s210 + $0x208] sm:$0xff]
      %v308 = vld [vmem:[%s210 + $0x210] sm:$0xff]
      %v309 = vld [vmem:[%s210 + $0x218] sm:$0xf]
      %v310 = vld [vmem:[%s210 + $0x21c] sm:$0xff]
      %v311 = vld [vmem:[%s210 + $0x224] sm:$0xff]
      %v312 = vld [vmem:[%s210 + $0x22c] sm:$0xf]
      %v313 = vld [vmem:[%s210 + $0x230] sm:$0xff]
      %v314 = vld [vmem:[%s210 + $0x238] sm:$0xff]
      %v315 = vld [vmem:[%s210 + $0x240] sm:$0xf]
      %v316 = vld [vmem:[%s210 + $0x244] sm:$0xff]
      %v317 = vld [vmem:[%s210 + $0x24c] sm:$0xff]
      %v318 = vld [vmem:[%s210 + $0x254] sm:$0xf]
      %v319 = vld [vmem:[%s210 + $0x258] sm:$0xff]
      %v320 = vld [vmem:[%s210 + $0x260] sm:$0xff]
      %v321 = vld [vmem:[%s210 + $0x268] sm:$0xf]
      %v322 = vld [vmem:[%s210 + $0x26c] sm:$0xff]
      %v323 = vld [vmem:[%s210 + $0x274] sm:$0xff]
      %v324 = vld [vmem:[%s210 + $0x27c] sm:$0xf]
      %v325 = vld [vmem:[%s210 + $0x280] sm:$0xff]
      %v326 = vld [vmem:[%s210 + $0x288] sm:$0xff]
      %v327 = vld [vmem:[%s210 + $0x290] sm:$0xf]
      %v328 = vld [vmem:[%s210 + $0x294] sm:$0xff]
      %v329 = vld [vmem:[%s210 + $0x29c] sm:$0xff]
      %v330 = vld [vmem:[%s210 + $0x2a4] sm:$0xf]
      %v331 = vld [vmem:[%s210 + $0x2a8] sm:$0xff]
      %v332 = vld [vmem:[%s210 + $0x2b0] sm:$0xff]
      %v333 = vld [vmem:[%s210 + $0x2b8] sm:$0xf]
      %v334 = vld [vmem:[%s210 + $0x2bc] sm:$0xff]
      %v335 = vld [vmem:[%s210 + $0x2c4] sm:$0xff]
      %v336 = vld [vmem:[%s210 + $0x2cc] sm:$0xf]
      %v337 = vld [vmem:[%s210 + $0x2d0] sm:$0xff]
      %v338 = vld [vmem:[%s210 + $0x2d8] sm:$0xff]
      %v339 = vld [vmem:[%s210 + $0x2e0] sm:$0xf]
      %v340 = vld [vmem:[%s210 + $0x2e4] sm:$0xff]
      %v341 = vld [vmem:[%s210 + $0x2ec] sm:$0xff]
      %v342 = vld [vmem:[%s210 + $0x2f4] sm:$0xf]
      %v343 = vld [vmem:[%s210 + $0x2f8] sm:$0xff]
      %v344 = vld [vmem:[%s210 + $0x300] sm:$0xff]
      %v345 = vld [vmem:[%s210 + $0x308] sm:$0xf]
      %v346 = vld [vmem:[%s210 + $0x30c] sm:$0xff]
      %v347 = vld [vmem:[%s210 + $0x314] sm:$0xff]
      %v348 = vld [vmem:[%s210 + $0x31c] sm:$0xf]
      %v349 = vld [vmem:[%s210 + $0x320] sm:$0xff]
      %v350 = vld [vmem:[%s210 + $0x328] sm:$0xff]
      %v351 = vld [vmem:[%s210 + $0x330] sm:$0xf]
      %v352 = vld [vmem:[%s210 + $0x334] sm:$0xff]
      %v353 = vld [vmem:[%s210 + $0x33c] sm:$0xff]
      %v354 = vld [vmem:[%s210 + $0x344] sm:$0xf]
      %v355 = vld [vmem:[%s210 + $0x348] sm:$0xff]
      %v356 = vld [vmem:[%s210 + $0x350] sm:$0xff]
      %v357 = vld [vmem:[%s210 + $0x358] sm:$0xf]
      %v358 = vld [vmem:[%s210 + $0x35c] sm:$0xff]
      %v359 = vld [vmem:[%s210 + $0x364] sm:$0xff]
      %v360 = vld [vmem:[%s210 + $0x36c] sm:$0xf]
      %v361 = vld [vmem:[%s210 + $0x370] sm:$0xff]
      %v362 = vld [vmem:[%s210 + $0x378] sm:$0xff]
      %v363 = vld [vmem:[%s210 + $0x380] sm:$0xf]
      %v364 = vld [vmem:[%s210 + $0x384] sm:$0xff]
      %v365 = vld [vmem:[%s210 + $0x38c] sm:$0xff]
      %v366 = vld [vmem:[%s210 + $0x394] sm:$0xf]
      %v367 = vld [vmem:[%s210 + $0x398] sm:$0xff]
      %v368 = vld [vmem:[%s210 + $0x3a0] sm:$0xff]
      %v369 = vld [vmem:[%s210 + $0x3a8] sm:$0xf]
      %v370 = vld [vmem:[%s210 + $0x3ac] sm:$0xff]
      %v371 = vld [vmem:[%s210 + $0x3b4] sm:$0xff]
      %v372 = vld [vmem:[%s210 + $0x3bc] sm:$0xf]
      %v373 = vld [vmem:[%s210 + $0x3c0] sm:$0xff]
      %v374 = vld [vmem:[%s210 + $0x3c8] sm:$0xff]
      %v375 = vld [vmem:[%s210 + $0x3d0] sm:$0xf]
      %v376 = vld [vmem:[%s210 + $0x3d4] sm:$0xff]
      %v377 = vld [vmem:[%s210 + $0x3dc] sm:$0xff]
      %v378 = vld [vmem:[%s210 + $0x3e4] sm:$0xf]
      %v379 = vld [vmem:[%s210 + $0x3e8] sm:$0xff]
      %v380 = vld [vmem:[%s210 + $0x3f0] sm:$0xff]
      %v381 = vld [vmem:[%s210 + $0x3f8] sm:$0xf]
      %v382 = vld [vmem:[%s210 + $0x3fc] sm:$0xff]
      %v383 = vld [vmem:[%s210 + $0x404] sm:$0xff]
      %v384 = vld [vmem:[%s210 + $0x40c] sm:$0xf]
      %v385 = vld [vmem:[%s210 + $0x410] sm:$0xff]
      %v386 = vld [vmem:[%s210 + $0x418] sm:$0xff]
      %v387 = vld [vmem:[%s210 + $0x420] sm:$0xf]
      %v388 = vld [vmem:[%s210 + $0x424] sm:$0xff]
      %v389 = vld [vmem:[%s210 + $0x42c] sm:$0xff]
      %v390 = vld [vmem:[%s210 + $0x434] sm:$0xf]
      %v391 = vld [vmem:[%s210 + $0x438] sm:$0xff]
      %v392 = vld [vmem:[%s210 + $0x440] sm:$0xff]
      %v393 = vld [vmem:[%s210 + $0x448] sm:$0xf]
      %v394 = vld [vmem:[%s210 + $0x44c] sm:$0xff]
      %v395 = vld [vmem:[%s210 + $0x454] sm:$0xff]
      %v396 = vld [vmem:[%s210 + $0x45c] sm:$0xf]
      %v397 = vld [vmem:[%s210 + $0x460] sm:$0xff]
      %v398 = vld [vmem:[%s210 + $0x468] sm:$0xff]
      %v399 = vld [vmem:[%s210 + $0x470] sm:$0xf]
      %v400 = vld [vmem:[%s210 + $0x474] sm:$0xff]
      %v401 = vld [vmem:[%s210 + $0x47c] sm:$0xff]
      %v402 = vld [vmem:[%s210 + $0x484] sm:$0xf]
      %v403 = vld [vmem:[%s210 + $0x488] sm:$0xff]
      %v404 = vld [vmem:[%s210 + $0x490] sm:$0xff]
      %v405 = vld [vmem:[%s210 + $0x498] sm:$0xf]
      %v406 = vld [vmem:[%s210 + $0x49c] sm:$0xff]
      %v407 = vld [vmem:[%s210 + $0x4a4] sm:$0xff]
      %v408 = vld [vmem:[%s210 + $0x4ac] sm:$0xf]
      %v409 = vld [vmem:[%s210 + $0x4b0] sm:$0xff]
      %v410 = vld [vmem:[%s210 + $0x4b8] sm:$0xff]
      %v411 = vld [vmem:[%s210 + $0x4c0] sm:$0xf]
      %v412 = vld [vmem:[%s210 + $0x4c4] sm:$0xff]
      %v413 = vld [vmem:[%s210 + $0x4cc] sm:$0xff]
      %v414 = vld [vmem:[%s210 + $0x4d4] sm:$0xf]
      %v415 = vld [vmem:[%s210 + $0x4d8] sm:$0xff]
      %v416 = vld [vmem:[%s210 + $0x4e0] sm:$0xff]
      %v417 = vld [vmem:[%s210 + $0x4e8] sm:$0xf]
      %v418 = vld [vmem:[%s210 + $0x4ec] sm:$0xff]
      %v419 = vld [vmem:[%s210 + $0x4f4] sm:$0xff]
      %v420 = vld [vmem:[%s210 + $0x4fc] sm:$0xf]
      %v421 = vld [vmem:[%s210 + $0x500] sm:$0xff]
      %v422 = vld [vmem:[%s210 + $0x508] sm:$0xff]
      %v423 = vld [vmem:[%s210 + $0x510] sm:$0xf]
      %v424 = vld [vmem:[%s210 + $0x514] sm:$0xff]
      %v425 = vld [vmem:[%s210 + $0x51c] sm:$0xff]
      %v426 = vld [vmem:[%s210 + $0x524] sm:$0xf]
      %v427 = vld [vmem:[%s210 + $0x528] sm:$0xff]
      %v428 = vld [vmem:[%s210 + $0x530] sm:$0xff]
      %v429 = vld [vmem:[%s210 + $0x538] sm:$0xf]
      %v430 = vld [vmem:[%s210 + $0x53c] sm:$0xff]
      %v431 = vld [vmem:[%s210 + $0x544] sm:$0xff]
      %v432 = vld [vmem:[%s210 + $0x54c] sm:$0xf]
      %v433 = vld [vmem:[%s210 + $0x550] sm:$0xff]
      %v434 = vld [vmem:[%s210 + $0x558] sm:$0xff]
      %v435 = vld [vmem:[%s210 + $0x560] sm:$0xf]
      %v436 = vld [vmem:[%s210 + $0x564] sm:$0xff]
      %v437 = vld [vmem:[%s210 + $0x56c] sm:$0xff]
      %v438 = vld [vmem:[%s210 + $0x574] sm:$0xf]
      %v439 = vld [vmem:[%s210 + $0x578] sm:$0xff]
      %v440 = vld [vmem:[%s210 + $0x580] sm:$0xff]
      %v441 = vld [vmem:[%s210 + $0x588] sm:$0xf]
      %v442 = vld [vmem:[%s210 + $0x58c] sm:$0xff]
      %v443 = vld [vmem:[%s210 + $0x594] sm:$0xff]
      %v444 = vld [vmem:[%s210 + $0x59c] sm:$0xf]
      %v445 = vld [vmem:[%s210 + $0x5a0] sm:$0xff]
      %v446 = vld [vmem:[%s210 + $0x5a8] sm:$0xff]
      %v447 = vld [vmem:[%s210 + $0x5b0] sm:$0xf]
      %v448 = vld [vmem:[%s210 + $0x5b4] sm:$0xff]
      %v449 = vld [vmem:[%s210 + $0x5bc] sm:$0xff]
      %v450 = vld [vmem:[%s210 + $0x5c4] sm:$0xf]
      %v451 = vld [vmem:[%s210 + $0x5c8] sm:$0xff]
      %v452 = vld [vmem:[%s210 + $0x5d0] sm:$0xff]
      %v453 = vld [vmem:[%s210 + $0x5d8] sm:$0xf]
      %v454 = vld [vmem:[%s210 + $0x5dc] sm:$0xff]
      %v455 = vld [vmem:[%s210 + $0x5e4] sm:$0xff]
      %v456 = vld [vmem:[%s210 + $0x5ec] sm:$0xf]
      %v457 = vld [vmem:[%s210 + $0x5f0] sm:$0xff]
      %v458 = vld [vmem:[%s210 + $0x5f8] sm:$0xff]
      %v459 = vld [vmem:[%s210 + $0x600] sm:$0xf]
      %v460 = vld [vmem:[%s210 + $0x604] sm:$0xff]
      %v461 = vld [vmem:[%s210 + $0x60c] sm:$0xff]
      %v462 = vld [vmem:[%s210 + $0x614] sm:$0xf]
      %v463 = vld [vmem:[%s210 + $0x618] sm:$0xff]
      %v464 = vld [vmem:[%s210 + $0x620] sm:$0xff]
      %v465 = vld [vmem:[%s210 + $0x628] sm:$0xf]
      %v466 = vld [vmem:[%s210 + $0x62c] sm:$0xff]
      %v467 = vld [vmem:[%s210 + $0x634] sm:$0xff]
      %v468 = vld [vmem:[%s210 + $0x63c] sm:$0xf]
      %v469 = vld [vmem:[%s210 + $0x640] sm:$0xff]
      %v470 = vld [vmem:[%s210 + $0x648] sm:$0xff]
      %v471 = vld [vmem:[%s210 + $0x650] sm:$0xf]
      %v472 = vld [vmem:[%s210 + $0x654] sm:$0xff]
      %v473 = vld [vmem:[%s210 + $0x65c] sm:$0xff]
      %v474 = vld [vmem:[%s210 + $0x664] sm:$0xf]
      %v475 = vld [vmem:[%s210 + $0x668] sm:$0xff]
      %v476 = vld [vmem:[%s210 + $0x670] sm:$0xff]
      %v477 = vld [vmem:[%s210 + $0x678] sm:$0xf]
      %v478 = vld [vmem:[%s210 + $0x67c] sm:$0xff]
      %v479 = vld [vmem:[%s210 + $0x684] sm:$0xff]
      %v480 = vld [vmem:[%s210 + $0x68c] sm:$0xf]
      %v481 = vld [vmem:[%s210 + $0x690] sm:$0xff]
      %v482 = vld [vmem:[%s210 + $0x698] sm:$0xff]
      %v483 = vld [vmem:[%s210 + $0x6a0] sm:$0xf]
      %v484 = vld [vmem:[%s210 + $0x6a4] sm:$0xff]
      %v485 = vld [vmem:[%s210 + $0x6ac] sm:$0xff]
      %v486 = vld [vmem:[%s210 + $0x6b4] sm:$0xf]
      %v487 = vld [vmem:[%s210 + $0x6b8] sm:$0xff]
      %v488 = vld [vmem:[%s210 + $0x6c0] sm:$0xff]
      %v489 = vld [vmem:[%s210 + $0x6c8] sm:$0xf]
      %v490 = vld [vmem:[%s210 + $0x6cc] sm:$0xff]
      %v491 = vld [vmem:[%s210 + $0x6d4] sm:$0xff]
      %v492 = vld [vmem:[%s210 + $0x6dc] sm:$0xf]
      %v493 = vld [vmem:[%s210 + $0x6e0] sm:$0xff]
      %v494 = vld [vmem:[%s210 + $0x6e8] sm:$0xff]
      %v495 = vld [vmem:[%s210 + $0x6f0] sm:$0xf]
      %v496 = vld [vmem:[%s210 + $0x6f4] sm:$0xff]
      %v497 = vld [vmem:[%s210 + $0x6fc] sm:$0xff]
      %v498 = vld [vmem:[%s210 + $0x704] sm:$0xf]
      %v499 = vld [vmem:[%s210 + $0x708] sm:$0xff]
      %v500 = vld [vmem:[%s210 + $0x710] sm:$0xff]
      %v501 = vld [vmem:[%s210 + $0x718] sm:$0xf]
      %v502 = vld [vmem:[%s210 + $0x71c] sm:$0xff]
      %v503 = vld [vmem:[%s210 + $0x724] sm:$0xff]
      %v504 = vld [vmem:[%s210 + $0x72c] sm:$0xf]
      %v505 = vld [vmem:[%s210 + $0x730] sm:$0xff]
      %v506 = vld [vmem:[%s210 + $0x738] sm:$0xff]
      %v507 = vld [vmem:[%s210 + $0x740] sm:$0xf]
      %v508 = vld [vmem:[%s210 + $0x744] sm:$0xff]
      %v509 = vld [vmem:[%s210 + $0x74c] sm:$0xff]
      %v510 = vld [vmem:[%s210 + $0x754] sm:$0xf]
      %v511 = vld [vmem:[%s210 + $0x758] sm:$0xff]
      %v512 = vld [vmem:[%s210 + $0x760] sm:$0xff]
      %v513 = vld [vmem:[%s210 + $0x768] sm:$0xf]
      %v514 = vld [vmem:[%s210 + $0x76c] sm:$0xff]
      %v515 = vld [vmem:[%s210 + $0x774] sm:$0xff]
      %v516 = vld [vmem:[%s210 + $0x77c] sm:$0xf]
      %v517 = vld [vmem:[%s210 + $0x780] sm:$0xff]
      %v518 = vld [vmem:[%s210 + $0x788] sm:$0xff]
      %v519 = vld [vmem:[%s210 + $0x790] sm:$0xf]
      %v520 = vld [vmem:[%s210 + $0x794] sm:$0xff]
      %v521 = vld [vmem:[%s210 + $0x79c] sm:$0xff]
      %v522 = vld [vmem:[%s210 + $0x7a4] sm:$0xf]
      %v523 = vld [vmem:[%s210 + $0x7a8] sm:$0xff]
      %v524 = vld [vmem:[%s210 + $0x7b0] sm:$0xff]
      %v525 = vld [vmem:[%s210 + $0x7b8] sm:$0xf]
      %v526 = vld [vmem:[%s210 + $0x7bc] sm:$0xff]
      %v527 = vld [vmem:[%s210 + $0x7c4] sm:$0xff]
      %v528 = vld [vmem:[%s210 + $0x7cc] sm:$0xf]
      %v529 = vld [vmem:[%s210 + $0x7d0] sm:$0xff]
      %v530 = vld [vmem:[%s210 + $0x7d8] sm:$0xff]
      %v531 = vld [vmem:[%s210 + $0x7e0] sm:$0xf]
      %v532 = vld [vmem:[%s210 + $0x7e4] sm:$0xff]
      %v533 = vld [vmem:[%s210 + $0x7ec] sm:$0xff]
      %v534 = vld [vmem:[%s210 + $0x7f4] sm:$0xf]
      %v535 = vld [vmem:[%s210 + $0x7f8] sm:$0xff]
      %v536 = vld [vmem:[%s210 + $0x800] sm:$0xff]
      %v537 = vld [vmem:[%s210 + $0x808] sm:$0xf]
      %v538 = vld [vmem:[%s210 + $0x80c] sm:$0xff]
      %v539 = vld [vmem:[%s210 + $0x814] sm:$0xff]
      %v540 = vld [vmem:[%s210 + $0x81c] sm:$0xf]
      %v541 = vld [vmem:[%s210 + $0x820] sm:$0xff]
      %v542 = vld [vmem:[%s210 + $0x828] sm:$0xff]
      %v543 = vld [vmem:[%s210 + $0x830] sm:$0xf]
      %v544 = vld [vmem:[%s210 + $0x834] sm:$0xff]
      %v545 = vld [vmem:[%s210 + $0x83c] sm:$0xff]
      %v546 = vld [vmem:[%s210 + $0x844] sm:$0xf]
      %v547 = vld [vmem:[%s210 + $0x848] sm:$0xff]
      %v548 = vld [vmem:[%s210 + $0x850] sm:$0xff]
      %v549 = vld [vmem:[%s210 + $0x858] sm:$0xf]
      %v550 = vld [vmem:[%s210 + $0x85c] sm:$0xff]
      %v551 = vld [vmem:[%s210 + $0x864] sm:$0xff]
      %v552 = vld [vmem:[%s210 + $0x86c] sm:$0xf]
      %v553 = vld [vmem:[%s210 + $0x870] sm:$0xff]
      %v554 = vld [vmem:[%s210 + $0x878] sm:$0xff]
      %v555 = vld [vmem:[%s210 + $0x880] sm:$0xf]
      %v556 = vld [vmem:[%s210 + $0x884] sm:$0xff]
      %v557 = vld [vmem:[%s210 + $0x88c] sm:$0xff]
      %v558 = vld [vmem:[%s210 + $0x894] sm:$0xf]
      %v559 = vld [vmem:[%s210 + $0x898] sm:$0xff]
      %v560 = vld [vmem:[%s210 + $0x8a0] sm:$0xff]
      %v561 = vld [vmem:[%s210 + $0x8a8] sm:$0xf]
      %v562 = vld [vmem:[%s210 + $0x8ac] sm:$0xff]
      %v563 = vld [vmem:[%s210 + $0x8b4] sm:$0xff]
      %v564 = vld [vmem:[%s210 + $0x8bc] sm:$0xf]
      %v565 = vld [vmem:[%s210 + $0x8c0] sm:$0xff]
      %v566 = vld [vmem:[%s210 + $0x8c8] sm:$0xff]
      %v567 = vld [vmem:[%s210 + $0x8d0] sm:$0xf]
      %v568 = vld [vmem:[%s210 + $0x8d4] sm:$0xff]
      %v569 = vld [vmem:[%s210 + $0x8dc] sm:$0xff]
      %v570 = vld [vmem:[%s210 + $0x8e4] sm:$0xf]
      %v571 = vld [vmem:[%s210 + $0x8e8] sm:$0xff]
      %v572 = vld [vmem:[%s210 + $0x8f0] sm:$0xff]
      %v573 = vld [vmem:[%s210 + $0x8f8] sm:$0xf]
      %v574 = vld [vmem:[%s210 + $0x8fc] sm:$0xff]
      %v575 = vld [vmem:[%s210 + $0x904] sm:$0xff]
      %v576 = vld [vmem:[%s210 + $0x90c] sm:$0xf]
      %v577 = vld [vmem:[%s210 + $0x910] sm:$0xff]
      %v578 = vld [vmem:[%s210 + $0x918] sm:$0xff]
      %v579 = vld [vmem:[%s210 + $0x920] sm:$0xf]
      %v580 = vld [vmem:[%s210 + $0x924] sm:$0xff]
      %v581 = vld [vmem:[%s210 + $0x92c] sm:$0xff]
      %v582 = vld [vmem:[%s210 + $0x934] sm:$0xf]
      %v583 = vld [vmem:[%s210 + $0x938] sm:$0xff]
      %v584 = vld [vmem:[%s210 + $0x940] sm:$0xff]
      %v585 = vld [vmem:[%s210 + $0x948] sm:$0xf]
      %v586 = vld [vmem:[%s210 + $0x94c] sm:$0xff]
      %v587 = vld [vmem:[%s210 + $0x954] sm:$0xff]
      %v588 = vld [vmem:[%s210 + $0x95c] sm:$0xf]
      %v589 = vld [vmem:[%s210 + $0x960] sm:$0xff]
      %v590 = vld [vmem:[%s210 + $0x968] sm:$0xff]
      %v591 = vld [vmem:[%s210 + $0x970] sm:$0xf]
      %v592 = vld [vmem:[%s210 + $0x974] sm:$0xff]
      %v593 = vld [vmem:[%s210 + $0x97c] sm:$0xff]
      %v594 = vld [vmem:[%s210 + $0x984] sm:$0xf]
      %v595 = vld [vmem:[%s210 + $0x988] sm:$0xff]
      %v596 = vld [vmem:[%s210 + $0x990] sm:$0xff]
      %v597 = vld [vmem:[%s210 + $0x998] sm:$0xf]
      %v598 = vld [vmem:[%s210 + $0x99c] sm:$0xff]
      %v599 = vld [vmem:[%s210 + $0x9a4] sm:$0xff]
      %v600 = vld [vmem:[%s210 + $0x9ac] sm:$0xf]
      %v601 = vld [vmem:[%s210 + $0x9b0] sm:$0xff]
      %v602 = vld [vmem:[%s210 + $0x9b8] sm:$0xff]
      %v603 = vld [vmem:[%s210 + $0x9c0] sm:$0xf]
      %v604 = vld [vmem:[%s210 + $0x9c4] sm:$0xff]
      %v605 = vld [vmem:[%s210 + $0x9cc] sm:$0xff]
      %v606 = vld [vmem:[%s210 + $0x9d4] sm:$0xf]
      %v607 = vld [vmem:[%s210 + $0x9d8] sm:$0xff]
      %v608 = vld [vmem:[%s210 + $0x9e0] sm:$0xff]
      %v609 = vld [vmem:[%s210 + $0x9e8] sm:$0xf]
      %v610 = vld [vmem:[%s210 + $0x9ec] sm:$0xff]
      %v611 = vld [vmem:[%s210 + $0x9f4] sm:$0xff]
      %v612 = vld [vmem:[%s210 + $0x9fc] sm:$0xf]
      %v613 = vld [vmem:[%s210 + $0xa00] sm:$0xff]
      %v614 = vld [vmem:[%s210 + $0xa08] sm:$0xff]
      %v615 = vld [vmem:[%s210 + $0xa10] sm:$0xf]
      %v616 = vld [vmem:[%s210 + $0xa14] sm:$0xff]
      %v617 = vld [vmem:[%s210 + $0xa1c] sm:$0xff]
      %v618 = vld [vmem:[%s210 + $0xa24] sm:$0xf]
      %v619 = vld [vmem:[%s210 + $0xa28] sm:$0xff]
      %v620 = vld [vmem:[%s210 + $0xa30] sm:$0xff]
      %v621 = vld [vmem:[%s210 + $0xa38] sm:$0xf]
      %v622 = vld [vmem:[%s210 + $0xa3c] sm:$0xff]
      %v623 = vld [vmem:[%s210 + $0xa44] sm:$0xff]
      %v624 = vld [vmem:[%s210 + $0xa4c] sm:$0xf]
      %v625 = vld [vmem:[%s210 + $0xa50] sm:$0xff]
      %v626 = vld [vmem:[%s210 + $0xa58] sm:$0xff]
      %v627 = vld [vmem:[%s210 + $0xa60] sm:$0xf]
      %v628 = vld [vmem:[%s210 + $0xa64] sm:$0xff]
      %v629 = vld [vmem:[%s210 + $0xa6c] sm:$0xff]
      %v630 = vld [vmem:[%s210 + $0xa74] sm:$0xf]
      %v631 = vld [vmem:[%s210 + $0xa78] sm:$0xff]
      %v632 = vld [vmem:[%s210 + $0xa80] sm:$0xff]
      %v633 = vld [vmem:[%s210 + $0xa88] sm:$0xf]
      %v634 = vld [vmem:[%s210 + $0xa8c] sm:$0xff]
      %v635 = vld [vmem:[%s210 + $0xa94] sm:$0xff]
      %v636 = vld [vmem:[%s210 + $0xa9c] sm:$0xf]
      %v637 = vld [vmem:[%s210 + $0xaa0] sm:$0xff]
      %v638 = vld [vmem:[%s210 + $0xaa8] sm:$0xff]
      %v639 = vld [vmem:[%s210 + $0xab0] sm:$0xf]
      %v640 = vld [vmem:[%s210 + $0xab4] sm:$0xff]
      %v641 = vld [vmem:[%s210 + $0xabc] sm:$0xff]
      %v642 = vld [vmem:[%s210 + $0xac4] sm:$0xf]
      %v643 = vld [vmem:[%s210 + $0xac8] sm:$0xff]
      %v644 = vld [vmem:[%s210 + $0xad0] sm:$0xff]
      %v645 = vld [vmem:[%s210 + $0xad8] sm:$0xf]
      %v646 = vld [vmem:[%s210 + $0xadc] sm:$0xff]
      %v647 = vld [vmem:[%s210 + $0xae4] sm:$0xff]
      %v648 = vld [vmem:[%s210 + $0xaec] sm:$0xf]
      %v649 = vld [vmem:[%s210 + $0xaf0] sm:$0xff]
      %v650 = vld [vmem:[%s210 + $0xaf8] sm:$0xff]
      %v651 = vld [vmem:[%s210 + $0xb00] sm:$0xf]
      %v652 = vld [vmem:[%s210 + $0xb04] sm:$0xff]
      %v653 = vld [vmem:[%s210 + $0xb0c] sm:$0xff]
      %v654 = vld [vmem:[%s210 + $0xb14] sm:$0xf]
      %v655 = vld [vmem:[%s210 + $0xb18] sm:$0xff]
      %v656 = vld [vmem:[%s210 + $0xb20] sm:$0xff]
      %v657 = vld [vmem:[%s210 + $0xb28] sm:$0xf]
      %v658 = vld [vmem:[%s210 + $0xb2c] sm:$0xff]
      %v659 = vld [vmem:[%s210 + $0xb34] sm:$0xff]
      %v660 = vld [vmem:[%s210 + $0xb3c] sm:$0xf]
      %v661 = vld [vmem:[%s210 + $0xb40] sm:$0xff]
      %v662 = vld [vmem:[%s210 + $0xb48] sm:$0xff]
      %v663 = vld [vmem:[%s210 + $0xb50] sm:$0xf]
      %v664 = vld [vmem:[%s210 + $0xb54] sm:$0xff]
      %v665 = vld [vmem:[%s210 + $0xb5c] sm:$0xff]
      %v666 = vld [vmem:[%s210 + $0xb64] sm:$0xf]
      %v667 = vld [vmem:[%s210 + $0xb68] sm:$0xff]
      %v668 = vld [vmem:[%s210 + $0xb70] sm:$0xff]
      %v669 = vld [vmem:[%s210 + $0xb78] sm:$0xf]
      %v670 = vld [vmem:[%s210 + $0xb7c] sm:$0xff]
      %v671 = vld [vmem:[%s210 + $0xb84] sm:$0xff]
      %v672 = vld [vmem:[%s210 + $0xb8c] sm:$0xf]
      %v673 = vld [vmem:[%s210 + $0xb90] sm:$0xff]
      %v674 = vld [vmem:[%s210 + $0xb98] sm:$0xff]
      %v675 = vld [vmem:[%s210 + $0xba0] sm:$0xf]
      %v676 = vld [vmem:[%s210 + $0xba4] sm:$0xff]
      %v677 = vld [vmem:[%s210 + $0xbac] sm:$0xff]
      %v678 = vld [vmem:[%s210 + $0xbb4] sm:$0xf]
      %v679 = vld [vmem:[%s210 + $0xbb8] sm:$0xff]
      %v680 = vld [vmem:[%s210 + $0xbc0] sm:$0xff]
      %v681 = vld [vmem:[%s210 + $0xbc8] sm:$0xf]
      %v682 = vld [vmem:[%s210 + $0xbcc] sm:$0xff]
      %v683 = vld [vmem:[%s210 + $0xbd4] sm:$0xff]
      %v684 = vld [vmem:[%s210 + $0xbdc] sm:$0xf]
      %v685 = vld [vmem:[%s210 + $0xbe0] sm:$0xff]
      %v686 = vld [vmem:[%s210 + $0xbe8] sm:$0xff]
      %v687 = vld [vmem:[%s210 + $0xbf0] sm:$0xf]
      %v688 = vld [vmem:[%s210 + $0xbf4] sm:$0xff]
      %v689 = vld [vmem:[%s210 + $0xbfc] sm:$0xff]
      %v690 = vld [vmem:[%s210 + $0xc04] sm:$0xf]
      %v691 = vld [vmem:[%s210 + $0xc08] sm:$0xff]
      %v692 = vld [vmem:[%s210 + $0xc10] sm:$0xff]
      %v693 = vld [vmem:[%s210 + $0xc18] sm:$0xf]
      %v694 = vld [vmem:[%s210 + $0xc1c] sm:$0xff]
      %v695 = vld [vmem:[%s210 + $0xc24] sm:$0xff]
      %v696 = vld [vmem:[%s210 + $0xc2c] sm:$0xf]
      %v697 = vld [vmem:[%s210 + $0xc30] sm:$0xff]
      %v698 = vld [vmem:[%s210 + $0xc38] sm:$0xff]
      %v699 = vld [vmem:[%s210 + $0xc40] sm:$0xf]
      %v700 = vld [vmem:[%s210 + $0xc44] sm:$0xff]
      %v701 = vld [vmem:[%s210 + $0xc4c] sm:$0xff]
      %v702 = vld [vmem:[%s210 + $0xc54] sm:$0xf]
      %v703 = vld [vmem:[%s210 + $0xc58] sm:$0xff]
      %v704 = vld [vmem:[%s210 + $0xc60] sm:$0xff]
      %v705 = vld [vmem:[%s210 + $0xc68] sm:$0xf]
      %v706 = vld [vmem:[%s210 + $0xc6c] sm:$0xff]
      %v707 = vld [vmem:[%s210 + $0xc74] sm:$0xff]
      %v708 = vld [vmem:[%s210 + $0xc7c] sm:$0xf]
      %v709 = vld [vmem:[%s210 + $0xc80] sm:$0xff]
      %v710 = vld [vmem:[%s210 + $0xc88] sm:$0xff]
      %v711 = vld [vmem:[%s210 + $0xc90] sm:$0xf]
      %v712 = vld [vmem:[%s210 + $0xc94] sm:$0xff]
      %v713 = vld [vmem:[%s210 + $0xc9c] sm:$0xff]
      %v714 = vld [vmem:[%s210 + $0xca4] sm:$0xf]
      %v715 = vld [vmem:[%s210 + $0xca8] sm:$0xff]
      %v716 = vld [vmem:[%s210 + $0xcb0] sm:$0xff]
      %v717 = vld [vmem:[%s210 + $0xcb8] sm:$0xf]
      %v718 = vld [vmem:[%s210 + $0xcbc] sm:$0xff]
      %v719 = vld [vmem:[%s210 + $0xcc4] sm:$0xff]
      %v720 = vld [vmem:[%s210 + $0xccc] sm:$0xf]
      %v721 = vld [vmem:[%s210 + $0xcd0] sm:$0xff]
      %v722 = vld [vmem:[%s210 + $0xcd8] sm:$0xff]
      %v723 = vld [vmem:[%s210 + $0xce0] sm:$0xf]
      %v724 = vld [vmem:[%s210 + $0xce4] sm:$0xff]
      %v725 = vld [vmem:[%s210 + $0xcec] sm:$0xff]
      %v726 = vld [vmem:[%s210 + $0xcf4] sm:$0xf]
      %v727 = vld [vmem:[%s210 + $0xcf8] sm:$0xff]
      %v728 = vld [vmem:[%s210 + $0xd00] sm:$0xff]
      %v729 = vld [vmem:[%s210 + $0xd08] sm:$0xf]
      %v730 = vld [vmem:[%s210 + $0xd0c] sm:$0xff]
      %v731 = vld [vmem:[%s210 + $0xd14] sm:$0xff]
      %v732 = vld [vmem:[%s210 + $0xd1c] sm:$0xf]
      %v733 = vld [vmem:[%s210 + $0xd20] sm:$0xff]
      %v734 = vld [vmem:[%s210 + $0xd28] sm:$0xff]
      %v735 = vld [vmem:[%s210 + $0xd30] sm:$0xf]
      %v736 = vld [vmem:[%s210 + $0xd34] sm:$0xff]
      %v737 = vld [vmem:[%s210 + $0xd3c] sm:$0xff]
      %v738 = vld [vmem:[%s210 + $0xd44] sm:$0xf]
      %v739 = vld [vmem:[%s210 + $0xd48] sm:$0xff]
      %v740 = vld [vmem:[%s210 + $0xd50] sm:$0xff]
      %v741 = vld [vmem:[%s210 + $0xd58] sm:$0xf]
      %v742 = vld [vmem:[%s210 + $0xd5c] sm:$0xff]
      %v743 = vld [vmem:[%s210 + $0xd64] sm:$0xff]
      %v744 = vld [vmem:[%s210 + $0xd6c] sm:$0xf]
      %v745 = vld [vmem:[%s210 + $0xd70] sm:$0xff]
      %v746 = vld [vmem:[%s210 + $0xd78] sm:$0xff]
      %v747 = vld [vmem:[%s210 + $0xd80] sm:$0xf]
      %v748 = vld [vmem:[%s210 + $0xd84] sm:$0xff]
      %v749 = vld [vmem:[%s210 + $0xd8c] sm:$0xff]
      %v750 = vld [vmem:[%s210 + $0xd94] sm:$0xf]
      %v751 = vld [vmem:[%s210 + $0xd98] sm:$0xff]
      %v752 = vld [vmem:[%s210 + $0xda0] sm:$0xff]
      %v753 = vld [vmem:[%s210 + $0xda8] sm:$0xf]
      %v754 = vld [vmem:[%s210 + $0xdac] sm:$0xff]
      %v755 = vld [vmem:[%s210 + $0xdb4] sm:$0xff]
      %v756 = vld [vmem:[%s210 + $0xdbc] sm:$0xf]
      %v757 = vld [vmem:[%s210 + $0xdc0] sm:$0xff]
      %v758 = vld [vmem:[%s210 + $0xdc8] sm:$0xff]
      %v759 = vld [vmem:[%s210 + $0xdd0] sm:$0xf]
      %v760 = vld [vmem:[%s210 + $0xdd4] sm:$0xff]
      %v761 = vld [vmem:[%s210 + $0xddc] sm:$0xff]
      %v762 = vld [vmem:[%s210 + $0xde4] sm:$0xf]
      %v763 = vld [vmem:[%s210 + $0xde8] sm:$0xff]
      %v764 = vld [vmem:[%s210 + $0xdf0] sm:$0xff]
      %v765 = vld [vmem:[%s210 + $0xdf8] sm:$0xf]
      %v766 = vld [vmem:[%s210 + $0xdfc] sm:$0xff]
      %v767 = vld [vmem:[%s210 + $0xe04] sm:$0xff]
      %v768 = vld [vmem:[%s210 + $0xe0c] sm:$0xf]
      %v769 = vld [vmem:[%s210 + $0xe10] sm:$0xff]
      %v770 = vld [vmem:[%s210 + $0xe18] sm:$0xff]
      %v771 = vld [vmem:[%s210 + $0xe20] sm:$0xf]
      %v772 = vld [vmem:[%s210 + $0xe24] sm:$0xff]
      %v773 = vld [vmem:[%s210 + $0xe2c] sm:$0xff]
      %v774 = vld [vmem:[%s210 + $0xe34] sm:$0xf]
      %v775 = vld [vmem:[%s210 + $0xe38] sm:$0xff]
      %v776 = vld [vmem:[%s210 + $0xe40] sm:$0xff]
      %v777 = vld [vmem:[%s210 + $0xe48] sm:$0xf]
      %v778 = vld [vmem:[%s210 + $0xe4c] sm:$0xff]
      %v779 = vld [vmem:[%s210 + $0xe54] sm:$0xff]
      %v780 = vld [vmem:[%s210 + $0xe5c] sm:$0xf]
      %v781 = vld [vmem:[%s210 + $0xe60] sm:$0xff]
      %v782 = vld [vmem:[%s210 + $0xe68] sm:$0xff]
      %v783 = vld [vmem:[%s210 + $0xe70] sm:$0xf]
      %v784 = vld [vmem:[%s210 + $0xe74] sm:$0xff]
      %v785 = vld [vmem:[%s210 + $0xe7c] sm:$0xff]
      %v786 = vld [vmem:[%s210 + $0xe84] sm:$0xf]
      %v787 = vld [vmem:[%s210 + $0xe88] sm:$0xff]
      %v788 = vld [vmem:[%s210 + $0xe90] sm:$0xff]
      %v789 = vld [vmem:[%s210 + $0xe98] sm:$0xf]
      %v790 = vld [vmem:[%s210 + $0xe9c] sm:$0xff]
      %v791 = vld [vmem:[%s210 + $0xea4] sm:$0xff]
      %v792 = vld [vmem:[%s210 + $0xeac] sm:$0xf]
      %v793 = vld [vmem:[%s210 + $0xeb0] sm:$0xff]
      %v794 = vld [vmem:[%s210 + $0xeb8] sm:$0xff]
      %v795 = vld [vmem:[%s210 + $0xec0] sm:$0xf]
      %v796 = vld [vmem:[%s210 + $0xec4] sm:$0xff]
      %v797 = vld [vmem:[%s210 + $0xecc] sm:$0xff]
      %v798 = vld [vmem:[%s210 + $0xed4] sm:$0xf]
      %v799 = vld [vmem:[%s210 + $0xed8] sm:$0xff]
      %v800 = vld [vmem:[%s210 + $0xee0] sm:$0xff]
      %v801 = vld [vmem:[%s210 + $0xee8] sm:$0xf]
      %v802 = vld [vmem:[%s210 + $0xeec] sm:$0xff]
      %v803 = vld [vmem:[%s210 + $0xef4] sm:$0xff]
      %v804 = vld [vmem:[%s210 + $0xefc] sm:$0xf]
      %v805 = vld [vmem:[%s210 + $0xf00] sm:$0xff]
      %v806 = vld [vmem:[%s210 + $0xf08] sm:$0xff]
      %v807 = vld [vmem:[%s210 + $0xf10] sm:$0xf]
      %v808 = vld [vmem:[%s210 + $0xf14] sm:$0xff]
      %v809 = vld [vmem:[%s210 + $0xf1c] sm:$0xff]
      %v810 = vld [vmem:[%s210 + $0xf24] sm:$0xf]
      %v811 = vld [vmem:[%s210 + $0xf28] sm:$0xff]
      %v812 = vld [vmem:[%s210 + $0xf30] sm:$0xff]
      %v813 = vld [vmem:[%s210 + $0xf38] sm:$0xf]
      %v814 = vld [vmem:[%s210 + $0xf3c] sm:$0xff]
      %v815 = vld [vmem:[%s210 + $0xf44] sm:$0xff]
      %v816 = vld [vmem:[%s210 + $0xf4c] sm:$0xf]
      %v817 = vld [vmem:[%s210 + $0xf50] sm:$0xff]
      %v818 = vld [vmem:[%s210 + $0xf58] sm:$0xff]
      %v819 = vld [vmem:[%s210 + $0xf60] sm:$0xf]
      %v820 = vld [vmem:[%s210 + $0xf64] sm:$0xff]
      %v821 = vld [vmem:[%s210 + $0xf6c] sm:$0xff]
      %v822 = vld [vmem:[%s210 + $0xf74] sm:$0xf]
      %v823 = vld [vmem:[%s210 + $0xf78] sm:$0xff]
      %v824 = vld [vmem:[%s210 + $0xf80] sm:$0xff]
      %v825 = vld [vmem:[%s210 + $0xf88] sm:$0xf]
      %v826 = vld [vmem:[%s210 + $0xf8c] sm:$0xff]
      %v827 = vld [vmem:[%s210 + $0xf94] sm:$0xff]
      %v828 = vld [vmem:[%s210 + $0xf9c] sm:$0xf]
      %v829 = vld [vmem:[%s210 + $0xfa0] sm:$0xff]
      %v830 = vld [vmem:[%s210 + $0xfa8] sm:$0xff]
      %v831 = vld [vmem:[%s210 + $0xfb0] sm:$0xf]
      %v832 = vld [vmem:[%s210 + $0xfb4] sm:$0xff]
      %v833 = vld [vmem:[%s210 + $0xfbc] sm:$0xff]
      %v834 = vld [vmem:[%s210 + $0xfc4] sm:$0xf]
      %v835 = vld [vmem:[%s210 + $0xfc8] sm:$0xff]
      %v836 = vld [vmem:[%s210 + $0xfd0] sm:$0xff]
      %v837 = vld [vmem:[%s210 + $0xfd8] sm:$0xf]
      %v838 = vld [vmem:[%s210 + $0xfdc] sm:$0xff]
      %v839 = vld [vmem:[%s210 + $0xfe4] sm:$0xff]
      %v840 = vld [vmem:[%s210 + $0xfec] sm:$0xf]
      %v841 = vld [vmem:[%s210 + $0xff0] sm:$0xff]
      %v842 = vld [vmem:[%s210 + $0xff8] sm:$0xff]
      %v843 = vld [vmem:[%s210 + $0x1000] sm:$0xf]
      %v844 = vld [vmem:[%s210 + $0x1004] sm:$0xff]
      %v845 = vld [vmem:[%s210 + $0x100c] sm:$0xff]
      %v846 = vld [vmem:[%s210 + $0x1014] sm:$0xf]
      %v847 = vld [vmem:[%s210 + $0x1018] sm:$0xff]
      %v848 = vld [vmem:[%s210 + $0x1020] sm:$0xff]
      %v849 = vld [vmem:[%s210 + $0x1028] sm:$0xf]
      %v850 = vld [vmem:[%s210 + $0x102c] sm:$0xff]
      %v851 = vld [vmem:[%s210 + $0x1034] sm:$0xff]
      %v852 = vld [vmem:[%s210 + $0x103c] sm:$0xf]
      %v853 = vld [vmem:[%s210 + $0x1040] sm:$0xff]
      %v854 = vld [vmem:[%s210 + $0x1048] sm:$0xff]
      %v855 = vld [vmem:[%s210 + $0x1050] sm:$0xf]
      %v856 = vld [vmem:[%s210 + $0x1054] sm:$0xff]
      %v857 = vld [vmem:[%s210 + $0x105c] sm:$0xff]
      %v858 = vld [vmem:[%s210 + $0x1064] sm:$0xf]
      %v859 = vld [vmem:[%s210 + $0x1068] sm:$0xff]
      %v860 = vld [vmem:[%s210 + $0x1070] sm:$0xff]
      %v861 = vld [vmem:[%s210 + $0x1078] sm:$0xf]
      %v862 = vld [vmem:[%s210 + $0x107c] sm:$0xff]
      %v863 = vld [vmem:[%s210 + $0x1084] sm:$0xff]
      %v864 = vld [vmem:[%s210 + $0x108c] sm:$0xf]
      %v865 = vld [vmem:[%s210 + $0x1090] sm:$0xff]
      %v866 = vld [vmem:[%s210 + $0x1098] sm:$0xff]
      %v867 = vld [vmem:[%s210 + $0x10a0] sm:$0xf]
      %v868 = vld [vmem:[%s210 + $0x10a4] sm:$0xff]
      %v869 = vld [vmem:[%s210 + $0x10ac] sm:$0xff]
      %v870 = vld [vmem:[%s210 + $0x10b4] sm:$0xf]
      %v871 = vld [vmem:[%s210 + $0x10b8] sm:$0xff]
      %v872 = vld [vmem:[%s210 + $0x10c0] sm:$0xff]
      %v873 = vld [vmem:[%s210 + $0x10c8] sm:$0xf]
      %v874 = vld [vmem:[%s210 + $0x10cc] sm:$0xff]
      %v875 = vld [vmem:[%s210 + $0x10d4] sm:$0xff]
      %v876 = vld [vmem:[%s210 + $0x10dc] sm:$0xf]
      %v877 = vld [vmem:[%s210 + $0x10e0] sm:$0xff]
      %v878 = vld [vmem:[%s210 + $0x10e8] sm:$0xff]
      %v879 = vld [vmem:[%s210 + $0x10f0] sm:$0xf]
      %v880 = vld [vmem:[%s210 + $0x10f4] sm:$0xff]
      %v881 = vld [vmem:[%s210 + $0x10fc] sm:$0xff]
      %v882 = vld [vmem:[%s210 + $0x1104] sm:$0xf]
      %v883 = vld [vmem:[%s210 + $0x1108] sm:$0xff]
      %v884 = vld [vmem:[%s210 + $0x1110] sm:$0xff]
      %v885 = vld [vmem:[%s210 + $0x1118] sm:$0xf]
      %v886 = vld [vmem:[%s210 + $0x111c] sm:$0xff]
      %v887 = vld [vmem:[%s210 + $0x1124] sm:$0xff]
      %v888 = vld [vmem:[%s210 + $0x112c] sm:$0xf]
      %v889 = vld [vmem:[%s210 + $0x1130] sm:$0xff]
      %v890 = vld [vmem:[%s210 + $0x1138] sm:$0xff]
      %v891 = vld [vmem:[%s210 + $0x1140] sm:$0xf]
      %v892 = vld [vmem:[%s210 + $0x1144] sm:$0xff]
      %v893 = vld [vmem:[%s210 + $0x114c] sm:$0xff]
      %v894 = vld [vmem:[%s210 + $0x1154] sm:$0xf]
      %v895 = vld [vmem:[%s210 + $0x1158] sm:$0xff]
      %v896 = vld [vmem:[%s210 + $0x1160] sm:$0xff]
      %v897 = vld [vmem:[%s210 + $0x1168] sm:$0xf]
      %v898 = vld [vmem:[%s210 + $0x116c] sm:$0xff]
      %v899 = vld [vmem:[%s210 + $0x1174] sm:$0xff]
      %v900 = vld [vmem:[%s210 + $0x117c] sm:$0xf]
      %v901 = vld [vmem:[%s210 + $0x1180] sm:$0xff]
      %v902 = vld [vmem:[%s210 + $0x1188] sm:$0xff]
      %v903 = vld [vmem:[%s210 + $0x1190] sm:$0xf]
      %v904 = vld [vmem:[%s210 + $0x1194] sm:$0xff]
      %v905 = vld [vmem:[%s210 + $0x119c] sm:$0xff]
      %v906 = vld [vmem:[%s210 + $0x11a4] sm:$0xf]
      %v907 = vld [vmem:[%s210 + $0x11a8] sm:$0xff]
      %v908 = vld [vmem:[%s210 + $0x11b0] sm:$0xff]
      %v909 = vld [vmem:[%s210 + $0x11b8] sm:$0xf]
      %v910 = vld [vmem:[%s210 + $0x11bc] sm:$0xff]
      %v911 = vld [vmem:[%s210 + $0x11c4] sm:$0xff]
      %v912 = vld [vmem:[%s210 + $0x11cc] sm:$0xf]
      %v913 = vld [vmem:[%s210 + $0x11d0] sm:$0xff]
      %v914 = vld [vmem:[%s210 + $0x11d8] sm:$0xff]
      %v915 = vld [vmem:[%s210 + $0x11e0] sm:$0xf]
      %v916 = vld [vmem:[%s210 + $0x11e4] sm:$0xff]
      %v917 = vld [vmem:[%s210 + $0x11ec] sm:$0xff]
      %v918 = vld [vmem:[%s210 + $0x11f4] sm:$0xf]
      %v919 = vld [vmem:[%s210 + $0x11f8] sm:$0xff]
      %v920 = vld [vmem:[%s210 + $0x1200] sm:$0xff]
      %v921 = vld [vmem:[%s210 + $0x1208] sm:$0xf]
      %v922 = vld [vmem:[%s210 + $0x120c] sm:$0xff]
      %v923 = vld [vmem:[%s210 + $0x1214] sm:$0xff]
      %v924 = vld [vmem:[%s210 + $0x121c] sm:$0xf]
      %v925 = vld [vmem:[%s210 + $0x1220] sm:$0xff]
      %v926 = vld [vmem:[%s210 + $0x1228] sm:$0xff]
      %v927 = vld [vmem:[%s210 + $0x1230] sm:$0xf]
      %v928 = vld [vmem:[%s210 + $0x1234] sm:$0xff]
      %v929 = vld [vmem:[%s210 + $0x123c] sm:$0xff]
      %v930 = vld [vmem:[%s210 + $0x1244] sm:$0xf]
      %v931 = vld [vmem:[%s210 + $0x1248] sm:$0xff]
      %v932 = vld [vmem:[%s210 + $0x1250] sm:$0xff]
      %v933 = vld [vmem:[%s210 + $0x1258] sm:$0xf]
      %v934 = vld [vmem:[%s210 + $0x125c] sm:$0xff]
      %v935 = vld [vmem:[%s210 + $0x1264] sm:$0xff]
      %v936 = vld [vmem:[%s210 + $0x126c] sm:$0xf]
      %v937 = vld [vmem:[%s210 + $0x1270] sm:$0xff]
      %v938 = vld [vmem:[%s210 + $0x1278] sm:$0xff]
      %v939 = vld [vmem:[%s210 + $0x1280] sm:$0xf]
      %v940 = vld [vmem:[%s210 + $0x1284] sm:$0xff]
      %v941 = vld [vmem:[%s210 + $0x128c] sm:$0xff]
      %v942 = vld [vmem:[%s210 + $0x1294] sm:$0xf]
      %v943 = vld [vmem:[%s210 + $0x1298] sm:$0xff]
      %v944 = vld [vmem:[%s210 + $0x12a0] sm:$0xff]
      %v945 = vld [vmem:[%s210 + $0x12a8] sm:$0xf]
      %v946 = vld [vmem:[%s210 + $0x12ac] sm:$0xff]
      %v947 = vld [vmem:[%s210 + $0x12b4] sm:$0xff]
      %v948 = vld [vmem:[%s210 + $0x12bc] sm:$0xf]
      %v949 = vld [vmem:[%s210 + $0x12c0] sm:$0xff]
      %v950 = vld [vmem:[%s210 + $0x12c8] sm:$0xff]
      %v951 = vld [vmem:[%s210 + $0x12d0] sm:$0xf]
      %v952 = vld [vmem:[%s210 + $0x12d4] sm:$0xff]
      %v953 = vld [vmem:[%s210 + $0x12dc] sm:$0xff]
      %v954 = vld [vmem:[%s210 + $0x12e4] sm:$0xf]
      %v955 = vld [vmem:[%s210 + $0x12e8] sm:$0xff]
      %v956 = vld [vmem:[%s210 + $0x12f0] sm:$0xff]
      %v957 = vld [vmem:[%s210 + $0x12f8] sm:$0xf]
      %v958 = vld [vmem:[%s210 + $0x12fc] sm:$0xff]
      %v959 = vld [vmem:[%s210 + $0x1304] sm:$0xff]
      %v960 = vld [vmem:[%s210 + $0x130c] sm:$0xf]
      %v961 = vld [vmem:[%s210 + $0x1310] sm:$0xff]
      %v962 = vld [vmem:[%s210 + $0x1318] sm:$0xff]
      %v963 = vld [vmem:[%s210 + $0x1320] sm:$0xf]
      %v964 = vld [vmem:[%s210 + $0x1324] sm:$0xff]
      %v965 = vld [vmem:[%s210 + $0x132c] sm:$0xff]
      %v966 = vld [vmem:[%s210 + $0x1334] sm:$0xf]
      %v967 = vld [vmem:[%s210 + $0x1338] sm:$0xff]
      %v968 = vld [vmem:[%s210 + $0x1340] sm:$0xff]
      %v969 = vld [vmem:[%s210 + $0x1348] sm:$0xf]
      %v970 = vld [vmem:[%s210 + $0x134c] sm:$0xff]
      %v971 = vld [vmem:[%s210 + $0x1354] sm:$0xff]
      %v972 = vld [vmem:[%s210 + $0x135c] sm:$0xf]
      %v973 = vld [vmem:[%s210 + $0x1360] sm:$0xff]
      %v974 = vld [vmem:[%s210 + $0x1368] sm:$0xff]
      %v975 = vld [vmem:[%s210 + $0x1370] sm:$0xf]
      %v976 = vld [vmem:[%s210 + $0x1374] sm:$0xff]
      %v977 = vld [vmem:[%s210 + $0x137c] sm:$0xff]
      %v978 = vld [vmem:[%s210 + $0x1384] sm:$0xf]
      %v979 = vld [vmem:[%s210 + $0x1388] sm:$0xff]
      %v980 = vld [vmem:[%s210 + $0x1390] sm:$0xff]
      %v981 = vld [vmem:[%s210 + $0x1398] sm:$0xf]
      %v982 = vld [vmem:[%s210 + $0x139c] sm:$0xff]
      %v983 = vld [vmem:[%s210 + $0x13a4] sm:$0xff]
      %v984 = vld [vmem:[%s210 + $0x13ac] sm:$0xf]
      %v985 = vld [vmem:[%s210 + $0x13b0] sm:$0xff]
      %v986 = vld [vmem:[%s210 + $0x13b8] sm:$0xff]
      %v987 = vld [vmem:[%s210 + $0x13c0] sm:$0xf]
      %v988 = vld [vmem:[%s210 + $0x13c4] sm:$0xff]
      %v989 = vld [vmem:[%s210 + $0x13cc] sm:$0xff]
      %v990 = vld [vmem:[%s210 + $0x13d4] sm:$0xf]
      %v991 = vld [vmem:[%s210 + $0x13d8] sm:$0xff]
      %v992 = vld [vmem:[%s210 + $0x13e0] sm:$0xff]
      %v993 = vld [vmem:[%s210 + $0x13e8] sm:$0xf]
      %v994 = vld [vmem:[%s210 + $0x13ec] sm:$0xff]
      %v995 = vld [vmem:[%s210 + $0x13f4] sm:$0xff]
      %v996 = vld [vmem:[%s210 + $0x13fc] sm:$0xf]
      %v997 = vld [vmem:[%s204] sm:$0xff]
      %v998 = vld [vmem:[%s204 + $0x8] sm:$0xff]
      %v999 = vld [vmem:[%s204 + $0x10] sm:$0xff]
      %v1000 = vld [vmem:[%s204 + $0x18] sm:$0xff]
      %v1001 = vld [vmem:[%s204 + $0x20] sm:$0xff]
      %v1002 = vld [vmem:[%s204 + $0x28] sm:$0xff]
      %v1003 = vld [vmem:[%s204 + $0x30] sm:$0xff]
      %v1004 = vld [vmem:[%s204 + $0x38] sm:$0xff]
      %v1005 = vld [vmem:[%s204 + $0x40] sm:$0xff]
      %v1006 = vld [vmem:[%s204 + $0x48] sm:$0xff]
      %v1007 = vld [vmem:[%s204 + $0x50] sm:$0xff]
      %v1008 = vld [vmem:[%s204 + $0x58] sm:$0xff]
      %v1009 = vld [vmem:[%s204 + $0x60] sm:$0xff]
      %v1010 = vld [vmem:[%s204 + $0x68] sm:$0xff]
      %v1011 = vld [vmem:[%s204 + $0x70] sm:$0xff]
      %v1012 = vld [vmem:[%s204 + $0x78] sm:$0xff]
      %v1013 = vld [vmem:[%s204 + $0x80] sm:$0xff]
      %v1014 = vld [vmem:[%s204 + $0x88] sm:$0xff]
      %v1015 = vld [vmem:[%s204 + $0x90] sm:$0xff]
      %v1016 = vld [vmem:[%s204 + $0x98] sm:$0xff]
      %v1017 = vld [vmem:[%s204 + $0xa0] sm:$0xff]
      %v1018 = vld [vmem:[%s204 + $0xa8] sm:$0xff]
      %v1019 = vld [vmem:[%s204 + $0xb0] sm:$0xff]
      %v1020 = vld [vmem:[%s204 + $0xb8] sm:$0xff]
      %v1021 = vld [vmem:[%s204 + $0xc0] sm:$0xff]
      %v1022 = vld [vmem:[%s204 + $0xc8] sm:$0xff]
      %v1023 = vld [vmem:[%s204 + $0xd0] sm:$0xff]
      %v1024 = vld [vmem:[%s204 + $0xd8] sm:$0xff]
      %v1025 = vld [vmem:[%s204 + $0xe0] sm:$0xff]
      %v1026 = vld [vmem:[%s204 + $0xe8] sm:$0xff]
      %v1027 = vld [vmem:[%s204 + $0xf0] sm:$0xff]
      %v1028 = vld [vmem:[%s204 + $0xf8] sm:$0xff]
      %v1029 = vld [vmem:[%s204 + $0x100] sm:$0xff]
      %v1030 = vld [vmem:[%s204 + $0x108] sm:$0xff]
      %v1031 = vld [vmem:[%s204 + $0x110] sm:$0xff]
      %v1032 = vld [vmem:[%s204 + $0x118] sm:$0xff]
      %v1033 = vld [vmem:[%s204 + $0x120] sm:$0xff]
      %v1034 = vld [vmem:[%s204 + $0x128] sm:$0xff]
      %v1035 = vld [vmem:[%s204 + $0x130] sm:$0xff]
      %v1036 = vld [vmem:[%s204 + $0x138] sm:$0xff]
      %v1037 = vld [vmem:[%s204 + $0x140] sm:$0xff]
      %v1038 = vld [vmem:[%s204 + $0x148] sm:$0xff]
      %v1039 = vld [vmem:[%s204 + $0x150] sm:$0xff]
      %v1040 = vld [vmem:[%s204 + $0x158] sm:$0xff]
      %v1041 = vld [vmem:[%s204 + $0x160] sm:$0xff]
      %v1042 = vld [vmem:[%s204 + $0x168] sm:$0xff]
      %v1043 = vld [vmem:[%s204 + $0x170] sm:$0xff]
      %v1044 = vld [vmem:[%s204 + $0x178] sm:$0xff]
      %v1093 = vunpack.c.l.b16 %v997
      %v1094 = vunpack.c.h.b16 %v997
      %v1095 = vunpack.c.l.b16 %v998
      %v1096 = vunpack.c.h.b16 %v998
      %v1097 = vunpack.c.l.b16 %v999
      %v1098 = vunpack.c.h.b16 %v999
      %v1099 = vunpack.c.l.b16 %v1000
      %v1100 = vunpack.c.h.b16 %v1000
      %v1101 = vunpack.c.l.b16 %v1001
      %v1102 = vunpack.c.h.b16 %v1001
      %v1103 = vunpack.c.l.b16 %v1002
      %v1104 = vunpack.c.h.b16 %v1002
      %v1105 = vunpack.c.l.b16 %v1003
      %v1106 = vunpack.c.h.b16 %v1003
      %v1107 = vunpack.c.l.b16 %v1004
      %v1108 = vunpack.c.h.b16 %v1004
      %v1109 = vunpack.c.l.b16 %v1005
      %v1110 = vunpack.c.h.b16 %v1005
      %v1111 = vunpack.c.l.b16 %v1006
      %v1112 = vunpack.c.h.b16 %v1006
      %v1113 = vunpack.c.l.b16 %v1007
      %v1114 = vunpack.c.h.b16 %v1007
      %v1115 = vunpack.c.l.b16 %v1008
      %v1116 = vunpack.c.h.b16 %v1008
      %v1117 = vunpack.c.l.b16 %v1009
      %v1118 = vunpack.c.h.b16 %v1009
      %v1119 = vunpack.c.l.b16 %v1010
      %v1120 = vunpack.c.h.b16 %v1010
      %v1121 = vunpack.c.l.b16 %v1011
      %v1122 = vunpack.c.h.b16 %v1011
      %v1123 = vunpack.c.l.b16 %v1012
      %v1124 = vunpack.c.h.b16 %v1012
      %v1125 = vunpack.c.l.b16 %v1013
      %v1126 = vunpack.c.h.b16 %v1013
      %v1127 = vunpack.c.l.b16 %v1014
      %v1128 = vunpack.c.h.b16 %v1014
      %v1129 = vunpack.c.l.b16 %v1015
      %v1130 = vunpack.c.h.b16 %v1015
      %v1131 = vunpack.c.l.b16 %v1016
      %v1132 = vunpack.c.h.b16 %v1016
      %v1133 = vunpack.c.l.b16 %v1017
      %v1134 = vunpack.c.h.b16 %v1017
      %v1135 = vunpack.c.l.b16 %v1018
      %v1136 = vunpack.c.h.b16 %v1018
      %v1137 = vunpack.c.l.b16 %v1019
      %v1138 = vunpack.c.h.b16 %v1019
      %v1139 = vunpack.c.l.b16 %v1020
      %v1140 = vunpack.c.h.b16 %v1020
      %v1141 = vunpack.c.l.b16 %v1021
      %v1142 = vunpack.c.h.b16 %v1021
      %v1143 = vunpack.c.l.b16 %v1022
      %v1144 = vunpack.c.h.b16 %v1022
      %v1145 = vunpack.c.l.b16 %v1023
      %v1146 = vunpack.c.h.b16 %v1023
      %v1147 = vunpack.c.l.b16 %v1024
      %v1148 = vunpack.c.h.b16 %v1024
      %v1149 = vunpack.c.l.b16 %v1025
      %v1150 = vunpack.c.h.b16 %v1025
      %v1151 = vunpack.c.l.b16 %v1026
      %v1152 = vunpack.c.h.b16 %v1026
      %v1153 = vunpack.c.l.b16 %v1027
      %v1154 = vunpack.c.h.b16 %v1027
      %v1155 = vunpack.c.l.b16 %v1028
      %v1156 = vunpack.c.h.b16 %v1028
      %v1157 = vunpack.c.l.b16 %v1029
      %v1158 = vunpack.c.h.b16 %v1029
      %v1159 = vunpack.c.l.b16 %v1030
      %v1160 = vunpack.c.h.b16 %v1030
      %v1161 = vunpack.c.l.b16 %v1031
      %v1162 = vunpack.c.h.b16 %v1031
      %v1163 = vunpack.c.l.b16 %v1032
      %v1164 = vunpack.c.h.b16 %v1032
      %v1165 = vunpack.c.l.b16 %v1033
      %v1166 = vunpack.c.h.b16 %v1033
      %v1167 = vunpack.c.l.b16 %v1034
      %v1168 = vunpack.c.h.b16 %v1034
      %v1169 = vunpack.c.l.b16 %v1035
      %v1170 = vunpack.c.h.b16 %v1035
      %v1171 = vunpack.c.l.b16 %v1036
      %v1172 = vunpack.c.h.b16 %v1036
      %v1173 = vunpack.c.l.b16 %v1037
      %v1174 = vunpack.c.h.b16 %v1037
      %v1175 = vunpack.c.l.b16 %v1038
      %v1176 = vunpack.c.h.b16 %v1038
      %v1177 = vunpack.c.l.b16 %v1039
      %v1178 = vunpack.c.h.b16 %v1039
      %v1179 = vunpack.c.l.b16 %v1040
      %v1180 = vunpack.c.h.b16 %v1040
      %v1181 = vunpack.c.l.b16 %v1041
      %v1182 = vunpack.c.h.b16 %v1041
      %v1183 = vunpack.c.l.b16 %v1042
      %v1184 = vunpack.c.h.b16 %v1042
      %v1185 = vunpack.c.l.b16 %v1043
      %v1186 = vunpack.c.h.b16 %v1043
      %v1187 = vunpack.c.l.b16 %v1044
      %v1188 = vunpack.c.h.b16 %v1044
      %v1189 = vpack.c.b16 %v1109, %v1093
      %v1190 = vpack.c.b16 %v1110, %v1094
      %v1191 = vpack.c.b16 %v1111, %v1095
      %v1192 = vpack.c.b16 %v1112, %v1096
      %v1193 = vpack.c.b16 %v1113, %v1097
      %v1194 = vpack.c.b16 %v1114, %v1098
      %v1195 = vpack.c.b16 %v1115, %v1099
      %v1196 = vpack.c.b16 %v1116, %v1100
      %v1197 = vpack.c.b16 %v1117, %v1101
      %v1198 = vpack.c.b16 %v1118, %v1102
      %v1199 = vpack.c.b16 %v1119, %v1103
      %v1200 = vpack.c.b16 %v1120, %v1104
      %v1201 = vpack.c.b16 %v1121, %v1105
      %v1202 = vpack.c.b16 %v1122, %v1106
      %v1203 = vpack.c.b16 %v1123, %v1107
      %v1204 = vpack.c.b16 %v1124, %v1108
      %v1205 = vpack.c.b16 %v1141, %v1125
      %v1206 = vpack.c.b16 %v1142, %v1126
      %v1207 = vpack.c.b16 %v1143, %v1127
      %v1208 = vpack.c.b16 %v1144, %v1128
      %v1209 = vpack.c.b16 %v1145, %v1129
      %v1210 = vpack.c.b16 %v1146, %v1130
      %v1211 = vpack.c.b16 %v1147, %v1131
      %v1212 = vpack.c.b16 %v1148, %v1132
      %v1213 = vpack.c.b16 %v1149, %v1133
      %v1214 = vpack.c.b16 %v1150, %v1134
      %v1215 = vpack.c.b16 %v1151, %v1135
      %v1216 = vpack.c.b16 %v1152, %v1136
      %v1217 = vpack.c.b16 %v1153, %v1137
      %v1218 = vpack.c.b16 %v1154, %v1138
      %v1219 = vpack.c.b16 %v1155, %v1139
      %v1220 = vpack.c.b16 %v1156, %v1140
      %v1221 = vpack.c.b16 %v1173, %v1157
      %v1222 = vpack.c.b16 %v1174, %v1158
      %v1223 = vpack.c.b16 %v1175, %v1159
      %v1224 = vpack.c.b16 %v1176, %v1160
      %v1225 = vpack.c.b16 %v1177, %v1161
      %v1226 = vpack.c.b16 %v1178, %v1162
      %v1227 = vpack.c.b16 %v1179, %v1163
      %v1228 = vpack.c.b16 %v1180, %v1164
      %v1229 = vpack.c.b16 %v1181, %v1165
      %v1230 = vpack.c.b16 %v1182, %v1166
      %v1231 = vpack.c.b16 %v1183, %v1167
      %v1232 = vpack.c.b16 %v1184, %v1168
      %v1233 = vpack.c.b16 %v1185, %v1169
      %v1234 = vpack.c.b16 %v1186, %v1170
      %v1235 = vpack.c.b16 %v1187, %v1171
      %v1236 = vpack.c.b16 %v1188, %v1172
      %v2053 = vunpack.c.l.b16 %v229
      %v2054 = vunpack.c.h.b16 %v229
      %v2055 = vunpack.c.l.b16 %v230
      %v2056 = vunpack.c.h.b16 %v230
      %v2057 = vunpack.c.l.b16 %v231
      %v2058 = vunpack.c.l.b16 %v232
      %v2059 = vunpack.c.h.b16 %v232
      %v2060 = vunpack.c.l.b16 %v233
      %v2061 = vunpack.c.h.b16 %v233
      %v2062 = vunpack.c.l.b16 %v234
      %v2063 = vunpack.c.l.b16 %v235
      %v2064 = vunpack.c.h.b16 %v235
      %v2065 = vunpack.c.l.b16 %v236
      %v2066 = vunpack.c.h.b16 %v236
      %v2067 = vunpack.c.l.b16 %v237
      %v2068 = vunpack.c.l.b16 %v238
      %v2069 = vunpack.c.h.b16 %v238
      %v2070 = vunpack.c.l.b16 %v239
      %v2071 = vunpack.c.h.b16 %v239
      %v2072 = vunpack.c.l.b16 %v240
      %v2073 = vunpack.c.l.b16 %v241
      %v2074 = vunpack.c.h.b16 %v241
      %v2075 = vunpack.c.l.b16 %v242
      %v2076 = vunpack.c.h.b16 %v242
      %v2077 = vunpack.c.l.b16 %v243
      %v2078 = vunpack.c.l.b16 %v244
      %v2079 = vunpack.c.h.b16 %v244
      %v2080 = vunpack.c.l.b16 %v245
      %v2081 = vunpack.c.h.b16 %v245
      %v2082 = vunpack.c.l.b16 %v246
      %v2083 = vunpack.c.l.b16 %v247
      %v2084 = vunpack.c.h.b16 %v247
      %v2085 = vunpack.c.l.b16 %v248
      %v2086 = vunpack.c.h.b16 %v248
      %v2087 = vunpack.c.l.b16 %v249
      %v2088 = vunpack.c.l.b16 %v250
      %v2089 = vunpack.c.h.b16 %v250
      %v2090 = vunpack.c.l.b16 %v251
      %v2091 = vunpack.c.h.b16 %v251
      %v2092 = vunpack.c.l.b16 %v252
      %v2093 = vunpack.c.l.b16 %v253
      %v2094 = vunpack.c.h.b16 %v253
      %v2095 = vunpack.c.l.b16 %v254
      %v2096 = vunpack.c.h.b16 %v254
      %v2097 = vunpack.c.l.b16 %v255
      %v2098 = vunpack.c.l.b16 %v256
      %v2099 = vunpack.c.h.b16 %v256
      %v2100 = vunpack.c.l.b16 %v257
      %v2101 = vunpack.c.h.b16 %v257
      %v2102 = vunpack.c.l.b16 %v258
      %v2103 = vunpack.c.l.b16 %v259
      %v2104 = vunpack.c.h.b16 %v259
      %v2105 = vunpack.c.l.b16 %v260
      %v2106 = vunpack.c.h.b16 %v260
      %v2107 = vunpack.c.l.b16 %v261
      %v2108 = vunpack.c.l.b16 %v262
      %v2109 = vunpack.c.h.b16 %v262
      %v2110 = vunpack.c.l.b16 %v263
      %v2111 = vunpack.c.h.b16 %v263
      %v2112 = vunpack.c.l.b16 %v264
      %v2113 = vunpack.c.l.b16 %v265
      %v2114 = vunpack.c.h.b16 %v265
      %v2115 = vunpack.c.l.b16 %v266
      %v2116 = vunpack.c.h.b16 %v266
      %v2117 = vunpack.c.l.b16 %v267
      %v2118 = vunpack.c.l.b16 %v268
      %v2119 = vunpack.c.h.b16 %v268
      %v2120 = vunpack.c.l.b16 %v269
      %v2121 = vunpack.c.h.b16 %v269
      %v2122 = vunpack.c.l.b16 %v270
      %v2123 = vunpack.c.l.b16 %v271
      %v2124 = vunpack.c.h.b16 %v271
      %v2125 = vunpack.c.l.b16 %v272
      %v2126 = vunpack.c.h.b16 %v272
      %v2127 = vunpack.c.l.b16 %v273
      %v2128 = vunpack.c.l.b16 %v274
      %v2129 = vunpack.c.h.b16 %v274
      %v2130 = vunpack.c.l.b16 %v275
      %v2131 = vunpack.c.h.b16 %v275
      %v2132 = vunpack.c.l.b16 %v276
      %v2133 = vunpack.c.l.b16 %v277
      %v2134 = vunpack.c.h.b16 %v277
      %v2135 = vunpack.c.l.b16 %v278
      %v2136 = vunpack.c.h.b16 %v278
      %v2137 = vunpack.c.l.b16 %v279
      %v2138 = vunpack.c.l.b16 %v280
      %v2139 = vunpack.c.h.b16 %v280
      %v2140 = vunpack.c.l.b16 %v281
      %v2141 = vunpack.c.h.b16 %v281
      %v2142 = vunpack.c.l.b16 %v282
      %v2143 = vunpack.c.l.b16 %v283
      %v2144 = vunpack.c.h.b16 %v283
      %v2145 = vunpack.c.l.b16 %v284
      %v2146 = vunpack.c.h.b16 %v284
      %v2147 = vunpack.c.l.b16 %v285
      %v2148 = vunpack.c.l.b16 %v286
      %v2149 = vunpack.c.h.b16 %v286
      %v2150 = vunpack.c.l.b16 %v287
      %v2151 = vunpack.c.h.b16 %v287
      %v2152 = vunpack.c.l.b16 %v288
      %v2153 = vunpack.c.l.b16 %v289
      %v2154 = vunpack.c.h.b16 %v289
      %v2155 = vunpack.c.l.b16 %v290
      %v2156 = vunpack.c.h.b16 %v290
      %v2157 = vunpack.c.l.b16 %v291
      %v2158 = vunpack.c.l.b16 %v292
      %v2159 = vunpack.c.h.b16 %v292
      %v2160 = vunpack.c.l.b16 %v293
      %v2161 = vunpack.c.h.b16 %v293
      %v2162 = vunpack.c.l.b16 %v294
      %v2163 = vunpack.c.l.b16 %v295
      %v2164 = vunpack.c.h.b16 %v295
      %v2165 = vunpack.c.l.b16 %v296
      %v2166 = vunpack.c.h.b16 %v296
      %v2167 = vunpack.c.l.b16 %v297
      %v2168 = vunpack.c.l.b16 %v298
      %v2169 = vunpack.c.h.b16 %v298
      %v2170 = vunpack.c.l.b16 %v299
      %v2171 = vunpack.c.h.b16 %v299
      %v2172 = vunpack.c.l.b16 %v300
      %v2173 = vunpack.c.l.b16 %v301
      %v2174 = vunpack.c.h.b16 %v301
      %v2175 = vunpack.c.l.b16 %v302
      %v2176 = vunpack.c.h.b16 %v302
      %v2177 = vunpack.c.l.b16 %v303
      %v2178 = vunpack.c.l.b16 %v304
      %v2179 = vunpack.c.h.b16 %v304
      %v2180 = vunpack.c.l.b16 %v305
      %v2181 = vunpack.c.h.b16 %v305
      %v2182 = vunpack.c.l.b16 %v306
      %v2183 = vunpack.c.l.b16 %v307
      %v2184 = vunpack.c.h.b16 %v307
      %v2185 = vunpack.c.l.b16 %v308
      %v2186 = vunpack.c.h.b16 %v308
      %v2187 = vunpack.c.l.b16 %v309
      %v2188 = vunpack.c.l.b16 %v310
      %v2189 = vunpack.c.h.b16 %v310
      %v2190 = vunpack.c.l.b16 %v311
      %v2191 = vunpack.c.h.b16 %v311
      %v2192 = vunpack.c.l.b16 %v312
      %v2193 = vunpack.c.l.b16 %v313
      %v2194 = vunpack.c.h.b16 %v313
      %v2195 = vunpack.c.l.b16 %v314
      %v2196 = vunpack.c.h.b16 %v314
      %v2197 = vunpack.c.l.b16 %v315
      %v2198 = vunpack.c.l.b16 %v316
      %v2199 = vunpack.c.h.b16 %v316
      %v2200 = vunpack.c.l.b16 %v317
      %v2201 = vunpack.c.h.b16 %v317
      %v2202 = vunpack.c.l.b16 %v318
      %v2203 = vunpack.c.l.b16 %v319
      %v2204 = vunpack.c.h.b16 %v319
      %v2205 = vunpack.c.l.b16 %v320
      %v2206 = vunpack.c.h.b16 %v320
      %v2207 = vunpack.c.l.b16 %v321
      %v2208 = vunpack.c.l.b16 %v322
      %v2209 = vunpack.c.h.b16 %v322
      %v2210 = vunpack.c.l.b16 %v323
      %v2211 = vunpack.c.h.b16 %v323
      %v2212 = vunpack.c.l.b16 %v324
      %v2213 = vunpack.c.l.b16 %v325
      %v2214 = vunpack.c.h.b16 %v325
      %v2215 = vunpack.c.l.b16 %v326
      %v2216 = vunpack.c.h.b16 %v326
      %v2217 = vunpack.c.l.b16 %v327
      %v2218 = vunpack.c.l.b16 %v328
      %v2219 = vunpack.c.h.b16 %v328
      %v2220 = vunpack.c.l.b16 %v329
      %v2221 = vunpack.c.h.b16 %v329
      %v2222 = vunpack.c.l.b16 %v330
      %v2223 = vunpack.c.l.b16 %v331
      %v2224 = vunpack.c.h.b16 %v331
      %v2225 = vunpack.c.l.b16 %v332
      %v2226 = vunpack.c.h.b16 %v332
      %v2227 = vunpack.c.l.b16 %v333
      %v2228 = vunpack.c.l.b16 %v334
      %v2229 = vunpack.c.h.b16 %v334
      %v2230 = vunpack.c.l.b16 %v335
      %v2231 = vunpack.c.h.b16 %v335
      %v2232 = vunpack.c.l.b16 %v336
      %v2233 = vunpack.c.l.b16 %v337
      %v2234 = vunpack.c.h.b16 %v337
      %v2235 = vunpack.c.l.b16 %v338
      %v2236 = vunpack.c.h.b16 %v338
      %v2237 = vunpack.c.l.b16 %v339
      %v2238 = vunpack.c.l.b16 %v340
      %v2239 = vunpack.c.h.b16 %v340
      %v2240 = vunpack.c.l.b16 %v341
      %v2241 = vunpack.c.h.b16 %v341
      %v2242 = vunpack.c.l.b16 %v342
      %v2243 = vunpack.c.l.b16 %v343
      %v2244 = vunpack.c.h.b16 %v343
      %v2245 = vunpack.c.l.b16 %v344
      %v2246 = vunpack.c.h.b16 %v344
      %v2247 = vunpack.c.l.b16 %v345
      %v2248 = vunpack.c.l.b16 %v346
      %v2249 = vunpack.c.h.b16 %v346
      %v2250 = vunpack.c.l.b16 %v347
      %v2251 = vunpack.c.h.b16 %v347
      %v2252 = vunpack.c.l.b16 %v348
      %v2253 = vunpack.c.l.b16 %v349
      %v2254 = vunpack.c.h.b16 %v349
      %v2255 = vunpack.c.l.b16 %v350
      %v2256 = vunpack.c.h.b16 %v350
      %v2257 = vunpack.c.l.b16 %v351
      %v2258 = vunpack.c.l.b16 %v352
      %v2259 = vunpack.c.h.b16 %v352
      %v2260 = vunpack.c.l.b16 %v353
      %v2261 = vunpack.c.h.b16 %v353
      %v2262 = vunpack.c.l.b16 %v354
      %v2263 = vunpack.c.l.b16 %v355
      %v2264 = vunpack.c.h.b16 %v355
      %v2265 = vunpack.c.l.b16 %v356
      %v2266 = vunpack.c.h.b16 %v356
      %v2267 = vunpack.c.l.b16 %v357
      %v2268 = vunpack.c.l.b16 %v358
      %v2269 = vunpack.c.h.b16 %v358
      %v2270 = vunpack.c.l.b16 %v359
      %v2271 = vunpack.c.h.b16 %v359
      %v2272 = vunpack.c.l.b16 %v360
      %v2273 = vunpack.c.l.b16 %v361
      %v2274 = vunpack.c.h.b16 %v361
      %v2275 = vunpack.c.l.b16 %v362
      %v2276 = vunpack.c.h.b16 %v362
      %v2277 = vunpack.c.l.b16 %v363
      %v2278 = vunpack.c.l.b16 %v364
      %v2279 = vunpack.c.h.b16 %v364
      %v2280 = vunpack.c.l.b16 %v365
      %v2281 = vunpack.c.h.b16 %v365
      %v2282 = vunpack.c.l.b16 %v366
      %v2283 = vunpack.c.l.b16 %v367
      %v2284 = vunpack.c.h.b16 %v367
      %v2285 = vunpack.c.l.b16 %v368
      %v2286 = vunpack.c.h.b16 %v368
      %v2287 = vunpack.c.l.b16 %v369
      %v2288 = vunpack.c.l.b16 %v370
      %v2289 = vunpack.c.h.b16 %v370
      %v2290 = vunpack.c.l.b16 %v371
      %v2291 = vunpack.c.h.b16 %v371
      %v2292 = vunpack.c.l.b16 %v372
      %v2293 = vunpack.c.l.b16 %v373
      %v2294 = vunpack.c.h.b16 %v373
      %v2295 = vunpack.c.l.b16 %v374
      %v2296 = vunpack.c.h.b16 %v374
      %v2297 = vunpack.c.l.b16 %v375
      %v2298 = vunpack.c.l.b16 %v376
      %v2299 = vunpack.c.h.b16 %v376
      %v2300 = vunpack.c.l.b16 %v377
      %v2301 = vunpack.c.h.b16 %v377
      %v2302 = vunpack.c.l.b16 %v378
      %v2303 = vunpack.c.l.b16 %v379
      %v2304 = vunpack.c.h.b16 %v379
      %v2305 = vunpack.c.l.b16 %v380
      %v2306 = vunpack.c.h.b16 %v380
      %v2307 = vunpack.c.l.b16 %v381
      %v2308 = vunpack.c.l.b16 %v382
      %v2309 = vunpack.c.h.b16 %v382
      %v2310 = vunpack.c.l.b16 %v383
      %v2311 = vunpack.c.h.b16 %v383
      %v2312 = vunpack.c.l.b16 %v384
      %v2313 = vunpack.c.l.b16 %v385
      %v2314 = vunpack.c.h.b16 %v385
      %v2315 = vunpack.c.l.b16 %v386
      %v2316 = vunpack.c.h.b16 %v386
      %v2317 = vunpack.c.l.b16 %v387
      %v2318 = vunpack.c.l.b16 %v388
      %v2319 = vunpack.c.h.b16 %v388
      %v2320 = vunpack.c.l.b16 %v389
      %v2321 = vunpack.c.h.b16 %v389
      %v2322 = vunpack.c.l.b16 %v390
      %v2323 = vunpack.c.l.b16 %v391
      %v2324 = vunpack.c.h.b16 %v391
      %v2325 = vunpack.c.l.b16 %v392
      %v2326 = vunpack.c.h.b16 %v392
      %v2327 = vunpack.c.l.b16 %v393
      %v2328 = vunpack.c.l.b16 %v394
      %v2329 = vunpack.c.h.b16 %v394
      %v2330 = vunpack.c.l.b16 %v395
      %v2331 = vunpack.c.h.b16 %v395
      %v2332 = vunpack.c.l.b16 %v396
      %v2333 = vunpack.c.l.b16 %v397
      %v2334 = vunpack.c.h.b16 %v397
      %v2335 = vunpack.c.l.b16 %v398
      %v2336 = vunpack.c.h.b16 %v398
      %v2337 = vunpack.c.l.b16 %v399
      %v2338 = vunpack.c.l.b16 %v400
      %v2339 = vunpack.c.h.b16 %v400
      %v2340 = vunpack.c.l.b16 %v401
      %v2341 = vunpack.c.h.b16 %v401
      %v2342 = vunpack.c.l.b16 %v402
      %v2343 = vunpack.c.l.b16 %v403
      %v2344 = vunpack.c.h.b16 %v403
      %v2345 = vunpack.c.l.b16 %v404
      %v2346 = vunpack.c.h.b16 %v404
      %v2347 = vunpack.c.l.b16 %v405
      %v2348 = vunpack.c.l.b16 %v406
      %v2349 = vunpack.c.h.b16 %v406
      %v2350 = vunpack.c.l.b16 %v407
      %v2351 = vunpack.c.h.b16 %v407
      %v2352 = vunpack.c.l.b16 %v408
      %v2353 = vunpack.c.l.b16 %v409
      %v2354 = vunpack.c.h.b16 %v409
      %v2355 = vunpack.c.l.b16 %v410
      %v2356 = vunpack.c.h.b16 %v410
      %v2357 = vunpack.c.l.b16 %v411
      %v2358 = vunpack.c.l.b16 %v412
      %v2359 = vunpack.c.h.b16 %v412
      %v2360 = vunpack.c.l.b16 %v413
      %v2361 = vunpack.c.h.b16 %v413
      %v2362 = vunpack.c.l.b16 %v414
      %v2363 = vunpack.c.l.b16 %v415
      %v2364 = vunpack.c.h.b16 %v415
      %v2365 = vunpack.c.l.b16 %v416
      %v2366 = vunpack.c.h.b16 %v416
      %v2367 = vunpack.c.l.b16 %v417
      %v2368 = vunpack.c.l.b16 %v418
      %v2369 = vunpack.c.h.b16 %v418
      %v2370 = vunpack.c.l.b16 %v419
      %v2371 = vunpack.c.h.b16 %v419
      %v2372 = vunpack.c.l.b16 %v420
      %v2373 = vunpack.c.l.b16 %v421
      %v2374 = vunpack.c.h.b16 %v421
      %v2375 = vunpack.c.l.b16 %v422
      %v2376 = vunpack.c.h.b16 %v422
      %v2377 = vunpack.c.l.b16 %v423
      %v2378 = vunpack.c.l.b16 %v424
      %v2379 = vunpack.c.h.b16 %v424
      %v2380 = vunpack.c.l.b16 %v425
      %v2381 = vunpack.c.h.b16 %v425
      %v2382 = vunpack.c.l.b16 %v426
      %v2383 = vunpack.c.l.b16 %v427
      %v2384 = vunpack.c.h.b16 %v427
      %v2385 = vunpack.c.l.b16 %v428
      %v2386 = vunpack.c.h.b16 %v428
      %v2387 = vunpack.c.l.b16 %v429
      %v2388 = vunpack.c.l.b16 %v430
      %v2389 = vunpack.c.h.b16 %v430
      %v2390 = vunpack.c.l.b16 %v431
      %v2391 = vunpack.c.h.b16 %v431
      %v2392 = vunpack.c.l.b16 %v432
      %v2393 = vunpack.c.l.b16 %v433
      %v2394 = vunpack.c.h.b16 %v433
      %v2395 = vunpack.c.l.b16 %v434
      %v2396 = vunpack.c.h.b16 %v434
      %v2397 = vunpack.c.l.b16 %v435
      %v2398 = vunpack.c.l.b16 %v436
      %v2399 = vunpack.c.h.b16 %v436
      %v2400 = vunpack.c.l.b16 %v437
      %v2401 = vunpack.c.h.b16 %v437
      %v2402 = vunpack.c.l.b16 %v438
      %v2403 = vunpack.c.l.b16 %v439
      %v2404 = vunpack.c.h.b16 %v439
      %v2405 = vunpack.c.l.b16 %v440
      %v2406 = vunpack.c.h.b16 %v440
      %v2407 = vunpack.c.l.b16 %v441
      %v2408 = vunpack.c.l.b16 %v442
      %v2409 = vunpack.c.h.b16 %v442
      %v2410 = vunpack.c.l.b16 %v443
      %v2411 = vunpack.c.h.b16 %v443
      %v2412 = vunpack.c.l.b16 %v444
      %v2413 = vunpack.c.l.b16 %v445
      %v2414 = vunpack.c.h.b16 %v445
      %v2415 = vunpack.c.l.b16 %v446
      %v2416 = vunpack.c.h.b16 %v446
      %v2417 = vunpack.c.l.b16 %v447
      %v2418 = vunpack.c.l.b16 %v448
      %v2419 = vunpack.c.h.b16 %v448
      %v2420 = vunpack.c.l.b16 %v449
      %v2421 = vunpack.c.h.b16 %v449
      %v2422 = vunpack.c.l.b16 %v450
      %v2423 = vunpack.c.l.b16 %v451
      %v2424 = vunpack.c.h.b16 %v451
      %v2425 = vunpack.c.l.b16 %v452
      %v2426 = vunpack.c.h.b16 %v452
      %v2427 = vunpack.c.l.b16 %v453
      %v2428 = vunpack.c.l.b16 %v454
      %v2429 = vunpack.c.h.b16 %v454
      %v2430 = vunpack.c.l.b16 %v455
      %v2431 = vunpack.c.h.b16 %v455
      %v2432 = vunpack.c.l.b16 %v456
      %v2433 = vunpack.c.l.b16 %v457
      %v2434 = vunpack.c.h.b16 %v457
      %v2435 = vunpack.c.l.b16 %v458
      %v2436 = vunpack.c.h.b16 %v458
      %v2437 = vunpack.c.l.b16 %v459
      %v2438 = vunpack.c.l.b16 %v460
      %v2439 = vunpack.c.h.b16 %v460
      %v2440 = vunpack.c.l.b16 %v461
      %v2441 = vunpack.c.h.b16 %v461
      %v2442 = vunpack.c.l.b16 %v462
      %v2443 = vunpack.c.l.b16 %v463
      %v2444 = vunpack.c.h.b16 %v463
      %v2445 = vunpack.c.l.b16 %v464
      %v2446 = vunpack.c.h.b16 %v464
      %v2447 = vunpack.c.l.b16 %v465
      %v2448 = vunpack.c.l.b16 %v466
      %v2449 = vunpack.c.h.b16 %v466
      %v2450 = vunpack.c.l.b16 %v467
      %v2451 = vunpack.c.h.b16 %v467
      %v2452 = vunpack.c.l.b16 %v468
      %v2453 = vunpack.c.l.b16 %v469
      %v2454 = vunpack.c.h.b16 %v469
      %v2455 = vunpack.c.l.b16 %v470
      %v2456 = vunpack.c.h.b16 %v470
      %v2457 = vunpack.c.l.b16 %v471
      %v2458 = vunpack.c.l.b16 %v472
      %v2459 = vunpack.c.h.b16 %v472
      %v2460 = vunpack.c.l.b16 %v473
      %v2461 = vunpack.c.h.b16 %v473
      %v2462 = vunpack.c.l.b16 %v474
      %v2463 = vunpack.c.l.b16 %v475
      %v2464 = vunpack.c.h.b16 %v475
      %v2465 = vunpack.c.l.b16 %v476
      %v2466 = vunpack.c.h.b16 %v476
      %v2467 = vunpack.c.l.b16 %v477
      %v2468 = vunpack.c.l.b16 %v478
      %v2469 = vunpack.c.h.b16 %v478
      %v2470 = vunpack.c.l.b16 %v479
      %v2471 = vunpack.c.h.b16 %v479
      %v2472 = vunpack.c.l.b16 %v480
      %v2473 = vunpack.c.l.b16 %v481
      %v2474 = vunpack.c.h.b16 %v481
      %v2475 = vunpack.c.l.b16 %v482
      %v2476 = vunpack.c.h.b16 %v482
      %v2477 = vunpack.c.l.b16 %v483
      %v2478 = vunpack.c.l.b16 %v484
      %v2479 = vunpack.c.h.b16 %v484
      %v2480 = vunpack.c.l.b16 %v485
      %v2481 = vunpack.c.h.b16 %v485
      %v2482 = vunpack.c.l.b16 %v486
      %v2483 = vunpack.c.l.b16 %v487
      %v2484 = vunpack.c.h.b16 %v487
      %v2485 = vunpack.c.l.b16 %v488
      %v2486 = vunpack.c.h.b16 %v488
      %v2487 = vunpack.c.l.b16 %v489
      %v2488 = vunpack.c.l.b16 %v490
      %v2489 = vunpack.c.h.b16 %v490
      %v2490 = vunpack.c.l.b16 %v491
      %v2491 = vunpack.c.h.b16 %v491
      %v2492 = vunpack.c.l.b16 %v492
      %v2493 = vunpack.c.l.b16 %v493
      %v2494 = vunpack.c.h.b16 %v493
      %v2495 = vunpack.c.l.b16 %v494
      %v2496 = vunpack.c.h.b16 %v494
      %v2497 = vunpack.c.l.b16 %v495
      %v2498 = vunpack.c.l.b16 %v496
      %v2499 = vunpack.c.h.b16 %v496
      %v2500 = vunpack.c.l.b16 %v497
      %v2501 = vunpack.c.h.b16 %v497
      %v2502 = vunpack.c.l.b16 %v498
      %v2503 = vunpack.c.l.b16 %v499
      %v2504 = vunpack.c.h.b16 %v499
      %v2505 = vunpack.c.l.b16 %v500
      %v2506 = vunpack.c.h.b16 %v500
      %v2507 = vunpack.c.l.b16 %v501
      %v2508 = vunpack.c.l.b16 %v502
      %v2509 = vunpack.c.h.b16 %v502
      %v2510 = vunpack.c.l.b16 %v503
      %v2511 = vunpack.c.h.b16 %v503
      %v2512 = vunpack.c.l.b16 %v504
      %v2513 = vunpack.c.l.b16 %v505
      %v2514 = vunpack.c.h.b16 %v505
      %v2515 = vunpack.c.l.b16 %v506
      %v2516 = vunpack.c.h.b16 %v506
      %v2517 = vunpack.c.l.b16 %v507
      %v2518 = vunpack.c.l.b16 %v508
      %v2519 = vunpack.c.h.b16 %v508
      %v2520 = vunpack.c.l.b16 %v509
      %v2521 = vunpack.c.h.b16 %v509
      %v2522 = vunpack.c.l.b16 %v510
      %v2523 = vunpack.c.l.b16 %v511
      %v2524 = vunpack.c.h.b16 %v511
      %v2525 = vunpack.c.l.b16 %v512
      %v2526 = vunpack.c.h.b16 %v512
      %v2527 = vunpack.c.l.b16 %v513
      %v2528 = vunpack.c.l.b16 %v514
      %v2529 = vunpack.c.h.b16 %v514
      %v2530 = vunpack.c.l.b16 %v515
      %v2531 = vunpack.c.h.b16 %v515
      %v2532 = vunpack.c.l.b16 %v516
      %v2533 = vunpack.c.l.b16 %v517
      %v2534 = vunpack.c.h.b16 %v517
      %v2535 = vunpack.c.l.b16 %v518
      %v2536 = vunpack.c.h.b16 %v518
      %v2537 = vunpack.c.l.b16 %v519
      %v2538 = vunpack.c.l.b16 %v520
      %v2539 = vunpack.c.h.b16 %v520
      %v2540 = vunpack.c.l.b16 %v521
      %v2541 = vunpack.c.h.b16 %v521
      %v2542 = vunpack.c.l.b16 %v522
      %v2543 = vunpack.c.l.b16 %v523
      %v2544 = vunpack.c.h.b16 %v523
      %v2545 = vunpack.c.l.b16 %v524
      %v2546 = vunpack.c.h.b16 %v524
      %v2547 = vunpack.c.l.b16 %v525
      %v2548 = vunpack.c.l.b16 %v526
      %v2549 = vunpack.c.h.b16 %v526
      %v2550 = vunpack.c.l.b16 %v527
      %v2551 = vunpack.c.h.b16 %v527
      %v2552 = vunpack.c.l.b16 %v528
      %v2553 = vunpack.c.l.b16 %v529
      %v2554 = vunpack.c.h.b16 %v529
      %v2555 = vunpack.c.l.b16 %v530
      %v2556 = vunpack.c.h.b16 %v530
      %v2557 = vunpack.c.l.b16 %v531
      %v2558 = vunpack.c.l.b16 %v532
      %v2559 = vunpack.c.h.b16 %v532
      %v2560 = vunpack.c.l.b16 %v533
      %v2561 = vunpack.c.h.b16 %v533
      %v2562 = vunpack.c.l.b16 %v534
      %v2563 = vunpack.c.l.b16 %v535
      %v2564 = vunpack.c.h.b16 %v535
      %v2565 = vunpack.c.l.b16 %v536
      %v2566 = vunpack.c.h.b16 %v536
      %v2567 = vunpack.c.l.b16 %v537
      %v2568 = vunpack.c.l.b16 %v538
      %v2569 = vunpack.c.h.b16 %v538
      %v2570 = vunpack.c.l.b16 %v539
      %v2571 = vunpack.c.h.b16 %v539
      %v2572 = vunpack.c.l.b16 %v540
      %v2573 = vunpack.c.l.b16 %v541
      %v2574 = vunpack.c.h.b16 %v541
      %v2575 = vunpack.c.l.b16 %v542
      %v2576 = vunpack.c.h.b16 %v542
      %v2577 = vunpack.c.l.b16 %v543
      %v2578 = vunpack.c.l.b16 %v544
      %v2579 = vunpack.c.h.b16 %v544
      %v2580 = vunpack.c.l.b16 %v545
      %v2581 = vunpack.c.h.b16 %v545
      %v2582 = vunpack.c.l.b16 %v546
      %v2583 = vunpack.c.l.b16 %v547
      %v2584 = vunpack.c.h.b16 %v547
      %v2585 = vunpack.c.l.b16 %v548
      %v2586 = vunpack.c.h.b16 %v548
      %v2587 = vunpack.c.l.b16 %v549
      %v2588 = vunpack.c.l.b16 %v550
      %v2589 = vunpack.c.h.b16 %v550
      %v2590 = vunpack.c.l.b16 %v551
      %v2591 = vunpack.c.h.b16 %v551
      %v2592 = vunpack.c.l.b16 %v552
      %v2593 = vunpack.c.l.b16 %v553
      %v2594 = vunpack.c.h.b16 %v553
      %v2595 = vunpack.c.l.b16 %v554
      %v2596 = vunpack.c.h.b16 %v554
      %v2597 = vunpack.c.l.b16 %v555
      %v2598 = vunpack.c.l.b16 %v556
      %v2599 = vunpack.c.h.b16 %v556
      %v2600 = vunpack.c.l.b16 %v557
      %v2601 = vunpack.c.h.b16 %v557
      %v2602 = vunpack.c.l.b16 %v558
      %v2603 = vunpack.c.l.b16 %v559
      %v2604 = vunpack.c.h.b16 %v559
      %v2605 = vunpack.c.l.b16 %v560
      %v2606 = vunpack.c.h.b16 %v560
      %v2607 = vunpack.c.l.b16 %v561
      %v2608 = vunpack.c.l.b16 %v562
      %v2609 = vunpack.c.h.b16 %v562
      %v2610 = vunpack.c.l.b16 %v563
      %v2611 = vunpack.c.h.b16 %v563
      %v2612 = vunpack.c.l.b16 %v564
      %v2613 = vunpack.c.l.b16 %v565
      %v2614 = vunpack.c.h.b16 %v565
      %v2615 = vunpack.c.l.b16 %v566
      %v2616 = vunpack.c.h.b16 %v566
      %v2617 = vunpack.c.l.b16 %v567
      %v2618 = vunpack.c.l.b16 %v568
      %v2619 = vunpack.c.h.b16 %v568
      %v2620 = vunpack.c.l.b16 %v569
      %v2621 = vunpack.c.h.b16 %v569
      %v2622 = vunpack.c.l.b16 %v570
      %v2623 = vunpack.c.l.b16 %v571
      %v2624 = vunpack.c.h.b16 %v571
      %v2625 = vunpack.c.l.b16 %v572
      %v2626 = vunpack.c.h.b16 %v572
      %v2627 = vunpack.c.l.b16 %v573
      %v2628 = vunpack.c.l.b16 %v574
      %v2629 = vunpack.c.h.b16 %v574
      %v2630 = vunpack.c.l.b16 %v575
      %v2631 = vunpack.c.h.b16 %v575
      %v2632 = vunpack.c.l.b16 %v576
      %v2633 = vunpack.c.l.b16 %v577
      %v2634 = vunpack.c.h.b16 %v577
      %v2635 = vunpack.c.l.b16 %v578
      %v2636 = vunpack.c.h.b16 %v578
      %v2637 = vunpack.c.l.b16 %v579
      %v2638 = vunpack.c.l.b16 %v580
      %v2639 = vunpack.c.h.b16 %v580
      %v2640 = vunpack.c.l.b16 %v581
      %v2641 = vunpack.c.h.b16 %v581
      %v2642 = vunpack.c.l.b16 %v582
      %v2643 = vunpack.c.l.b16 %v583
      %v2644 = vunpack.c.h.b16 %v583
      %v2645 = vunpack.c.l.b16 %v584
      %v2646 = vunpack.c.h.b16 %v584
      %v2647 = vunpack.c.l.b16 %v585
      %v2648 = vunpack.c.l.b16 %v586
      %v2649 = vunpack.c.h.b16 %v586
      %v2650 = vunpack.c.l.b16 %v587
      %v2651 = vunpack.c.h.b16 %v587
      %v2652 = vunpack.c.l.b16 %v588
      %v2653 = vunpack.c.l.b16 %v589
      %v2654 = vunpack.c.h.b16 %v589
      %v2655 = vunpack.c.l.b16 %v590
      %v2656 = vunpack.c.h.b16 %v590
      %v2657 = vunpack.c.l.b16 %v591
      %v2658 = vunpack.c.l.b16 %v592
      %v2659 = vunpack.c.h.b16 %v592
      %v2660 = vunpack.c.l.b16 %v593
      %v2661 = vunpack.c.h.b16 %v593
      %v2662 = vunpack.c.l.b16 %v594
      %v2663 = vunpack.c.l.b16 %v595
      %v2664 = vunpack.c.h.b16 %v595
      %v2665 = vunpack.c.l.b16 %v596
      %v2666 = vunpack.c.h.b16 %v596
      %v2667 = vunpack.c.l.b16 %v597
      %v2668 = vunpack.c.l.b16 %v598
      %v2669 = vunpack.c.h.b16 %v598
      %v2670 = vunpack.c.l.b16 %v599
      %v2671 = vunpack.c.h.b16 %v599
      %v2672 = vunpack.c.l.b16 %v600
      %v2673 = vunpack.c.l.b16 %v601
      %v2674 = vunpack.c.h.b16 %v601
      %v2675 = vunpack.c.l.b16 %v602
      %v2676 = vunpack.c.h.b16 %v602
      %v2677 = vunpack.c.l.b16 %v603
      %v2678 = vunpack.c.l.b16 %v604
      %v2679 = vunpack.c.h.b16 %v604
      %v2680 = vunpack.c.l.b16 %v605
      %v2681 = vunpack.c.h.b16 %v605
      %v2682 = vunpack.c.l.b16 %v606
      %v2683 = vunpack.c.l.b16 %v607
      %v2684 = vunpack.c.h.b16 %v607
      %v2685 = vunpack.c.l.b16 %v608
      %v2686 = vunpack.c.h.b16 %v608
      %v2687 = vunpack.c.l.b16 %v609
      %v2688 = vunpack.c.l.b16 %v610
      %v2689 = vunpack.c.h.b16 %v610
      %v2690 = vunpack.c.l.b16 %v611
      %v2691 = vunpack.c.h.b16 %v611
      %v2692 = vunpack.c.l.b16 %v612
      %v2693 = vunpack.c.l.b16 %v613
      %v2694 = vunpack.c.h.b16 %v613
      %v2695 = vunpack.c.l.b16 %v614
      %v2696 = vunpack.c.h.b16 %v614
      %v2697 = vunpack.c.l.b16 %v615
      %v2698 = vunpack.c.l.b16 %v616
      %v2699 = vunpack.c.h.b16 %v616
      %v2700 = vunpack.c.l.b16 %v617
      %v2701 = vunpack.c.h.b16 %v617
      %v2702 = vunpack.c.l.b16 %v618
      %v2703 = vunpack.c.l.b16 %v619
      %v2704 = vunpack.c.h.b16 %v619
      %v2705 = vunpack.c.l.b16 %v620
      %v2706 = vunpack.c.h.b16 %v620
      %v2707 = vunpack.c.l.b16 %v621
      %v2708 = vunpack.c.l.b16 %v622
      %v2709 = vunpack.c.h.b16 %v622
      %v2710 = vunpack.c.l.b16 %v623
      %v2711 = vunpack.c.h.b16 %v623
      %v2712 = vunpack.c.l.b16 %v624
      %v2713 = vunpack.c.l.b16 %v625
      %v2714 = vunpack.c.h.b16 %v625
      %v2715 = vunpack.c.l.b16 %v626
      %v2716 = vunpack.c.h.b16 %v626
      %v2717 = vunpack.c.l.b16 %v627
      %v2718 = vunpack.c.l.b16 %v628
      %v2719 = vunpack.c.h.b16 %v628
      %v2720 = vunpack.c.l.b16 %v629
      %v2721 = vunpack.c.h.b16 %v629
      %v2722 = vunpack.c.l.b16 %v630
      %v2723 = vunpack.c.l.b16 %v631
      %v2724 = vunpack.c.h.b16 %v631
      %v2725 = vunpack.c.l.b16 %v632
      %v2726 = vunpack.c.h.b16 %v632
      %v2727 = vunpack.c.l.b16 %v633
      %v2728 = vunpack.c.l.b16 %v634
      %v2729 = vunpack.c.h.b16 %v634
      %v2730 = vunpack.c.l.b16 %v635
      %v2731 = vunpack.c.h.b16 %v635
      %v2732 = vunpack.c.l.b16 %v636
      %v2733 = vunpack.c.l.b16 %v637
      %v2734 = vunpack.c.h.b16 %v637
      %v2735 = vunpack.c.l.b16 %v638
      %v2736 = vunpack.c.h.b16 %v638
      %v2737 = vunpack.c.l.b16 %v639
      %v2738 = vunpack.c.l.b16 %v640
      %v2739 = vunpack.c.h.b16 %v640
      %v2740 = vunpack.c.l.b16 %v641
      %v2741 = vunpack.c.h.b16 %v641
      %v2742 = vunpack.c.l.b16 %v642
      %v2743 = vunpack.c.l.b16 %v643
      %v2744 = vunpack.c.h.b16 %v643
      %v2745 = vunpack.c.l.b16 %v644
      %v2746 = vunpack.c.h.b16 %v644
      %v2747 = vunpack.c.l.b16 %v645
      %v2748 = vunpack.c.l.b16 %v646
      %v2749 = vunpack.c.h.b16 %v646
      %v2750 = vunpack.c.l.b16 %v647
      %v2751 = vunpack.c.h.b16 %v647
      %v2752 = vunpack.c.l.b16 %v648
      %v2753 = vunpack.c.l.b16 %v649
      %v2754 = vunpack.c.h.b16 %v649
      %v2755 = vunpack.c.l.b16 %v650
      %v2756 = vunpack.c.h.b16 %v650
      %v2757 = vunpack.c.l.b16 %v651
      %v2758 = vunpack.c.l.b16 %v652
      %v2759 = vunpack.c.h.b16 %v652
      %v2760 = vunpack.c.l.b16 %v653
      %v2761 = vunpack.c.h.b16 %v653
      %v2762 = vunpack.c.l.b16 %v654
      %v2763 = vunpack.c.l.b16 %v655
      %v2764 = vunpack.c.h.b16 %v655
      %v2765 = vunpack.c.l.b16 %v656
      %v2766 = vunpack.c.h.b16 %v656
      %v2767 = vunpack.c.l.b16 %v657
      %v2768 = vunpack.c.l.b16 %v658
      %v2769 = vunpack.c.h.b16 %v658
      %v2770 = vunpack.c.l.b16 %v659
      %v2771 = vunpack.c.h.b16 %v659
      %v2772 = vunpack.c.l.b16 %v660
      %v2773 = vunpack.c.l.b16 %v661
      %v2774 = vunpack.c.h.b16 %v661
      %v2775 = vunpack.c.l.b16 %v662
      %v2776 = vunpack.c.h.b16 %v662
      %v2777 = vunpack.c.l.b16 %v663
      %v2778 = vunpack.c.l.b16 %v664
      %v2779 = vunpack.c.h.b16 %v664
      %v2780 = vunpack.c.l.b16 %v665
      %v2781 = vunpack.c.h.b16 %v665
      %v2782 = vunpack.c.l.b16 %v666
      %v2783 = vunpack.c.l.b16 %v667
      %v2784 = vunpack.c.h.b16 %v667
      %v2785 = vunpack.c.l.b16 %v668
      %v2786 = vunpack.c.h.b16 %v668
      %v2787 = vunpack.c.l.b16 %v669
      %v2788 = vunpack.c.l.b16 %v670
      %v2789 = vunpack.c.h.b16 %v670
      %v2790 = vunpack.c.l.b16 %v671
      %v2791 = vunpack.c.h.b16 %v671
      %v2792 = vunpack.c.l.b16 %v672
      %v2793 = vunpack.c.l.b16 %v673
      %v2794 = vunpack.c.h.b16 %v673
      %v2795 = vunpack.c.l.b16 %v674
      %v2796 = vunpack.c.h.b16 %v674
      %v2797 = vunpack.c.l.b16 %v675
      %v2798 = vunpack.c.l.b16 %v676
      %v2799 = vunpack.c.h.b16 %v676
      %v2800 = vunpack.c.l.b16 %v677
      %v2801 = vunpack.c.h.b16 %v677
      %v2802 = vunpack.c.l.b16 %v678
      %v2803 = vunpack.c.l.b16 %v679
      %v2804 = vunpack.c.h.b16 %v679
      %v2805 = vunpack.c.l.b16 %v680
      %v2806 = vunpack.c.h.b16 %v680
      %v2807 = vunpack.c.l.b16 %v681
      %v2808 = vunpack.c.l.b16 %v682
      %v2809 = vunpack.c.h.b16 %v682
      %v2810 = vunpack.c.l.b16 %v683
      %v2811 = vunpack.c.h.b16 %v683
      %v2812 = vunpack.c.l.b16 %v684
      %v2813 = vunpack.c.l.b16 %v685
      %v2814 = vunpack.c.h.b16 %v685
      %v2815 = vunpack.c.l.b16 %v686
      %v2816 = vunpack.c.h.b16 %v686
      %v2817 = vunpack.c.l.b16 %v687
      %v2818 = vunpack.c.l.b16 %v688
      %v2819 = vunpack.c.h.b16 %v688
      %v2820 = vunpack.c.l.b16 %v689
      %v2821 = vunpack.c.h.b16 %v689
      %v2822 = vunpack.c.l.b16 %v690
      %v2823 = vunpack.c.l.b16 %v691
      %v2824 = vunpack.c.h.b16 %v691
      %v2825 = vunpack.c.l.b16 %v692
      %v2826 = vunpack.c.h.b16 %v692
      %v2827 = vunpack.c.l.b16 %v693
      %v2828 = vunpack.c.l.b16 %v694
      %v2829 = vunpack.c.h.b16 %v694
      %v2830 = vunpack.c.l.b16 %v695
      %v2831 = vunpack.c.h.b16 %v695
      %v2832 = vunpack.c.l.b16 %v696
      %v2833 = vunpack.c.l.b16 %v697
      %v2834 = vunpack.c.h.b16 %v697
      %v2835 = vunpack.c.l.b16 %v698
      %v2836 = vunpack.c.h.b16 %v698
      %v2837 = vunpack.c.l.b16 %v699
      %v2838 = vunpack.c.l.b16 %v700
      %v2839 = vunpack.c.h.b16 %v700
      %v2840 = vunpack.c.l.b16 %v701
      %v2841 = vunpack.c.h.b16 %v701
      %v2842 = vunpack.c.l.b16 %v702
      %v2843 = vunpack.c.l.b16 %v703
      %v2844 = vunpack.c.h.b16 %v703
      %v2845 = vunpack.c.l.b16 %v704
      %v2846 = vunpack.c.h.b16 %v704
      %v2847 = vunpack.c.l.b16 %v705
      %v2848 = vunpack.c.l.b16 %v706
      %v2849 = vunpack.c.h.b16 %v706
      %v2850 = vunpack.c.l.b16 %v707
      %v2851 = vunpack.c.h.b16 %v707
      %v2852 = vunpack.c.l.b16 %v708
      %v2853 = vunpack.c.l.b16 %v709
      %v2854 = vunpack.c.h.b16 %v709
      %v2855 = vunpack.c.l.b16 %v710
      %v2856 = vunpack.c.h.b16 %v710
      %v2857 = vunpack.c.l.b16 %v711
      %v2858 = vunpack.c.l.b16 %v712
      %v2859 = vunpack.c.h.b16 %v712
      %v2860 = vunpack.c.l.b16 %v713
      %v2861 = vunpack.c.h.b16 %v713
      %v2862 = vunpack.c.l.b16 %v714
      %v2863 = vunpack.c.l.b16 %v715
      %v2864 = vunpack.c.h.b16 %v715
      %v2865 = vunpack.c.l.b16 %v716
      %v2866 = vunpack.c.h.b16 %v716
      %v2867 = vunpack.c.l.b16 %v717
      %v2868 = vunpack.c.l.b16 %v718
      %v2869 = vunpack.c.h.b16 %v718
      %v2870 = vunpack.c.l.b16 %v719
      %v2871 = vunpack.c.h.b16 %v719
      %v2872 = vunpack.c.l.b16 %v720
      %v2873 = vunpack.c.l.b16 %v721
      %v2874 = vunpack.c.h.b16 %v721
      %v2875 = vunpack.c.l.b16 %v722
      %v2876 = vunpack.c.h.b16 %v722
      %v2877 = vunpack.c.l.b16 %v723
      %v2878 = vunpack.c.l.b16 %v724
      %v2879 = vunpack.c.h.b16 %v724
      %v2880 = vunpack.c.l.b16 %v725
      %v2881 = vunpack.c.h.b16 %v725
      %v2882 = vunpack.c.l.b16 %v726
      %v2883 = vunpack.c.l.b16 %v727
      %v2884 = vunpack.c.h.b16 %v727
      %v2885 = vunpack.c.l.b16 %v728
      %v2886 = vunpack.c.h.b16 %v728
      %v2887 = vunpack.c.l.b16 %v729
      %v2888 = vunpack.c.l.b16 %v730
      %v2889 = vunpack.c.h.b16 %v730
      %v2890 = vunpack.c.l.b16 %v731
      %v2891 = vunpack.c.h.b16 %v731
      %v2892 = vunpack.c.l.b16 %v732
      %v2893 = vunpack.c.l.b16 %v733
      %v2894 = vunpack.c.h.b16 %v733
      %v2895 = vunpack.c.l.b16 %v734
      %v2896 = vunpack.c.h.b16 %v734
      %v2897 = vunpack.c.l.b16 %v735
      %v2898 = vunpack.c.l.b16 %v736
      %v2899 = vunpack.c.h.b16 %v736
      %v2900 = vunpack.c.l.b16 %v737
      %v2901 = vunpack.c.h.b16 %v737
      %v2902 = vunpack.c.l.b16 %v738
      %v2903 = vunpack.c.l.b16 %v739
      %v2904 = vunpack.c.h.b16 %v739
      %v2905 = vunpack.c.l.b16 %v740
      %v2906 = vunpack.c.h.b16 %v740
      %v2907 = vunpack.c.l.b16 %v741
      %v2908 = vunpack.c.l.b16 %v742
      %v2909 = vunpack.c.h.b16 %v742
      %v2910 = vunpack.c.l.b16 %v743
      %v2911 = vunpack.c.h.b16 %v743
      %v2912 = vunpack.c.l.b16 %v744
      %v2913 = vunpack.c.l.b16 %v745
      %v2914 = vunpack.c.h.b16 %v745
      %v2915 = vunpack.c.l.b16 %v746
      %v2916 = vunpack.c.h.b16 %v746
      %v2917 = vunpack.c.l.b16 %v747
      %v2918 = vunpack.c.l.b16 %v748
      %v2919 = vunpack.c.h.b16 %v748
      %v2920 = vunpack.c.l.b16 %v749
      %v2921 = vunpack.c.h.b16 %v749
      %v2922 = vunpack.c.l.b16 %v750
      %v2923 = vunpack.c.l.b16 %v751
      %v2924 = vunpack.c.h.b16 %v751
      %v2925 = vunpack.c.l.b16 %v752
      %v2926 = vunpack.c.h.b16 %v752
      %v2927 = vunpack.c.l.b16 %v753
      %v2928 = vunpack.c.l.b16 %v754
      %v2929 = vunpack.c.h.b16 %v754
      %v2930 = vunpack.c.l.b16 %v755
      %v2931 = vunpack.c.h.b16 %v755
      %v2932 = vunpack.c.l.b16 %v756
      %v2933 = vunpack.c.l.b16 %v757
      %v2934 = vunpack.c.h.b16 %v757
      %v2935 = vunpack.c.l.b16 %v758
      %v2936 = vunpack.c.h.b16 %v758
      %v2937 = vunpack.c.l.b16 %v759
      %v2938 = vunpack.c.l.b16 %v760
      %v2939 = vunpack.c.h.b16 %v760
      %v2940 = vunpack.c.l.b16 %v761
      %v2941 = vunpack.c.h.b16 %v761
      %v2942 = vunpack.c.l.b16 %v762
      %v2943 = vunpack.c.l.b16 %v763
      %v2944 = vunpack.c.h.b16 %v763
      %v2945 = vunpack.c.l.b16 %v764
      %v2946 = vunpack.c.h.b16 %v764
      %v2947 = vunpack.c.l.b16 %v765
      %v2948 = vunpack.c.l.b16 %v766
      %v2949 = vunpack.c.h.b16 %v766
      %v2950 = vunpack.c.l.b16 %v767
      %v2951 = vunpack.c.h.b16 %v767
      %v2952 = vunpack.c.l.b16 %v768
      %v2953 = vunpack.c.l.b16 %v769
      %v2954 = vunpack.c.h.b16 %v769
      %v2955 = vunpack.c.l.b16 %v770
      %v2956 = vunpack.c.h.b16 %v770
      %v2957 = vunpack.c.l.b16 %v771
      %v2958 = vunpack.c.l.b16 %v772
      %v2959 = vunpack.c.h.b16 %v772
      %v2960 = vunpack.c.l.b16 %v773
      %v2961 = vunpack.c.h.b16 %v773
      %v2962 = vunpack.c.l.b16 %v774
      %v2963 = vunpack.c.l.b16 %v775
      %v2964 = vunpack.c.h.b16 %v775
      %v2965 = vunpack.c.l.b16 %v776
      %v2966 = vunpack.c.h.b16 %v776
      %v2967 = vunpack.c.l.b16 %v777
      %v2968 = vunpack.c.l.b16 %v778
      %v2969 = vunpack.c.h.b16 %v778
      %v2970 = vunpack.c.l.b16 %v779
      %v2971 = vunpack.c.h.b16 %v779
      %v2972 = vunpack.c.l.b16 %v780
      %v2973 = vunpack.c.l.b16 %v781
      %v2974 = vunpack.c.h.b16 %v781
      %v2975 = vunpack.c.l.b16 %v782
      %v2976 = vunpack.c.h.b16 %v782
      %v2977 = vunpack.c.l.b16 %v783
      %v2978 = vunpack.c.l.b16 %v784
      %v2979 = vunpack.c.h.b16 %v784
      %v2980 = vunpack.c.l.b16 %v785
      %v2981 = vunpack.c.h.b16 %v785
      %v2982 = vunpack.c.l.b16 %v786
      %v2983 = vunpack.c.l.b16 %v787
      %v2984 = vunpack.c.h.b16 %v787
      %v2985 = vunpack.c.l.b16 %v788
      %v2986 = vunpack.c.h.b16 %v788
      %v2987 = vunpack.c.l.b16 %v789
      %v2988 = vunpack.c.l.b16 %v790
      %v2989 = vunpack.c.h.b16 %v790
      %v2990 = vunpack.c.l.b16 %v791
      %v2991 = vunpack.c.h.b16 %v791
      %v2992 = vunpack.c.l.b16 %v792
      %v2993 = vunpack.c.l.b16 %v793
      %v2994 = vunpack.c.h.b16 %v793
      %v2995 = vunpack.c.l.b16 %v794
      %v2996 = vunpack.c.h.b16 %v794
      %v2997 = vunpack.c.l.b16 %v795
      %v2998 = vunpack.c.l.b16 %v796
      %v2999 = vunpack.c.h.b16 %v796
      %v3000 = vunpack.c.l.b16 %v797
      %v3001 = vunpack.c.h.b16 %v797
      %v3002 = vunpack.c.l.b16 %v798
      %v3003 = vunpack.c.l.b16 %v799
      %v3004 = vunpack.c.h.b16 %v799
      %v3005 = vunpack.c.l.b16 %v800
      %v3006 = vunpack.c.h.b16 %v800
      %v3007 = vunpack.c.l.b16 %v801
      %v3008 = vunpack.c.l.b16 %v802
      %v3009 = vunpack.c.h.b16 %v802
      %v3010 = vunpack.c.l.b16 %v803
      %v3011 = vunpack.c.h.b16 %v803
      %v3012 = vunpack.c.l.b16 %v804
      %v3013 = vunpack.c.l.b16 %v805
      %v3014 = vunpack.c.h.b16 %v805
      %v3015 = vunpack.c.l.b16 %v806
      %v3016 = vunpack.c.h.b16 %v806
      %v3017 = vunpack.c.l.b16 %v807
      %v3018 = vunpack.c.l.b16 %v808
      %v3019 = vunpack.c.h.b16 %v808
      %v3020 = vunpack.c.l.b16 %v809
      %v3021 = vunpack.c.h.b16 %v809
      %v3022 = vunpack.c.l.b16 %v810
      %v3023 = vunpack.c.l.b16 %v811
      %v3024 = vunpack.c.h.b16 %v811
      %v3025 = vunpack.c.l.b16 %v812
      %v3026 = vunpack.c.h.b16 %v812
      %v3027 = vunpack.c.l.b16 %v813
      %v3028 = vunpack.c.l.b16 %v814
      %v3029 = vunpack.c.h.b16 %v814
      %v3030 = vunpack.c.l.b16 %v815
      %v3031 = vunpack.c.h.b16 %v815
      %v3032 = vunpack.c.l.b16 %v816
      %v3033 = vunpack.c.l.b16 %v817
      %v3034 = vunpack.c.h.b16 %v817
      %v3035 = vunpack.c.l.b16 %v818
      %v3036 = vunpack.c.h.b16 %v818
      %v3037 = vunpack.c.l.b16 %v819
      %v3038 = vunpack.c.l.b16 %v820
      %v3039 = vunpack.c.h.b16 %v820
      %v3040 = vunpack.c.l.b16 %v821
      %v3041 = vunpack.c.h.b16 %v821
      %v3042 = vunpack.c.l.b16 %v822
      %v3043 = vunpack.c.l.b16 %v823
      %v3044 = vunpack.c.h.b16 %v823
      %v3045 = vunpack.c.l.b16 %v824
      %v3046 = vunpack.c.h.b16 %v824
      %v3047 = vunpack.c.l.b16 %v825
      %v3048 = vunpack.c.l.b16 %v826
      %v3049 = vunpack.c.h.b16 %v826
      %v3050 = vunpack.c.l.b16 %v827
      %v3051 = vunpack.c.h.b16 %v827
      %v3052 = vunpack.c.l.b16 %v828
      %v3053 = vunpack.c.l.b16 %v829
      %v3054 = vunpack.c.h.b16 %v829
      %v3055 = vunpack.c.l.b16 %v830
      %v3056 = vunpack.c.h.b16 %v830
      %v3057 = vunpack.c.l.b16 %v831
      %v3058 = vunpack.c.l.b16 %v832
      %v3059 = vunpack.c.h.b16 %v832
      %v3060 = vunpack.c.l.b16 %v833
      %v3061 = vunpack.c.h.b16 %v833
      %v3062 = vunpack.c.l.b16 %v834
      %v3063 = vunpack.c.l.b16 %v835
      %v3064 = vunpack.c.h.b16 %v835
      %v3065 = vunpack.c.l.b16 %v836
      %v3066 = vunpack.c.h.b16 %v836
      %v3067 = vunpack.c.l.b16 %v837
      %v3068 = vunpack.c.l.b16 %v838
      %v3069 = vunpack.c.h.b16 %v838
      %v3070 = vunpack.c.l.b16 %v839
      %v3071 = vunpack.c.h.b16 %v839
      %v3072 = vunpack.c.l.b16 %v840
      %v3073 = vunpack.c.l.b16 %v841
      %v3074 = vunpack.c.h.b16 %v841
      %v3075 = vunpack.c.l.b16 %v842
      %v3076 = vunpack.c.h.b16 %v842
      %v3077 = vunpack.c.l.b16 %v843
      %v3078 = vunpack.c.l.b16 %v844
      %v3079 = vunpack.c.h.b16 %v844
      %v3080 = vunpack.c.l.b16 %v845
      %v3081 = vunpack.c.h.b16 %v845
      %v3082 = vunpack.c.l.b16 %v846
      %v3083 = vunpack.c.l.b16 %v847
      %v3084 = vunpack.c.h.b16 %v847
      %v3085 = vunpack.c.l.b16 %v848
      %v3086 = vunpack.c.h.b16 %v848
      %v3087 = vunpack.c.l.b16 %v849
      %v3088 = vunpack.c.l.b16 %v850
      %v3089 = vunpack.c.h.b16 %v850
      %v3090 = vunpack.c.l.b16 %v851
      %v3091 = vunpack.c.h.b16 %v851
      %v3092 = vunpack.c.l.b16 %v852
      %v3093 = vunpack.c.l.b16 %v853
      %v3094 = vunpack.c.h.b16 %v853
      %v3095 = vunpack.c.l.b16 %v854
      %v3096 = vunpack.c.h.b16 %v854
      %v3097 = vunpack.c.l.b16 %v855
      %v3098 = vunpack.c.l.b16 %v856
      %v3099 = vunpack.c.h.b16 %v856
      %v3100 = vunpack.c.l.b16 %v857
      %v3101 = vunpack.c.h.b16 %v857
      %v3102 = vunpack.c.l.b16 %v858
      %v3103 = vunpack.c.l.b16 %v859
      %v3104 = vunpack.c.h.b16 %v859
      %v3105 = vunpack.c.l.b16 %v860
      %v3106 = vunpack.c.h.b16 %v860
      %v3107 = vunpack.c.l.b16 %v861
      %v3108 = vunpack.c.l.b16 %v862
      %v3109 = vunpack.c.h.b16 %v862
      %v3110 = vunpack.c.l.b16 %v863
      %v3111 = vunpack.c.h.b16 %v863
      %v3112 = vunpack.c.l.b16 %v864
      %v3113 = vunpack.c.l.b16 %v865
      %v3114 = vunpack.c.h.b16 %v865
      %v3115 = vunpack.c.l.b16 %v866
      %v3116 = vunpack.c.h.b16 %v866
      %v3117 = vunpack.c.l.b16 %v867
      %v3118 = vunpack.c.l.b16 %v868
      %v3119 = vunpack.c.h.b16 %v868
      %v3120 = vunpack.c.l.b16 %v869
      %v3121 = vunpack.c.h.b16 %v869
      %v3122 = vunpack.c.l.b16 %v870
      %v3123 = vunpack.c.l.b16 %v871
      %v3124 = vunpack.c.h.b16 %v871
      %v3125 = vunpack.c.l.b16 %v872
      %v3126 = vunpack.c.h.b16 %v872
      %v3127 = vunpack.c.l.b16 %v873
      %v3128 = vunpack.c.l.b16 %v874
      %v3129 = vunpack.c.h.b16 %v874
      %v3130 = vunpack.c.l.b16 %v875
      %v3131 = vunpack.c.h.b16 %v875
      %v3132 = vunpack.c.l.b16 %v876
      %v3133 = vunpack.c.l.b16 %v877
      %v3134 = vunpack.c.h.b16 %v877
      %v3135 = vunpack.c.l.b16 %v878
      %v3136 = vunpack.c.h.b16 %v878
      %v3137 = vunpack.c.l.b16 %v879
      %v3138 = vunpack.c.l.b16 %v880
      %v3139 = vunpack.c.h.b16 %v880
      %v3140 = vunpack.c.l.b16 %v881
      %v3141 = vunpack.c.h.b16 %v881
      %v3142 = vunpack.c.l.b16 %v882
      %v3143 = vunpack.c.l.b16 %v883
      %v3144 = vunpack.c.h.b16 %v883
      %v3145 = vunpack.c.l.b16 %v884
      %v3146 = vunpack.c.h.b16 %v884
      %v3147 = vunpack.c.l.b16 %v885
      %v3148 = vunpack.c.l.b16 %v886
      %v3149 = vunpack.c.h.b16 %v886
      %v3150 = vunpack.c.l.b16 %v887
      %v3151 = vunpack.c.h.b16 %v887
      %v3152 = vunpack.c.l.b16 %v888
      %v3153 = vunpack.c.l.b16 %v889
      %v3154 = vunpack.c.h.b16 %v889
      %v3155 = vunpack.c.l.b16 %v890
      %v3156 = vunpack.c.h.b16 %v890
      %v3157 = vunpack.c.l.b16 %v891
      %v3158 = vunpack.c.l.b16 %v892
      %v3159 = vunpack.c.h.b16 %v892
      %v3160 = vunpack.c.l.b16 %v893
      %v3161 = vunpack.c.h.b16 %v893
      %v3162 = vunpack.c.l.b16 %v894
      %v3163 = vunpack.c.l.b16 %v895
      %v3164 = vunpack.c.h.b16 %v895
      %v3165 = vunpack.c.l.b16 %v896
      %v3166 = vunpack.c.h.b16 %v896
      %v3167 = vunpack.c.l.b16 %v897
      %v3168 = vunpack.c.l.b16 %v898
      %v3169 = vunpack.c.h.b16 %v898
      %v3170 = vunpack.c.l.b16 %v899
      %v3171 = vunpack.c.h.b16 %v899
      %v3172 = vunpack.c.l.b16 %v900
      %v3173 = vunpack.c.l.b16 %v901
      %v3174 = vunpack.c.h.b16 %v901
      %v3175 = vunpack.c.l.b16 %v902
      %v3176 = vunpack.c.h.b16 %v902
      %v3177 = vunpack.c.l.b16 %v903
      %v3178 = vunpack.c.l.b16 %v904
      %v3179 = vunpack.c.h.b16 %v904
      %v3180 = vunpack.c.l.b16 %v905
      %v3181 = vunpack.c.h.b16 %v905
      %v3182 = vunpack.c.l.b16 %v906
      %v3183 = vunpack.c.l.b16 %v907
      %v3184 = vunpack.c.h.b16 %v907
      %v3185 = vunpack.c.l.b16 %v908
      %v3186 = vunpack.c.h.b16 %v908
      %v3187 = vunpack.c.l.b16 %v909
      %v3188 = vunpack.c.l.b16 %v910
      %v3189 = vunpack.c.h.b16 %v910
      %v3190 = vunpack.c.l.b16 %v911
      %v3191 = vunpack.c.h.b16 %v911
      %v3192 = vunpack.c.l.b16 %v912
      %v3193 = vunpack.c.l.b16 %v913
      %v3194 = vunpack.c.h.b16 %v913
      %v3195 = vunpack.c.l.b16 %v914
      %v3196 = vunpack.c.h.b16 %v914
      %v3197 = vunpack.c.l.b16 %v915
      %v3198 = vunpack.c.l.b16 %v916
      %v3199 = vunpack.c.h.b16 %v916
      %v3200 = vunpack.c.l.b16 %v917
      %v3201 = vunpack.c.h.b16 %v917
      %v3202 = vunpack.c.l.b16 %v918
      %v3203 = vunpack.c.l.b16 %v919
      %v3204 = vunpack.c.h.b16 %v919
      %v3205 = vunpack.c.l.b16 %v920
      %v3206 = vunpack.c.h.b16 %v920
      %v3207 = vunpack.c.l.b16 %v921
      %v3208 = vunpack.c.l.b16 %v922
      %v3209 = vunpack.c.h.b16 %v922
      %v3210 = vunpack.c.l.b16 %v923
      %v3211 = vunpack.c.h.b16 %v923
      %v3212 = vunpack.c.l.b16 %v924
      %v3213 = vunpack.c.l.b16 %v925
      %v3214 = vunpack.c.h.b16 %v925
      %v3215 = vunpack.c.l.b16 %v926
      %v3216 = vunpack.c.h.b16 %v926
      %v3217 = vunpack.c.l.b16 %v927
      %v3218 = vunpack.c.l.b16 %v928
      %v3219 = vunpack.c.h.b16 %v928
      %v3220 = vunpack.c.l.b16 %v929
      %v3221 = vunpack.c.h.b16 %v929
      %v3222 = vunpack.c.l.b16 %v930
      %v3223 = vunpack.c.l.b16 %v931
      %v3224 = vunpack.c.h.b16 %v931
      %v3225 = vunpack.c.l.b16 %v932
      %v3226 = vunpack.c.h.b16 %v932
      %v3227 = vunpack.c.l.b16 %v933
      %v3228 = vunpack.c.l.b16 %v934
      %v3229 = vunpack.c.h.b16 %v934
      %v3230 = vunpack.c.l.b16 %v935
      %v3231 = vunpack.c.h.b16 %v935
      %v3232 = vunpack.c.l.b16 %v936
      %v3233 = vunpack.c.l.b16 %v937
      %v3234 = vunpack.c.h.b16 %v937
      %v3235 = vunpack.c.l.b16 %v938
      %v3236 = vunpack.c.h.b16 %v938
      %v3237 = vunpack.c.l.b16 %v939
      %v3238 = vunpack.c.l.b16 %v940
      %v3239 = vunpack.c.h.b16 %v940
      %v3240 = vunpack.c.l.b16 %v941
      %v3241 = vunpack.c.h.b16 %v941
      %v3242 = vunpack.c.l.b16 %v942
      %v3243 = vunpack.c.l.b16 %v943
      %v3244 = vunpack.c.h.b16 %v943
      %v3245 = vunpack.c.l.b16 %v944
      %v3246 = vunpack.c.h.b16 %v944
      %v3247 = vunpack.c.l.b16 %v945
      %v3248 = vunpack.c.l.b16 %v946
      %v3249 = vunpack.c.h.b16 %v946
      %v3250 = vunpack.c.l.b16 %v947
      %v3251 = vunpack.c.h.b16 %v947
      %v3252 = vunpack.c.l.b16 %v948
      %v3253 = vunpack.c.l.b16 %v949
      %v3254 = vunpack.c.h.b16 %v949
      %v3255 = vunpack.c.l.b16 %v950
      %v3256 = vunpack.c.h.b16 %v950
      %v3257 = vunpack.c.l.b16 %v951
      %v3258 = vunpack.c.l.b16 %v952
      %v3259 = vunpack.c.h.b16 %v952
      %v3260 = vunpack.c.l.b16 %v953
      %v3261 = vunpack.c.h.b16 %v953
      %v3262 = vunpack.c.l.b16 %v954
      %v3263 = vunpack.c.l.b16 %v955
      %v3264 = vunpack.c.h.b16 %v955
      %v3265 = vunpack.c.l.b16 %v956
      %v3266 = vunpack.c.h.b16 %v956
      %v3267 = vunpack.c.l.b16 %v957
      %v3268 = vunpack.c.l.b16 %v958
      %v3269 = vunpack.c.h.b16 %v958
      %v3270 = vunpack.c.l.b16 %v959
      %v3271 = vunpack.c.h.b16 %v959
      %v3272 = vunpack.c.l.b16 %v960
      %v3273 = vunpack.c.l.b16 %v961
      %v3274 = vunpack.c.h.b16 %v961
      %v3275 = vunpack.c.l.b16 %v962
      %v3276 = vunpack.c.h.b16 %v962
      %v3277 = vunpack.c.l.b16 %v963
      %v3278 = vunpack.c.l.b16 %v964
      %v3279 = vunpack.c.h.b16 %v964
      %v3280 = vunpack.c.l.b16 %v965
      %v3281 = vunpack.c.h.b16 %v965
      %v3282 = vunpack.c.l.b16 %v966
      %v3283 = vunpack.c.l.b16 %v967
      %v3284 = vunpack.c.h.b16 %v967
      %v3285 = vunpack.c.l.b16 %v968
      %v3286 = vunpack.c.h.b16 %v968
      %v3287 = vunpack.c.l.b16 %v969
      %v3288 = vunpack.c.l.b16 %v970
      %v3289 = vunpack.c.h.b16 %v970
      %v3290 = vunpack.c.l.b16 %v971
      %v3291 = vunpack.c.h.b16 %v971
      %v3292 = vunpack.c.l.b16 %v972
      %v3293 = vunpack.c.l.b16 %v973
      %v3294 = vunpack.c.h.b16 %v973
      %v3295 = vunpack.c.l.b16 %v974
      %v3296 = vunpack.c.h.b16 %v974
      %v3297 = vunpack.c.l.b16 %v975
      %v3298 = vunpack.c.l.b16 %v976
      %v3299 = vunpack.c.h.b16 %v976
      %v3300 = vunpack.c.l.b16 %v977
      %v3301 = vunpack.c.h.b16 %v977
      %v3302 = vunpack.c.l.b16 %v978
      %v3303 = vunpack.c.l.b16 %v979
      %v3304 = vunpack.c.h.b16 %v979
      %v3305 = vunpack.c.l.b16 %v980
      %v3306 = vunpack.c.h.b16 %v980
      %v3307 = vunpack.c.l.b16 %v981
      %v3308 = vunpack.c.l.b16 %v982
      %v3309 = vunpack.c.h.b16 %v982
      %v3310 = vunpack.c.l.b16 %v983
      %v3311 = vunpack.c.h.b16 %v983
      %v3312 = vunpack.c.l.b16 %v984
      %v3313 = vunpack.c.l.b16 %v985
      %v3314 = vunpack.c.h.b16 %v985
      %v3315 = vunpack.c.l.b16 %v986
      %v3316 = vunpack.c.h.b16 %v986
      %v3317 = vunpack.c.l.b16 %v987
      %v3318 = vunpack.c.l.b16 %v988
      %v3319 = vunpack.c.h.b16 %v988
      %v3320 = vunpack.c.l.b16 %v989
      %v3321 = vunpack.c.h.b16 %v989
      %v3322 = vunpack.c.l.b16 %v990
      %v3323 = vunpack.c.l.b16 %v991
      %v3324 = vunpack.c.h.b16 %v991
      %v3325 = vunpack.c.l.b16 %v992
      %v3326 = vunpack.c.h.b16 %v992
      %v3327 = vunpack.c.l.b16 %v993
      %v3328 = vunpack.c.l.b16 %v994
      %v3329 = vunpack.c.h.b16 %v994
      %v3330 = vunpack.c.l.b16 %v995
      %v3331 = vunpack.c.h.b16 %v995
      %v3332 = vunpack.c.l.b16 %v996
      %v3333 = vpack.c.b16 %v2058, %v2053
      %v3334 = vpack.c.b16 %v2059, %v2054
      %v3335 = vpack.c.b16 %v2060, %v2055
      %v3336 = vpack.c.b16 %v2061, %v2056
      %v3337 = vpack.c.b16 %v2062, %v2057
      %v3338 = vpack.c.b16 %v2068, %v2063
      %v3339 = vpack.c.b16 %v2069, %v2064
      %v3340 = vpack.c.b16 %v2070, %v2065
      %v3341 = vpack.c.b16 %v2071, %v2066
      %v3342 = vpack.c.b16 %v2072, %v2067
      %v3343 = vpack.c.b16 %v2078, %v2073
      %v3344 = vpack.c.b16 %v2079, %v2074
      %v3345 = vpack.c.b16 %v2080, %v2075
      %v3346 = vpack.c.b16 %v2081, %v2076
      %v3347 = vpack.c.b16 %v2082, %v2077
      %v3348 = vpack.c.b16 %v2088, %v2083
      %v3349 = vpack.c.b16 %v2089, %v2084
      %v3350 = vpack.c.b16 %v2090, %v2085
      %v3351 = vpack.c.b16 %v2091, %v2086
      %v3352 = vpack.c.b16 %v2092, %v2087
      %v3353 = vpack.c.b16 %v2098, %v2093
      %v3354 = vpack.c.b16 %v2099, %v2094
      %v3355 = vpack.c.b16 %v2100, %v2095
      %v3356 = vpack.c.b16 %v2101, %v2096
      %v3357 = vpack.c.b16 %v2102, %v2097
      %v3358 = vpack.c.b16 %v2108, %v2103
      %v3359 = vpack.c.b16 %v2109, %v2104
      %v3360 = vpack.c.b16 %v2110, %v2105
      %v3361 = vpack.c.b16 %v2111, %v2106
      %v3362 = vpack.c.b16 %v2112, %v2107
      %v3363 = vpack.c.b16 %v2118, %v2113
      %v3364 = vpack.c.b16 %v2119, %v2114
      %v3365 = vpack.c.b16 %v2120, %v2115
      %v3366 = vpack.c.b16 %v2121, %v2116
      %v3367 = vpack.c.b16 %v2122, %v2117
      %v3368 = vpack.c.b16 %v2128, %v2123
      %v3369 = vpack.c.b16 %v2129, %v2124
      %v3370 = vpack.c.b16 %v2130, %v2125
      %v3371 = vpack.c.b16 %v2131, %v2126
      %v3372 = vpack.c.b16 %v2132, %v2127
      %v3373 = vpack.c.b16 %v2138, %v2133
      %v3374 = vpack.c.b16 %v2139, %v2134
      %v3375 = vpack.c.b16 %v2140, %v2135
      %v3376 = vpack.c.b16 %v2141, %v2136
      %v3377 = vpack.c.b16 %v2142, %v2137
      %v3378 = vpack.c.b16 %v2148, %v2143
      %v3379 = vpack.c.b16 %v2149, %v2144
      %v3380 = vpack.c.b16 %v2150, %v2145
      %v3381 = vpack.c.b16 %v2151, %v2146
      %v3382 = vpack.c.b16 %v2152, %v2147
      %v3383 = vpack.c.b16 %v2158, %v2153
      %v3384 = vpack.c.b16 %v2159, %v2154
      %v3385 = vpack.c.b16 %v2160, %v2155
      %v3386 = vpack.c.b16 %v2161, %v2156
      %v3387 = vpack.c.b16 %v2162, %v2157
      %v3388 = vpack.c.b16 %v2168, %v2163
      %v3389 = vpack.c.b16 %v2169, %v2164
      %v3390 = vpack.c.b16 %v2170, %v2165
      %v3391 = vpack.c.b16 %v2171, %v2166
      %v3392 = vpack.c.b16 %v2172, %v2167
      %v3393 = vpack.c.b16 %v2178, %v2173
      %v3394 = vpack.c.b16 %v2179, %v2174
      %v3395 = vpack.c.b16 %v2180, %v2175
      %v3396 = vpack.c.b16 %v2181, %v2176
      %v3397 = vpack.c.b16 %v2182, %v2177
      %v3398 = vpack.c.b16 %v2188, %v2183
      %v3399 = vpack.c.b16 %v2189, %v2184
      %v3400 = vpack.c.b16 %v2190, %v2185
      %v3401 = vpack.c.b16 %v2191, %v2186
      %v3402 = vpack.c.b16 %v2192, %v2187
      %v3403 = vpack.c.b16 %v2198, %v2193
      %v3404 = vpack.c.b16 %v2199, %v2194
      %v3405 = vpack.c.b16 %v2200, %v2195
      %v3406 = vpack.c.b16 %v2201, %v2196
      %v3407 = vpack.c.b16 %v2202, %v2197
      %v3408 = vpack.c.b16 %v2208, %v2203
      %v3409 = vpack.c.b16 %v2209, %v2204
      %v3410 = vpack.c.b16 %v2210, %v2205
      %v3411 = vpack.c.b16 %v2211, %v2206
      %v3412 = vpack.c.b16 %v2212, %v2207
      %v3413 = vpack.c.b16 %v2218, %v2213
      %v3414 = vpack.c.b16 %v2219, %v2214
      %v3415 = vpack.c.b16 %v2220, %v2215
      %v3416 = vpack.c.b16 %v2221, %v2216
      %v3417 = vpack.c.b16 %v2222, %v2217
      %v3418 = vpack.c.b16 %v2228, %v2223
      %v3419 = vpack.c.b16 %v2229, %v2224
      %v3420 = vpack.c.b16 %v2230, %v2225
      %v3421 = vpack.c.b16 %v2231, %v2226
      %v3422 = vpack.c.b16 %v2232, %v2227
      %v3423 = vpack.c.b16 %v2238, %v2233
      %v3424 = vpack.c.b16 %v2239, %v2234
      %v3425 = vpack.c.b16 %v2240, %v2235
      %v3426 = vpack.c.b16 %v2241, %v2236
      %v3427 = vpack.c.b16 %v2242, %v2237
      %v3428 = vpack.c.b16 %v2248, %v2243
      %v3429 = vpack.c.b16 %v2249, %v2244
      %v3430 = vpack.c.b16 %v2250, %v2245
      %v3431 = vpack.c.b16 %v2251, %v2246
      %v3432 = vpack.c.b16 %v2252, %v2247
      %v3433 = vpack.c.b16 %v2258, %v2253
      %v3434 = vpack.c.b16 %v2259, %v2254
      %v3435 = vpack.c.b16 %v2260, %v2255
      %v3436 = vpack.c.b16 %v2261, %v2256
      %v3437 = vpack.c.b16 %v2262, %v2257
      %v3438 = vpack.c.b16 %v2268, %v2263
      %v3439 = vpack.c.b16 %v2269, %v2264
      %v3440 = vpack.c.b16 %v2270, %v2265
      %v3441 = vpack.c.b16 %v2271, %v2266
      %v3442 = vpack.c.b16 %v2272, %v2267
      %v3443 = vpack.c.b16 %v2278, %v2273
      %v3444 = vpack.c.b16 %v2279, %v2274
      %v3445 = vpack.c.b16 %v2280, %v2275
      %v3446 = vpack.c.b16 %v2281, %v2276
      %v3447 = vpack.c.b16 %v2282, %v2277
      %v3448 = vpack.c.b16 %v2288, %v2283
      %v3449 = vpack.c.b16 %v2289, %v2284
      %v3450 = vpack.c.b16 %v2290, %v2285
      %v3451 = vpack.c.b16 %v2291, %v2286
      %v3452 = vpack.c.b16 %v2292, %v2287
      %v3453 = vpack.c.b16 %v2298, %v2293
      %v3454 = vpack.c.b16 %v2299, %v2294
      %v3455 = vpack.c.b16 %v2300, %v2295
      %v3456 = vpack.c.b16 %v2301, %v2296
      %v3457 = vpack.c.b16 %v2302, %v2297
      %v3458 = vpack.c.b16 %v2308, %v2303
      %v3459 = vpack.c.b16 %v2309, %v2304
      %v3460 = vpack.c.b16 %v2310, %v2305
      %v3461 = vpack.c.b16 %v2311, %v2306
      %v3462 = vpack.c.b16 %v2312, %v2307
      %v3463 = vpack.c.b16 %v2318, %v2313
      %v3464 = vpack.c.b16 %v2319, %v2314
      %v3465 = vpack.c.b16 %v2320, %v2315
      %v3466 = vpack.c.b16 %v2321, %v2316
      %v3467 = vpack.c.b16 %v2322, %v2317
      %v3468 = vpack.c.b16 %v2328, %v2323
      %v3469 = vpack.c.b16 %v2329, %v2324
      %v3470 = vpack.c.b16 %v2330, %v2325
      %v3471 = vpack.c.b16 %v2331, %v2326
      %v3472 = vpack.c.b16 %v2332, %v2327
      %v3473 = vpack.c.b16 %v2338, %v2333
      %v3474 = vpack.c.b16 %v2339, %v2334
      %v3475 = vpack.c.b16 %v2340, %v2335
      %v3476 = vpack.c.b16 %v2341, %v2336
      %v3477 = vpack.c.b16 %v2342, %v2337
      %v3478 = vpack.c.b16 %v2348, %v2343
      %v3479 = vpack.c.b16 %v2349, %v2344
      %v3480 = vpack.c.b16 %v2350, %v2345
      %v3481 = vpack.c.b16 %v2351, %v2346
      %v3482 = vpack.c.b16 %v2352, %v2347
      %v3483 = vpack.c.b16 %v2358, %v2353
      %v3484 = vpack.c.b16 %v2359, %v2354
      %v3485 = vpack.c.b16 %v2360, %v2355
      %v3486 = vpack.c.b16 %v2361, %v2356
      %v3487 = vpack.c.b16 %v2362, %v2357
      %v3488 = vpack.c.b16 %v2368, %v2363
      %v3489 = vpack.c.b16 %v2369, %v2364
      %v3490 = vpack.c.b16 %v2370, %v2365
      %v3491 = vpack.c.b16 %v2371, %v2366
      %v3492 = vpack.c.b16 %v2372, %v2367
      %v3493 = vpack.c.b16 %v2378, %v2373
      %v3494 = vpack.c.b16 %v2379, %v2374
      %v3495 = vpack.c.b16 %v2380, %v2375
      %v3496 = vpack.c.b16 %v2381, %v2376
      %v3497 = vpack.c.b16 %v2382, %v2377
      %v3498 = vpack.c.b16 %v2388, %v2383
      %v3499 = vpack.c.b16 %v2389, %v2384
      %v3500 = vpack.c.b16 %v2390, %v2385
      %v3501 = vpack.c.b16 %v2391, %v2386
      %v3502 = vpack.c.b16 %v2392, %v2387
      %v3503 = vpack.c.b16 %v2398, %v2393
      %v3504 = vpack.c.b16 %v2399, %v2394
      %v3505 = vpack.c.b16 %v2400, %v2395
      %v3506 = vpack.c.b16 %v2401, %v2396
      %v3507 = vpack.c.b16 %v2402, %v2397
      %v3508 = vpack.c.b16 %v2408, %v2403
      %v3509 = vpack.c.b16 %v2409, %v2404
      %v3510 = vpack.c.b16 %v2410, %v2405
      %v3511 = vpack.c.b16 %v2411, %v2406
      %v3512 = vpack.c.b16 %v2412, %v2407
      %v3513 = vpack.c.b16 %v2418, %v2413
      %v3514 = vpack.c.b16 %v2419, %v2414
      %v3515 = vpack.c.b16 %v2420, %v2415
      %v3516 = vpack.c.b16 %v2421, %v2416
      %v3517 = vpack.c.b16 %v2422, %v2417
      %v3518 = vpack.c.b16 %v2428, %v2423
      %v3519 = vpack.c.b16 %v2429, %v2424
      %v3520 = vpack.c.b16 %v2430, %v2425
      %v3521 = vpack.c.b16 %v2431, %v2426
      %v3522 = vpack.c.b16 %v2432, %v2427
      %v3523 = vpack.c.b16 %v2438, %v2433
      %v3524 = vpack.c.b16 %v2439, %v2434
      %v3525 = vpack.c.b16 %v2440, %v2435
      %v3526 = vpack.c.b16 %v2441, %v2436
      %v3527 = vpack.c.b16 %v2442, %v2437
      %v3528 = vpack.c.b16 %v2448, %v2443
      %v3529 = vpack.c.b16 %v2449, %v2444
      %v3530 = vpack.c.b16 %v2450, %v2445
      %v3531 = vpack.c.b16 %v2451, %v2446
      %v3532 = vpack.c.b16 %v2452, %v2447
      %v3533 = vpack.c.b16 %v2458, %v2453
      %v3534 = vpack.c.b16 %v2459, %v2454
      %v3535 = vpack.c.b16 %v2460, %v2455
      %v3536 = vpack.c.b16 %v2461, %v2456
      %v3537 = vpack.c.b16 %v2462, %v2457
      %v3538 = vpack.c.b16 %v2468, %v2463
      %v3539 = vpack.c.b16 %v2469, %v2464
      %v3540 = vpack.c.b16 %v2470, %v2465
      %v3541 = vpack.c.b16 %v2471, %v2466
      %v3542 = vpack.c.b16 %v2472, %v2467
      %v3543 = vpack.c.b16 %v2478, %v2473
      %v3544 = vpack.c.b16 %v2479, %v2474
      %v3545 = vpack.c.b16 %v2480, %v2475
      %v3546 = vpack.c.b16 %v2481, %v2476
      %v3547 = vpack.c.b16 %v2482, %v2477
      %v3548 = vpack.c.b16 %v2488, %v2483
      %v3549 = vpack.c.b16 %v2489, %v2484
      %v3550 = vpack.c.b16 %v2490, %v2485
      %v3551 = vpack.c.b16 %v2491, %v2486
      %v3552 = vpack.c.b16 %v2492, %v2487
      %v3553 = vpack.c.b16 %v2498, %v2493
      %v3554 = vpack.c.b16 %v2499, %v2494
      %v3555 = vpack.c.b16 %v2500, %v2495
      %v3556 = vpack.c.b16 %v2501, %v2496
      %v3557 = vpack.c.b16 %v2502, %v2497
      %v3558 = vpack.c.b16 %v2508, %v2503
      %v3559 = vpack.c.b16 %v2509, %v2504
      %v3560 = vpack.c.b16 %v2510, %v2505
      %v3561 = vpack.c.b16 %v2511, %v2506
      %v3562 = vpack.c.b16 %v2512, %v2507
      %v3563 = vpack.c.b16 %v2518, %v2513
      %v3564 = vpack.c.b16 %v2519, %v2514
      %v3565 = vpack.c.b16 %v2520, %v2515
      %v3566 = vpack.c.b16 %v2521, %v2516
      %v3567 = vpack.c.b16 %v2522, %v2517
      %v3568 = vpack.c.b16 %v2528, %v2523
      %v3569 = vpack.c.b16 %v2529, %v2524
      %v3570 = vpack.c.b16 %v2530, %v2525
      %v3571 = vpack.c.b16 %v2531, %v2526
      %v3572 = vpack.c.b16 %v2532, %v2527
      %v3573 = vpack.c.b16 %v2538, %v2533
      %v3574 = vpack.c.b16 %v2539, %v2534
      %v3575 = vpack.c.b16 %v2540, %v2535
      %v3576 = vpack.c.b16 %v2541, %v2536
      %v3577 = vpack.c.b16 %v2542, %v2537
      %v3578 = vpack.c.b16 %v2548, %v2543
      %v3579 = vpack.c.b16 %v2549, %v2544
      %v3580 = vpack.c.b16 %v2550, %v2545
      %v3581 = vpack.c.b16 %v2551, %v2546
      %v3582 = vpack.c.b16 %v2552, %v2547
      %v3583 = vpack.c.b16 %v2558, %v2553
      %v3584 = vpack.c.b16 %v2559, %v2554
      %v3585 = vpack.c.b16 %v2560, %v2555
      %v3586 = vpack.c.b16 %v2561, %v2556
      %v3587 = vpack.c.b16 %v2562, %v2557
      %v3588 = vpack.c.b16 %v2568, %v2563
      %v3589 = vpack.c.b16 %v2569, %v2564
      %v3590 = vpack.c.b16 %v2570, %v2565
      %v3591 = vpack.c.b16 %v2571, %v2566
      %v3592 = vpack.c.b16 %v2572, %v2567
      %v3593 = vpack.c.b16 %v2578, %v2573
      %v3594 = vpack.c.b16 %v2579, %v2574
      %v3595 = vpack.c.b16 %v2580, %v2575
      %v3596 = vpack.c.b16 %v2581, %v2576
      %v3597 = vpack.c.b16 %v2582, %v2577
      %v3598 = vpack.c.b16 %v2588, %v2583
      %v3599 = vpack.c.b16 %v2589, %v2584
      %v3600 = vpack.c.b16 %v2590, %v2585
      %v3601 = vpack.c.b16 %v2591, %v2586
      %v3602 = vpack.c.b16 %v2592, %v2587
      %v3603 = vpack.c.b16 %v2598, %v2593
      %v3604 = vpack.c.b16 %v2599, %v2594
      %v3605 = vpack.c.b16 %v2600, %v2595
      %v3606 = vpack.c.b16 %v2601, %v2596
      %v3607 = vpack.c.b16 %v2602, %v2597
      %v3608 = vpack.c.b16 %v2608, %v2603
      %v3609 = vpack.c.b16 %v2609, %v2604
      %v3610 = vpack.c.b16 %v2610, %v2605
      %v3611 = vpack.c.b16 %v2611, %v2606
      %v3612 = vpack.c.b16 %v2612, %v2607
      %v3613 = vpack.c.b16 %v2618, %v2613
      %v3614 = vpack.c.b16 %v2619, %v2614
      %v3615 = vpack.c.b16 %v2620, %v2615
      %v3616 = vpack.c.b16 %v2621, %v2616
      %v3617 = vpack.c.b16 %v2622, %v2617
      %v3618 = vpack.c.b16 %v2628, %v2623
      %v3619 = vpack.c.b16 %v2629, %v2624
      %v3620 = vpack.c.b16 %v2630, %v2625
      %v3621 = vpack.c.b16 %v2631, %v2626
      %v3622 = vpack.c.b16 %v2632, %v2627
      %v3623 = vpack.c.b16 %v2638, %v2633
      %v3624 = vpack.c.b16 %v2639, %v2634
      %v3625 = vpack.c.b16 %v2640, %v2635
      %v3626 = vpack.c.b16 %v2641, %v2636
      %v3627 = vpack.c.b16 %v2642, %v2637
      %v3628 = vpack.c.b16 %v2648, %v2643
      %v3629 = vpack.c.b16 %v2649, %v2644
      %v3630 = vpack.c.b16 %v2650, %v2645
      %v3631 = vpack.c.b16 %v2651, %v2646
      %v3632 = vpack.c.b16 %v2652, %v2647
      %v3633 = vpack.c.b16 %v2658, %v2653
      %v3634 = vpack.c.b16 %v2659, %v2654
      %v3635 = vpack.c.b16 %v2660, %v2655
      %v3636 = vpack.c.b16 %v2661, %v2656
      %v3637 = vpack.c.b16 %v2662, %v2657
      %v3638 = vpack.c.b16 %v2668, %v2663
      %v3639 = vpack.c.b16 %v2669, %v2664
      %v3640 = vpack.c.b16 %v2670, %v2665
      %v3641 = vpack.c.b16 %v2671, %v2666
      %v3642 = vpack.c.b16 %v2672, %v2667
      %v3643 = vpack.c.b16 %v2678, %v2673
      %v3644 = vpack.c.b16 %v2679, %v2674
      %v3645 = vpack.c.b16 %v2680, %v2675
      %v3646 = vpack.c.b16 %v2681, %v2676
      %v3647 = vpack.c.b16 %v2682, %v2677
      %v3648 = vpack.c.b16 %v2688, %v2683
      %v3649 = vpack.c.b16 %v2689, %v2684
      %v3650 = vpack.c.b16 %v2690, %v2685
      %v3651 = vpack.c.b16 %v2691, %v2686
      %v3652 = vpack.c.b16 %v2692, %v2687
      %v3653 = vpack.c.b16 %v2698, %v2693
      %v3654 = vpack.c.b16 %v2699, %v2694
      %v3655 = vpack.c.b16 %v2700, %v2695
      %v3656 = vpack.c.b16 %v2701, %v2696
      %v3657 = vpack.c.b16 %v2702, %v2697
      %v3658 = vpack.c.b16 %v2708, %v2703
      %v3659 = vpack.c.b16 %v2709, %v2704
      %v3660 = vpack.c.b16 %v2710, %v2705
      %v3661 = vpack.c.b16 %v2711, %v2706
      %v3662 = vpack.c.b16 %v2712, %v2707
      %v3663 = vpack.c.b16 %v2718, %v2713
      %v3664 = vpack.c.b16 %v2719, %v2714
      %v3665 = vpack.c.b16 %v2720, %v2715
      %v3666 = vpack.c.b16 %v2721, %v2716
      %v3667 = vpack.c.b16 %v2722, %v2717
      %v3668 = vpack.c.b16 %v2728, %v2723
      %v3669 = vpack.c.b16 %v2729, %v2724
      %v3670 = vpack.c.b16 %v2730, %v2725
      %v3671 = vpack.c.b16 %v2731, %v2726
      %v3672 = vpack.c.b16 %v2732, %v2727
      %v3673 = vpack.c.b16 %v2738, %v2733
      %v3674 = vpack.c.b16 %v2739, %v2734
      %v3675 = vpack.c.b16 %v2740, %v2735
      %v3676 = vpack.c.b16 %v2741, %v2736
      %v3677 = vpack.c.b16 %v2742, %v2737
      %v3678 = vpack.c.b16 %v2748, %v2743
      %v3679 = vpack.c.b16 %v2749, %v2744
      %v3680 = vpack.c.b16 %v2750, %v2745
      %v3681 = vpack.c.b16 %v2751, %v2746
      %v3682 = vpack.c.b16 %v2752, %v2747
      %v3683 = vpack.c.b16 %v2758, %v2753
      %v3684 = vpack.c.b16 %v2759, %v2754
      %v3685 = vpack.c.b16 %v2760, %v2755
      %v3686 = vpack.c.b16 %v2761, %v2756
      %v3687 = vpack.c.b16 %v2762, %v2757
      %v3688 = vpack.c.b16 %v2768, %v2763
      %v3689 = vpack.c.b16 %v2769, %v2764
      %v3690 = vpack.c.b16 %v2770, %v2765
      %v3691 = vpack.c.b16 %v2771, %v2766
      %v3692 = vpack.c.b16 %v2772, %v2767
      %v3693 = vpack.c.b16 %v2778, %v2773
      %v3694 = vpack.c.b16 %v2779, %v2774
      %v3695 = vpack.c.b16 %v2780, %v2775
      %v3696 = vpack.c.b16 %v2781, %v2776
      %v3697 = vpack.c.b16 %v2782, %v2777
      %v3698 = vpack.c.b16 %v2788, %v2783
      %v3699 = vpack.c.b16 %v2789, %v2784
      %v3700 = vpack.c.b16 %v2790, %v2785
      %v3701 = vpack.c.b16 %v2791, %v2786
      %v3702 = vpack.c.b16 %v2792, %v2787
      %v3703 = vpack.c.b16 %v2798, %v2793
      %v3704 = vpack.c.b16 %v2799, %v2794
      %v3705 = vpack.c.b16 %v2800, %v2795
      %v3706 = vpack.c.b16 %v2801, %v2796
      %v3707 = vpack.c.b16 %v2802, %v2797
      %v3708 = vpack.c.b16 %v2808, %v2803
      %v3709 = vpack.c.b16 %v2809, %v2804
      %v3710 = vpack.c.b16 %v2810, %v2805
      %v3711 = vpack.c.b16 %v2811, %v2806
      %v3712 = vpack.c.b16 %v2812, %v2807
      %v3713 = vpack.c.b16 %v2818, %v2813
      %v3714 = vpack.c.b16 %v2819, %v2814
      %v3715 = vpack.c.b16 %v2820, %v2815
      %v3716 = vpack.c.b16 %v2821, %v2816
      %v3717 = vpack.c.b16 %v2822, %v2817
      %v3718 = vpack.c.b16 %v2828, %v2823
      %v3719 = vpack.c.b16 %v2829, %v2824
      %v3720 = vpack.c.b16 %v2830, %v2825
      %v3721 = vpack.c.b16 %v2831, %v2826
      %v3722 = vpack.c.b16 %v2832, %v2827
      %v3723 = vpack.c.b16 %v2838, %v2833
      %v3724 = vpack.c.b16 %v2839, %v2834
      %v3725 = vpack.c.b16 %v2840, %v2835
      %v3726 = vpack.c.b16 %v2841, %v2836
      %v3727 = vpack.c.b16 %v2842, %v2837
      %v3728 = vpack.c.b16 %v2848, %v2843
      %v3729 = vpack.c.b16 %v2849, %v2844
      %v3730 = vpack.c.b16 %v2850, %v2845
      %v3731 = vpack.c.b16 %v2851, %v2846
      %v3732 = vpack.c.b16 %v2852, %v2847
      %v3733 = vpack.c.b16 %v2858, %v2853
      %v3734 = vpack.c.b16 %v2859, %v2854
      %v3735 = vpack.c.b16 %v2860, %v2855
      %v3736 = vpack.c.b16 %v2861, %v2856
      %v3737 = vpack.c.b16 %v2862, %v2857
      %v3738 = vpack.c.b16 %v2868, %v2863
      %v3739 = vpack.c.b16 %v2869, %v2864
      %v3740 = vpack.c.b16 %v2870, %v2865
      %v3741 = vpack.c.b16 %v2871, %v2866
      %v3742 = vpack.c.b16 %v2872, %v2867
      %v3743 = vpack.c.b16 %v2878, %v2873
      %v3744 = vpack.c.b16 %v2879, %v2874
      %v3745 = vpack.c.b16 %v2880, %v2875
      %v3746 = vpack.c.b16 %v2881, %v2876
      %v3747 = vpack.c.b16 %v2882, %v2877
      %v3748 = vpack.c.b16 %v2888, %v2883
      %v3749 = vpack.c.b16 %v2889, %v2884
      %v3750 = vpack.c.b16 %v2890, %v2885
      %v3751 = vpack.c.b16 %v2891, %v2886
      %v3752 = vpack.c.b16 %v2892, %v2887
      %v3753 = vpack.c.b16 %v2898, %v2893
      %v3754 = vpack.c.b16 %v2899, %v2894
      %v3755 = vpack.c.b16 %v2900, %v2895
      %v3756 = vpack.c.b16 %v2901, %v2896
      %v3757 = vpack.c.b16 %v2902, %v2897
      %v3758 = vpack.c.b16 %v2908, %v2903
      %v3759 = vpack.c.b16 %v2909, %v2904
      %v3760 = vpack.c.b16 %v2910, %v2905
      %v3761 = vpack.c.b16 %v2911, %v2906
      %v3762 = vpack.c.b16 %v2912, %v2907
      %v3763 = vpack.c.b16 %v2918, %v2913
      %v3764 = vpack.c.b16 %v2919, %v2914
      %v3765 = vpack.c.b16 %v2920, %v2915
      %v3766 = vpack.c.b16 %v2921, %v2916
      %v3767 = vpack.c.b16 %v2922, %v2917
      %v3768 = vpack.c.b16 %v2928, %v2923
      %v3769 = vpack.c.b16 %v2929, %v2924
      %v3770 = vpack.c.b16 %v2930, %v2925
      %v3771 = vpack.c.b16 %v2931, %v2926
      %v3772 = vpack.c.b16 %v2932, %v2927
      %v3773 = vpack.c.b16 %v2938, %v2933
      %v3774 = vpack.c.b16 %v2939, %v2934
      %v3775 = vpack.c.b16 %v2940, %v2935
      %v3776 = vpack.c.b16 %v2941, %v2936
      %v3777 = vpack.c.b16 %v2942, %v2937
      %v3778 = vpack.c.b16 %v2948, %v2943
      %v3779 = vpack.c.b16 %v2949, %v2944
      %v3780 = vpack.c.b16 %v2950, %v2945
      %v3781 = vpack.c.b16 %v2951, %v2946
      %v3782 = vpack.c.b16 %v2952, %v2947
      %v3783 = vpack.c.b16 %v2958, %v2953
      %v3784 = vpack.c.b16 %v2959, %v2954
      %v3785 = vpack.c.b16 %v2960, %v2955
      %v3786 = vpack.c.b16 %v2961, %v2956
      %v3787 = vpack.c.b16 %v2962, %v2957
      %v3788 = vpack.c.b16 %v2968, %v2963
      %v3789 = vpack.c.b16 %v2969, %v2964
      %v3790 = vpack.c.b16 %v2970, %v2965
      %v3791 = vpack.c.b16 %v2971, %v2966
      %v3792 = vpack.c.b16 %v2972, %v2967
      %v3793 = vpack.c.b16 %v2978, %v2973
      %v3794 = vpack.c.b16 %v2979, %v2974
      %v3795 = vpack.c.b16 %v2980, %v2975
      %v3796 = vpack.c.b16 %v2981, %v2976
      %v3797 = vpack.c.b16 %v2982, %v2977
      %v3798 = vpack.c.b16 %v2988, %v2983
      %v3799 = vpack.c.b16 %v2989, %v2984
      %v3800 = vpack.c.b16 %v2990, %v2985
      %v3801 = vpack.c.b16 %v2991, %v2986
      %v3802 = vpack.c.b16 %v2992, %v2987
      %v3803 = vpack.c.b16 %v2998, %v2993
      %v3804 = vpack.c.b16 %v2999, %v2994
      %v3805 = vpack.c.b16 %v3000, %v2995
      %v3806 = vpack.c.b16 %v3001, %v2996
      %v3807 = vpack.c.b16 %v3002, %v2997
      %v3808 = vpack.c.b16 %v3008, %v3003
      %v3809 = vpack.c.b16 %v3009, %v3004
      %v3810 = vpack.c.b16 %v3010, %v3005
      %v3811 = vpack.c.b16 %v3011, %v3006
      %v3812 = vpack.c.b16 %v3012, %v3007
      %v3813 = vpack.c.b16 %v3018, %v3013
      %v3814 = vpack.c.b16 %v3019, %v3014
      %v3815 = vpack.c.b16 %v3020, %v3015
      %v3816 = vpack.c.b16 %v3021, %v3016
      %v3817 = vpack.c.b16 %v3022, %v3017
      %v3818 = vpack.c.b16 %v3028, %v3023
      %v3819 = vpack.c.b16 %v3029, %v3024
      %v3820 = vpack.c.b16 %v3030, %v3025
      %v3821 = vpack.c.b16 %v3031, %v3026
      %v3822 = vpack.c.b16 %v3032, %v3027
      %v3823 = vpack.c.b16 %v3038, %v3033
      %v3824 = vpack.c.b16 %v3039, %v3034
      %v3825 = vpack.c.b16 %v3040, %v3035
      %v3826 = vpack.c.b16 %v3041, %v3036
      %v3827 = vpack.c.b16 %v3042, %v3037
      %v3828 = vpack.c.b16 %v3048, %v3043
      %v3829 = vpack.c.b16 %v3049, %v3044
      %v3830 = vpack.c.b16 %v3050, %v3045
      %v3831 = vpack.c.b16 %v3051, %v3046
      %v3832 = vpack.c.b16 %v3052, %v3047
      %v3833 = vpack.c.b16 %v3058, %v3053
      %v3834 = vpack.c.b16 %v3059, %v3054
      %v3835 = vpack.c.b16 %v3060, %v3055
      %v3836 = vpack.c.b16 %v3061, %v3056
      %v3837 = vpack.c.b16 %v3062, %v3057
      %v3838 = vpack.c.b16 %v3068, %v3063
      %v3839 = vpack.c.b16 %v3069, %v3064
      %v3840 = vpack.c.b16 %v3070, %v3065
      %v3841 = vpack.c.b16 %v3071, %v3066
      %v3842 = vpack.c.b16 %v3072, %v3067
      %v3843 = vpack.c.b16 %v3078, %v3073
      %v3844 = vpack.c.b16 %v3079, %v3074
      %v3845 = vpack.c.b16 %v3080, %v3075
      %v3846 = vpack.c.b16 %v3081, %v3076
      %v3847 = vpack.c.b16 %v3082, %v3077
      %v3848 = vpack.c.b16 %v3088, %v3083
      %v3849 = vpack.c.b16 %v3089, %v3084
      %v3850 = vpack.c.b16 %v3090, %v3085
      %v3851 = vpack.c.b16 %v3091, %v3086
      %v3852 = vpack.c.b16 %v3092, %v3087
      %v3853 = vpack.c.b16 %v3098, %v3093
      %v3854 = vpack.c.b16 %v3099, %v3094
      %v3855 = vpack.c.b16 %v3100, %v3095
      %v3856 = vpack.c.b16 %v3101, %v3096
      %v3857 = vpack.c.b16 %v3102, %v3097
      %v3858 = vpack.c.b16 %v3108, %v3103
      %v3859 = vpack.c.b16 %v3109, %v3104
      %v3860 = vpack.c.b16 %v3110, %v3105
      %v3861 = vpack.c.b16 %v3111, %v3106
      %v3862 = vpack.c.b16 %v3112, %v3107
      %v3863 = vpack.c.b16 %v3118, %v3113
      %v3864 = vpack.c.b16 %v3119, %v3114
      %v3865 = vpack.c.b16 %v3120, %v3115
      %v3866 = vpack.c.b16 %v3121, %v3116
      %v3867 = vpack.c.b16 %v3122, %v3117
      %v3868 = vpack.c.b16 %v3128, %v3123
      %v3869 = vpack.c.b16 %v3129, %v3124
      %v3870 = vpack.c.b16 %v3130, %v3125
      %v3871 = vpack.c.b16 %v3131, %v3126
      %v3872 = vpack.c.b16 %v3132, %v3127
      %v3873 = vpack.c.b16 %v3138, %v3133
      %v3874 = vpack.c.b16 %v3139, %v3134
      %v3875 = vpack.c.b16 %v3140, %v3135
      %v3876 = vpack.c.b16 %v3141, %v3136
      %v3877 = vpack.c.b16 %v3142, %v3137
      %v3878 = vpack.c.b16 %v3148, %v3143
      %v3879 = vpack.c.b16 %v3149, %v3144
      %v3880 = vpack.c.b16 %v3150, %v3145
      %v3881 = vpack.c.b16 %v3151, %v3146
      %v3882 = vpack.c.b16 %v3152, %v3147
      %v3883 = vpack.c.b16 %v3158, %v3153
      %v3884 = vpack.c.b16 %v3159, %v3154
      %v3885 = vpack.c.b16 %v3160, %v3155
      %v3886 = vpack.c.b16 %v3161, %v3156
      %v3887 = vpack.c.b16 %v3162, %v3157
      %v3888 = vpack.c.b16 %v3168, %v3163
      %v3889 = vpack.c.b16 %v3169, %v3164
      %v3890 = vpack.c.b16 %v3170, %v3165
      %v3891 = vpack.c.b16 %v3171, %v3166
      %v3892 = vpack.c.b16 %v3172, %v3167
      %v3893 = vpack.c.b16 %v3178, %v3173
      %v3894 = vpack.c.b16 %v3179, %v3174
      %v3895 = vpack.c.b16 %v3180, %v3175
      %v3896 = vpack.c.b16 %v3181, %v3176
      %v3897 = vpack.c.b16 %v3182, %v3177
      %v3898 = vpack.c.b16 %v3188, %v3183
      %v3899 = vpack.c.b16 %v3189, %v3184
      %v3900 = vpack.c.b16 %v3190, %v3185
      %v3901 = vpack.c.b16 %v3191, %v3186
      %v3902 = vpack.c.b16 %v3192, %v3187
      %v3903 = vpack.c.b16 %v3198, %v3193
      %v3904 = vpack.c.b16 %v3199, %v3194
      %v3905 = vpack.c.b16 %v3200, %v3195
      %v3906 = vpack.c.b16 %v3201, %v3196
      %v3907 = vpack.c.b16 %v3202, %v3197
      %v3908 = vpack.c.b16 %v3208, %v3203
      %v3909 = vpack.c.b16 %v3209, %v3204
      %v3910 = vpack.c.b16 %v3210, %v3205
      %v3911 = vpack.c.b16 %v3211, %v3206
      %v3912 = vpack.c.b16 %v3212, %v3207
      %v3913 = vpack.c.b16 %v3218, %v3213
      %v3914 = vpack.c.b16 %v3219, %v3214
      %v3915 = vpack.c.b16 %v3220, %v3215
      %v3916 = vpack.c.b16 %v3221, %v3216
      %v3917 = vpack.c.b16 %v3222, %v3217
      %v3918 = vpack.c.b16 %v3228, %v3223
      %v3919 = vpack.c.b16 %v3229, %v3224
      %v3920 = vpack.c.b16 %v3230, %v3225
      %v3921 = vpack.c.b16 %v3231, %v3226
      %v3922 = vpack.c.b16 %v3232, %v3227
      %v3923 = vpack.c.b16 %v3238, %v3233
      %v3924 = vpack.c.b16 %v3239, %v3234
      %v3925 = vpack.c.b16 %v3240, %v3235
      %v3926 = vpack.c.b16 %v3241, %v3236
      %v3927 = vpack.c.b16 %v3242, %v3237
      %v3928 = vpack.c.b16 %v3248, %v3243
      %v3929 = vpack.c.b16 %v3249, %v3244
      %v3930 = vpack.c.b16 %v3250, %v3245
      %v3931 = vpack.c.b16 %v3251, %v3246
      %v3932 = vpack.c.b16 %v3252, %v3247
      %v3933 = vpack.c.b16 %v3258, %v3253
      %v3934 = vpack.c.b16 %v3259, %v3254
      %v3935 = vpack.c.b16 %v3260, %v3255
      %v3936 = vpack.c.b16 %v3261, %v3256
      %v3937 = vpack.c.b16 %v3262, %v3257
      %v3938 = vpack.c.b16 %v3268, %v3263
      %v3939 = vpack.c.b16 %v3269, %v3264
      %v3940 = vpack.c.b16 %v3270, %v3265
      %v3941 = vpack.c.b16 %v3271, %v3266
      %v3942 = vpack.c.b16 %v3272, %v3267
      %v3943 = vpack.c.b16 %v3278, %v3273
      %v3944 = vpack.c.b16 %v3279, %v3274
      %v3945 = vpack.c.b16 %v3280, %v3275
      %v3946 = vpack.c.b16 %v3281, %v3276
      %v3947 = vpack.c.b16 %v3282, %v3277
      %v3948 = vpack.c.b16 %v3288, %v3283
      %v3949 = vpack.c.b16 %v3289, %v3284
      %v3950 = vpack.c.b16 %v3290, %v3285
      %v3951 = vpack.c.b16 %v3291, %v3286
      %v3952 = vpack.c.b16 %v3292, %v3287
      %v3953 = vpack.c.b16 %v3298, %v3293
      %v3954 = vpack.c.b16 %v3299, %v3294
      %v3955 = vpack.c.b16 %v3300, %v3295
      %v3956 = vpack.c.b16 %v3301, %v3296
      %v3957 = vpack.c.b16 %v3302, %v3297
      %v3958 = vpack.c.b16 %v3308, %v3303
      %v3959 = vpack.c.b16 %v3309, %v3304
      %v3960 = vpack.c.b16 %v3310, %v3305
      %v3961 = vpack.c.b16 %v3311, %v3306
      %v3962 = vpack.c.b16 %v3312, %v3307
      %v3963 = vpack.c.b16 %v3318, %v3313
      %v3964 = vpack.c.b16 %v3319, %v3314
      %v3965 = vpack.c.b16 %v3320, %v3315
      %v3966 = vpack.c.b16 %v3321, %v3316
      %v3967 = vpack.c.b16 %v3322, %v3317
      %v3968 = vpack.c.b16 %v3328, %v3323
      %v3969 = vpack.c.b16 %v3329, %v3324
      %v3970 = vpack.c.b16 %v3330, %v3325
      %v3971 = vpack.c.b16 %v3331, %v3326
      %v3972 = vpack.c.b16 %v3332, %v3327
      %4613 = vmatprep.subr.bf16.mxu0 %v3334
      %4614 = vmatpush1.bf16.msra.mxu0 %v3333
      %4615 = vmatprep.subr.bf16.mxu0 %v3339
      %4616 = vmatpush1.bf16.msra.mxu0 %v3338
      %4617 = vmatprep.subr.bf16.mxu0 %v3344
      %4618 = vmatpush1.bf16.msra.mxu0 %v3343
      %4619 = vmatprep.subr.bf16.mxu0 %v3349
      %4620 = vmatpush1.bf16.msra.mxu0 %v3348
      %4621 = vmatprep.subr.bf16.mxu0 %v3354
      %4622 = vmatpush1.bf16.msra.mxu0 %v3353
      %4623 = vmatprep.subr.bf16.mxu0 %v3359
      %4624 = vmatpush1.bf16.msra.mxu0 %v3358
      %4625 = vmatprep.subr.bf16.mxu0 %v3364
      %4626 = vmatpush1.bf16.msra.mxu0 %v3363
      %4627 = vmatprep.subr.bf16.mxu0 %v3369
      %4628 = vmatpush1.bf16.msra.mxu0 %v3368
      %4629 = vmatprep.subr.bf16.mxu0 %v3374
      %4630 = vmatpush1.bf16.msra.mxu0 %v3373
      %4631 = vmatprep.subr.bf16.mxu0 %v3379
      %4632 = vmatpush1.bf16.msra.mxu0 %v3378
      %4633 = vmatprep.subr.bf16.mxu0 %v3384
      %4634 = vmatpush1.bf16.msra.mxu0 %v3383
      %4635 = vmatprep.subr.bf16.mxu0 %v3389
      %4636 = vmatpush1.bf16.msra.mxu0 %v3388
      %4637 = vmatprep.subr.bf16.mxu0 %v3394
      %4638 = vmatpush1.bf16.msra.mxu0 %v3393
      %4639 = vmatprep.subr.bf16.mxu0 %v3399
      %4640 = vmatpush1.bf16.msra.mxu0 %v3398
      %4641 = vmatprep.subr.bf16.mxu0 %v3404
      %4642 = vmatpush1.bf16.msra.mxu0 %v3403
      %4643 = vmatprep.subr.bf16.mxu0 %v3409
      %4644 = vmatpush1.bf16.msra.mxu0 %v3408
      %4645 = vmatprep.mubr.bf16.mxu0 %v1190
      %4646 = vmatmul.mubr.bf16.gmra.mrb[0].mxu0 %v1189
      %v4647 = vpop.f32.mrb[0].mxu0
      %v4648 = vadd.f32 0.0, %v4647
      %v4649 = vpop.f32.mrb[0].mxu0
      %v4650 = vadd.f32 0.0, %v4649
      %v4651 = vpop.f32.mrb[0].mxu0
      %v4652 = vadd.f32 0.0, %v4651
      %v4653 = vpop.f32.mrb[0].mxu0
      %v4654 = vadd.f32 0.0, %v4653
      %4655 = vmatprep.mubr.bf16.mxu0 %v1206
      %4656 = vmatmul.mubr.bf16.gmra.mrb[0].mxu0 %v1205
      %v4657 = vpop.f32.mrb[0].mxu0
      %v4658 = vadd.f32 0.0, %v4657
      %v4659 = vpop.f32.mrb[0].mxu0
      %v4660 = vadd.f32 0.0, %v4659
      %v4661 = vpop.f32.mrb[0].mxu0
      %v4662 = vadd.f32 0.0, %v4661
      %v4663 = vpop.f32.mrb[0].mxu0
      %v4664 = vadd.f32 0.0, %v4663
      %4665 = vmatprep.mubr.bf16.mxu0 %v1222
      %4666 = vmatmul.mubr.bf16.gmra.mrb[0].mxu0 %v1221
      %v4667 = vpop.f32.mrb[0].mxu0
      %v4668 = vadd.f32 0.0, %v4667
      %v4669 = vpop.f32.mrb[0].mxu0
      %v4670 = vadd.f32 0.0, %v4669
      %v4671 = vpop.f32.mrb[0].mxu0
      %v4672 = vadd.f32 0.0, %v4671
      %v4673 = vpop.f32.mrb[0].mxu0
      %v4674 = vadd.f32 0.0, %v4673
      %4675 = vdwg.mxu0
      %4676 = vmatprep.subr.bf16.mxu0 %v3414
      %4677 = vmatpush1.bf16.msra.mxu0 %v3413
      %4678 = vmatprep.subr.bf16.mxu0 %v3419
      %4679 = vmatpush1.bf16.msra.mxu0 %v3418
      %4680 = vmatprep.subr.bf16.mxu0 %v3424
      %4681 = vmatpush1.bf16.msra.mxu0 %v3423
      %4682 = vmatprep.subr.bf16.mxu0 %v3429
      %4683 = vmatpush1.bf16.msra.mxu0 %v3428
      %4684 = vmatprep.subr.bf16.mxu0 %v3434
      %4685 = vmatpush1.bf16.msra.mxu0 %v3433
      %4686 = vmatprep.subr.bf16.mxu0 %v3439
      %4687 = vmatpush1.bf16.msra.mxu0 %v3438
      %4688 = vmatprep.subr.bf16.mxu0 %v3444
      %4689 = vmatpush1.bf16.msra.mxu0 %v3443
      %4690 = vmatprep.subr.bf16.mxu0 %v3449
      %4691 = vmatpush1.bf16.msra.mxu0 %v3448
      %4692 = vmatprep.subr.bf16.mxu0 %v3454
      %4693 = vmatpush1.bf16.msra.mxu0 %v3453
      %4694 = vmatprep.subr.bf16.mxu0 %v3459
      %4695 = vmatpush1.bf16.msra.mxu0 %v3458
      %4696 = vmatprep.subr.bf16.mxu0 %v3464
      %4697 = vmatpush1.bf16.msra.mxu0 %v3463
      %4698 = vmatprep.subr.bf16.mxu0 %v3469
      %4699 = vmatpush1.bf16.msra.mxu0 %v3468
      %4700 = vmatprep.subr.bf16.mxu0 %v3474
      %4701 = vmatpush1.bf16.msra.mxu0 %v3473
      %4702 = vmatprep.subr.bf16.mxu0 %v3479
      %4703 = vmatpush1.bf16.msra.mxu0 %v3478
      %4704 = vmatprep.subr.bf16.mxu0 %v3484
      %4705 = vmatpush1.bf16.msra.mxu0 %v3483
      %4706 = vmatprep.subr.bf16.mxu0 %v3489
      %4707 = vmatpush1.bf16.msra.mxu0 %v3488
      %4708 = vmatprep.mubr.bf16.mxu0 %v1192
      %4709 = vmatmul.mubr.bf16.gmra.mrb[0].mxu0 %v1191
      %v4710 = vpop.f32.mrb[0].mxu0
      %v4711 = vadd.f32 %v4648, %v4710
      %v4712 = vpop.f32.mrb[0].mxu0
      %v4713 = vadd.f32 %v4650, %v4712
      %v4714 = vpop.f32.mrb[0].mxu0
      %v4715 = vadd.f32 %v4652, %v4714
      %v4716 = vpop.f32.mrb[0].mxu0
      %v4717 = vadd.f32 %v4654, %v4716
      %4718 = vmatprep.mubr.bf16.mxu0 %v1208
      %4719 = vmatmul.mubr.bf16.gmra.mrb[0].mxu0 %v1207
      %v4720 = vpop.f32.mrb[0].mxu0
      %v4721 = vadd.f32 %v4658, %v4720
      %v4722 = vpop.f32.mrb[0].mxu0
      %v4723 = vadd.f32 %v4660, %v4722
      %v4724 = vpop.f32.mrb[0].mxu0
      %v4725 = vadd.f32 %v4662, %v4724
      %v4726 = vpop.f32.mrb[0].mxu0
      %v4727 = vadd.f32 %v4664, %v4726
      %4728 = vmatprep.mubr.bf16.mxu0 %v1224
      %4729 = vmatmul.mubr.bf16.gmra.mrb[0].mxu0 %v1223
      %v4730 = vpop.f32.mrb[0].mxu0
      %v4731 = vadd.f32 %v4668, %v4730
      %v4732 = vpop.f32.mrb[0].mxu0
      %v4733 = vadd.f32 %v4670, %v4732
      %v4734 = vpop.f32.mrb[0].mxu0
      %v4735 = vadd.f32 %v4672, %v4734
      %v4736 = vpop.f32.mrb[0].mxu0
      %v4737 = vadd.f32 %v4674, %v4736
      %4738 = vdwg.mxu0
      %4739 = vmatprep.subr.bf16.mxu0 %v3494
      %4740 = vmatpush1.bf16.msra.mxu0 %v3493
      %4741 = vmatprep.subr.bf16.mxu0 %v3499
      %4742 = vmatpush1.bf16.msra.mxu0 %v3498
      %4743 = vmatprep.subr.bf16.mxu0 %v3504
      %4744 = vmatpush1.bf16.msra.mxu0 %v3503
      %4745 = vmatprep.subr.bf16.mxu0 %v3509
      %4746 = vmatpush1.bf16.msra.mxu0 %v3508
      %4747 = vmatprep.subr.bf16.mxu0 %v3514
      %4748 = vmatpush1.bf16.msra.mxu0 %v3513
      %4749 = vmatprep.subr.bf16.mxu0 %v3519
      %4750 = vmatpush1.bf16.msra.mxu0 %v3518
      %4751 = vmatprep.subr.bf16.mxu0 %v3524
      %4752 = vmatpush1.bf16.msra.mxu0 %v3523
      %4753 = vmatprep.subr.bf16.mxu0 %v3529
      %4754 = vmatpush1.bf16.msra.mxu0 %v3528
      %4755 = vmatprep.subr.bf16.mxu0 %v3534
      %4756 = vmatpush1.bf16.msra.mxu0 %v3533
      %4757 = vmatprep.subr.bf16.mxu0 %v3539
      %4758 = vmatpush1.bf16.msra.mxu0 %v3538
      %4759 = vmatprep.subr.bf16.mxu0 %v3544
      %4760 = vmatpush1.bf16.msra.mxu0 %v3543
      %4761 = vmatprep.subr.bf16.mxu0 %v3549
      %4762 = vmatpush1.bf16.msra.mxu0 %v3548
      %4763 = vmatprep.subr.bf16.mxu0 %v3554
      %4764 = vmatpush1.bf16.msra.mxu0 %v3553
      %4765 = vmatprep.subr.bf16.mxu0 %v3559
      %4766 = vmatpush1.bf16.msra.mxu0 %v3558
      %4767 = vmatprep.subr.bf16.mxu0 %v3564
      %4768 = vmatpush1.bf16.msra.mxu0 %v3563
      %4769 = vmatprep.subr.bf16.mxu0 %v3569
      %4770 = vmatpush1.bf16.msra.mxu0 %v3568
      %4771 = vmatprep.mubr.bf16.mxu0 %v1194
      %4772 = vmatmul.mubr.bf16.gmra.mrb[0].mxu0 %v1193
      %v4773 = vpop.f32.mrb[0].mxu0
      %v4774 = vadd.f32 %v4711, %v4773
      %v4775 = vpop.f32.mrb[0].mxu0
      %v4776 = vadd.f32 %v4713, %v4775
      %v4777 = vpop.f32.mrb[0].mxu0
      %v4778 = vadd.f32 %v4715, %v4777
      %v4779 = vpop.f32.mrb[0].mxu0
      %v4780 = vadd.f32 %v4717, %v4779
      %4781 = vmatprep.mubr.bf16.mxu0 %v1210
      %4782 = vmatmul.mubr.bf16.gmra.mrb[0].mxu0 %v1209
      %v4783 = vpop.f32.mrb[0].mxu0
      %v4784 = vadd.f32 %v4721, %v4783
      %v4785 = vpop.f32.mrb[0].mxu0
      %v4786 = vadd.f32 %v4723, %v4785
      %v4787 = vpop.f32.mrb[0].mxu0
      %v4788 = vadd.f32 %v4725, %v4787
      %v4789 = vpop.f32.mrb[0].mxu0
      %v4790 = vadd.f32 %v4727, %v4789
      %4791 = vmatprep.mubr.bf16.mxu0 %v1226
      %4792 = vmatmul.mubr.bf16.gmra.mrb[0].mxu0 %v1225
      %v4793 = vpop.f32.mrb[0].mxu0
      %v4794 = vadd.f32 %v4731, %v4793
      %v4795 = vpop.f32.mrb[0].mxu0
      %v4796 = vadd.f32 %v4733, %v4795
      %v4797 = vpop.f32.mrb[0].mxu0
      %v4798 = vadd.f32 %v4735, %v4797
      %v4799 = vpop.f32.mrb[0].mxu0
      %v4800 = vadd.f32 %v4737, %v4799
      %4801 = vdwg.mxu0
      %4802 = vmatprep.subr.bf16.mxu0 %v3574
      %4803 = vmatpush1.bf16.msra.mxu0 %v3573
      %4804 = vmatprep.subr.bf16.mxu0 %v3579
      %4805 = vmatpush1.bf16.msra.mxu0 %v3578
      %4806 = vmatprep.subr.bf16.mxu0 %v3584
      %4807 = vmatpush1.bf16.msra.mxu0 %v3583
      %4808 = vmatprep.subr.bf16.mxu0 %v3589
      %4809 = vmatpush1.bf16.msra.mxu0 %v3588
      %4810 = vmatprep.subr.bf16.mxu0 %v3594
      %4811 = vmatpush1.bf16.msra.mxu0 %v3593
      %4812 = vmatprep.subr.bf16.mxu0 %v3599
      %4813 = vmatpush1.bf16.msra.mxu0 %v3598
      %4814 = vmatprep.subr.bf16.mxu0 %v3604
      %4815 = vmatpush1.bf16.msra.mxu0 %v3603
      %4816 = vmatprep.subr.bf16.mxu0 %v3609
      %4817 = vmatpush1.bf16.msra.mxu0 %v3608
      %4818 = vmatprep.subr.bf16.mxu0 %v3614
      %4819 = vmatpush1.bf16.msra.mxu0 %v3613
      %4820 = vmatprep.subr.bf16.mxu0 %v3619
      %4821 = vmatpush1.bf16.msra.mxu0 %v3618
      %4822 = vmatprep.subr.bf16.mxu0 %v3624
      %4823 = vmatpush1.bf16.msra.mxu0 %v3623
      %4824 = vmatprep.subr.bf16.mxu0 %v3629
      %4825 = vmatpush1.bf16.msra.mxu0 %v3628
      %4826 = vmatprep.subr.bf16.mxu0 %v3634
      %4827 = vmatpush1.bf16.msra.mxu0 %v3633
      %4828 = vmatprep.subr.bf16.mxu0 %v3639
      %4829 = vmatpush1.bf16.msra.mxu0 %v3638
      %4830 = vmatprep.subr.bf16.mxu0 %v3644
      %4831 = vmatpush1.bf16.msra.mxu0 %v3643
      %4832 = vmatprep.subr.bf16.mxu0 %v3649
      %4833 = vmatpush1.bf16.msra.mxu0 %v3648
      %4834 = vmatprep.mubr.bf16.mxu0 %v1196
      %4835 = vmatmul.mubr.bf16.gmra.mrb[0].mxu0 %v1195
      %v4836 = vpop.f32.mrb[0].mxu0
      %v4837 = vadd.f32 %v4774, %v4836
      %v4838 = vpop.f32.mrb[0].mxu0
      %v4839 = vadd.f32 %v4776, %v4838
      %v4840 = vpop.f32.mrb[0].mxu0
      %v4841 = vadd.f32 %v4778, %v4840
      %v4842 = vpop.f32.mrb[0].mxu0
      %v4843 = vadd.f32 %v4780, %v4842
      %4844 = vmatprep.mubr.bf16.mxu0 %v1212
      %4845 = vmatmul.mubr.bf16.gmra.mrb[0].mxu0 %v1211
      %v4846 = vpop.f32.mrb[0].mxu0
      %v4847 = vadd.f32 %v4784, %v4846
      %v4848 = vpop.f32.mrb[0].mxu0
      %v4849 = vadd.f32 %v4786, %v4848
      %v4850 = vpop.f32.mrb[0].mxu0
      %v4851 = vadd.f32 %v4788, %v4850
      %v4852 = vpop.f32.mrb[0].mxu0
      %v4853 = vadd.f32 %v4790, %v4852
      %4854 = vmatprep.mubr.bf16.mxu0 %v1228
      %4855 = vmatmul.mubr.bf16.gmra.mrb[0].mxu0 %v1227
      %v4856 = vpop.f32.mrb[0].mxu0
      %v4857 = vadd.f32 %v4794, %v4856
      %v4858 = vpop.f32.mrb[0].mxu0
      %v4859 = vadd.f32 %v4796, %v4858
      %v4860 = vpop.f32.mrb[0].mxu0
      %v4861 = vadd.f32 %v4798, %v4860
      %v4862 = vpop.f32.mrb[0].mxu0
      %v4863 = vadd.f32 %v4800, %v4862
      %4864 = vdwg.mxu0
      %4865 = vmatprep.subr.bf16.mxu0 %v3654
      %4866 = vmatpush1.bf16.msra.mxu0 %v3653
      %4867 = vmatprep.subr.bf16.mxu0 %v3659
      %4868 = vmatpush1.bf16.msra.mxu0 %v3658
      %4869 = vmatprep.subr.bf16.mxu0 %v3664
      %4870 = vmatpush1.bf16.msra.mxu0 %v3663
      %4871 = vmatprep.subr.bf16.mxu0 %v3669
      %4872 = vmatpush1.bf16.msra.mxu0 %v3668
      %4873 = vmatprep.subr.bf16.mxu0 %v3674
      %4874 = vmatpush1.bf16.msra.mxu0 %v3673
      %4875 = vmatprep.subr.bf16.mxu0 %v3679
      %4876 = vmatpush1.bf16.msra.mxu0 %v3678
      %4877 = vmatprep.subr.bf16.mxu0 %v3684
      %4878 = vmatpush1.bf16.msra.mxu0 %v3683
      %4879 = vmatprep.subr.bf16.mxu0 %v3689
      %4880 = vmatpush1.bf16.msra.mxu0 %v3688
      %4881 = vmatprep.subr.bf16.mxu0 %v3694
      %4882 = vmatpush1.bf16.msra.mxu0 %v3693
      %4883 = vmatprep.subr.bf16.mxu0 %v3699
      %4884 = vmatpush1.bf16.msra.mxu0 %v3698
      %4885 = vmatprep.subr.bf16.mxu0 %v3704
      %4886 = vmatpush1.bf16.msra.mxu0 %v3703
      %4887 = vmatprep.subr.bf16.mxu0 %v3709
      %4888 = vmatpush1.bf16.msra.mxu0 %v3708
      %4889 = vmatprep.subr.bf16.mxu0 %v3714
      %4890 = vmatpush1.bf16.msra.mxu0 %v3713
      %4891 = vmatprep.subr.bf16.mxu0 %v3719
      %4892 = vmatpush1.bf16.msra.mxu0 %v3718
      %4893 = vmatprep.subr.bf16.mxu0 %v3724
      %4894 = vmatpush1.bf16.msra.mxu0 %v3723
      %4895 = vmatprep.subr.bf16.mxu0 %v3729
      %4896 = vmatpush1.bf16.msra.mxu0 %v3728
      %4897 = vmatprep.mubr.bf16.mxu0 %v1198
      %4898 = vmatmul.mubr.bf16.gmra.mrb[0].mxu0 %v1197
      %v4899 = vpop.f32.mrb[0].mxu0
      %v4900 = vadd.f32 %v4837, %v4899
      %v4901 = vpop.f32.mrb[0].mxu0
      %v4902 = vadd.f32 %v4839, %v4901
      %v4903 = vpop.f32.mrb[0].mxu0
      %v4904 = vadd.f32 %v4841, %v4903
      %v4905 = vpop.f32.mrb[0].mxu0
      %v4906 = vadd.f32 %v4843, %v4905
      %4907 = vmatprep.mubr.bf16.mxu0 %v1214
      %4908 = vmatmul.mubr.bf16.gmra.mrb[0].mxu0 %v1213
      %v4909 = vpop.f32.mrb[0].mxu0
      %v4910 = vadd.f32 %v4847, %v4909
      %v4911 = vpop.f32.mrb[0].mxu0
      %v4912 = vadd.f32 %v4849, %v4911
      %v4913 = vpop.f32.mrb[0].mxu0
      %v4914 = vadd.f32 %v4851, %v4913
      %v4915 = vpop.f32.mrb[0].mxu0
      %v4916 = vadd.f32 %v4853, %v4915
      %4917 = vmatprep.mubr.bf16.mxu0 %v1230
      %4918 = vmatmul.mubr.bf16.gmra.mrb[0].mxu0 %v1229
      %v4919 = vpop.f32.mrb[0].mxu0
      %v4920 = vadd.f32 %v4857, %v4919
      %v4921 = vpop.f32.mrb[0].mxu0
      %v4922 = vadd.f32 %v4859, %v4921
      %v4923 = vpop.f32.mrb[0].mxu0
      %v4924 = vadd.f32 %v4861, %v4923
      %v4925 = vpop.f32.mrb[0].mxu0
      %v4926 = vadd.f32 %v4863, %v4925
      %4927 = vdwg.mxu0
      %4928 = vmatprep.subr.bf16.mxu0 %v3734
      %4929 = vmatpush1.bf16.msra.mxu0 %v3733
      %4930 = vmatprep.subr.bf16.mxu0 %v3739
      %4931 = vmatpush1.bf16.msra.mxu0 %v3738
      %4932 = vmatprep.subr.bf16.mxu0 %v3744
      %4933 = vmatpush1.bf16.msra.mxu0 %v3743
      %4934 = vmatprep.subr.bf16.mxu0 %v3749
      %4935 = vmatpush1.bf16.msra.mxu0 %v3748
      %4936 = vmatprep.subr.bf16.mxu0 %v3754
      %4937 = vmatpush1.bf16.msra.mxu0 %v3753
      %4938 = vmatprep.subr.bf16.mxu0 %v3759
      %4939 = vmatpush1.bf16.msra.mxu0 %v3758
      %4940 = vmatprep.subr.bf16.mxu0 %v3764
      %4941 = vmatpush1.bf16.msra.mxu0 %v3763
      %4942 = vmatprep.subr.bf16.mxu0 %v3769
      %4943 = vmatpush1.bf16.msra.mxu0 %v3768
      %4944 = vmatprep.subr.bf16.mxu0 %v3774
      %4945 = vmatpush1.bf16.msra.mxu0 %v3773
      %4946 = vmatprep.subr.bf16.mxu0 %v3779
      %4947 = vmatpush1.bf16.msra.mxu0 %v3778
      %4948 = vmatprep.subr.bf16.mxu0 %v3784
      %4949 = vmatpush1.bf16.msra.mxu0 %v3783
      %4950 = vmatprep.subr.bf16.mxu0 %v3789
      %4951 = vmatpush1.bf16.msra.mxu0 %v3788
      %4952 = vmatprep.subr.bf16.mxu0 %v3794
      %4953 = vmatpush1.bf16.msra.mxu0 %v3793
      %4954 = vmatprep.subr.bf16.mxu0 %v3799
      %4955 = vmatpush1.bf16.msra.mxu0 %v3798
      %4956 = vmatprep.subr.bf16.mxu0 %v3804
      %4957 = vmatpush1.bf16.msra.mxu0 %v3803
      %4958 = vmatprep.subr.bf16.mxu0 %v3809
      %4959 = vmatpush1.bf16.msra.mxu0 %v3808
      %4960 = vmatprep.mubr.bf16.mxu0 %v1200
      %4961 = vmatmul.mubr.bf16.gmra.mrb[0].mxu0 %v1199
      %v4962 = vpop.f32.mrb[0].mxu0
      %v4963 = vadd.f32 %v4900, %v4962
      %v4964 = vpop.f32.mrb[0].mxu0
      %v4965 = vadd.f32 %v4902, %v4964
      %v4966 = vpop.f32.mrb[0].mxu0
      %v4967 = vadd.f32 %v4904, %v4966
      %v4968 = vpop.f32.mrb[0].mxu0
      %v4969 = vadd.f32 %v4906, %v4968
      %4970 = vmatprep.mubr.bf16.mxu0 %v1216
      %4971 = vmatmul.mubr.bf16.gmra.mrb[0].mxu0 %v1215
      %v4972 = vpop.f32.mrb[0].mxu0
      %v4973 = vadd.f32 %v4910, %v4972
      %v4974 = vpop.f32.mrb[0].mxu0
      %v4975 = vadd.f32 %v4912, %v4974
      %v4976 = vpop.f32.mrb[0].mxu0
      %v4977 = vadd.f32 %v4914, %v4976
      %v4978 = vpop.f32.mrb[0].mxu0
      %v4979 = vadd.f32 %v4916, %v4978
      %4980 = vmatprep.mubr.bf16.mxu0 %v1232
      %4981 = vmatmul.mubr.bf16.gmra.mrb[0].mxu0 %v1231
      %v4982 = vpop.f32.mrb[0].mxu0
      %v4983 = vadd.f32 %v4920, %v4982
      %v4984 = vpop.f32.mrb[0].mxu0
      %v4985 = vadd.f32 %v4922, %v4984
      %v4986 = vpop.f32.mrb[0].mxu0
      %v4987 = vadd.f32 %v4924, %v4986
      %v4988 = vpop.f32.mrb[0].mxu0
      %v4989 = vadd.f32 %v4926, %v4988
      %4990 = vdwg.mxu0
      %4991 = vmatprep.subr.bf16.mxu0 %v3814
      %4992 = vmatpush1.bf16.msra.mxu0 %v3813
      %4993 = vmatprep.subr.bf16.mxu0 %v3819
      %4994 = vmatpush1.bf16.msra.mxu0 %v3818
      %4995 = vmatprep.subr.bf16.mxu0 %v3824
      %4996 = vmatpush1.bf16.msra.mxu0 %v3823
      %4997 = vmatprep.subr.bf16.mxu0 %v3829
      %4998 = vmatpush1.bf16.msra.mxu0 %v3828
      %4999 = vmatprep.subr.bf16.mxu0 %v3834
      %5000 = vmatpush1.bf16.msra.mxu0 %v3833
      %5001 = vmatprep.subr.bf16.mxu0 %v3839
      %5002 = vmatpush1.bf16.msra.mxu0 %v3838
      %5003 = vmatprep.subr.bf16.mxu0 %v3844
      %5004 = vmatpush1.bf16.msra.mxu0 %v3843
      %5005 = vmatprep.subr.bf16.mxu0 %v3849
      %5006 = vmatpush1.bf16.msra.mxu0 %v3848
      %5007 = vmatprep.subr.bf16.mxu0 %v3854
      %5008 = vmatpush1.bf16.msra.mxu0 %v3853
      %5009 = vmatprep.subr.bf16.mxu0 %v3859
      %5010 = vmatpush1.bf16.msra.mxu0 %v3858
      %5011 = vmatprep.subr.bf16.mxu0 %v3864
      %5012 = vmatpush1.bf16.msra.mxu0 %v3863
      %5013 = vmatprep.subr.bf16.mxu0 %v3869
      %5014 = vmatpush1.bf16.msra.mxu0 %v3868
      %5015 = vmatprep.subr.bf16.mxu0 %v3874
      %5016 = vmatpush1.bf16.msra.mxu0 %v3873
      %5017 = vmatprep.subr.bf16.mxu0 %v3879
      %5018 = vmatpush1.bf16.msra.mxu0 %v3878
      %5019 = vmatprep.subr.bf16.mxu0 %v3884
      %5020 = vmatpush1.bf16.msra.mxu0 %v3883
      %5021 = vmatprep.subr.bf16.mxu0 %v3889
      %5022 = vmatpush1.bf16.msra.mxu0 %v3888
      %5023 = vmatprep.mubr.bf16.mxu0 %v1202
      %5024 = vmatmul.mubr.bf16.gmra.mrb[0].mxu0 %v1201
      %v5025 = vpop.f32.mrb[0].mxu0
      %v5026 = vadd.f32 %v4963, %v5025
      %v5027 = vpop.f32.mrb[0].mxu0
      %v5028 = vadd.f32 %v4965, %v5027
      %v5029 = vpop.f32.mrb[0].mxu0
      %v5030 = vadd.f32 %v4967, %v5029
      %v5031 = vpop.f32.mrb[0].mxu0
      %v5032 = vadd.f32 %v4969, %v5031
      %5033 = vmatprep.mubr.bf16.mxu0 %v1218
      %5034 = vmatmul.mubr.bf16.gmra.mrb[0].mxu0 %v1217
      %v5035 = vpop.f32.mrb[0].mxu0
      %v5036 = vadd.f32 %v4973, %v5035
      %v5037 = vpop.f32.mrb[0].mxu0
      %v5038 = vadd.f32 %v4975, %v5037
      %v5039 = vpop.f32.mrb[0].mxu0
      %v5040 = vadd.f32 %v4977, %v5039
      %v5041 = vpop.f32.mrb[0].mxu0
      %v5042 = vadd.f32 %v4979, %v5041
      %5043 = vmatprep.mubr.bf16.mxu0 %v1234
      %5044 = vmatmul.mubr.bf16.gmra.mrb[0].mxu0 %v1233
      %v5045 = vpop.f32.mrb[0].mxu0
      %v5046 = vadd.f32 %v4983, %v5045
      %v5047 = vpop.f32.mrb[0].mxu0
      %v5048 = vadd.f32 %v4985, %v5047
      %v5049 = vpop.f32.mrb[0].mxu0
      %v5050 = vadd.f32 %v4987, %v5049
      %v5051 = vpop.f32.mrb[0].mxu0
      %v5052 = vadd.f32 %v4989, %v5051
      %5053 = vdwg.mxu0
      %5054 = vmatprep.subr.bf16.mxu0 %v3894
      %5055 = vmatpush1.bf16.msra.mxu0 %v3893
      %5056 = vmatprep.subr.bf16.mxu0 %v3899
      %5057 = vmatpush1.bf16.msra.mxu0 %v3898
      %5058 = vmatprep.subr.bf16.mxu0 %v3904
      %5059 = vmatpush1.bf16.msra.mxu0 %v3903
      %5060 = vmatprep.subr.bf16.mxu0 %v3909
      %5061 = vmatpush1.bf16.msra.mxu0 %v3908
      %5062 = vmatprep.subr.bf16.mxu0 %v3914
      %5063 = vmatpush1.bf16.msra.mxu0 %v3913
      %5064 = vmatprep.subr.bf16.mxu0 %v3919
      %5065 = vmatpush1.bf16.msra.mxu0 %v3918
      %5066 = vmatprep.subr.bf16.mxu0 %v3924
      %5067 = vmatpush1.bf16.msra.mxu0 %v3923
      %5068 = vmatprep.subr.bf16.mxu0 %v3929
      %5069 = vmatpush1.bf16.msra.mxu0 %v3928
      %5070 = vmatprep.subr.bf16.mxu0 %v3934
      %5071 = vmatpush1.bf16.msra.mxu0 %v3933
      %5072 = vmatprep.subr.bf16.mxu0 %v3939
      %5073 = vmatpush1.bf16.msra.mxu0 %v3938
      %5074 = vmatprep.subr.bf16.mxu0 %v3944
      %5075 = vmatpush1.bf16.msra.mxu0 %v3943
      %5076 = vmatprep.subr.bf16.mxu0 %v3949
      %5077 = vmatpush1.bf16.msra.mxu0 %v3948
      %5078 = vmatprep.subr.bf16.mxu0 %v3954
      %5079 = vmatpush1.bf16.msra.mxu0 %v3953
      %5080 = vmatprep.subr.bf16.mxu0 %v3959
      %5081 = vmatpush1.bf16.msra.mxu0 %v3958
      %5082 = vmatprep.subr.bf16.mxu0 %v3964
      %5083 = vmatpush1.bf16.msra.mxu0 %v3963
      %5084 = vmatprep.subr.bf16.mxu0 %v3969
      %5085 = vmatpush1.bf16.msra.mxu0 %v3968
      %5086 = vmatprep.mubr.bf16.mxu0 %v1204
      %5087 = vmatmul.mubr.bf16.gmra.mrb[0].mxu0 %v1203
      %v5088 = vpop.f32.mrb[0].mxu0
      %v5089 = vadd.f32 %v5026, %v5088
      %v5090 = vpop.f32.mrb[0].mxu0
      %v5091 = vadd.f32 %v5028, %v5090
      %v5092 = vpop.f32.mrb[0].mxu0
      %v5093 = vadd.f32 %v5030, %v5092
      %v5094 = vpop.f32.mrb[0].mxu0
      %v5095 = vadd.f32 %v5032, %v5094
      %5096 = vmatprep.mubr.bf16.mxu0 %v1220
      %5097 = vmatmul.mubr.bf16.gmra.mrb[0].mxu0 %v1219
      %v5098 = vpop.f32.mrb[0].mxu0
      %v5099 = vadd.f32 %v5036, %v5098
      %v5100 = vpop.f32.mrb[0].mxu0
      %v5101 = vadd.f32 %v5038, %v5100
      %v5102 = vpop.f32.mrb[0].mxu0
      %v5103 = vadd.f32 %v5040, %v5102
      %v5104 = vpop.f32.mrb[0].mxu0
      %v5105 = vadd.f32 %v5042, %v5104
      %5106 = vmatprep.mubr.bf16.mxu0 %v1236
      %5107 = vmatmul.mubr.bf16.gmra.mrb[0].mxu0 %v1235
      %v5108 = vpop.f32.mrb[0].mxu0
      %v5109 = vadd.f32 %v5046, %v5108
      %v5110 = vpop.f32.mrb[0].mxu0
      %v5111 = vadd.f32 %v5048, %v5110
      %v5112 = vpop.f32.mrb[0].mxu0
      %v5113 = vadd.f32 %v5050, %v5112
      %v5114 = vpop.f32.mrb[0].mxu0
      %v5115 = vadd.f32 %v5052, %v5114
      %5116 = vdwg.mxu0
      %5117 = vmatprep.subr.bf16.mxu0 %v3336
      %5118 = vmatpush1.bf16.msra.mxu0 %v3335
      %5119 = vmatprep.subr.bf16.mxu0 %v3341
      %5120 = vmatpush1.bf16.msra.mxu0 %v3340
      %5121 = vmatprep.subr.bf16.mxu0 %v3346
      %5122 = vmatpush1.bf16.msra.mxu0 %v3345
      %5123 = vmatprep.subr.bf16.mxu0 %v3351
      %5124 = vmatpush1.bf16.msra.mxu0 %v3350
      %5125 = vmatprep.subr.bf16.mxu0 %v3356
      %5126 = vmatpush1.bf16.msra.mxu0 %v3355
      %5127 = vmatprep.subr.bf16.mxu0 %v3361
      %5128 = vmatpush1.bf16.msra.mxu0 %v3360
      %5129 = vmatprep.subr.bf16.mxu0 %v3366
      %5130 = vmatpush1.bf16.msra.mxu0 %v3365
      %5131 = vmatprep.subr.bf16.mxu0 %v3371
      %5132 = vmatpush1.bf16.msra.mxu0 %v3370
      %5133 = vmatprep.subr.bf16.mxu0 %v3376
      %5134 = vmatpush1.bf16.msra.mxu0 %v3375
      %5135 = vmatprep.subr.bf16.mxu0 %v3381
      %5136 = vmatpush1.bf16.msra.mxu0 %v3380
      %5137 = vmatprep.subr.bf16.mxu0 %v3386
      %5138 = vmatpush1.bf16.msra.mxu0 %v3385
      %5139 = vmatprep.subr.bf16.mxu0 %v3391
      %5140 = vmatpush1.bf16.msra.mxu0 %v3390
      %5141 = vmatprep.subr.bf16.mxu0 %v3396
      %5142 = vmatpush1.bf16.msra.mxu0 %v3395
      %5143 = vmatprep.subr.bf16.mxu0 %v3401
      %5144 = vmatpush1.bf16.msra.mxu0 %v3400
      %5145 = vmatprep.subr.bf16.mxu0 %v3406
      %5146 = vmatpush1.bf16.msra.mxu0 %v3405
      %5147 = vmatprep.subr.bf16.mxu0 %v3411
      %5148 = vmatpush1.bf16.msra.mxu0 %v3410
      %5149 = vmatprep.mubr.bf16.mxu0 %v1190
      %5150 = vmatmul.mubr.bf16.gmra.mrb[0].mxu0 %v1189
      %v5151 = vpop.f32.mrb[0].mxu0
      %v5152 = vadd.f32 0.0, %v5151
      %v5153 = vpop.f32.mrb[0].mxu0
      %v5154 = vadd.f32 0.0, %v5153
      %v5155 = vpop.f32.mrb[0].mxu0
      %v5156 = vadd.f32 0.0, %v5155
      %v5157 = vpop.f32.mrb[0].mxu0
      %v5158 = vadd.f32 0.0, %v5157
      %5159 = vmatprep.mubr.bf16.mxu0 %v1206
      %5160 = vmatmul.mubr.bf16.gmra.mrb[0].mxu0 %v1205
      %v5161 = vpop.f32.mrb[0].mxu0
      %v5162 = vadd.f32 0.0, %v5161
      %v5163 = vpop.f32.mrb[0].mxu0
      %v5164 = vadd.f32 0.0, %v5163
      %v5165 = vpop.f32.mrb[0].mxu0
      %v5166 = vadd.f32 0.0, %v5165
      %v5167 = vpop.f32.mrb[0].mxu0
      %v5168 = vadd.f32 0.0, %v5167
      %5169 = vmatprep.mubr.bf16.mxu0 %v1222
      %5170 = vmatmul.mubr.bf16.gmra.mrb[0].mxu0 %v1221
      %v5171 = vpop.f32.mrb[0].mxu0
      %v5172 = vadd.f32 0.0, %v5171
      %v5173 = vpop.f32.mrb[0].mxu0
      %v5174 = vadd.f32 0.0, %v5173
      %v5175 = vpop.f32.mrb[0].mxu0
      %v5176 = vadd.f32 0.0, %v5175
      %v5177 = vpop.f32.mrb[0].mxu0
      %v5178 = vadd.f32 0.0, %v5177
      %5179 = vdwg.mxu0
      %5180 = vmatprep.subr.bf16.mxu0 %v3416
      %5181 = vmatpush1.bf16.msra.mxu0 %v3415
      %5182 = vmatprep.subr.bf16.mxu0 %v3421
      %5183 = vmatpush1.bf16.msra.mxu0 %v3420
      %5184 = vmatprep.subr.bf16.mxu0 %v3426
      %5185 = vmatpush1.bf16.msra.mxu0 %v3425
      %5186 = vmatprep.subr.bf16.mxu0 %v3431
      %5187 = vmatpush1.bf16.msra.mxu0 %v3430
      %5188 = vmatprep.subr.bf16.mxu0 %v3436
      %5189 = vmatpush1.bf16.msra.mxu0 %v3435
      %5190 = vmatprep.subr.bf16.mxu0 %v3441
      %5191 = vmatpush1.bf16.msra.mxu0 %v3440
      %5192 = vmatprep.subr.bf16.mxu0 %v3446
      %5193 = vmatpush1.bf16.msra.mxu0 %v3445
      %5194 = vmatprep.subr.bf16.mxu0 %v3451
      %5195 = vmatpush1.bf16.msra.mxu0 %v3450
      %5196 = vmatprep.subr.bf16.mxu0 %v3456
      %5197 = vmatpush1.bf16.msra.mxu0 %v3455
      %5198 = vmatprep.subr.bf16.mxu0 %v3461
      %5199 = vmatpush1.bf16.msra.mxu0 %v3460
      %5200 = vmatprep.subr.bf16.mxu0 %v3466
      %5201 = vmatpush1.bf16.msra.mxu0 %v3465
      %5202 = vmatprep.subr.bf16.mxu0 %v3471
      %5203 = vmatpush1.bf16.msra.mxu0 %v3470
      %5204 = vmatprep.subr.bf16.mxu0 %v3476
      %5205 = vmatpush1.bf16.msra.mxu0 %v3475
      %5206 = vmatprep.subr.bf16.mxu0 %v3481
      %5207 = vmatpush1.bf16.msra.mxu0 %v3480
      %5208 = vmatprep.subr.bf16.mxu0 %v3486
      %5209 = vmatpush1.bf16.msra.mxu0 %v3485
      %5210 = vmatprep.subr.bf16.mxu0 %v3491
      %5211 = vmatpush1.bf16.msra.mxu0 %v3490
      %5212 = vmatprep.mubr.bf16.mxu0 %v1192
      %5213 = vmatmul.mubr.bf16.gmra.mrb[0].mxu0 %v1191
      %v5214 = vpop.f32.mrb[0].mxu0
      %v5215 = vadd.f32 %v5152, %v5214
      %v5216 = vpop.f32.mrb[0].mxu0
      %v5217 = vadd.f32 %v5154, %v5216
      %v5218 = vpop.f32.mrb[0].mxu0
      %v5219 = vadd.f32 %v5156, %v5218
      %v5220 = vpop.f32.mrb[0].mxu0
      %v5221 = vadd.f32 %v5158, %v5220
      %5222 = vmatprep.mubr.bf16.mxu0 %v1208
      %5223 = vmatmul.mubr.bf16.gmra.mrb[0].mxu0 %v1207
      %v5224 = vpop.f32.mrb[0].mxu0
      %v5225 = vadd.f32 %v5162, %v5224
      %v5226 = vpop.f32.mrb[0].mxu0
      %v5227 = vadd.f32 %v5164, %v5226
      %v5228 = vpop.f32.mrb[0].mxu0
      %v5229 = vadd.f32 %v5166, %v5228
      %v5230 = vpop.f32.mrb[0].mxu0
      %v5231 = vadd.f32 %v5168, %v5230
      %5232 = vmatprep.mubr.bf16.mxu0 %v1224
      %5233 = vmatmul.mubr.bf16.gmra.mrb[0].mxu0 %v1223
      %v5234 = vpop.f32.mrb[0].mxu0
      %v5235 = vadd.f32 %v5172, %v5234
      %v5236 = vpop.f32.mrb[0].mxu0
      %v5237 = vadd.f32 %v5174, %v5236
      %v5238 = vpop.f32.mrb[0].mxu0
      %v5239 = vadd.f32 %v5176, %v5238
      %v5240 = vpop.f32.mrb[0].mxu0
      %v5241 = vadd.f32 %v5178, %v5240
      %5242 = vdwg.mxu0
      %5243 = vmatprep.subr.bf16.mxu0 %v3496
      %5244 = vmatpush1.bf16.msra.mxu0 %v3495
      %5245 = vmatprep.subr.bf16.mxu0 %v3501
      %5246 = vmatpush1.bf16.msra.mxu0 %v3500
      %5247 = vmatprep.subr.bf16.mxu0 %v3506
      %5248 = vmatpush1.bf16.msra.mxu0 %v3505
      %5249 = vmatprep.subr.bf16.mxu0 %v3511
      %5250 = vmatpush1.bf16.msra.mxu0 %v3510
      %5251 = vmatprep.subr.bf16.mxu0 %v3516
      %5252 = vmatpush1.bf16.msra.mxu0 %v3515
      %5253 = vmatprep.subr.bf16.mxu0 %v3521
      %5254 = vmatpush1.bf16.msra.mxu0 %v3520
      %5255 = vmatprep.subr.bf16.mxu0 %v3526
      %5256 = vmatpush1.bf16.msra.mxu0 %v3525
      %5257 = vmatprep.subr.bf16.mxu0 %v3531
      %5258 = vmatpush1.bf16.msra.mxu0 %v3530
      %5259 = vmatprep.subr.bf16.mxu0 %v3536
      %5260 = vmatpush1.bf16.msra.mxu0 %v3535
      %5261 = vmatprep.subr.bf16.mxu0 %v3541
      %5262 = vmatpush1.bf16.msra.mxu0 %v3540
      %5263 = vmatprep.subr.bf16.mxu0 %v3546
      %5264 = vmatpush1.bf16.msra.mxu0 %v3545
      %5265 = vmatprep.subr.bf16.mxu0 %v3551
      %5266 = vmatpush1.bf16.msra.mxu0 %v3550
      %5267 = vmatprep.subr.bf16.mxu0 %v3556
      %5268 = vmatpush1.bf16.msra.mxu0 %v3555
      %5269 = vmatprep.subr.bf16.mxu0 %v3561
      %5270 = vmatpush1.bf16.msra.mxu0 %v3560
      %5271 = vmatprep.subr.bf16.mxu0 %v3566
      %5272 = vmatpush1.bf16.msra.mxu0 %v3565
      %5273 = vmatprep.subr.bf16.mxu0 %v3571
      %5274 = vmatpush1.bf16.msra.mxu0 %v3570
      %5275 = vmatprep.mubr.bf16.mxu0 %v1194
      %5276 = vmatmul.mubr.bf16.gmra.mrb[0].mxu0 %v1193
      %v5277 = vpop.f32.mrb[0].mxu0
      %v5278 = vadd.f32 %v5215, %v5277
      %v5279 = vpop.f32.mrb[0].mxu0
      %v5280 = vadd.f32 %v5217, %v5279
      %v5281 = vpop.f32.mrb[0].mxu0
      %v5282 = vadd.f32 %v5219, %v5281
      %v5283 = vpop.f32.mrb[0].mxu0
      %v5284 = vadd.f32 %v5221, %v5283
      %5285 = vmatprep.mubr.bf16.mxu0 %v1210
      %5286 = vmatmul.mubr.bf16.gmra.mrb[0].mxu0 %v1209
      %v5287 = vpop.f32.mrb[0].mxu0
      %v5288 = vadd.f32 %v5225, %v5287
      %v5289 = vpop.f32.mrb[0].mxu0
      %v5290 = vadd.f32 %v5227, %v5289
      %v5291 = vpop.f32.mrb[0].mxu0
      %v5292 = vadd.f32 %v5229, %v5291
      %v5293 = vpop.f32.mrb[0].mxu0
      %v5294 = vadd.f32 %v5231, %v5293
      %5295 = vmatprep.mubr.bf16.mxu0 %v1226
      %5296 = vmatmul.mubr.bf16.gmra.mrb[0].mxu0 %v1225
      %v5297 = vpop.f32.mrb[0].mxu0
      %v5298 = vadd.f32 %v5235, %v5297
      %v5299 = vpop.f32.mrb[0].mxu0
      %v5300 = vadd.f32 %v5237, %v5299
      %v5301 = vpop.f32.mrb[0].mxu0
      %v5302 = vadd.f32 %v5239, %v5301
      %v5303 = vpop.f32.mrb[0].mxu0
      %v5304 = vadd.f32 %v5241, %v5303
      %5305 = vdwg.mxu0
      %5306 = vmatprep.subr.bf16.mxu0 %v3576
      %5307 = vmatpush1.bf16.msra.mxu0 %v3575
      %5308 = vmatprep.subr.bf16.mxu0 %v3581
      %5309 = vmatpush1.bf16.msra.mxu0 %v3580
      %5310 = vmatprep.subr.bf16.mxu0 %v3586
      %5311 = vmatpush1.bf16.msra.mxu0 %v3585
      %5312 = vmatprep.subr.bf16.mxu0 %v3591
      %5313 = vmatpush1.bf16.msra.mxu0 %v3590
      %5314 = vmatprep.subr.bf16.mxu0 %v3596
      %5315 = vmatpush1.bf16.msra.mxu0 %v3595
      %5316 = vmatprep.subr.bf16.mxu0 %v3601
      %5317 = vmatpush1.bf16.msra.mxu0 %v3600
      %5318 = vmatprep.subr.bf16.mxu0 %v3606
      %5319 = vmatpush1.bf16.msra.mxu0 %v3605
      %5320 = vmatprep.subr.bf16.mxu0 %v3611
      %5321 = vmatpush1.bf16.msra.mxu0 %v3610
      %5322 = vmatprep.subr.bf16.mxu0 %v3616
      %5323 = vmatpush1.bf16.msra.mxu0 %v3615
      %5324 = vmatprep.subr.bf16.mxu0 %v3621
      %5325 = vmatpush1.bf16.msra.mxu0 %v3620
      %5326 = vmatprep.subr.bf16.mxu0 %v3626
      %5327 = vmatpush1.bf16.msra.mxu0 %v3625
      %5328 = vmatprep.subr.bf16.mxu0 %v3631
      %5329 = vmatpush1.bf16.msra.mxu0 %v3630
      %5330 = vmatprep.subr.bf16.mxu0 %v3636
      %5331 = vmatpush1.bf16.msra.mxu0 %v3635
      %5332 = vmatprep.subr.bf16.mxu0 %v3641
      %5333 = vmatpush1.bf16.msra.mxu0 %v3640
      %5334 = vmatprep.subr.bf16.mxu0 %v3646
      %5335 = vmatpush1.bf16.msra.mxu0 %v3645
      %5336 = vmatprep.subr.bf16.mxu0 %v3651
      %5337 = vmatpush1.bf16.msra.mxu0 %v3650
      %5338 = vmatprep.mubr.bf16.mxu0 %v1196
      %5339 = vmatmul.mubr.bf16.gmra.mrb[0].mxu0 %v1195
      %v5340 = vpop.f32.mrb[0].mxu0
      %v5341 = vadd.f32 %v5278, %v5340
      %v5342 = vpop.f32.mrb[0].mxu0
      %v5343 = vadd.f32 %v5280, %v5342
      %v5344 = vpop.f32.mrb[0].mxu0
      %v5345 = vadd.f32 %v5282, %v5344
      %v5346 = vpop.f32.mrb[0].mxu0
      %v5347 = vadd.f32 %v5284, %v5346
      %5348 = vmatprep.mubr.bf16.mxu0 %v1212
      %5349 = vmatmul.mubr.bf16.gmra.mrb[0].mxu0 %v1211
      %v5350 = vpop.f32.mrb[0].mxu0
      %v5351 = vadd.f32 %v5288, %v5350
      %v5352 = vpop.f32.mrb[0].mxu0
      %v5353 = vadd.f32 %v5290, %v5352
      %v5354 = vpop.f32.mrb[0].mxu0
      %v5355 = vadd.f32 %v5292, %v5354
      %v5356 = vpop.f32.mrb[0].mxu0
      %v5357 = vadd.f32 %v5294, %v5356
      %5358 = vmatprep.mubr.bf16.mxu0 %v1228
      %5359 = vmatmul.mubr.bf16.gmra.mrb[0].mxu0 %v1227
      %v5360 = vpop.f32.mrb[0].mxu0
      %v5361 = vadd.f32 %v5298, %v5360
      %v5362 = vpop.f32.mrb[0].mxu0
      %v5363 = vadd.f32 %v5300, %v5362
      %v5364 = vpop.f32.mrb[0].mxu0
      %v5365 = vadd.f32 %v5302, %v5364
      %v5366 = vpop.f32.mrb[0].mxu0
      %v5367 = vadd.f32 %v5304, %v5366
      %5368 = vdwg.mxu0
      %5369 = vmatprep.subr.bf16.mxu0 %v3656
      %5370 = vmatpush1.bf16.msra.mxu0 %v3655
      %5371 = vmatprep.subr.bf16.mxu0 %v3661
      %5372 = vmatpush1.bf16.msra.mxu0 %v3660
      %5373 = vmatprep.subr.bf16.mxu0 %v3666
      %5374 = vmatpush1.bf16.msra.mxu0 %v3665
      %5375 = vmatprep.subr.bf16.mxu0 %v3671
      %5376 = vmatpush1.bf16.msra.mxu0 %v3670
      %5377 = vmatprep.subr.bf16.mxu0 %v3676
      %5378 = vmatpush1.bf16.msra.mxu0 %v3675
      %5379 = vmatprep.subr.bf16.mxu0 %v3681
      %5380 = vmatpush1.bf16.msra.mxu0 %v3680
      %5381 = vmatprep.subr.bf16.mxu0 %v3686
      %5382 = vmatpush1.bf16.msra.mxu0 %v3685
      %5383 = vmatprep.subr.bf16.mxu0 %v3691
      %5384 = vmatpush1.bf16.msra.mxu0 %v3690
      %5385 = vmatprep.subr.bf16.mxu0 %v3696
      %5386 = vmatpush1.bf16.msra.mxu0 %v3695
      %5387 = vmatprep.subr.bf16.mxu0 %v3701
      %5388 = vmatpush1.bf16.msra.mxu0 %v3700
      %5389 = vmatprep.subr.bf16.mxu0 %v3706
      %5390 = vmatpush1.bf16.msra.mxu0 %v3705
      %5391 = vmatprep.subr.bf16.mxu0 %v3711
      %5392 = vmatpush1.bf16.msra.mxu0 %v3710
      %5393 = vmatprep.subr.bf16.mxu0 %v3716
      %5394 = vmatpush1.bf16.msra.mxu0 %v3715
      %5395 = vmatprep.subr.bf16.mxu0 %v3721
      %5396 = vmatpush1.bf16.msra.mxu0 %v3720
      %5397 = vmatprep.subr.bf16.mxu0 %v3726
      %5398 = vmatpush1.bf16.msra.mxu0 %v3725
      %5399 = vmatprep.subr.bf16.mxu0 %v3731
      %5400 = vmatpush1.bf16.msra.mxu0 %v3730
      %5401 = vmatprep.mubr.bf16.mxu0 %v1198
      %5402 = vmatmul.mubr.bf16.gmra.mrb[0].mxu0 %v1197
      %v5403 = vpop.f32.mrb[0].mxu0
      %v5404 = vadd.f32 %v5341, %v5403
      %v5405 = vpop.f32.mrb[0].mxu0
      %v5406 = vadd.f32 %v5343, %v5405
      %v5407 = vpop.f32.mrb[0].mxu0
      %v5408 = vadd.f32 %v5345, %v5407
      %v5409 = vpop.f32.mrb[0].mxu0
      %v5410 = vadd.f32 %v5347, %v5409
      %5411 = vmatprep.mubr.bf16.mxu0 %v1214
      %5412 = vmatmul.mubr.bf16.gmra.mrb[0].mxu0 %v1213
      %v5413 = vpop.f32.mrb[0].mxu0
      %v5414 = vadd.f32 %v5351, %v5413
      %v5415 = vpop.f32.mrb[0].mxu0
      %v5416 = vadd.f32 %v5353, %v5415
      %v5417 = vpop.f32.mrb[0].mxu0
      %v5418 = vadd.f32 %v5355, %v5417
      %v5419 = vpop.f32.mrb[0].mxu0
      %v5420 = vadd.f32 %v5357, %v5419
      %5421 = vmatprep.mubr.bf16.mxu0 %v1230
      %5422 = vmatmul.mubr.bf16.gmra.mrb[0].mxu0 %v1229
      %v5423 = vpop.f32.mrb[0].mxu0
      %v5424 = vadd.f32 %v5361, %v5423
      %v5425 = vpop.f32.mrb[0].mxu0
      %v5426 = vadd.f32 %v5363, %v5425
      %v5427 = vpop.f32.mrb[0].mxu0
      %v5428 = vadd.f32 %v5365, %v5427
      %v5429 = vpop.f32.mrb[0].mxu0
      %v5430 = vadd.f32 %v5367, %v5429
      %5431 = vdwg.mxu0
      %5432 = vmatprep.subr.bf16.mxu0 %v3736
      %5433 = vmatpush1.bf16.msra.mxu0 %v3735
      %5434 = vmatprep.subr.bf16.mxu0 %v3741
      %5435 = vmatpush1.bf16.msra.mxu0 %v3740
      %5436 = vmatprep.subr.bf16.mxu0 %v3746
      %5437 = vmatpush1.bf16.msra.mxu0 %v3745
      %5438 = vmatprep.subr.bf16.mxu0 %v3751
      %5439 = vmatpush1.bf16.msra.mxu0 %v3750
      %5440 = vmatprep.subr.bf16.mxu0 %v3756
      %5441 = vmatpush1.bf16.msra.mxu0 %v3755
      %5442 = vmatprep.subr.bf16.mxu0 %v3761
      %5443 = vmatpush1.bf16.msra.mxu0 %v3760
      %5444 = vmatprep.subr.bf16.mxu0 %v3766
      %5445 = vmatpush1.bf16.msra.mxu0 %v3765
      %5446 = vmatprep.subr.bf16.mxu0 %v3771
      %5447 = vmatpush1.bf16.msra.mxu0 %v3770
      %5448 = vmatprep.subr.bf16.mxu0 %v3776
      %5449 = vmatpush1.bf16.msra.mxu0 %v3775
      %5450 = vmatprep.subr.bf16.mxu0 %v3781
      %5451 = vmatpush1.bf16.msra.mxu0 %v3780
      %5452 = vmatprep.subr.bf16.mxu0 %v3786
      %5453 = vmatpush1.bf16.msra.mxu0 %v3785
      %5454 = vmatprep.subr.bf16.mxu0 %v3791
      %5455 = vmatpush1.bf16.msra.mxu0 %v3790
      %5456 = vmatprep.subr.bf16.mxu0 %v3796
      %5457 = vmatpush1.bf16.msra.mxu0 %v3795
      %5458 = vmatprep.subr.bf16.mxu0 %v3801
      %5459 = vmatpush1.bf16.msra.mxu0 %v3800
      %5460 = vmatprep.subr.bf16.mxu0 %v3806
      %5461 = vmatpush1.bf16.msra.mxu0 %v3805
      %5462 = vmatprep.subr.bf16.mxu0 %v3811
      %5463 = vmatpush1.bf16.msra.mxu0 %v3810
      %5464 = vmatprep.mubr.bf16.mxu0 %v1200
      %5465 = vmatmul.mubr.bf16.gmra.mrb[0].mxu0 %v1199
      %v5466 = vpop.f32.mrb[0].mxu0
      %v5467 = vadd.f32 %v5404, %v5466
      %v5468 = vpop.f32.mrb[0].mxu0
      %v5469 = vadd.f32 %v5406, %v5468
      %v5470 = vpop.f32.mrb[0].mxu0
      %v5471 = vadd.f32 %v5408, %v5470
      %v5472 = vpop.f32.mrb[0].mxu0
      %v5473 = vadd.f32 %v5410, %v5472
      %5474 = vmatprep.mubr.bf16.mxu0 %v1216
      %5475 = vmatmul.mubr.bf16.gmra.mrb[0].mxu0 %v1215
      %v5476 = vpop.f32.mrb[0].mxu0
      %v5477 = vadd.f32 %v5414, %v5476
      %v5478 = vpop.f32.mrb[0].mxu0
      %v5479 = vadd.f32 %v5416, %v5478
      %v5480 = vpop.f32.mrb[0].mxu0
      %v5481 = vadd.f32 %v5418, %v5480
      %v5482 = vpop.f32.mrb[0].mxu0
      %v5483 = vadd.f32 %v5420, %v5482
      %5484 = vmatprep.mubr.bf16.mxu0 %v1232
      %5485 = vmatmul.mubr.bf16.gmra.mrb[0].mxu0 %v1231
      %v5486 = vpop.f32.mrb[0].mxu0
      %v5487 = vadd.f32 %v5424, %v5486
      %v5488 = vpop.f32.mrb[0].mxu0
      %v5489 = vadd.f32 %v5426, %v5488
      %v5490 = vpop.f32.mrb[0].mxu0
      %v5491 = vadd.f32 %v5428, %v5490
      %v5492 = vpop.f32.mrb[0].mxu0
      %v5493 = vadd.f32 %v5430, %v5492
      %5494 = vdwg.mxu0
      %5495 = vmatprep.subr.bf16.mxu0 %v3816
      %5496 = vmatpush1.bf16.msra.mxu0 %v3815
      %5497 = vmatprep.subr.bf16.mxu0 %v3821
      %5498 = vmatpush1.bf16.msra.mxu0 %v3820
      %5499 = vmatprep.subr.bf16.mxu0 %v3826
      %5500 = vmatpush1.bf16.msra.mxu0 %v3825
      %5501 = vmatprep.subr.bf16.mxu0 %v3831
      %5502 = vmatpush1.bf16.msra.mxu0 %v3830
      %5503 = vmatprep.subr.bf16.mxu0 %v3836
      %5504 = vmatpush1.bf16.msra.mxu0 %v3835
      %5505 = vmatprep.subr.bf16.mxu0 %v3841
      %5506 = vmatpush1.bf16.msra.mxu0 %v3840
      %5507 = vmatprep.subr.bf16.mxu0 %v3846
      %5508 = vmatpush1.bf16.msra.mxu0 %v3845
      %5509 = vmatprep.subr.bf16.mxu0 %v3851
      %5510 = vmatpush1.bf16.msra.mxu0 %v3850
      %5511 = vmatprep.subr.bf16.mxu0 %v3856
      %5512 = vmatpush1.bf16.msra.mxu0 %v3855
      %5513 = vmatprep.subr.bf16.mxu0 %v3861
      %5514 = vmatpush1.bf16.msra.mxu0 %v3860
      %5515 = vmatprep.subr.bf16.mxu0 %v3866
      %5516 = vmatpush1.bf16.msra.mxu0 %v3865
      %5517 = vmatprep.subr.bf16.mxu0 %v3871
      %5518 = vmatpush1.bf16.msra.mxu0 %v3870
      %5519 = vmatprep.subr.bf16.mxu0 %v3876
      %5520 = vmatpush1.bf16.msra.mxu0 %v3875
      %5521 = vmatprep.subr.bf16.mxu0 %v3881
      %5522 = vmatpush1.bf16.msra.mxu0 %v3880
      %5523 = vmatprep.subr.bf16.mxu0 %v3886
      %5524 = vmatpush1.bf16.msra.mxu0 %v3885
      %5525 = vmatprep.subr.bf16.mxu0 %v3891
      %5526 = vmatpush1.bf16.msra.mxu0 %v3890
      %5527 = vmatprep.mubr.bf16.mxu0 %v1202
      %5528 = vmatmul.mubr.bf16.gmra.mrb[0].mxu0 %v1201
      %v5529 = vpop.f32.mrb[0].mxu0
      %v5530 = vadd.f32 %v5467, %v5529
      %v5531 = vpop.f32.mrb[0].mxu0
      %v5532 = vadd.f32 %v5469, %v5531
      %v5533 = vpop.f32.mrb[0].mxu0
      %v5534 = vadd.f32 %v5471, %v5533
      %v5535 = vpop.f32.mrb[0].mxu0
      %v5536 = vadd.f32 %v5473, %v5535
      %5537 = vmatprep.mubr.bf16.mxu0 %v1218
      %5538 = vmatmul.mubr.bf16.gmra.mrb[0].mxu0 %v1217
      %v5539 = vpop.f32.mrb[0].mxu0
      %v5540 = vadd.f32 %v5477, %v5539
      %v5541 = vpop.f32.mrb[0].mxu0
      %v5542 = vadd.f32 %v5479, %v5541
      %v5543 = vpop.f32.mrb[0].mxu0
      %v5544 = vadd.f32 %v5481, %v5543
      %v5545 = vpop.f32.mrb[0].mxu0
      %v5546 = vadd.f32 %v5483, %v5545
      %5547 = vmatprep.mubr.bf16.mxu0 %v1234
      %5548 = vmatmul.mubr.bf16.gmra.mrb[0].mxu0 %v1233
      %v5549 = vpop.f32.mrb[0].mxu0
      %v5550 = vadd.f32 %v5487, %v5549
      %v5551 = vpop.f32.mrb[0].mxu0
      %v5552 = vadd.f32 %v5489, %v5551
      %v5553 = vpop.f32.mrb[0].mxu0
      %v5554 = vadd.f32 %v5491, %v5553
      %v5555 = vpop.f32.mrb[0].mxu0
      %v5556 = vadd.f32 %v5493, %v5555
      %5557 = vdwg.mxu0
      %5558 = vmatprep.subr.bf16.mxu0 %v3896
      %5559 = vmatpush1.bf16.msra.mxu0 %v3895
      %5560 = vmatprep.subr.bf16.mxu0 %v3901
      %5561 = vmatpush1.bf16.msra.mxu0 %v3900
      %5562 = vmatprep.subr.bf16.mxu0 %v3906
      %5563 = vmatpush1.bf16.msra.mxu0 %v3905
      %5564 = vmatprep.subr.bf16.mxu0 %v3911
      %5565 = vmatpush1.bf16.msra.mxu0 %v3910
      %5566 = vmatprep.subr.bf16.mxu0 %v3916
      %5567 = vmatpush1.bf16.msra.mxu0 %v3915
      %5568 = vmatprep.subr.bf16.mxu0 %v3921
      %5569 = vmatpush1.bf16.msra.mxu0 %v3920
      %5570 = vmatprep.subr.bf16.mxu0 %v3926
      %5571 = vmatpush1.bf16.msra.mxu0 %v3925
      %5572 = vmatprep.subr.bf16.mxu0 %v3931
      %5573 = vmatpush1.bf16.msra.mxu0 %v3930
      %5574 = vmatprep.subr.bf16.mxu0 %v3936
      %5575 = vmatpush1.bf16.msra.mxu0 %v3935
      %5576 = vmatprep.subr.bf16.mxu0 %v3941
      %5577 = vmatpush1.bf16.msra.mxu0 %v3940
      %5578 = vmatprep.subr.bf16.mxu0 %v3946
      %5579 = vmatpush1.bf16.msra.mxu0 %v3945
      %5580 = vmatprep.subr.bf16.mxu0 %v3951
      %5581 = vmatpush1.bf16.msra.mxu0 %v3950
      %5582 = vmatprep.subr.bf16.mxu0 %v3956
      %5583 = vmatpush1.bf16.msra.mxu0 %v3955
      %5584 = vmatprep.subr.bf16.mxu0 %v3961
      %5585 = vmatpush1.bf16.msra.mxu0 %v3960
      %5586 = vmatprep.subr.bf16.mxu0 %v3966
      %5587 = vmatpush1.bf16.msra.mxu0 %v3965
      %5588 = vmatprep.subr.bf16.mxu0 %v3971
      %5589 = vmatpush1.bf16.msra.mxu0 %v3970
      %5590 = vmatprep.mubr.bf16.mxu0 %v1204
      %5591 = vmatmul.mubr.bf16.gmra.mrb[0].mxu0 %v1203
      %v5592 = vpop.f32.mrb[0].mxu0
      %v5593 = vadd.f32 %v5530, %v5592
      %v5594 = vpop.f32.mrb[0].mxu0
      %v5595 = vadd.f32 %v5532, %v5594
      %v5596 = vpop.f32.mrb[0].mxu0
      %v5597 = vadd.f32 %v5534, %v5596
      %v5598 = vpop.f32.mrb[0].mxu0
      %v5599 = vadd.f32 %v5536, %v5598
      %5600 = vmatprep.mubr.bf16.mxu0 %v1220
      %5601 = vmatmul.mubr.bf16.gmra.mrb[0].mxu0 %v1219
      %v5602 = vpop.f32.mrb[0].mxu0
      %v5603 = vadd.f32 %v5540, %v5602
      %v5604 = vpop.f32.mrb[0].mxu0
      %v5605 = vadd.f32 %v5542, %v5604
      %v5606 = vpop.f32.mrb[0].mxu0
      %v5607 = vadd.f32 %v5544, %v5606
      %v5608 = vpop.f32.mrb[0].mxu0
      %v5609 = vadd.f32 %v5546, %v5608
      %5610 = vmatprep.mubr.bf16.mxu0 %v1236
      %5611 = vmatmul.mubr.bf16.gmra.mrb[0].mxu0 %v1235
      %v5612 = vpop.f32.mrb[0].mxu0
      %v5613 = vadd.f32 %v5550, %v5612
      %v5614 = vpop.f32.mrb[0].mxu0
      %v5615 = vadd.f32 %v5552, %v5614
      %v5616 = vpop.f32.mrb[0].mxu0
      %v5617 = vadd.f32 %v5554, %v5616
      %v5618 = vpop.f32.mrb[0].mxu0
      %v5619 = vadd.f32 %v5556, %v5618
      %5620 = vdwg.mxu0
      %5621 = vmatprep.subr.bf16.mxu0 0
      %5622 = vmatpush1.bf16.msra.mxu0 %v3337
      %5623 = vmatprep.subr.bf16.mxu0 0
      %5624 = vmatpush1.bf16.msra.mxu0 %v3342
      %5625 = vmatprep.subr.bf16.mxu0 0
      %5626 = vmatpush1.bf16.msra.mxu0 %v3347
      %5627 = vmatprep.subr.bf16.mxu0 0
      %5628 = vmatpush1.bf16.msra.mxu0 %v3352
      %5629 = vmatprep.subr.bf16.mxu0 0
      %5630 = vmatpush1.bf16.msra.mxu0 %v3357
      %5631 = vmatprep.subr.bf16.mxu0 0
      %5632 = vmatpush1.bf16.msra.mxu0 %v3362
      %5633 = vmatprep.subr.bf16.mxu0 0
      %5634 = vmatpush1.bf16.msra.mxu0 %v3367
      %5635 = vmatprep.subr.bf16.mxu0 0
      %5636 = vmatpush1.bf16.msra.mxu0 %v3372
      %5637 = vmatprep.subr.bf16.mxu0 0
      %5638 = vmatpush1.bf16.msra.mxu0 %v3377
      %5639 = vmatprep.subr.bf16.mxu0 0
      %5640 = vmatpush1.bf16.msra.mxu0 %v3382
      %5641 = vmatprep.subr.bf16.mxu0 0
      %5642 = vmatpush1.bf16.msra.mxu0 %v3387
      %5643 = vmatprep.subr.bf16.mxu0 0
      %5644 = vmatpush1.bf16.msra.mxu0 %v3392
      %5645 = vmatprep.subr.bf16.mxu0 0
      %5646 = vmatpush1.bf16.msra.mxu0 %v3397
      %5647 = vmatprep.subr.bf16.mxu0 0
      %5648 = vmatpush1.bf16.msra.mxu0 %v3402
      %5649 = vmatprep.subr.bf16.mxu0 0
      %5650 = vmatpush1.bf16.msra.mxu0 %v3407
      %5651 = vmatprep.subr.bf16.mxu0 0
      %5652 = vmatpush1.bf16.msra.mxu0 %v3412
      %5653 = vmatprep.mubr.bf16.mxu0 %v1190
      %5654 = vmatmul.mubr.bf16.gmra.mrb[0].mxu0 %v1189
      %v5655 = vpop.f32.mrb[0].mxu0
      %v5656 = vadd.f32 0.0, %v5655
      %v5657 = vpop.f32.mrb[0].mxu0
      %v5658 = vpop.f32.mrb[0].mxu0
      %v5659 = vadd.f32 0.0, %v5658
      %v5660 = vpop.f32.mrb[0].mxu0
      %5661 = vmatprep.mubr.bf16.mxu0 %v1206
      %5662 = vmatmul.mubr.bf16.gmra.mrb[0].mxu0 %v1205
      %v5663 = vpop.f32.mrb[0].mxu0
      %v5664 = vadd.f32 0.0, %v5663
      %v5665 = vpop.f32.mrb[0].mxu0
      %v5666 = vpop.f32.mrb[0].mxu0
      %v5667 = vadd.f32 0.0, %v5666
      %v5668 = vpop.f32.mrb[0].mxu0
      %5669 = vmatprep.mubr.bf16.mxu0 %v1222
      %5670 = vmatmul.mubr.bf16.gmra.mrb[0].mxu0 %v1221
      %v5671 = vpop.f32.mrb[0].mxu0
      %v5672 = vadd.f32 0.0, %v5671
      %v5673 = vpop.f32.mrb[0].mxu0
      %v5674 = vpop.f32.mrb[0].mxu0
      %v5675 = vadd.f32 0.0, %v5674
      %v5676 = vpop.f32.mrb[0].mxu0
      %5677 = vdwg.mxu0
      %5678 = vmatprep.subr.bf16.mxu0 0
      %5679 = vmatpush1.bf16.msra.mxu0 %v3417
      %5680 = vmatprep.subr.bf16.mxu0 0
      %5681 = vmatpush1.bf16.msra.mxu0 %v3422
      %5682 = vmatprep.subr.bf16.mxu0 0
      %5683 = vmatpush1.bf16.msra.mxu0 %v3427
      %5684 = vmatprep.subr.bf16.mxu0 0
      %5685 = vmatpush1.bf16.msra.mxu0 %v3432
      %5686 = vmatprep.subr.bf16.mxu0 0
      %5687 = vmatpush1.bf16.msra.mxu0 %v3437
      %5688 = vmatprep.subr.bf16.mxu0 0
      %5689 = vmatpush1.bf16.msra.mxu0 %v3442
      %5690 = vmatprep.subr.bf16.mxu0 0
      %5691 = vmatpush1.bf16.msra.mxu0 %v3447
      %5692 = vmatprep.subr.bf16.mxu0 0
      %5693 = vmatpush1.bf16.msra.mxu0 %v3452
      %5694 = vmatprep.subr.bf16.mxu0 0
      %5695 = vmatpush1.bf16.msra.mxu0 %v3457
      %5696 = vmatprep.subr.bf16.mxu0 0
      %5697 = vmatpush1.bf16.msra.mxu0 %v3462
      %5698 = vmatprep.subr.bf16.mxu0 0
      %5699 = vmatpush1.bf16.msra.mxu0 %v3467
      %5700 = vmatprep.subr.bf16.mxu0 0
      %5701 = vmatpush1.bf16.msra.mxu0 %v3472
      %5702 = vmatprep.subr.bf16.mxu0 0
      %5703 = vmatpush1.bf16.msra.mxu0 %v3477
      %5704 = vmatprep.subr.bf16.mxu0 0
      %5705 = vmatpush1.bf16.msra.mxu0 %v3482
      %5706 = vmatprep.subr.bf16.mxu0 0
      %5707 = vmatpush1.bf16.msra.mxu0 %v3487
      %5708 = vmatprep.subr.bf16.mxu0 0
      %5709 = vmatpush1.bf16.msra.mxu0 %v3492
      %5710 = vmatprep.mubr.bf16.mxu0 %v1192
      %5711 = vmatmul.mubr.bf16.gmra.mrb[0].mxu0 %v1191
      %v5712 = vpop.f32.mrb[0].mxu0
      %v5713 = vadd.f32 %v5656, %v5712
      %v5714 = vpop.f32.mrb[0].mxu0
      %v5715 = vpop.f32.mrb[0].mxu0
      %v5716 = vadd.f32 %v5659, %v5715
      %v5717 = vpop.f32.mrb[0].mxu0
      %5718 = vmatprep.mubr.bf16.mxu0 %v1208
      %5719 = vmatmul.mubr.bf16.gmra.mrb[0].mxu0 %v1207
      %v5720 = vpop.f32.mrb[0].mxu0
      %v5721 = vadd.f32 %v5664, %v5720
      %v5722 = vpop.f32.mrb[0].mxu0
      %v5723 = vpop.f32.mrb[0].mxu0
      %v5724 = vadd.f32 %v5667, %v5723
      %v5725 = vpop.f32.mrb[0].mxu0
      %5726 = vmatprep.mubr.bf16.mxu0 %v1224
      %5727 = vmatmul.mubr.bf16.gmra.mrb[0].mxu0 %v1223
      %v5728 = vpop.f32.mrb[0].mxu0
      %v5729 = vadd.f32 %v5672, %v5728
      %v5730 = vpop.f32.mrb[0].mxu0
      %v5731 = vpop.f32.mrb[0].mxu0
      %v5732 = vadd.f32 %v5675, %v5731
      %v5733 = vpop.f32.mrb[0].mxu0
      %5734 = vdwg.mxu0
      %5735 = vmatprep.subr.bf16.mxu0 0
      %5736 = vmatpush1.bf16.msra.mxu0 %v3497
      %5737 = vmatprep.subr.bf16.mxu0 0
      %5738 = vmatpush1.bf16.msra.mxu0 %v3502
      %5739 = vmatprep.subr.bf16.mxu0 0
      %5740 = vmatpush1.bf16.msra.mxu0 %v3507
      %5741 = vmatprep.subr.bf16.mxu0 0
      %5742 = vmatpush1.bf16.msra.mxu0 %v3512
      %5743 = vmatprep.subr.bf16.mxu0 0
      %5744 = vmatpush1.bf16.msra.mxu0 %v3517
      %5745 = vmatprep.subr.bf16.mxu0 0
      %5746 = vmatpush1.bf16.msra.mxu0 %v3522
      %5747 = vmatprep.subr.bf16.mxu0 0
      %5748 = vmatpush1.bf16.msra.mxu0 %v3527
      %5749 = vmatprep.subr.bf16.mxu0 0
      %5750 = vmatpush1.bf16.msra.mxu0 %v3532
      %5751 = vmatprep.subr.bf16.mxu0 0
      %5752 = vmatpush1.bf16.msra.mxu0 %v3537
      %5753 = vmatprep.subr.bf16.mxu0 0
      %5754 = vmatpush1.bf16.msra.mxu0 %v3542
      %5755 = vmatprep.subr.bf16.mxu0 0
      %5756 = vmatpush1.bf16.msra.mxu0 %v3547
      %5757 = vmatprep.subr.bf16.mxu0 0
      %5758 = vmatpush1.bf16.msra.mxu0 %v3552
      %5759 = vmatprep.subr.bf16.mxu0 0
      %5760 = vmatpush1.bf16.msra.mxu0 %v3557
      %5761 = vmatprep.subr.bf16.mxu0 0
      %5762 = vmatpush1.bf16.msra.mxu0 %v3562
      %5763 = vmatprep.subr.bf16.mxu0 0
      %5764 = vmatpush1.bf16.msra.mxu0 %v3567
      %5765 = vmatprep.subr.bf16.mxu0 0
      %5766 = vmatpush1.bf16.msra.mxu0 %v3572
      %5767 = vmatprep.mubr.bf16.mxu0 %v1194
      %5768 = vmatmul.mubr.bf16.gmra.mrb[0].mxu0 %v1193
      %v5769 = vpop.f32.mrb[0].mxu0
      %v5770 = vadd.f32 %v5713, %v5769
      %v5771 = vpop.f32.mrb[0].mxu0
      %v5772 = vpop.f32.mrb[0].mxu0
      %v5773 = vadd.f32 %v5716, %v5772
      %v5774 = vpop.f32.mrb[0].mxu0
      %5775 = vmatprep.mubr.bf16.mxu0 %v1210
      %5776 = vmatmul.mubr.bf16.gmra.mrb[0].mxu0 %v1209
      %v5777 = vpop.f32.mrb[0].mxu0
      %v5778 = vadd.f32 %v5721, %v5777
      %v5779 = vpop.f32.mrb[0].mxu0
      %v5780 = vpop.f32.mrb[0].mxu0
      %v5781 = vadd.f32 %v5724, %v5780
      %v5782 = vpop.f32.mrb[0].mxu0
      %5783 = vmatprep.mubr.bf16.mxu0 %v1226
      %5784 = vmatmul.mubr.bf16.gmra.mrb[0].mxu0 %v1225
      %v5785 = vpop.f32.mrb[0].mxu0
      %v5786 = vadd.f32 %v5729, %v5785
      %v5787 = vpop.f32.mrb[0].mxu0
      %v5788 = vpop.f32.mrb[0].mxu0
      %v5789 = vadd.f32 %v5732, %v5788
      %v5790 = vpop.f32.mrb[0].mxu0
      %5791 = vdwg.mxu0
      %5792 = vmatprep.subr.bf16.mxu0 0
      %5793 = vmatpush1.bf16.msra.mxu0 %v3577
      %5794 = vmatprep.subr.bf16.mxu0 0
      %5795 = vmatpush1.bf16.msra.mxu0 %v3582
      %5796 = vmatprep.subr.bf16.mxu0 0
      %5797 = vmatpush1.bf16.msra.mxu0 %v3587
      %5798 = vmatprep.subr.bf16.mxu0 0
      %5799 = vmatpush1.bf16.msra.mxu0 %v3592
      %5800 = vmatprep.subr.bf16.mxu0 0
      %5801 = vmatpush1.bf16.msra.mxu0 %v3597
      %5802 = vmatprep.subr.bf16.mxu0 0
      %5803 = vmatpush1.bf16.msra.mxu0 %v3602
      %5804 = vmatprep.subr.bf16.mxu0 0
      %5805 = vmatpush1.bf16.msra.mxu0 %v3607
      %5806 = vmatprep.subr.bf16.mxu0 0
      %5807 = vmatpush1.bf16.msra.mxu0 %v3612
      %5808 = vmatprep.subr.bf16.mxu0 0
      %5809 = vmatpush1.bf16.msra.mxu0 %v3617
      %5810 = vmatprep.subr.bf16.mxu0 0
      %5811 = vmatpush1.bf16.msra.mxu0 %v3622
      %5812 = vmatprep.subr.bf16.mxu0 0
      %5813 = vmatpush1.bf16.msra.mxu0 %v3627
      %5814 = vmatprep.subr.bf16.mxu0 0
      %5815 = vmatpush1.bf16.msra.mxu0 %v3632
      %5816 = vmatprep.subr.bf16.mxu0 0
      %5817 = vmatpush1.bf16.msra.mxu0 %v3637
      %5818 = vmatprep.subr.bf16.mxu0 0
      %5819 = vmatpush1.bf16.msra.mxu0 %v3642
      %5820 = vmatprep.subr.bf16.mxu0 0
      %5821 = vmatpush1.bf16.msra.mxu0 %v3647
      %5822 = vmatprep.subr.bf16.mxu0 0
      %5823 = vmatpush1.bf16.msra.mxu0 %v3652
      %5824 = vmatprep.mubr.bf16.mxu0 %v1196
      %5825 = vmatmul.mubr.bf16.gmra.mrb[0].mxu0 %v1195
      %v5826 = vpop.f32.mrb[0].mxu0
      %v5827 = vadd.f32 %v5770, %v5826
      %v5828 = vpop.f32.mrb[0].mxu0
      %v5829 = vpop.f32.mrb[0].mxu0
      %v5830 = vadd.f32 %v5773, %v5829
      %v5831 = vpop.f32.mrb[0].mxu0
      %5832 = vmatprep.mubr.bf16.mxu0 %v1212
      %5833 = vmatmul.mubr.bf16.gmra.mrb[0].mxu0 %v1211
      %v5834 = vpop.f32.mrb[0].mxu0
      %v5835 = vadd.f32 %v5778, %v5834
      %v5836 = vpop.f32.mrb[0].mxu0
      %v5837 = vpop.f32.mrb[0].mxu0
      %v5838 = vadd.f32 %v5781, %v5837
      %v5839 = vpop.f32.mrb[0].mxu0
      %5840 = vmatprep.mubr.bf16.mxu0 %v1228
      %5841 = vmatmul.mubr.bf16.gmra.mrb[0].mxu0 %v1227
      %v5842 = vpop.f32.mrb[0].mxu0
      %v5843 = vadd.f32 %v5786, %v5842
      %v5844 = vpop.f32.mrb[0].mxu0
      %v5845 = vpop.f32.mrb[0].mxu0
      %v5846 = vadd.f32 %v5789, %v5845
      %v5847 = vpop.f32.mrb[0].mxu0
      %5848 = vdwg.mxu0
      %5849 = vmatprep.subr.bf16.mxu0 0
      %5850 = vmatpush1.bf16.msra.mxu0 %v3657
      %5851 = vmatprep.subr.bf16.mxu0 0
      %5852 = vmatpush1.bf16.msra.mxu0 %v3662
      %5853 = vmatprep.subr.bf16.mxu0 0
      %5854 = vmatpush1.bf16.msra.mxu0 %v3667
      %5855 = vmatprep.subr.bf16.mxu0 0
      %5856 = vmatpush1.bf16.msra.mxu0 %v3672
      %5857 = vmatprep.subr.bf16.mxu0 0
      %5858 = vmatpush1.bf16.msra.mxu0 %v3677
      %5859 = vmatprep.subr.bf16.mxu0 0
      %5860 = vmatpush1.bf16.msra.mxu0 %v3682
      %5861 = vmatprep.subr.bf16.mxu0 0
      %5862 = vmatpush1.bf16.msra.mxu0 %v3687
      %5863 = vmatprep.subr.bf16.mxu0 0
      %5864 = vmatpush1.bf16.msra.mxu0 %v3692
      %5865 = vmatprep.subr.bf16.mxu0 0
      %5866 = vmatpush1.bf16.msra.mxu0 %v3697
      %5867 = vmatprep.subr.bf16.mxu0 0
      %5868 = vmatpush1.bf16.msra.mxu0 %v3702
      %5869 = vmatprep.subr.bf16.mxu0 0
      %5870 = vmatpush1.bf16.msra.mxu0 %v3707
      %5871 = vmatprep.subr.bf16.mxu0 0
      %5872 = vmatpush1.bf16.msra.mxu0 %v3712
      %5873 = vmatprep.subr.bf16.mxu0 0
      %5874 = vmatpush1.bf16.msra.mxu0 %v3717
      %5875 = vmatprep.subr.bf16.mxu0 0
      %5876 = vmatpush1.bf16.msra.mxu0 %v3722
      %5877 = vmatprep.subr.bf16.mxu0 0
      %5878 = vmatpush1.bf16.msra.mxu0 %v3727
      %5879 = vmatprep.subr.bf16.mxu0 0
      %5880 = vmatpush1.bf16.msra.mxu0 %v3732
      %5881 = vmatprep.mubr.bf16.mxu0 %v1198
      %5882 = vmatmul.mubr.bf16.gmra.mrb[0].mxu0 %v1197
      %v5883 = vpop.f32.mrb[0].mxu0
      %v5884 = vadd.f32 %v5827, %v5883
      %v5885 = vpop.f32.mrb[0].mxu0
      %v5886 = vpop.f32.mrb[0].mxu0
      %v5887 = vadd.f32 %v5830, %v5886
      %v5888 = vpop.f32.mrb[0].mxu0
      %5889 = vmatprep.mubr.bf16.mxu0 %v1214
      %5890 = vmatmul.mubr.bf16.gmra.mrb[0].mxu0 %v1213
      %v5891 = vpop.f32.mrb[0].mxu0
      %v5892 = vadd.f32 %v5835, %v5891
      %v5893 = vpop.f32.mrb[0].mxu0
      %v5894 = vpop.f32.mrb[0].mxu0
      %v5895 = vadd.f32 %v5838, %v5894
      %v5896 = vpop.f32.mrb[0].mxu0
      %5897 = vmatprep.mubr.bf16.mxu0 %v1230
      %5898 = vmatmul.mubr.bf16.gmra.mrb[0].mxu0 %v1229
      %v5899 = vpop.f32.mrb[0].mxu0
      %v5900 = vadd.f32 %v5843, %v5899
      %v5901 = vpop.f32.mrb[0].mxu0
      %v5902 = vpop.f32.mrb[0].mxu0
      %v5903 = vadd.f32 %v5846, %v5902
      %v5904 = vpop.f32.mrb[0].mxu0
      %5905 = vdwg.mxu0
      %5906 = vmatprep.subr.bf16.mxu0 0
      %5907 = vmatpush1.bf16.msra.mxu0 %v3737
      %5908 = vmatprep.subr.bf16.mxu0 0
      %5909 = vmatpush1.bf16.msra.mxu0 %v3742
      %5910 = vmatprep.subr.bf16.mxu0 0
      %5911 = vmatpush1.bf16.msra.mxu0 %v3747
      %5912 = vmatprep.subr.bf16.mxu0 0
      %5913 = vmatpush1.bf16.msra.mxu0 %v3752
      %5914 = vmatprep.subr.bf16.mxu0 0
      %5915 = vmatpush1.bf16.msra.mxu0 %v3757
      %5916 = vmatprep.subr.bf16.mxu0 0
      %5917 = vmatpush1.bf16.msra.mxu0 %v3762
      %5918 = vmatprep.subr.bf16.mxu0 0
      %5919 = vmatpush1.bf16.msra.mxu0 %v3767
      %5920 = vmatprep.subr.bf16.mxu0 0
      %5921 = vmatpush1.bf16.msra.mxu0 %v3772
      %5922 = vmatprep.subr.bf16.mxu0 0
      %5923 = vmatpush1.bf16.msra.mxu0 %v3777
      %5924 = vmatprep.subr.bf16.mxu0 0
      %5925 = vmatpush1.bf16.msra.mxu0 %v3782
      %5926 = vmatprep.subr.bf16.mxu0 0
      %5927 = vmatpush1.bf16.msra.mxu0 %v3787
      %5928 = vmatprep.subr.bf16.mxu0 0
      %5929 = vmatpush1.bf16.msra.mxu0 %v3792
      %5930 = vmatprep.subr.bf16.mxu0 0
      %5931 = vmatpush1.bf16.msra.mxu0 %v3797
      %5932 = vmatprep.subr.bf16.mxu0 0
      %5933 = vmatpush1.bf16.msra.mxu0 %v3802
      %5934 = vmatprep.subr.bf16.mxu0 0
      %5935 = vmatpush1.bf16.msra.mxu0 %v3807
      %5936 = vmatprep.subr.bf16.mxu0 0
      %5937 = vmatpush1.bf16.msra.mxu0 %v3812
      %5938 = vmatprep.mubr.bf16.mxu0 %v1200
      %5939 = vmatmul.mubr.bf16.gmra.mrb[0].mxu0 %v1199
      %v5940 = vpop.f32.mrb[0].mxu0
      %v5941 = vadd.f32 %v5884, %v5940
      %v5942 = vpop.f32.mrb[0].mxu0
      %v5943 = vpop.f32.mrb[0].mxu0
      %v5944 = vadd.f32 %v5887, %v5943
      %v5945 = vpop.f32.mrb[0].mxu0
      %5946 = vmatprep.mubr.bf16.mxu0 %v1216
      %5947 = vmatmul.mubr.bf16.gmra.mrb[0].mxu0 %v1215
      %v5948 = vpop.f32.mrb[0].mxu0
      %v5949 = vadd.f32 %v5892, %v5948
      %v5950 = vpop.f32.mrb[0].mxu0
      %v5951 = vpop.f32.mrb[0].mxu0
      %v5952 = vadd.f32 %v5895, %v5951
      %v5953 = vpop.f32.mrb[0].mxu0
      %5954 = vmatprep.mubr.bf16.mxu0 %v1232
      %5955 = vmatmul.mubr.bf16.gmra.mrb[0].mxu0 %v1231
      %v5956 = vpop.f32.mrb[0].mxu0
      %v5957 = vadd.f32 %v5900, %v5956
      %v5958 = vpop.f32.mrb[0].mxu0
      %v5959 = vpop.f32.mrb[0].mxu0
      %v5960 = vadd.f32 %v5903, %v5959
      %v5961 = vpop.f32.mrb[0].mxu0
      %5962 = vdwg.mxu0
      %5963 = vmatprep.subr.bf16.mxu0 0
      %5964 = vmatpush1.bf16.msra.mxu0 %v3817
      %5965 = vmatprep.subr.bf16.mxu0 0
      %5966 = vmatpush1.bf16.msra.mxu0 %v3822
      %5967 = vmatprep.subr.bf16.mxu0 0
      %5968 = vmatpush1.bf16.msra.mxu0 %v3827
      %5969 = vmatprep.subr.bf16.mxu0 0
      %5970 = vmatpush1.bf16.msra.mxu0 %v3832
      %5971 = vmatprep.subr.bf16.mxu0 0
      %5972 = vmatpush1.bf16.msra.mxu0 %v3837
      %5973 = vmatprep.subr.bf16.mxu0 0
      %5974 = vmatpush1.bf16.msra.mxu0 %v3842
      %5975 = vmatprep.subr.bf16.mxu0 0
      %5976 = vmatpush1.bf16.msra.mxu0 %v3847
      %5977 = vmatprep.subr.bf16.mxu0 0
      %5978 = vmatpush1.bf16.msra.mxu0 %v3852
      %5979 = vmatprep.subr.bf16.mxu0 0
      %5980 = vmatpush1.bf16.msra.mxu0 %v3857
      %5981 = vmatprep.subr.bf16.mxu0 0
      %5982 = vmatpush1.bf16.msra.mxu0 %v3862
      %5983 = vmatprep.subr.bf16.mxu0 0
      %5984 = vmatpush1.bf16.msra.mxu0 %v3867
      %5985 = vmatprep.subr.bf16.mxu0 0
      %5986 = vmatpush1.bf16.msra.mxu0 %v3872
      %5987 = vmatprep.subr.bf16.mxu0 0
      %5988 = vmatpush1.bf16.msra.mxu0 %v3877
      %5989 = vmatprep.subr.bf16.mxu0 0
      %5990 = vmatpush1.bf16.msra.mxu0 %v3882
      %5991 = vmatprep.subr.bf16.mxu0 0
      %5992 = vmatpush1.bf16.msra.mxu0 %v3887
      %5993 = vmatprep.subr.bf16.mxu0 0
      %5994 = vmatpush1.bf16.msra.mxu0 %v3892
      %5995 = vmatprep.mubr.bf16.mxu0 %v1202
      %5996 = vmatmul.mubr.bf16.gmra.mrb[0].mxu0 %v1201
      %v5997 = vpop.f32.mrb[0].mxu0
      %v5998 = vadd.f32 %v5941, %v5997
      %v5999 = vpop.f32.mrb[0].mxu0
      %v6000 = vpop.f32.mrb[0].mxu0
      %v6001 = vadd.f32 %v5944, %v6000
      %v6002 = vpop.f32.mrb[0].mxu0
      %6003 = vmatprep.mubr.bf16.mxu0 %v1218
      %6004 = vmatmul.mubr.bf16.gmra.mrb[0].mxu0 %v1217
      %v6005 = vpop.f32.mrb[0].mxu0
      %v6006 = vadd.f32 %v5949, %v6005
      %v6007 = vpop.f32.mrb[0].mxu0
      %v6008 = vpop.f32.mrb[0].mxu0
      %v6009 = vadd.f32 %v5952, %v6008
      %v6010 = vpop.f32.mrb[0].mxu0
      %6011 = vmatprep.mubr.bf16.mxu0 %v1234
      %6012 = vmatmul.mubr.bf16.gmra.mrb[0].mxu0 %v1233
      %v6013 = vpop.f32.mrb[0].mxu0
      %v6014 = vadd.f32 %v5957, %v6013
      %v6015 = vpop.f32.mrb[0].mxu0
      %v6016 = vpop.f32.mrb[0].mxu0
      %v6017 = vadd.f32 %v5960, %v6016
      %v6018 = vpop.f32.mrb[0].mxu0
      %6019 = vdwg.mxu0
      %6020 = vmatprep.subr.bf16.mxu0 0
      %6021 = vmatpush1.bf16.msra.mxu0 %v3897
      %6022 = vmatprep.subr.bf16.mxu0 0
      %6023 = vmatpush1.bf16.msra.mxu0 %v3902
      %6024 = vmatprep.subr.bf16.mxu0 0
      %6025 = vmatpush1.bf16.msra.mxu0 %v3907
      %6026 = vmatprep.subr.bf16.mxu0 0
      %6027 = vmatpush1.bf16.msra.mxu0 %v3912
      %6028 = vmatprep.subr.bf16.mxu0 0
      %6029 = vmatpush1.bf16.msra.mxu0 %v3917
      %6030 = vmatprep.subr.bf16.mxu0 0
      %6031 = vmatpush1.bf16.msra.mxu0 %v3922
      %6032 = vmatprep.subr.bf16.mxu0 0
      %6033 = vmatpush1.bf16.msra.mxu0 %v3927
      %6034 = vmatprep.subr.bf16.mxu0 0
      %6035 = vmatpush1.bf16.msra.mxu0 %v3932
      %6036 = vmatprep.subr.bf16.mxu0 0
      %6037 = vmatpush1.bf16.msra.mxu0 %v3937
      %6038 = vmatprep.subr.bf16.mxu0 0
      %6039 = vmatpush1.bf16.msra.mxu0 %v3942
      %6040 = vmatprep.subr.bf16.mxu0 0
      %6041 = vmatpush1.bf16.msra.mxu0 %v3947
      %6042 = vmatprep.subr.bf16.mxu0 0
      %6043 = vmatpush1.bf16.msra.mxu0 %v3952
      %6044 = vmatprep.subr.bf16.mxu0 0
      %6045 = vmatpush1.bf16.msra.mxu0 %v3957
      %6046 = vmatprep.subr.bf16.mxu0 0
      %6047 = vmatpush1.bf16.msra.mxu0 %v3962
      %6048 = vmatprep.subr.bf16.mxu0 0
      %6049 = vmatpush1.bf16.msra.mxu0 %v3967
      %6050 = vmatprep.subr.bf16.mxu0 0
      %6051 = vmatpush1.bf16.msra.mxu0 %v3972
      %6052 = vmatprep.mubr.bf16.mxu0 %v1204
      %6053 = vmatmul.mubr.bf16.gmra.mrb[0].mxu0 %v1203
      %v6054 = vpop.f32.mrb[0].mxu0
      %v6055 = vadd.f32 %v5998, %v6054
      %v6056 = vpop.f32.mrb[0].mxu0
      %v6057 = vpop.f32.mrb[0].mxu0
      %v6058 = vadd.f32 %v6001, %v6057
      %v6059 = vpop.f32.mrb[0].mxu0
      %6060 = vmatprep.mubr.bf16.mxu0 %v1220
      %6061 = vmatmul.mubr.bf16.gmra.mrb[0].mxu0 %v1219
      %v6062 = vpop.f32.mrb[0].mxu0
      %v6063 = vadd.f32 %v6006, %v6062
      %v6064 = vpop.f32.mrb[0].mxu0
      %v6065 = vpop.f32.mrb[0].mxu0
      %v6066 = vadd.f32 %v6009, %v6065
      %v6067 = vpop.f32.mrb[0].mxu0
      %6068 = vmatprep.mubr.bf16.mxu0 %v1236
      %6069 = vmatmul.mubr.bf16.gmra.mrb[0].mxu0 %v1235
      %v6070 = vpop.f32.mrb[0].mxu0
      %v6071 = vadd.f32 %v6014, %v6070
      %v6072 = vpop.f32.mrb[0].mxu0
      %v6073 = vpop.f32.mrb[0].mxu0
      %v6074 = vadd.f32 %v6017, %v6073
      %v6075 = vpop.f32.mrb[0].mxu0
      %6076 = vdwg.mxu0
      %v6077 = vmax.f32 %v5089, 0.0
      %v6078 = vmax.f32 %v5091, 0.0
      %v6079 = vmax.f32 %v5593, 0.0
      %v6080 = vmax.f32 %v5595, 0.0
      %v6081 = vmax.f32 %v6055, 0.0
      %v6082 = vmax.f32 %v5093, 0.0
      %v6083 = vmax.f32 %v5095, 0.0
      %v6084 = vmax.f32 %v5597, 0.0
      %v6085 = vmax.f32 %v5599, 0.0
      %v6086 = vmax.f32 %v6058, 0.0
      %v6087 = vmax.f32 %v5099, 0.0
      %v6088 = vmax.f32 %v5101, 0.0
      %v6089 = vmax.f32 %v5603, 0.0
      %v6090 = vmax.f32 %v5605, 0.0
      %v6091 = vmax.f32 %v6063, 0.0
      %v6092 = vmax.f32 %v5103, 0.0
      %v6093 = vmax.f32 %v5105, 0.0
      %v6094 = vmax.f32 %v5607, 0.0
      %v6095 = vmax.f32 %v5609, 0.0
      %v6096 = vmax.f32 %v6066, 0.0
      %v6097 = vmax.f32 %v5109, 0.0
      %v6098 = vmax.f32 %v5111, 0.0
      %v6099 = vmax.f32 %v5613, 0.0
      %v6100 = vmax.f32 %v5615, 0.0
      %v6101 = vmax.f32 %v6071, 0.0
      %v6102 = vmax.f32 %v5113, 0.0
      %v6103 = vmax.f32 %v5115, 0.0
      %v6104 = vmax.f32 %v5617, 0.0
      %v6105 = vmax.f32 %v5619, 0.0
      %v6106 = vmax.f32 %v6074, 0.0
      %v6107 = vpack.c.bf16 %v6082, %v6077
      %v6108 = vpack.c.bf16 %v6083, %v6078
      %v6109 = vpack.c.bf16 %v6084, %v6079
      %v6110 = vpack.c.bf16 %v6085, %v6080
      %v6111 = vpack.c.bf16 %v6086, %v6081
      %v6112 = vpack.c.bf16 %v6092, %v6087
      %v6113 = vpack.c.bf16 %v6093, %v6088
      %v6114 = vpack.c.bf16 %v6094, %v6089
      %v6115 = vpack.c.bf16 %v6095, %v6090
      %v6116 = vpack.c.bf16 %v6096, %v6091
      %v6117 = vpack.c.bf16 %v6102, %v6097
      %v6118 = vpack.c.bf16 %v6103, %v6098
      %v6119 = vpack.c.bf16 %v6104, %v6099
      %v6120 = vpack.c.bf16 %v6105, %v6100
      %v6121 = vpack.c.bf16 %v6106, %v6101
      %v6137 = vunpack.c.l.b16 %v6107
      %v6138 = vunpack.c.l.b16 %v6108
      %v6139 = vunpack.c.l.b16 %v6109
      %v6140 = vunpack.c.l.b16 %v6110
      %v6141 = vunpack.c.l.b16 %v6111
      %v6142 = vunpack.c.h.b16 %v6107
      %v6143 = vunpack.c.h.b16 %v6108
      %v6144 = vunpack.c.h.b16 %v6109
      %v6145 = vunpack.c.h.b16 %v6110
      %v6146 = vunpack.c.h.b16 %v6111
      %v6147 = vunpack.c.l.b16 %v6112
      %v6148 = vunpack.c.l.b16 %v6113
      %v6149 = vunpack.c.l.b16 %v6114
      %v6150 = vunpack.c.l.b16 %v6115
      %v6151 = vunpack.c.l.b16 %v6116
      %v6152 = vunpack.c.h.b16 %v6112
      %v6153 = vunpack.c.h.b16 %v6113
      %v6154 = vunpack.c.h.b16 %v6114
      %v6155 = vunpack.c.h.b16 %v6115
      %v6156 = vunpack.c.h.b16 %v6116
      %v6157 = vunpack.c.l.b16 %v6117
      %v6158 = vunpack.c.l.b16 %v6118
      %v6159 = vunpack.c.l.b16 %v6119
      %v6160 = vunpack.c.l.b16 %v6120
      %v6161 = vunpack.c.l.b16 %v6121
      %v6162 = vunpack.c.h.b16 %v6117
      %v6163 = vunpack.c.h.b16 %v6118
      %v6164 = vunpack.c.h.b16 %v6119
      %v6165 = vunpack.c.h.b16 %v6120
      %v6166 = vunpack.c.h.b16 %v6121
      %v6167 = vpack.c.b16 %v6138, %v6137
      %v6168 = vpack.c.b16 %v6140, %v6139
      %v6169 = vpack.c.b16 %v6141, %v6141
      %v6170 = vpack.c.b16 %v6143, %v6142
      %v6171 = vpack.c.b16 %v6145, %v6144
      %v6172 = vpack.c.b16 %v6146, %v6146
      %v6173 = vpack.c.b16 %v6148, %v6147
      %v6174 = vpack.c.b16 %v6150, %v6149
      %v6175 = vpack.c.b16 %v6151, %v6151
      %v6176 = vpack.c.b16 %v6153, %v6152
      %v6177 = vpack.c.b16 %v6155, %v6154
      %v6178 = vpack.c.b16 %v6156, %v6156
      %v6179 = vpack.c.b16 %v6158, %v6157
      %v6180 = vpack.c.b16 %v6160, %v6159
      %v6181 = vpack.c.b16 %v6161, %v6161
      %v6182 = vpack.c.b16 %v6163, %v6162
      %v6183 = vpack.c.b16 %v6165, %v6164
      %v6184 = vpack.c.b16 %v6166, %v6166
      %6203 = vst [vmem:[%s225] sm:$0xff] %v6167
      %6204 = vst [vmem:[%s225 + $0x8] sm:$0xff] %v6168
      %6205 = vst [vmem:[%s225 + $0x10] sm:$0xf] %v6169
      %6206 = vst [vmem:[%s225 + $0x14] sm:$0xff] %v6170
      %6207 = vst [vmem:[%s225 + $0x1c] sm:$0xff] %v6171
      %6208 = vst [vmem:[%s225 + $0x24] sm:$0xf] %v6172
      %6209 = vst [vmem:[%s225 + $0x28] sm:$0xff] %v6173
      %6210 = vst [vmem:[%s225 + $0x30] sm:$0xff] %v6174
      %6211 = vst [vmem:[%s225 + $0x38] sm:$0xf] %v6175
      %6212 = vst [vmem:[%s225 + $0x3c] sm:$0xff] %v6176
      %6213 = vst [vmem:[%s225 + $0x44] sm:$0xff] %v6177
      %6214 = vst [vmem:[%s225 + $0x4c] sm:$0xf] %v6178
      %6215 = vst [vmem:[%s225 + $0x50] sm:$0xff] %v6179
      %6216 = vst [vmem:[%s225 + $0x58] sm:$0xff] %v6180
      %6217 = vst [vmem:[%s225 + $0x60] sm:$0xf] %v6181
      %6218 = vst [vmem:[%s225 + $0x64] sm:$0xff] %v6182
      %6219 = vst [vmem:[%s225 + $0x6c] sm:$0xff] %v6183
      %6220 = vst [vmem:[%s225 + $0x74] sm:$0xf] %v6184
      %s6221 = smul.u32 6, %s20
      %s6222 = smul.u32 5, %s18
      %p6223 = scmp.lt.s32.totalorder %s19, 1
      %s6224 = scalar_select %p6223, %s19, 1
      %p6225 = scmp.lt.s32.totalorder %s6221, 17
      %s6226 = scalar_select %p6225, %s6221, 17
      %p6227 = scmp.lt.s32.totalorder %s6222, 4
      %s6228 = scalar_select %p6227, %s6222, 4
      %s6229 = smul.addr %s6226, 5
      %s6230 = sadd.s32 %s6228, %s6229
      %s6231 = smul.addr %s6224, 90
      %s6232 = sadd.s32 %s6230, %s6231
      %s6233 = smul.addr %s6232, 4
      %s6234 = scalar_lea.vmem %s2, %s6233
      // Predicated region
      $region29: #{generator_forward.4} parent=27 // pred_check
        %p6235 = pneg %p108
      $region30: #{generator_forward.4} parent=27 // pred_check_branch
        %6237 = sbr.rel (%p6235) target = $region32
      $region31: #{generator_forward.4} parent=27 // pred_region
        %s6238 = smul.u32 6, %s20
        %s6239 = smul.u32 5, %s18
      $region32: #{generator_forward.4} parent=27 // pred_fallthru
        _
    $region28: #{generator_forward.4} parent=5 // pred_fallthru
      _
    %p6240 = scmp.le.s32.totalorder 2, %s8
    // Predicated region
    $region33: #{generator_forward.4} parent=5 // pred_check
      %p6241 = pneg %p6240
    $region34: #{generator_forward.4} parent=5 // pred_check_branch
      %6243 = sbr.rel (%p6241) target = $region36
    $region35: #{generator_forward.4} parent=5 // pred_region
      %s6244 = ssub.s32 %s8, 2
      // Predicated region
      $region37: #{generator_forward.4} parent=35 // pred_check
        %p6245 = pneg %p114
      $region38: #{generator_forward.4} parent=35 // pred_check_branch
        %6247 = sbr.rel (%p6245) target = $region40
      $region39: #{generator_forward.4} parent=35 // pred_region
        %s6248 = smul.u32 6, %s23
        %s6249 = smul.u32 5, %s21
        %p6250 = scmp.lt.s32.totalorder %s22, 1
        %s6251 = scalar_select %p6250, %s22, 1
        %p6252 = scmp.lt.s32.totalorder %s6248, 17
        %s6253 = scalar_select %p6252, %s6248, 17
        %p6254 = scmp.lt.s32.totalorder %s6249, 4
        %s6255 = scalar_select %p6254, %s6249, 4
        %s6256 = smul.addr %s6253, 5
        %s6257 = sadd.s32 %s6255, %s6256
        %s6258 = smul.addr %s6251, 90
        %s6259 = sadd.s32 %s6257, %s6258
        %s6260 = smul.addr %s6259, 4
        %s6261 = scalar_lea.vmem %s2, %s6260
      $region40: #{generator_forward.4} parent=35 // pred_fallthru
        _
    $region36: #{generator_forward.4} parent=5 // pred_fallthru
      _
  $region6: #{generator_forward.4} parent=0 // loop_footer
    %s12 = sadd.s32 1, %s8
  $region7: #{generator_forward.4} parent=0 // loop_footer_branch
    %7 = sbr.rel target = $region3
  $region8: #{generator_forward.4} parent=0 // loop_exit
    _

// kernel: generator_forward.5
$region0: #{generator_forward.5}
  #allocation0 [shape = 'u32[]', space=smem, size = 0x4, offset = 0x4, fixed_abs, tag = 'smem constant byte address 0x4 - core index']
  #allocation1 [shape = 'u32[144,128]{1,0:T(1,128)}', space=vmem, size = 0x12000, scoped, tag = 'internal scratch']
  %s0 = inlined_call_operand.vmem [shape: bf16[2,1152,384], index: 0, kind: input, shape index: {}]
  %s1 = inlined_call_operand.vmem [shape: bf16[384,512], index: 1, kind: input, shape index: {}]
  %s2 = inlined_call_operand.vmem [shape: f32[2,1152,512], index: 2, kind: output, shape index: {}]
  %s3 = sld [smem:[#allocation0]]
  $region41: #{generator_forward.5} parent=0
    _
  %s5 = ssub.s32 1, %s3
  %s6 = scalar_select 0, %s5, %s3
  loop: start=0, step=1, limit=20
  $region2: #{generator_forward.5} parent=0 // loop_pre_header
    _
  $region3: #{generator_forward.5} parent=0 // loop_header
    %s8 = sphi 0, %s12
    %p9 = scmp.ge.s32.totalorder %s8, 20
    %s15 = sphi 0, %s34
    %s16 = sphi 0, %s30
    %s17 = sphi 0, %s26
    %s18 = sphi 0, %s15
    %s19 = sphi 0, %s16
    %s20 = sphi 0, %s17
    %s21 = sphi 0, %s18
    %s22 = sphi 0, %s19
    %s23 = sphi 0, %s20
    %s39 = sphi 0, %s41
    %s42 = sphi 0, %s39
    %s43 = sphi 0, %s42
    %s59 = sphi 0, %s43
    %s65 = sphi 0, %s67
    %s68 = sphi 0, %s65
    %s69 = sphi 0, %s68
    %s85 = sphi 0, %s69
    %s95 = sphi 0, %s97
    %s98 = sphi 0, %s95
    %s99 = sphi 0, %s98
    %s115 = sphi 0, %s99
  $region4: #{generator_forward.5} parent=0 // loop_header_branch
    %11 = sbr.rel (%p9) target = $region8
  $region5: #{generator_forward.5} parent=0 // loop_body
    %s13 = ssub.s32 %s8, 1
    %s14 = ssub.s32 %s8, 2
    %s24 = sadd.s32 1, %s17
    %p25 = scmp.ge.s32.totalorder %s24, 9
    %s26 = scalar_select %p25, 0, %s24
    %s27 = sadd.s32 1, %s16
    %s28 = scalar_select %p25, %s27, %s16
    %p29 = scmp.ge.s32.totalorder %s28, 2
    %s30 = scalar_select %p29, 0, %s28
    %s31 = sadd.s32 1, %s15
    %s32 = scalar_select %p29, %s31, %s15
    %p33 = scmp.ge.s32.totalorder %s32, 1
    %s34 = scalar_select %p33, 0, %s32
    %s35 = ssub.s32 %s16, %s30
    %s36 = ssub.s32 %s17, %s26
    %s37 = sor.u32 %s35, %s36
    %p38 = scmp.eq.s32.totalorder %s37, 0
    %s40 = sadd.s32 %s39, 1
    %s41 = scalar_select %p38, %s39, %s40
    %p44 = pneg %p38
    %p45 = scmp.eq.s32.totalorder %s8, 17
    %p46 = por %p44, %p45
    %p47 = scmp.ne.s32.totalorder %s39, %s42
    %p48 = scmp.eq.s32.totalorder %s8, 0
    %p49 = por %p47, %p48
    %p50 = scmp.ne.s32.totalorder %s39, %s42
    %p51 = scmp.eq.s32.totalorder %s13, 17
    %p52 = por %p50, %p51
    %p53 = scmp.ne.s32.totalorder %s42, %s43
    %p54 = scmp.eq.s32.totalorder %s13, 0
    %p55 = por %p53, %p54
    %p56 = scmp.ne.s32.totalorder %s42, %s43
    %p57 = scmp.eq.s32.totalorder %s14, 17
    %p58 = por %p56, %p57
    %p60 = scmp.ne.s32.totalorder %s43, %s59
    %p61 = scmp.eq.s32.totalorder %s14, 0
    %p62 = por %p60, %p61
    %s63 = ssub.s32 %s15, %s34
    %p64 = scmp.eq.s32.totalorder %s63, 0
    %s66 = sadd.s32 %s65, 1
    %s67 = scalar_select %p64, %s65, %s66
    %p70 = pneg %p64
    %p71 = scmp.eq.s32.totalorder %s8, 17
    %p72 = por %p70, %p71
    %p73 = scmp.ne.s32.totalorder %s65, %s68
    %p74 = scmp.eq.s32.totalorder %s8, 0
    %p75 = por %p73, %p74
    %p76 = scmp.ne.s32.totalorder %s65, %s68
    %p77 = scmp.eq.s32.totalorder %s13, 17
    %p78 = por %p76, %p77
    %p79 = scmp.ne.s32.totalorder %s68, %s69
    %p80 = scmp.eq.s32.totalorder %s13, 0
    %p81 = por %p79, %p80
    %p82 = scmp.ne.s32.totalorder %s68, %s69
    %p83 = scmp.eq.s32.totalorder %s14, 17
    %p84 = por %p82, %p83
    %p86 = scmp.ne.s32.totalorder %s69, %s85
    %p87 = scmp.eq.s32.totalorder %s14, 0
    %p88 = por %p86, %p87
    %s89 = ssub.s32 %s16, %s30
    %s90 = ssub.s32 %s17, %s26
    %s91 = sor.u32 %s89, %s90
    %s92 = ssub.s32 %s15, %s34
    %s93 = sor.u32 %s91, %s92
    %p94 = scmp.eq.s32.totalorder %s93, 0
    %s96 = sadd.s32 %s95, 1
    %s97 = scalar_select %p94, %s95, %s96
    %p100 = pneg %p94
    %p101 = scmp.eq.s32.totalorder %s8, 17
    %p102 = por %p100, %p101
    %p103 = scmp.ne.s32.totalorder %s95, %s98
    %p104 = scmp.eq.s32.totalorder %s8, 0
    %p105 = por %p103, %p104
    %p106 = scmp.ne.s32.totalorder %s95, %s98
    %p107 = scmp.eq.s32.totalorder %s13, 17
    %p108 = por %p106, %p107
    %p109 = scmp.ne.s32.totalorder %s98, %s99
    %p110 = scmp.eq.s32.totalorder %s13, 0
    %p111 = por %p109, %p110
    %p112 = scmp.ne.s32.totalorder %s98, %s99
    %p113 = scmp.eq.s32.totalorder %s14, 17
    %p114 = por %p112, %p113
    %p116 = scmp.ne.s32.totalorder %s99, %s115
    %p117 = scmp.eq.s32.totalorder %s14, 0
    %p118 = por %p116, %p117
    %p119 = scmp.le.s32.totalorder 1, %s8
    %p120 = scmp.lt.s32.totalorder %s8, 19
    %p121 = pnand %p119, %p120
    %p122 = pneg %p121
    // Predicated region
    $region9: #{generator_forward.5} parent=5 // pred_check
      _
    $region10: #{generator_forward.5} parent=5 // pred_check_branch
      %124 = sbr.rel (%p121) target = $region12
    $region11: #{generator_forward.5} parent=5 // pred_region
      %s125 = ssub.s32 %s8, 1
      // Predicated region
      $region13: #{generator_forward.5} parent=11 // pred_check
        %p126 = pneg %p81
      $region14: #{generator_forward.5} parent=11 // pred_check_branch
        %128 = sbr.rel (%p126) target = $region16
      $region15: #{generator_forward.5} parent=11 // pred_region
        %s129 = smul.u32 4, %s18
        %p130 = scmp.lt.s32.totalorder %s129, 3
        %s131 = scalar_select %p130, %s129, 3
        %s132 = smul.addr %s131, 4
        %s133 = scalar_lea.vmem %s1, %s132
        %s134 = smul.u32 4, %s18
      $region16: #{generator_forward.5} parent=11 // pred_fallthru
        _
    $region12: #{generator_forward.5} parent=5 // pred_fallthru
      _
    %p135 = scmp.lt.s32.totalorder %s8, 18
    // Predicated region
    $region17: #{generator_forward.5} parent=5 // pred_check
      %p136 = pneg %p135
    $region18: #{generator_forward.5} parent=5 // pred_check_branch
      %138 = sbr.rel (%p136) target = $region20
    $region19: #{generator_forward.5} parent=5 // pred_region
      // Predicated region
      $region21: #{generator_forward.5} parent=19 // pred_check
        %p139 = pneg %p49
      $region22: #{generator_forward.5} parent=19 // pred_check_branch
        %141 = sbr.rel (%p139) target = $region24
      $region23: #{generator_forward.5} parent=19 // pred_region
        %s142 = smul.u32 16, %s17
        %p143 = scmp.lt.s32.totalorder %s16, 1
        %s144 = scalar_select %p143, %s16, 1
        %p145 = scmp.lt.s32.totalorder %s142, 143
        %s146 = scalar_select %p145, %s142, 143
        %s147 = smul.addr %s146, 3
        %s148 = smul.addr %s144, 432
        %s149 = sadd.s32 %s147, %s148
        %s150 = smul.addr %s149, 4
        %s151 = scalar_lea.vmem %s0, %s150
        %s152 = smul.u32 16, %s17
      $region24: #{generator_forward.5} parent=19 // pred_fallthru
        _
    $region20: #{generator_forward.5} parent=5 // pred_fallthru
      _
    %p153 = scmp.le.s32.totalorder 1, %s8
    %p154 = scmp.lt.s32.totalorder %s8, 19
    %p155 = pnand %p153, %p154
    %p156 = pneg %p155
    // Predicated region
    $region25: #{generator_forward.5} parent=5 // pred_check
      _
    $region26: #{generator_forward.5} parent=5 // pred_check_branch
      %158 = sbr.rel (%p155) target = $region28
    $region27: #{generator_forward.5} parent=5 // pred_region
      %s159 = ssub.s32 %s8, 1
      %s160 = smul.u32 16, %s20
      %p161 = scmp.lt.s32.totalorder %s19, 1
      %s162 = scalar_select %p161, %s19, 1
      %p163 = scmp.lt.s32.totalorder %s160, 143
      %s164 = scalar_select %p163, %s160, 143
      %s165 = smul.addr %s164, 3
      %s166 = smul.addr %s162, 432
      %s167 = sadd.s32 %s165, %s166
      %s168 = smul.addr %s167, 4
      %s169 = scalar_lea.vmem %s0, %s168
      %p170 = pneg %p55
      %p171 = pneg %p52
      %s172 = smul.u32 4, %s18
      %p173 = scmp.lt.s32.totalorder %s172, 3
      %s174 = scalar_select %p173, %s172, 3
      %s175 = smul.addr %s174, 4
      %s176 = scalar_lea.vmem %s1, %s175
      %p177 = pneg %p81
      %p178 = pneg %p78
      %p179 = pneg %p111
      %p180 = pneg %p108
      %s181 = smul.u32 16, %s20
      %s182 = smul.u32 4, %s18
      %p183 = scmp.lt.s32.totalorder %s19, 1
      %s184 = scalar_select %p183, %s19, 1
      %p185 = scmp.lt.s32.totalorder %s181, 143
      %s186 = scalar_select %p185, %s181, 143
      %p187 = scmp.lt.s32.totalorder %s182, 3
      %s188 = scalar_select %p187, %s182, 3
      %s189 = smul.addr %s186, 4
      %s190 = sadd.s32 %s188, %s189
      %s191 = smul.addr %s184, 576
      %s192 = sadd.s32 %s190, %s191
      %s193 = smul.addr %s192, 8
      %s194 = scalar_lea.vmem %s2, %s193
      %s195 = smul.u32 16, %s20
      %p196 = scmp.lt.s32.totalorder %s19, 1
      %s197 = scalar_select %p196, %s19, 1
      %p198 = scmp.lt.s32.totalorder %s195, 143
      %s199 = scalar_select %p198, %s195, 143
      %s200 = smul.addr %s199, 3
      %s201 = smul.addr %s197, 432
      %s202 = sadd.s32 %s200, %s201
      %s203 = smul.addr %s202, 4
      %s204 = scalar_lea.vmem %s0, %s203
      %s205 = smul.u32 16, %s20
      %s206 = smul.u32 4, %s18
      %p207 = scmp.lt.s32.totalorder %s206, 3
      %s208 = scalar_select %p207, %s206, 3
      %s209 = smul.addr %s208, 4
      %s210 = scalar_lea.vmem %s1, %s209
      %s211 = smul.u32 4, %s18
      %s212 = smul.u32 16, %s20
      %s213 = smul.u32 4, %s18
      %p214 = scmp.lt.s32.totalorder %s19, 1
      %s215 = scalar_select %p214, %s19, 1
      %p216 = scmp.lt.s32.totalorder %s212, 143
      %s217 = scalar_select %p216, %s212, 143
      %p218 = scmp.lt.s32.totalorder %s213, 3
      %s219 = scalar_select %p218, %s213, 3
      %s220 = smul.addr %s217, 4
      %s221 = sadd.s32 %s219, %s220
      %s222 = smul.addr %s215, 576
      %s223 = sadd.s32 %s221, %s222
      %s224 = smul.addr %s223, 8
      %s225 = scalar_lea.vmem %s2, %s224
      %s226 = smul.u32 16, %s20
      %s227 = smul.u32 4, %s18
      %v229 = vld [vmem:[%s210] sm:$0xff]
      %v230 = vld [vmem:[%s210 + $0x10] sm:$0xff]
      %v231 = vld [vmem:[%s210 + $0x20] sm:$0xff]
      %v232 = vld [vmem:[%s210 + $0x30] sm:$0xff]
      %v233 = vld [vmem:[%s210 + $0x40] sm:$0xff]
      %v234 = vld [vmem:[%s210 + $0x50] sm:$0xff]
      %v235 = vld [vmem:[%s210 + $0x60] sm:$0xff]
      %v236 = vld [vmem:[%s210 + $0x70] sm:$0xff]
      %v237 = vld [vmem:[%s210 + $0x80] sm:$0xff]
      %v238 = vld [vmem:[%s210 + $0x90] sm:$0xff]
      %v239 = vld [vmem:[%s210 + $0xa0] sm:$0xff]
      %v240 = vld [vmem:[%s210 + $0xb0] sm:$0xff]
      %v241 = vld [vmem:[%s210 + $0xc0] sm:$0xff]
      %v242 = vld [vmem:[%s210 + $0xd0] sm:$0xff]
      %v243 = vld [vmem:[%s210 + $0xe0] sm:$0xff]
      %v244 = vld [vmem:[%s210 + $0xf0] sm:$0xff]
      %v245 = vld [vmem:[%s210 + $0x100] sm:$0xff]
      %v246 = vld [vmem:[%s210 + $0x110] sm:$0xff]
      %v247 = vld [vmem:[%s210 + $0x120] sm:$0xff]
      %v248 = vld [vmem:[%s210 + $0x130] sm:$0xff]
      %v249 = vld [vmem:[%s210 + $0x140] sm:$0xff]
      %v250 = vld [vmem:[%s210 + $0x150] sm:$0xff]
      %v251 = vld [vmem:[%s210 + $0x160] sm:$0xff]
      %v252 = vld [vmem:[%s210 + $0x170] sm:$0xff]
      %v253 = vld [vmem:[%s210 + $0x180] sm:$0xff]
      %v254 = vld [vmem:[%s210 + $0x190] sm:$0xff]
      %v255 = vld [vmem:[%s210 + $0x1a0] sm:$0xff]
      %v256 = vld [vmem:[%s210 + $0x1b0] sm:$0xff]
      %v257 = vld [vmem:[%s210 + $0x1c0] sm:$0xff]
      %v258 = vld [vmem:[%s210 + $0x1d0] sm:$0xff]
      %v259 = vld [vmem:[%s210 + $0x1e0] sm:$0xff]
      %v260 = vld [vmem:[%s210 + $0x1f0] sm:$0xff]
      %v261 = vld [vmem:[%s210 + $0x200] sm:$0xff]
      %v262 = vld [vmem:[%s210 + $0x210] sm:$0xff]
      %v263 = vld [vmem:[%s210 + $0x220] sm:$0xff]
      %v264 = vld [vmem:[%s210 + $0x230] sm:$0xff]
      %v265 = vld [vmem:[%s210 + $0x240] sm:$0xff]
      %v266 = vld [vmem:[%s210 + $0x250] sm:$0xff]
      %v267 = vld [vmem:[%s210 + $0x260] sm:$0xff]
      %v268 = vld [vmem:[%s210 + $0x270] sm:$0xff]
      %v269 = vld [vmem:[%s210 + $0x280] sm:$0xff]
      %v270 = vld [vmem:[%s210 + $0x290] sm:$0xff]
      %v271 = vld [vmem:[%s210 + $0x2a0] sm:$0xff]
      %v272 = vld [vmem:[%s210 + $0x2b0] sm:$0xff]
      %v273 = vld [vmem:[%s210 + $0x2c0] sm:$0xff]
      %v274 = vld [vmem:[%s210 + $0x2d0] sm:$0xff]
      %v275 = vld [vmem:[%s210 + $0x2e0] sm:$0xff]
      %v276 = vld [vmem:[%s210 + $0x2f0] sm:$0xff]
      %v277 = vld [vmem:[%s204] sm:$0xff]
      %v278 = vld [vmem:[%s204 + $0x8] sm:$0xf]
      %v279 = vld [vmem:[%s204 + $0xc] sm:$0xff]
      %v280 = vld [vmem:[%s204 + $0x14] sm:$0xf]
      %v281 = vld [vmem:[%s204 + $0x18] sm:$0xff]
      %v282 = vld [vmem:[%s204 + $0x20] sm:$0xf]
      %v283 = vld [vmem:[%s204 + $0x24] sm:$0xff]
      %v284 = vld [vmem:[%s204 + $0x2c] sm:$0xf]
      %v285 = vld [vmem:[%s204 + $0x30] sm:$0xff]
      %v286 = vld [vmem:[%s204 + $0x38] sm:$0xf]
      %v287 = vld [vmem:[%s204 + $0x3c] sm:$0xff]
      %v288 = vld [vmem:[%s204 + $0x44] sm:$0xf]
      %v289 = vld [vmem:[%s204 + $0x48] sm:$0xff]
      %v290 = vld [vmem:[%s204 + $0x50] sm:$0xf]
      %v291 = vld [vmem:[%s204 + $0x54] sm:$0xff]
      %v292 = vld [vmem:[%s204 + $0x5c] sm:$0xf]
      %v293 = vld [vmem:[%s204 + $0x60] sm:$0xff]
      %v294 = vld [vmem:[%s204 + $0x68] sm:$0xf]
      %v295 = vld [vmem:[%s204 + $0x6c] sm:$0xff]
      %v296 = vld [vmem:[%s204 + $0x74] sm:$0xf]
      %v297 = vld [vmem:[%s204 + $0x78] sm:$0xff]
      %v298 = vld [vmem:[%s204 + $0x80] sm:$0xf]
      %v299 = vld [vmem:[%s204 + $0x84] sm:$0xff]
      %v300 = vld [vmem:[%s204 + $0x8c] sm:$0xf]
      %v301 = vld [vmem:[%s204 + $0x90] sm:$0xff]
      %v302 = vld [vmem:[%s204 + $0x98] sm:$0xf]
      %v303 = vld [vmem:[%s204 + $0x9c] sm:$0xff]
      %v304 = vld [vmem:[%s204 + $0xa4] sm:$0xf]
      %v305 = vld [vmem:[%s204 + $0xa8] sm:$0xff]
      %v306 = vld [vmem:[%s204 + $0xb0] sm:$0xf]
      %v307 = vld [vmem:[%s204 + $0xb4] sm:$0xff]
      %v308 = vld [vmem:[%s204 + $0xbc] sm:$0xf]
      %v341 = vunpack.c.l.b16 %v277
      %v342 = vunpack.c.h.b16 %v277
      %v343 = vunpack.c.l.b16 %v278
      %v344 = vunpack.c.l.b16 %v279
      %v345 = vunpack.c.h.b16 %v279
      %v346 = vunpack.c.l.b16 %v280
      %v347 = vunpack.c.l.b16 %v281
      %v348 = vunpack.c.h.b16 %v281
      %v349 = vunpack.c.l.b16 %v282
      %v350 = vunpack.c.l.b16 %v283
      %v351 = vunpack.c.h.b16 %v283
      %v352 = vunpack.c.l.b16 %v284
      %v353 = vunpack.c.l.b16 %v285
      %v354 = vunpack.c.h.b16 %v285
      %v355 = vunpack.c.l.b16 %v286
      %v356 = vunpack.c.l.b16 %v287
      %v357 = vunpack.c.h.b16 %v287
      %v358 = vunpack.c.l.b16 %v288
      %v359 = vunpack.c.l.b16 %v289
      %v360 = vunpack.c.h.b16 %v289
      %v361 = vunpack.c.l.b16 %v290
      %v362 = vunpack.c.l.b16 %v291
      %v363 = vunpack.c.h.b16 %v291
      %v364 = vunpack.c.l.b16 %v292
      %v365 = vunpack.c.l.b16 %v293
      %v366 = vunpack.c.h.b16 %v293
      %v367 = vunpack.c.l.b16 %v294
      %v368 = vunpack.c.l.b16 %v295
      %v369 = vunpack.c.h.b16 %v295
      %v370 = vunpack.c.l.b16 %v296
      %v371 = vunpack.c.l.b16 %v297
      %v372 = vunpack.c.h.b16 %v297
      %v373 = vunpack.c.l.b16 %v298
      %v374 = vunpack.c.l.b16 %v299
      %v375 = vunpack.c.h.b16 %v299
      %v376 = vunpack.c.l.b16 %v300
      %v377 = vunpack.c.l.b16 %v301
      %v378 = vunpack.c.h.b16 %v301
      %v379 = vunpack.c.l.b16 %v302
      %v380 = vunpack.c.l.b16 %v303
      %v381 = vunpack.c.h.b16 %v303
      %v382 = vunpack.c.l.b16 %v304
      %v383 = vunpack.c.l.b16 %v305
      %v384 = vunpack.c.h.b16 %v305
      %v385 = vunpack.c.l.b16 %v306
      %v386 = vunpack.c.l.b16 %v307
      %v387 = vunpack.c.h.b16 %v307
      %v388 = vunpack.c.l.b16 %v308
      %v389 = vpack.c.b16 %v344, %v341
      %v390 = vpack.c.b16 %v345, %v342
      %v391 = vpack.c.b16 %v346, %v343
      %v392 = vpack.c.b16 %v350, %v347
      %v393 = vpack.c.b16 %v351, %v348
      %v394 = vpack.c.b16 %v352, %v349
      %v395 = vpack.c.b16 %v356, %v353
      %v396 = vpack.c.b16 %v357, %v354
      %v397 = vpack.c.b16 %v358, %v355
      %v398 = vpack.c.b16 %v362, %v359
      %v399 = vpack.c.b16 %v363, %v360
      %v400 = vpack.c.b16 %v364, %v361
      %v401 = vpack.c.b16 %v368, %v365
      %v402 = vpack.c.b16 %v369, %v366
      %v403 = vpack.c.b16 %v370, %v367
      %v404 = vpack.c.b16 %v374, %v371
      %v405 = vpack.c.b16 %v375, %v372
      %v406 = vpack.c.b16 %v376, %v373
      %v407 = vpack.c.b16 %v380, %v377
      %v408 = vpack.c.b16 %v381, %v378
      %v409 = vpack.c.b16 %v382, %v379
      %v410 = vpack.c.b16 %v386, %v383
      %v411 = vpack.c.b16 %v387, %v384
      %v412 = vpack.c.b16 %v388, %v385
      %v485 = vunpack.c.l.b16 %v229
      %v486 = vunpack.c.h.b16 %v229
      %v487 = vunpack.c.l.b16 %v230
      %v488 = vunpack.c.h.b16 %v230
      %v489 = vunpack.c.l.b16 %v231
      %v490 = vunpack.c.h.b16 %v231
      %v491 = vunpack.c.l.b16 %v232
      %v492 = vunpack.c.h.b16 %v232
      %v493 = vunpack.c.l.b16 %v233
      %v494 = vunpack.c.h.b16 %v233
      %v495 = vunpack.c.l.b16 %v234
      %v496 = vunpack.c.h.b16 %v234
      %v497 = vunpack.c.l.b16 %v235
      %v498 = vunpack.c.h.b16 %v235
      %v499 = vunpack.c.l.b16 %v236
      %v500 = vunpack.c.h.b16 %v236
      %v501 = vunpack.c.l.b16 %v237
      %v502 = vunpack.c.h.b16 %v237
      %v503 = vunpack.c.l.b16 %v238
      %v504 = vunpack.c.h.b16 %v238
      %v505 = vunpack.c.l.b16 %v239
      %v506 = vunpack.c.h.b16 %v239
      %v507 = vunpack.c.l.b16 %v240
      %v508 = vunpack.c.h.b16 %v240
      %v509 = vunpack.c.l.b16 %v241
      %v510 = vunpack.c.h.b16 %v241
      %v511 = vunpack.c.l.b16 %v242
      %v512 = vunpack.c.h.b16 %v242
      %v513 = vunpack.c.l.b16 %v243
      %v514 = vunpack.c.h.b16 %v243
      %v515 = vunpack.c.l.b16 %v244
      %v516 = vunpack.c.h.b16 %v244
      %v517 = vunpack.c.l.b16 %v245
      %v518 = vunpack.c.h.b16 %v245
      %v519 = vunpack.c.l.b16 %v246
      %v520 = vunpack.c.h.b16 %v246
      %v521 = vunpack.c.l.b16 %v247
      %v522 = vunpack.c.h.b16 %v247
      %v523 = vunpack.c.l.b16 %v248
      %v524 = vunpack.c.h.b16 %v248
      %v525 = vunpack.c.l.b16 %v249
      %v526 = vunpack.c.h.b16 %v249
      %v527 = vunpack.c.l.b16 %v250
      %v528 = vunpack.c.h.b16 %v250
      %v529 = vunpack.c.l.b16 %v251
      %v530 = vunpack.c.h.b16 %v251
      %v531 = vunpack.c.l.b16 %v252
      %v532 = vunpack.c.h.b16 %v252
      %v533 = vunpack.c.l.b16 %v253
      %v534 = vunpack.c.h.b16 %v253
      %v535 = vunpack.c.l.b16 %v254
      %v536 = vunpack.c.h.b16 %v254
      %v537 = vunpack.c.l.b16 %v255
      %v538 = vunpack.c.h.b16 %v255
      %v539 = vunpack.c.l.b16 %v256
      %v540 = vunpack.c.h.b16 %v256
      %v541 = vunpack.c.l.b16 %v257
      %v542 = vunpack.c.h.b16 %v257
      %v543 = vunpack.c.l.b16 %v258
      %v544 = vunpack.c.h.b16 %v258
      %v545 = vunpack.c.l.b16 %v259
      %v546 = vunpack.c.h.b16 %v259
      %v547 = vunpack.c.l.b16 %v260
      %v548 = vunpack.c.h.b16 %v260
      %v549 = vunpack.c.l.b16 %v261
      %v550 = vunpack.c.h.b16 %v261
      %v551 = vunpack.c.l.b16 %v262
      %v552 = vunpack.c.h.b16 %v262
      %v553 = vunpack.c.l.b16 %v263
      %v554 = vunpack.c.h.b16 %v263
      %v555 = vunpack.c.l.b16 %v264
      %v556 = vunpack.c.h.b16 %v264
      %v557 = vunpack.c.l.b16 %v265
      %v558 = vunpack.c.h.b16 %v265
      %v559 = vunpack.c.l.b16 %v266
      %v560 = vunpack.c.h.b16 %v266
      %v561 = vunpack.c.l.b16 %v267
      %v562 = vunpack.c.h.b16 %v267
      %v563 = vunpack.c.l.b16 %v268
      %v564 = vunpack.c.h.b16 %v268
      %v565 = vunpack.c.l.b16 %v269
      %v566 = vunpack.c.h.b16 %v269
      %v567 = vunpack.c.l.b16 %v270
      %v568 = vunpack.c.h.b16 %v270
      %v569 = vunpack.c.l.b16 %v271
      %v570 = vunpack.c.h.b16 %v271
      %v571 = vunpack.c.l.b16 %v272
      %v572 = vunpack.c.h.b16 %v272
      %v573 = vunpack.c.l.b16 %v273
      %v574 = vunpack.c.h.b16 %v273
      %v575 = vunpack.c.l.b16 %v274
      %v576 = vunpack.c.h.b16 %v274
      %v577 = vunpack.c.l.b16 %v275
      %v578 = vunpack.c.h.b16 %v275
      %v579 = vunpack.c.l.b16 %v276
      %v580 = vunpack.c.h.b16 %v276
      %v581 = vpack.c.b16 %v487, %v485
      %v582 = vpack.c.b16 %v488, %v486
      %v583 = vpack.c.b16 %v491, %v489
      %v584 = vpack.c.b16 %v492, %v490
      %v585 = vpack.c.b16 %v495, %v493
      %v586 = vpack.c.b16 %v496, %v494
      %v587 = vpack.c.b16 %v499, %v497
      %v588 = vpack.c.b16 %v500, %v498
      %v589 = vpack.c.b16 %v503, %v501
      %v590 = vpack.c.b16 %v504, %v502
      %v591 = vpack.c.b16 %v507, %v505
      %v592 = vpack.c.b16 %v508, %v506
      %v593 = vpack.c.b16 %v511, %v509
      %v594 = vpack.c.b16 %v512, %v510
      %v595 = vpack.c.b16 %v515, %v513
      %v596 = vpack.c.b16 %v516, %v514
      %v597 = vpack.c.b16 %v519, %v517
      %v598 = vpack.c.b16 %v520, %v518
      %v599 = vpack.c.b16 %v523, %v521
      %v600 = vpack.c.b16 %v524, %v522
      %v601 = vpack.c.b16 %v527, %v525
      %v602 = vpack.c.b16 %v528, %v526
      %v603 = vpack.c.b16 %v531, %v529
      %v604 = vpack.c.b16 %v532, %v530
      %v605 = vpack.c.b16 %v535, %v533
      %v606 = vpack.c.b16 %v536, %v534
      %v607 = vpack.c.b16 %v539, %v537
      %v608 = vpack.c.b16 %v540, %v538
      %v609 = vpack.c.b16 %v543, %v541
      %v610 = vpack.c.b16 %v544, %v542
      %v611 = vpack.c.b16 %v547, %v545
      %v612 = vpack.c.b16 %v548, %v546
      %v613 = vpack.c.b16 %v551, %v549
      %v614 = vpack.c.b16 %v552, %v550
      %v615 = vpack.c.b16 %v555, %v553
      %v616 = vpack.c.b16 %v556, %v554
      %v617 = vpack.c.b16 %v559, %v557
      %v618 = vpack.c.b16 %v560, %v558
      %v619 = vpack.c.b16 %v563, %v561
      %v620 = vpack.c.b16 %v564, %v562
      %v621 = vpack.c.b16 %v567, %v565
      %v622 = vpack.c.b16 %v568, %v566
      %v623 = vpack.c.b16 %v571, %v569
      %v624 = vpack.c.b16 %v572, %v570
      %v625 = vpack.c.b16 %v575, %v573
      %v626 = vpack.c.b16 %v576, %v574
      %v627 = vpack.c.b16 %v579, %v577
      %v628 = vpack.c.b16 %v580, %v578
      %677 = vmatprep.subr.bf16.mxu0 %v582
      %678 = vmatpush1.bf16.msra.mxu0 %v581
      %679 = vmatprep.subr.bf16.mxu0 %v584
      %680 = vmatpush1.bf16.msra.mxu0 %v583
      %681 = vmatprep.subr.bf16.mxu0 %v586
      %682 = vmatpush1.bf16.msra.mxu0 %v585
      %683 = vmatprep.subr.bf16.mxu0 %v588
      %684 = vmatpush1.bf16.msra.mxu0 %v587
      %685 = vmatprep.subr.bf16.mxu0 %v590
      %686 = vmatpush1.bf16.msra.mxu0 %v589
      %687 = vmatprep.subr.bf16.mxu0 %v592
      %688 = vmatpush1.bf16.msra.mxu0 %v591
      %689 = vmatprep.subr.bf16.mxu0 %v594
      %690 = vmatpush1.bf16.msra.mxu0 %v593
      %691 = vmatprep.subr.bf16.mxu0 %v596
      %692 = vmatpush1.bf16.msra.mxu0 %v595
      %693 = vmatprep.subr.bf16.mxu0 %v598
      %694 = vmatpush1.bf16.msra.mxu0 %v597
      %695 = vmatprep.subr.bf16.mxu0 %v600
      %696 = vmatpush1.bf16.msra.mxu0 %v599
      %697 = vmatprep.subr.bf16.mxu0 %v602
      %698 = vmatpush1.bf16.msra.mxu0 %v601
      %699 = vmatprep.subr.bf16.mxu0 %v604
      %700 = vmatpush1.bf16.msra.mxu0 %v603
      %701 = vmatprep.subr.bf16.mxu0 %v606
      %702 = vmatpush1.bf16.msra.mxu0 %v605
      %703 = vmatprep.subr.bf16.mxu0 %v608
      %704 = vmatpush1.bf16.msra.mxu0 %v607
      %705 = vmatprep.subr.bf16.mxu0 %v610
      %706 = vmatpush1.bf16.msra.mxu0 %v609
      %707 = vmatprep.subr.bf16.mxu0 %v612
      %708 = vmatpush1.bf16.msra.mxu0 %v611
      %709 = vmatprep.mubr.bf16.mxu0 %v390
      %710 = vmatmul.mubr.bf16.gmra.mrb[0].mxu0 %v389
      %v711 = vpop.f32.mrb[0].mxu0
      %v712 = vadd.f32 0.0, %v711
      %v713 = vpop.f32.mrb[0].mxu0
      %v714 = vadd.f32 0.0, %v713
      %v715 = vpop.f32.mrb[0].mxu0
      %v716 = vadd.f32 0.0, %v715
      %v717 = vpop.f32.mrb[0].mxu0
      %v718 = vadd.f32 0.0, %v717
      %719 = vmatprep.mubr.bf16.mxu0 %v393
      %720 = vmatmul.mubr.bf16.gmra.mrb[0].mxu0 %v392
      %v721 = vpop.f32.mrb[0].mxu0
      %v722 = vadd.f32 0.0, %v721
      %v723 = vpop.f32.mrb[0].mxu0
      %v724 = vadd.f32 0.0, %v723
      %v725 = vpop.f32.mrb[0].mxu0
      %v726 = vadd.f32 0.0, %v725
      %v727 = vpop.f32.mrb[0].mxu0
      %v728 = vadd.f32 0.0, %v727
      %729 = vmatprep.mubr.bf16.mxu0 %v396
      %730 = vmatmul.mubr.bf16.gmra.mrb[0].mxu0 %v395
      %v731 = vpop.f32.mrb[0].mxu0
      %v732 = vadd.f32 0.0, %v731
      %v733 = vpop.f32.mrb[0].mxu0
      %v734 = vadd.f32 0.0, %v733
      %v735 = vpop.f32.mrb[0].mxu0
      %v736 = vadd.f32 0.0, %v735
      %v737 = vpop.f32.mrb[0].mxu0
      %v738 = vadd.f32 0.0, %v737
      %739 = vmatprep.mubr.bf16.mxu0 %v399
      %740 = vmatmul.mubr.bf16.gmra.mrb[0].mxu0 %v398
      %v741 = vpop.f32.mrb[0].mxu0
      %v742 = vadd.f32 0.0, %v741
      %v743 = vpop.f32.mrb[0].mxu0
      %v744 = vadd.f32 0.0, %v743
      %v745 = vpop.f32.mrb[0].mxu0
      %v746 = vadd.f32 0.0, %v745
      %v747 = vpop.f32.mrb[0].mxu0
      %v748 = vadd.f32 0.0, %v747
      %749 = vmatprep.mubr.bf16.mxu0 %v402
      %750 = vmatmul.mubr.bf16.gmra.mrb[0].mxu0 %v401
      %v751 = vpop.f32.mrb[0].mxu0
      %v752 = vadd.f32 0.0, %v751
      %v753 = vpop.f32.mrb[0].mxu0
      %v754 = vadd.f32 0.0, %v753
      %v755 = vpop.f32.mrb[0].mxu0
      %v756 = vadd.f32 0.0, %v755
      %v757 = vpop.f32.mrb[0].mxu0
      %v758 = vadd.f32 0.0, %v757
      %759 = vmatprep.mubr.bf16.mxu0 %v405
      %760 = vmatmul.mubr.bf16.gmra.mrb[0].mxu0 %v404
      %v761 = vpop.f32.mrb[0].mxu0
      %v762 = vadd.f32 0.0, %v761
      %v763 = vpop.f32.mrb[0].mxu0
      %v764 = vadd.f32 0.0, %v763
      %v765 = vpop.f32.mrb[0].mxu0
      %v766 = vadd.f32 0.0, %v765
      %v767 = vpop.f32.mrb[0].mxu0
      %v768 = vadd.f32 0.0, %v767
      %769 = vmatprep.mubr.bf16.mxu0 %v408
      %770 = vmatmul.mubr.bf16.gmra.mrb[0].mxu0 %v407
      %v771 = vpop.f32.mrb[0].mxu0
      %v772 = vadd.f32 0.0, %v771
      %v773 = vpop.f32.mrb[0].mxu0
      %v774 = vadd.f32 0.0, %v773
      %v775 = vpop.f32.mrb[0].mxu0
      %v776 = vadd.f32 0.0, %v775
      %v777 = vpop.f32.mrb[0].mxu0
      %v778 = vadd.f32 0.0, %v777
      %779 = vmatprep.mubr.bf16.mxu0 %v411
      %780 = vmatmul.mubr.bf16.gmra.mrb[0].mxu0 %v410
      %v781 = vpop.f32.mrb[0].mxu0
      %v782 = vadd.f32 0.0, %v781
      %v783 = vpop.f32.mrb[0].mxu0
      %v784 = vadd.f32 0.0, %v783
      %v785 = vpop.f32.mrb[0].mxu0
      %v786 = vadd.f32 0.0, %v785
      %v787 = vpop.f32.mrb[0].mxu0
      %v788 = vadd.f32 0.0, %v787
      %789 = vdwg.mxu0
      %790 = vmatprep.subr.bf16.mxu0 %v614
      %791 = vmatpush1.bf16.msra.mxu0 %v613
      %792 = vmatprep.subr.bf16.mxu0 %v616
      %793 = vmatpush1.bf16.msra.mxu0 %v615
      %794 = vmatprep.subr.bf16.mxu0 %v618
      %795 = vmatpush1.bf16.msra.mxu0 %v617
      %796 = vmatprep.subr.bf16.mxu0 %v620
      %797 = vmatpush1.bf16.msra.mxu0 %v619
      %798 = vmatprep.subr.bf16.mxu0 %v622
      %799 = vmatpush1.bf16.msra.mxu0 %v621
      %800 = vmatprep.subr.bf16.mxu0 %v624
      %801 = vmatpush1.bf16.msra.mxu0 %v623
      %802 = vmatprep.subr.bf16.mxu0 %v626
      %803 = vmatpush1.bf16.msra.mxu0 %v625
      %804 = vmatprep.subr.bf16.mxu0 %v628
      %805 = vmatpush1.bf16.msra.mxu0 %v627
      %806 = vmatprep.subr.bf16.mxu0 0
      %807 = vmatpush1.bf16.msra.mxu0 0
      %808 = vmatprep.subr.bf16.mxu0 0
      %809 = vmatpush1.bf16.msra.mxu0 0
      %810 = vmatprep.subr.bf16.mxu0 0
      %811 = vmatpush1.bf16.msra.mxu0 0
      %812 = vmatprep.subr.bf16.mxu0 0
      %813 = vmatpush1.bf16.msra.mxu0 0
      %814 = vmatprep.subr.bf16.mxu0 0
      %815 = vmatpush1.bf16.msra.mxu0 0
      %816 = vmatprep.subr.bf16.mxu0 0
      %817 = vmatpush1.bf16.msra.mxu0 0
      %818 = vmatprep.subr.bf16.mxu0 0
      %819 = vmatpush1.bf16.msra.mxu0 0
      %820 = vmatprep.subr.bf16.mxu0 0
      %821 = vmatpush1.bf16.msra.mxu0 0
      %822 = vmatprep.mubr.bf16.mxu0 0
      %823 = vmatmul.mubr.bf16.gmra.mrb[0].mxu0 %v391
      %v824 = vpop.f32.mrb[0].mxu0
      %v825 = vadd.f32 %v712, %v824
      %v826 = vpop.f32.mrb[0].mxu0
      %v827 = vadd.f32 %v714, %v826
      %v828 = vpop.f32.mrb[0].mxu0
      %v829 = vadd.f32 %v716, %v828
      %v830 = vpop.f32.mrb[0].mxu0
      %v831 = vadd.f32 %v718, %v830
      %832 = vmatprep.mubr.bf16.mxu0 0
      %833 = vmatmul.mubr.bf16.gmra.mrb[0].mxu0 %v394
      %v834 = vpop.f32.mrb[0].mxu0
      %v835 = vadd.f32 %v722, %v834
      %v836 = vpop.f32.mrb[0].mxu0
      %v837 = vadd.f32 %v724, %v836
      %v838 = vpop.f32.mrb[0].mxu0
      %v839 = vadd.f32 %v726, %v838
      %v840 = vpop.f32.mrb[0].mxu0
      %v841 = vadd.f32 %v728, %v840
      %842 = vmatprep.mubr.bf16.mxu0 0
      %843 = vmatmul.mubr.bf16.gmra.mrb[0].mxu0 %v397
      %v844 = vpop.f32.mrb[0].mxu0
      %v845 = vadd.f32 %v732, %v844
      %v846 = vpop.f32.mrb[0].mxu0
      %v847 = vadd.f32 %v734, %v846
      %v848 = vpop.f32.mrb[0].mxu0
      %v849 = vadd.f32 %v736, %v848
      %v850 = vpop.f32.mrb[0].mxu0
      %v851 = vadd.f32 %v738, %v850
      %852 = vmatprep.mubr.bf16.mxu0 0
      %853 = vmatmul.mubr.bf16.gmra.mrb[0].mxu0 %v400
      %v854 = vpop.f32.mrb[0].mxu0
      %v855 = vadd.f32 %v742, %v854
      %v856 = vpop.f32.mrb[0].mxu0
      %v857 = vadd.f32 %v744, %v856
      %v858 = vpop.f32.mrb[0].mxu0
      %v859 = vadd.f32 %v746, %v858
      %v860 = vpop.f32.mrb[0].mxu0
      %v861 = vadd.f32 %v748, %v860
      %862 = vmatprep.mubr.bf16.mxu0 0
      %863 = vmatmul.mubr.bf16.gmra.mrb[0].mxu0 %v403
      %v864 = vpop.f32.mrb[0].mxu0
      %v865 = vadd.f32 %v752, %v864
      %v866 = vpop.f32.mrb[0].mxu0
      %v867 = vadd.f32 %v754, %v866
      %v868 = vpop.f32.mrb[0].mxu0
      %v869 = vadd.f32 %v756, %v868
      %v870 = vpop.f32.mrb[0].mxu0
      %v871 = vadd.f32 %v758, %v870
      %872 = vmatprep.mubr.bf16.mxu0 0
      %873 = vmatmul.mubr.bf16.gmra.mrb[0].mxu0 %v406
      %v874 = vpop.f32.mrb[0].mxu0
      %v875 = vadd.f32 %v762, %v874
      %v876 = vpop.f32.mrb[0].mxu0
      %v877 = vadd.f32 %v764, %v876
      %v878 = vpop.f32.mrb[0].mxu0
      %v879 = vadd.f32 %v766, %v878
      %v880 = vpop.f32.mrb[0].mxu0
      %v881 = vadd.f32 %v768, %v880
      %882 = vmatprep.mubr.bf16.mxu0 0
      %883 = vmatmul.mubr.bf16.gmra.mrb[0].mxu0 %v409
      %v884 = vpop.f32.mrb[0].mxu0
      %v885 = vadd.f32 %v772, %v884
      %v886 = vpop.f32.mrb[0].mxu0
      %v887 = vadd.f32 %v774, %v886
      %v888 = vpop.f32.mrb[0].mxu0
      %v889 = vadd.f32 %v776, %v888
      %v890 = vpop.f32.mrb[0].mxu0
      %v891 = vadd.f32 %v778, %v890
      %892 = vmatprep.mubr.bf16.mxu0 0
      %893 = vmatmul.mubr.bf16.gmra.mrb[0].mxu0 %v412
      %v894 = vpop.f32.mrb[0].mxu0
      %v895 = vadd.f32 %v782, %v894
      %v896 = vpop.f32.mrb[0].mxu0
      %v897 = vadd.f32 %v784, %v896
      %v898 = vpop.f32.mrb[0].mxu0
      %v899 = vadd.f32 %v786, %v898
      %v900 = vpop.f32.mrb[0].mxu0
      %v901 = vadd.f32 %v788, %v900
      %902 = vdwg.mxu0
      %v903 = vtanh.pop %v825
      %v904 = vtanh.pop %v827
      %v905 = vtanh.pop %v829
      %v906 = vtanh.pop %v831
      %v907 = vtanh.pop %v835
      %v908 = vtanh.pop %v837
      %v909 = vtanh.pop %v839
      %v910 = vtanh.pop %v841
      %v911 = vtanh.pop %v845
      %v912 = vtanh.pop %v847
      %v913 = vtanh.pop %v849
      %v914 = vtanh.pop %v851
      %v915 = vtanh.pop %v855
      %v916 = vtanh.pop %v857
      %v917 = vtanh.pop %v859
      %v918 = vtanh.pop %v861
      %v919 = vtanh.pop %v865
      %v920 = vtanh.pop %v867
      %v921 = vtanh.pop %v869
      %v922 = vtanh.pop %v871
      %v923 = vtanh.pop %v875
      %v924 = vtanh.pop %v877
      %v925 = vtanh.pop %v879
      %v926 = vtanh.pop %v881
      %v927 = vtanh.pop %v885
      %v928 = vtanh.pop %v887
      %v929 = vtanh.pop %v889
      %v930 = vtanh.pop %v891
      %v931 = vtanh.pop %v895
      %v932 = vtanh.pop %v897
      %v933 = vtanh.pop %v899
      %v934 = vtanh.pop %v901
      %935 = vst [vmem:[%s225] sm:$0xff] %v903
      %936 = vst [vmem:[%s225 + $0x8] sm:$0xff] %v904
      %937 = vst [vmem:[%s225 + $0x20] sm:$0xff] %v905
      %938 = vst [vmem:[%s225 + $0x28] sm:$0xff] %v906
      %939 = vst [vmem:[%s225 + $0x40] sm:$0xff] %v907
      %940 = vst [vmem:[%s225 + $0x48] sm:$0xff] %v908
      %941 = vst [vmem:[%s225 + $0x60] sm:$0xff] %v909
      %942 = vst [vmem:[%s225 + $0x68] sm:$0xff] %v910
      %943 = vst [vmem:[%s225 + $0x80] sm:$0xff] %v911
      %944 = vst [vmem:[%s225 + $0x88] sm:$0xff] %v912
      %945 = vst [vmem:[%s225 + $0xa0] sm:$0xff] %v913
      %946 = vst [vmem:[%s225 + $0xa8] sm:$0xff] %v914
      %947 = vst [vmem:[%s225 + $0xc0] sm:$0xff] %v915
      %948 = vst [vmem:[%s225 + $0xc8] sm:$0xff] %v916
      %949 = vst [vmem:[%s225 + $0xe0] sm:$0xff] %v917
      %950 = vst [vmem:[%s225 + $0xe8] sm:$0xff] %v918
      %951 = vst [vmem:[%s225 + $0x100] sm:$0xff] %v919
      %952 = vst [vmem:[%s225 + $0x108] sm:$0xff] %v920
      %953 = vst [vmem:[%s225 + $0x120] sm:$0xff] %v921
      %954 = vst [vmem:[%s225 + $0x128] sm:$0xff] %v922
      %955 = vst [vmem:[%s225 + $0x140] sm:$0xff] %v923
      %956 = vst [vmem:[%s225 + $0x148] sm:$0xff] %v924
      %957 = vst [vmem:[%s225 + $0x160] sm:$0xff] %v925
      %958 = vst [vmem:[%s225 + $0x168] sm:$0xff] %v926
      %959 = vst [vmem:[%s225 + $0x180] sm:$0xff] %v927
      %960 = vst [vmem:[%s225 + $0x188] sm:$0xff] %v928
      %961 = vst [vmem:[%s225 + $0x1a0] sm:$0xff] %v929
      %962 = vst [vmem:[%s225 + $0x1a8] sm:$0xff] %v930
      %963 = vst [vmem:[%s225 + $0x1c0] sm:$0xff] %v931
      %964 = vst [vmem:[%s225 + $0x1c8] sm:$0xff] %v932
      %965 = vst [vmem:[%s225 + $0x1e0] sm:$0xff] %v933
      %966 = vst [vmem:[%s225 + $0x1e8] sm:$0xff] %v934
      %v967 = vld [vmem:[%s210 + $0x8] sm:$0xff]
      %v968 = vld [vmem:[%s210 + $0x18] sm:$0xff]
      %v969 = vld [vmem:[%s210 + $0x28] sm:$0xff]
      %v970 = vld [vmem:[%s210 + $0x38] sm:$0xff]
      %v971 = vld [vmem:[%s210 + $0x48] sm:$0xff]
      %v972 = vld [vmem:[%s210 + $0x58] sm:$0xff]
      %v973 = vld [vmem:[%s210 + $0x68] sm:$0xff]
      %v974 = vld [vmem:[%s210 + $0x78] sm:$0xff]
      %v975 = vld [vmem:[%s210 + $0x88] sm:$0xff]
      %v976 = vld [vmem:[%s210 + $0x98] sm:$0xff]
      %v977 = vld [vmem:[%s210 + $0xa8] sm:$0xff]
      %v978 = vld [vmem:[%s210 + $0xb8] sm:$0xff]
      %v979 = vld [vmem:[%s210 + $0xc8] sm:$0xff]
      %v980 = vld [vmem:[%s210 + $0xd8] sm:$0xff]
      %v981 = vld [vmem:[%s210 + $0xe8] sm:$0xff]
      %v982 = vld [vmem:[%s210 + $0xf8] sm:$0xff]
      %v983 = vld [vmem:[%s210 + $0x108] sm:$0xff]
      %v984 = vld [vmem:[%s210 + $0x118] sm:$0xff]
      %v985 = vld [vmem:[%s210 + $0x128] sm:$0xff]
      %v986 = vld [vmem:[%s210 + $0x138] sm:$0xff]
      %v987 = vld [vmem:[%s210 + $0x148] sm:$0xff]
      %v988 = vld [vmem:[%s210 + $0x158] sm:$0xff]
      %v989 = vld [vmem:[%s210 + $0x168] sm:$0xff]
      %v990 = vld [vmem:[%s210 + $0x178] sm:$0xff]
      %v991 = vld [vmem:[%s210 + $0x188] sm:$0xff]
      %v992 = vld [vmem:[%s210 + $0x198] sm:$0xff]
      %v993 = vld [vmem:[%s210 + $0x1a8] sm:$0xff]
      %v994 = vld [vmem:[%s210 + $0x1b8] sm:$0xff]
      %v995 = vld [vmem:[%s210 + $0x1c8] sm:$0xff]
      %v996 = vld [vmem:[%s210 + $0x1d8] sm:$0xff]
      %v997 = vld [vmem:[%s210 + $0x1e8] sm:$0xff]
      %v998 = vld [vmem:[%s210 + $0x1f8] sm:$0xff]
      %v999 = vld [vmem:[%s210 + $0x208] sm:$0xff]
      %v1000 = vld [vmem:[%s210 + $0x218] sm:$0xff]
      %v1001 = vld [vmem:[%s210 + $0x228] sm:$0xff]
      %v1002 = vld [vmem:[%s210 + $0x238] sm:$0xff]
      %v1003 = vld [vmem:[%s210 + $0x248] sm:$0xff]
      %v1004 = vld [vmem:[%s210 + $0x258] sm:$0xff]
      %v1005 = vld [vmem:[%s210 + $0x268] sm:$0xff]
      %v1006 = vld [vmem:[%s210 + $0x278] sm:$0xff]
      %v1007 = vld [vmem:[%s210 + $0x288] sm:$0xff]
      %v1008 = vld [vmem:[%s210 + $0x298] sm:$0xff]
      %v1009 = vld [vmem:[%s210 + $0x2a8] sm:$0xff]
      %v1010 = vld [vmem:[%s210 + $0x2b8] sm:$0xff]
      %v1011 = vld [vmem:[%s210 + $0x2c8] sm:$0xff]
      %v1012 = vld [vmem:[%s210 + $0x2d8] sm:$0xff]
      %v1013 = vld [vmem:[%s210 + $0x2e8] sm:$0xff]
      %v1014 = vld [vmem:[%s210 + $0x2f8] sm:$0xff]
      %v1015 = vld [vmem:[%s204] sm:$0xff]
      %v1016 = vld [vmem:[%s204 + $0x8] sm:$0xf]
      %v1017 = vld [vmem:[%s204 + $0xc] sm:$0xff]
      %v1018 = vld [vmem:[%s204 + $0x14] sm:$0xf]
      %v1019 = vld [vmem:[%s204 + $0x18] sm:$0xff]
      %v1020 = vld [vmem:[%s204 + $0x20] sm:$0xf]
      %v1021 = vld [vmem:[%s204 + $0x24] sm:$0xff]
      %v1022 = vld [vmem:[%s204 + $0x2c] sm:$0xf]
      %v1023 = vld [vmem:[%s204 + $0x30] sm:$0xff]
      %v1024 = vld [vmem:[%s204 + $0x38] sm:$0xf]
      %v1025 = vld [vmem:[%s204 + $0x3c] sm:$0xff]
      %v1026 = vld [vmem:[%s204 + $0x44] sm:$0xf]
      %v1027 = vld [vmem:[%s204 + $0x48] sm:$0xff]
      %v1028 = vld [vmem:[%s204 + $0x50] sm:$0xf]
      %v1029 = vld [vmem:[%s204 + $0x54] sm:$0xff]
      %v1030 = vld [vmem:[%s204 + $0x5c] sm:$0xf]
      %v1031 = vld [vmem:[%s204 + $0x60] sm:$0xff]
      %v1032 = vld [vmem:[%s204 + $0x68] sm:$0xf]
      %v1033 = vld [vmem:[%s204 + $0x6c] sm:$0xff]
      %v1034 = vld [vmem:[%s204 + $0x74] sm:$0xf]
      %v1035 = vld [vmem:[%s204 + $0x78] sm:$0xff]
      %v1036 = vld [vmem:[%s204 + $0x80] sm:$0xf]
      %v1037 = vld [vmem:[%s204 + $0x84] sm:$0xff]
      %v1038 = vld [vmem:[%s204 + $0x8c] sm:$0xf]
      %v1039 = vld [vmem:[%s204 + $0x90] sm:$0xff]
      %v1040 = vld [vmem:[%s204 + $0x98] sm:$0xf]
      %v1041 = vld [vmem:[%s204 + $0x9c] sm:$0xff]
      %v1042 = vld [vmem:[%s204 + $0xa4] sm:$0xf]
      %v1043 = vld [vmem:[%s204 + $0xa8] sm:$0xff]
      %v1044 = vld [vmem:[%s204 + $0xb0] sm:$0xf]
      %v1045 = vld [vmem:[%s204 + $0xb4] sm:$0xff]
      %v1046 = vld [vmem:[%s204 + $0xbc] sm:$0xf]
      %v1079 = vunpack.c.l.b16 %v1015
      %v1080 = vunpack.c.h.b16 %v1015
      %v1081 = vunpack.c.l.b16 %v1016
      %v1082 = vunpack.c.l.b16 %v1017
      %v1083 = vunpack.c.h.b16 %v1017
      %v1084 = vunpack.c.l.b16 %v1018
      %v1085 = vunpack.c.l.b16 %v1019
      %v1086 = vunpack.c.h.b16 %v1019
      %v1087 = vunpack.c.l.b16 %v1020
      %v1088 = vunpack.c.l.b16 %v1021
      %v1089 = vunpack.c.h.b16 %v1021
      %v1090 = vunpack.c.l.b16 %v1022
      %v1091 = vunpack.c.l.b16 %v1023
      %v1092 = vunpack.c.h.b16 %v1023
      %v1093 = vunpack.c.l.b16 %v1024
      %v1094 = vunpack.c.l.b16 %v1025
      %v1095 = vunpack.c.h.b16 %v1025
      %v1096 = vunpack.c.l.b16 %v1026
      %v1097 = vunpack.c.l.b16 %v1027
      %v1098 = vunpack.c.h.b16 %v1027
      %v1099 = vunpack.c.l.b16 %v1028
      %v1100 = vunpack.c.l.b16 %v1029
      %v1101 = vunpack.c.h.b16 %v1029
      %v1102 = vunpack.c.l.b16 %v1030
      %v1103 = vunpack.c.l.b16 %v1031
      %v1104 = vunpack.c.h.b16 %v1031
      %v1105 = vunpack.c.l.b16 %v1032
      %v1106 = vunpack.c.l.b16 %v1033
      %v1107 = vunpack.c.h.b16 %v1033
      %v1108 = vunpack.c.l.b16 %v1034
      %v1109 = vunpack.c.l.b16 %v1035
      %v1110 = vunpack.c.h.b16 %v1035
      %v1111 = vunpack.c.l.b16 %v1036
      %v1112 = vunpack.c.l.b16 %v1037
      %v1113 = vunpack.c.h.b16 %v1037
      %v1114 = vunpack.c.l.b16 %v1038
      %v1115 = vunpack.c.l.b16 %v1039
      %v1116 = vunpack.c.h.b16 %v1039
      %v1117 = vunpack.c.l.b16 %v1040
      %v1118 = vunpack.c.l.b16 %v1041
      %v1119 = vunpack.c.h.b16 %v1041
      %v1120 = vunpack.c.l.b16 %v1042
      %v1121 = vunpack.c.l.b16 %v1043
      %v1122 = vunpack.c.h.b16 %v1043
      %v1123 = vunpack.c.l.b16 %v1044
      %v1124 = vunpack.c.l.b16 %v1045
      %v1125 = vunpack.c.h.b16 %v1045
      %v1126 = vunpack.c.l.b16 %v1046
      %v1127 = vpack.c.b16 %v1082, %v1079
      %v1128 = vpack.c.b16 %v1083, %v1080
      %v1129 = vpack.c.b16 %v1084, %v1081
      %v1130 = vpack.c.b16 %v1088, %v1085
      %v1131 = vpack.c.b16 %v1089, %v1086
      %v1132 = vpack.c.b16 %v1090, %v1087
      %v1133 = vpack.c.b16 %v1094, %v1091
      %v1134 = vpack.c.b16 %v1095, %v1092
      %v1135 = vpack.c.b16 %v1096, %v1093
      %v1136 = vpack.c.b16 %v1100, %v1097
      %v1137 = vpack.c.b16 %v1101, %v1098
      %v1138 = vpack.c.b16 %v1102, %v1099
      %v1139 = vpack.c.b16 %v1106, %v1103
      %v1140 = vpack.c.b16 %v1107, %v1104
      %v1141 = vpack.c.b16 %v1108, %v1105
      %v1142 = vpack.c.b16 %v1112, %v1109
      %v1143 = vpack.c.b16 %v1113, %v1110
      %v1144 = vpack.c.b16 %v1114, %v1111
      %v1145 = vpack.c.b16 %v1118, %v1115
      %v1146 = vpack.c.b16 %v1119, %v1116
      %v1147 = vpack.c.b16 %v1120, %v1117
      %v1148 = vpack.c.b16 %v1124, %v1121
      %v1149 = vpack.c.b16 %v1125, %v1122
      %v1150 = vpack.c.b16 %v1126, %v1123
      %v1223 = vunpack.c.l.b16 %v967
      %v1224 = vunpack.c.h.b16 %v967
      %v1225 = vunpack.c.l.b16 %v968
      %v1226 = vunpack.c.h.b16 %v968
      %v1227 = vunpack.c.l.b16 %v969
      %v1228 = vunpack.c.h.b16 %v969
      %v1229 = vunpack.c.l.b16 %v970
      %v1230 = vunpack.c.h.b16 %v970
      %v1231 = vunpack.c.l.b16 %v971
      %v1232 = vunpack.c.h.b16 %v971
      %v1233 = vunpack.c.l.b16 %v972
      %v1234 = vunpack.c.h.b16 %v972
      %v1235 = vunpack.c.l.b16 %v973
      %v1236 = vunpack.c.h.b16 %v973
      %v1237 = vunpack.c.l.b16 %v974
      %v1238 = vunpack.c.h.b16 %v974
      %v1239 = vunpack.c.l.b16 %v975
      %v1240 = vunpack.c.h.b16 %v975
      %v1241 = vunpack.c.l.b16 %v976
      %v1242 = vunpack.c.h.b16 %v976
      %v1243 = vunpack.c.l.b16 %v977
      %v1244 = vunpack.c.h.b16 %v977
      %v1245 = vunpack.c.l.b16 %v978
      %v1246 = vunpack.c.h.b16 %v978
      %v1247 = vunpack.c.l.b16 %v979
      %v1248 = vunpack.c.h.b16 %v979
      %v1249 = vunpack.c.l.b16 %v980
      %v1250 = vunpack.c.h.b16 %v980
      %v1251 = vunpack.c.l.b16 %v981
      %v1252 = vunpack.c.h.b16 %v981
      %v1253 = vunpack.c.l.b16 %v982
      %v1254 = vunpack.c.h.b16 %v982
      %v1255 = vunpack.c.l.b16 %v983
      %v1256 = vunpack.c.h.b16 %v983
      %v1257 = vunpack.c.l.b16 %v984
      %v1258 = vunpack.c.h.b16 %v984
      %v1259 = vunpack.c.l.b16 %v985
      %v1260 = vunpack.c.h.b16 %v985
      %v1261 = vunpack.c.l.b16 %v986
      %v1262 = vunpack.c.h.b16 %v986
      %v1263 = vunpack.c.l.b16 %v987
      %v1264 = vunpack.c.h.b16 %v987
      %v1265 = vunpack.c.l.b16 %v988
      %v1266 = vunpack.c.h.b16 %v988
      %v1267 = vunpack.c.l.b16 %v989
      %v1268 = vunpack.c.h.b16 %v989
      %v1269 = vunpack.c.l.b16 %v990
      %v1270 = vunpack.c.h.b16 %v990
      %v1271 = vunpack.c.l.b16 %v991
      %v1272 = vunpack.c.h.b16 %v991
      %v1273 = vunpack.c.l.b16 %v992
      %v1274 = vunpack.c.h.b16 %v992
      %v1275 = vunpack.c.l.b16 %v993
      %v1276 = vunpack.c.h.b16 %v993
      %v1277 = vunpack.c.l.b16 %v994
      %v1278 = vunpack.c.h.b16 %v994
      %v1279 = vunpack.c.l.b16 %v995
      %v1280 = vunpack.c.h.b16 %v995
      %v1281 = vunpack.c.l.b16 %v996
      %v1282 = vunpack.c.h.b16 %v996
      %v1283 = vunpack.c.l.b16 %v997
      %v1284 = vunpack.c.h.b16 %v997
      %v1285 = vunpack.c.l.b16 %v998
      %v1286 = vunpack.c.h.b16 %v998
      %v1287 = vunpack.c.l.b16 %v999
      %v1288 = vunpack.c.h.b16 %v999
      %v1289 = vunpack.c.l.b16 %v1000
      %v1290 = vunpack.c.h.b16 %v1000
      %v1291 = vunpack.c.l.b16 %v1001
      %v1292 = vunpack.c.h.b16 %v1001
      %v1293 = vunpack.c.l.b16 %v1002
      %v1294 = vunpack.c.h.b16 %v1002
      %v1295 = vunpack.c.l.b16 %v1003
      %v1296 = vunpack.c.h.b16 %v1003
      %v1297 = vunpack.c.l.b16 %v1004
      %v1298 = vunpack.c.h.b16 %v1004
      %v1299 = vunpack.c.l.b16 %v1005
      %v1300 = vunpack.c.h.b16 %v1005
      %v1301 = vunpack.c.l.b16 %v1006
      %v1302 = vunpack.c.h.b16 %v1006
      %v1303 = vunpack.c.l.b16 %v1007
      %v1304 = vunpack.c.h.b16 %v1007
      %v1305 = vunpack.c.l.b16 %v1008
      %v1306 = vunpack.c.h.b16 %v1008
      %v1307 = vunpack.c.l.b16 %v1009
      %v1308 = vunpack.c.h.b16 %v1009
      %v1309 = vunpack.c.l.b16 %v1010
      %v1310 = vunpack.c.h.b16 %v1010
      %v1311 = vunpack.c.l.b16 %v1011
      %v1312 = vunpack.c.h.b16 %v1011
      %v1313 = vunpack.c.l.b16 %v1012
      %v1314 = vunpack.c.h.b16 %v1012
      %v1315 = vunpack.c.l.b16 %v1013
      %v1316 = vunpack.c.h.b16 %v1013
      %v1317 = vunpack.c.l.b16 %v1014
      %v1318 = vunpack.c.h.b16 %v1014
      %v1319 = vpack.c.b16 %v1225, %v1223
      %v1320 = vpack.c.b16 %v1226, %v1224
      %v1321 = vpack.c.b16 %v1229, %v1227
      %v1322 = vpack.c.b16 %v1230, %v1228
      %v1323 = vpack.c.b16 %v1233, %v1231
      %v1324 = vpack.c.b16 %v1234, %v1232
      %v1325 = vpack.c.b16 %v1237, %v1235
      %v1326 = vpack.c.b16 %v1238, %v1236
      %v1327 = vpack.c.b16 %v1241, %v1239
      %v1328 = vpack.c.b16 %v1242, %v1240
      %v1329 = vpack.c.b16 %v1245, %v1243
      %v1330 = vpack.c.b16 %v1246, %v1244
      %v1331 = vpack.c.b16 %v1249, %v1247
      %v1332 = vpack.c.b16 %v1250, %v1248
      %v1333 = vpack.c.b16 %v1253, %v1251
      %v1334 = vpack.c.b16 %v1254, %v1252
      %v1335 = vpack.c.b16 %v1257, %v1255
      %v1336 = vpack.c.b16 %v1258, %v1256
      %v1337 = vpack.c.b16 %v1261, %v1259
      %v1338 = vpack.c.b16 %v1262, %v1260
      %v1339 = vpack.c.b16 %v1265, %v1263
      %v1340 = vpack.c.b16 %v1266, %v1264
      %v1341 = vpack.c.b16 %v1269, %v1267
      %v1342 = vpack.c.b16 %v1270, %v1268
      %v1343 = vpack.c.b16 %v1273, %v1271
      %v1344 = vpack.c.b16 %v1274, %v1272
      %v1345 = vpack.c.b16 %v1277, %v1275
      %v1346 = vpack.c.b16 %v1278, %v1276
      %v1347 = vpack.c.b16 %v1281, %v1279
      %v1348 = vpack.c.b16 %v1282, %v1280
      %v1349 = vpack.c.b16 %v1285, %v1283
      %v1350 = vpack.c.b16 %v1286, %v1284
      %v1351 = vpack.c.b16 %v1289, %v1287
      %v1352 = vpack.c.b16 %v1290, %v1288
      %v1353 = vpack.c.b16 %v1293, %v1291
      %v1354 = vpack.c.b16 %v1294, %v1292
      %v1355 = vpack.c.b16 %v1297, %v1295
      %v1356 = vpack.c.b16 %v1298, %v1296
      %v1357 = vpack.c.b16 %v1301, %v1299
      %v1358 = vpack.c.b16 %v1302, %v1300
      %v1359 = vpack.c.b16 %v1305, %v1303
      %v1360 = vpack.c.b16 %v1306, %v1304
      %v1361 = vpack.c.b16 %v1309, %v1307
      %v1362 = vpack.c.b16 %v1310, %v1308
      %v1363 = vpack.c.b16 %v1313, %v1311
      %v1364 = vpack.c.b16 %v1314, %v1312
      %v1365 = vpack.c.b16 %v1317, %v1315
      %v1366 = vpack.c.b16 %v1318, %v1316
      %1415 = vmatprep.subr.bf16.mxu0 %v1320
      %1416 = vmatpush1.bf16.msra.mxu0 %v1319
      %1417 = vmatprep.subr.bf16.mxu0 %v1322
      %1418 = vmatpush1.bf16.msra.mxu0 %v1321
      %1419 = vmatprep.subr.bf16.mxu0 %v1324
      %1420 = vmatpush1.bf16.msra.mxu0 %v1323
      %1421 = vmatprep.subr.bf16.mxu0 %v1326
      %1422 = vmatpush1.bf16.msra.mxu0 %v1325
      %1423 = vmatprep.subr.bf16.mxu0 %v1328
      %1424 = vmatpush1.bf16.msra.mxu0 %v1327
      %1425 = vmatprep.subr.bf16.mxu0 %v1330
      %1426 = vmatpush1.bf16.msra.mxu0 %v1329
      %1427 = vmatprep.subr.bf16.mxu0 %v1332
      %1428 = vmatpush1.bf16.msra.mxu0 %v1331
      %1429 = vmatprep.subr.bf16.mxu0 %v1334
      %1430 = vmatpush1.bf16.msra.mxu0 %v1333
      %1431 = vmatprep.subr.bf16.mxu0 %v1336
      %1432 = vmatpush1.bf16.msra.mxu0 %v1335
      %1433 = vmatprep.subr.bf16.mxu0 %v1338
      %1434 = vmatpush1.bf16.msra.mxu0 %v1337
      %1435 = vmatprep.subr.bf16.mxu0 %v1340
      %1436 = vmatpush1.bf16.msra.mxu0 %v1339
      %1437 = vmatprep.subr.bf16.mxu0 %v1342
      %1438 = vmatpush1.bf16.msra.mxu0 %v1341
      %1439 = vmatprep.subr.bf16.mxu0 %v1344
      %1440 = vmatpush1.bf16.msra.mxu0 %v1343
      %1441 = vmatprep.subr.bf16.mxu0 %v1346
      %1442 = vmatpush1.bf16.msra.mxu0 %v1345
      %1443 = vmatprep.subr.bf16.mxu0 %v1348
      %1444 = vmatpush1.bf16.msra.mxu0 %v1347
      %1445 = vmatprep.subr.bf16.mxu0 %v1350
      %1446 = vmatpush1.bf16.msra.mxu0 %v1349
      %1447 = vmatprep.mubr.bf16.mxu0 %v1128
      %1448 = vmatmul.mubr.bf16.gmra.mrb[0].mxu0 %v1127
      %v1449 = vpop.f32.mrb[0].mxu0
      %v1450 = vadd.f32 0.0, %v1449
      %v1451 = vpop.f32.mrb[0].mxu0
      %v1452 = vadd.f32 0.0, %v1451
      %v1453 = vpop.f32.mrb[0].mxu0
      %v1454 = vadd.f32 0.0, %v1453
      %v1455 = vpop.f32.mrb[0].mxu0
      %v1456 = vadd.f32 0.0, %v1455
      %1457 = vmatprep.mubr.bf16.mxu0 %v1131
      %1458 = vmatmul.mubr.bf16.gmra.mrb[0].mxu0 %v1130
      %v1459 = vpop.f32.mrb[0].mxu0
      %v1460 = vadd.f32 0.0, %v1459
      %v1461 = vpop.f32.mrb[0].mxu0
      %v1462 = vadd.f32 0.0, %v1461
      %v1463 = vpop.f32.mrb[0].mxu0
      %v1464 = vadd.f32 0.0, %v1463
      %v1465 = vpop.f32.mrb[0].mxu0
      %v1466 = vadd.f32 0.0, %v1465
      %1467 = vmatprep.mubr.bf16.mxu0 %v1134
      %1468 = vmatmul.mubr.bf16.gmra.mrb[0].mxu0 %v1133
      %v1469 = vpop.f32.mrb[0].mxu0
      %v1470 = vadd.f32 0.0, %v1469
      %v1471 = vpop.f32.mrb[0].mxu0
      %v1472 = vadd.f32 0.0, %v1471
      %v1473 = vpop.f32.mrb[0].mxu0
      %v1474 = vadd.f32 0.0, %v1473
      %v1475 = vpop.f32.mrb[0].mxu0
      %v1476 = vadd.f32 0.0, %v1475
      %1477 = vmatprep.mubr.bf16.mxu0 %v1137
      %1478 = vmatmul.mubr.bf16.gmra.mrb[0].mxu0 %v1136
      %v1479 = vpop.f32.mrb[0].mxu0
      %v1480 = vadd.f32 0.0, %v1479
      %v1481 = vpop.f32.mrb[0].mxu0
      %v1482 = vadd.f32 0.0, %v1481
      %v1483 = vpop.f32.mrb[0].mxu0
      %v1484 = vadd.f32 0.0, %v1483
      %v1485 = vpop.f32.mrb[0].mxu0
      %v1486 = vadd.f32 0.0, %v1485
      %1487 = vmatprep.mubr.bf16.mxu0 %v1140
      %1488 = vmatmul.mubr.bf16.gmra.mrb[0].mxu0 %v1139
      %v1489 = vpop.f32.mrb[0].mxu0
      %v1490 = vadd.f32 0.0, %v1489
      %v1491 = vpop.f32.mrb[0].mxu0
      %v1492 = vadd.f32 0.0, %v1491
      %v1493 = vpop.f32.mrb[0].mxu0
      %v1494 = vadd.f32 0.0, %v1493
      %v1495 = vpop.f32.mrb[0].mxu0
      %v1496 = vadd.f32 0.0, %v1495
      %1497 = vmatprep.mubr.bf16.mxu0 %v1143
      %1498 = vmatmul.mubr.bf16.gmra.mrb[0].mxu0 %v1142
      %v1499 = vpop.f32.mrb[0].mxu0
      %v1500 = vadd.f32 0.0, %v1499
      %v1501 = vpop.f32.mrb[0].mxu0
      %v1502 = vadd.f32 0.0, %v1501
      %v1503 = vpop.f32.mrb[0].mxu0
      %v1504 = vadd.f32 0.0, %v1503
      %v1505 = vpop.f32.mrb[0].mxu0
      %v1506 = vadd.f32 0.0, %v1505
      %1507 = vmatprep.mubr.bf16.mxu0 %v1146
      %1508 = vmatmul.mubr.bf16.gmra.mrb[0].mxu0 %v1145
      %v1509 = vpop.f32.mrb[0].mxu0
      %v1510 = vadd.f32 0.0, %v1509
      %v1511 = vpop.f32.mrb[0].mxu0
      %v1512 = vadd.f32 0.0, %v1511
      %v1513 = vpop.f32.mrb[0].mxu0
      %v1514 = vadd.f32 0.0, %v1513
      %v1515 = vpop.f32.mrb[0].mxu0
      %v1516 = vadd.f32 0.0, %v1515
      %1517 = vmatprep.mubr.bf16.mxu0 %v1149
      %1518 = vmatmul.mubr.bf16.gmra.mrb[0].mxu0 %v1148
      %v1519 = vpop.f32.mrb[0].mxu0
      %v1520 = vadd.f32 0.0, %v1519
      %v1521 = vpop.f32.mrb[0].mxu0
      %v1522 = vadd.f32 0.0, %v1521
      %v1523 = vpop.f32.mrb[0].mxu0
      %v1524 = vadd.f32 0.0, %v1523
      %v1525 = vpop.f32.mrb[0].mxu0
      %v1526 = vadd.f32 0.0, %v1525
      %1527 = vdwg.mxu0
      %1528 = vmatprep.subr.bf16.mxu0 %v1352
      %1529 = vmatpush1.bf16.msra.mxu0 %v1351
      %1530 = vmatprep.subr.bf16.mxu0 %v1354
      %1531 = vmatpush1.bf16.msra.mxu0 %v1353
      %1532 = vmatprep.subr.bf16.mxu0 %v1356
      %1533 = vmatpush1.bf16.msra.mxu0 %v1355
      %1534 = vmatprep.subr.bf16.mxu0 %v1358
      %1535 = vmatpush1.bf16.msra.mxu0 %v1357
      %1536 = vmatprep.subr.bf16.mxu0 %v1360
      %1537 = vmatpush1.bf16.msra.mxu0 %v1359
      %1538 = vmatprep.subr.bf16.mxu0 %v1362
      %1539 = vmatpush1.bf16.msra.mxu0 %v1361
      %1540 = vmatprep.subr.bf16.mxu0 %v1364
      %1541 = vmatpush1.bf16.msra.mxu0 %v1363
      %1542 = vmatprep.subr.bf16.mxu0 %v1366
      %1543 = vmatpush1.bf16.msra.mxu0 %v1365
      %1544 = vmatprep.subr.bf16.mxu0 0
      %1545 = vmatpush1.bf16.msra.mxu0 0
      %1546 = vmatprep.subr.bf16.mxu0 0
      %1547 = vmatpush1.bf16.msra.mxu0 0
      %1548 = vmatprep.subr.bf16.mxu0 0
      %1549 = vmatpush1.bf16.msra.mxu0 0
      %1550 = vmatprep.subr.bf16.mxu0 0
      %1551 = vmatpush1.bf16.msra.mxu0 0
      %1552 = vmatprep.subr.bf16.mxu0 0
      %1553 = vmatpush1.bf16.msra.mxu0 0
      %1554 = vmatprep.subr.bf16.mxu0 0
      %1555 = vmatpush1.bf16.msra.mxu0 0
      %1556 = vmatprep.subr.bf16.mxu0 0
      %1557 = vmatpush1.bf16.msra.mxu0 0
      %1558 = vmatprep.subr.bf16.mxu0 0
      %1559 = vmatpush1.bf16.msra.mxu0 0
      %1560 = vmatprep.mubr.bf16.mxu0 0
      %1561 = vmatmul.mubr.bf16.gmra.mrb[0].mxu0 %v1129
      %v1562 = vpop.f32.mrb[0].mxu0
      %v1563 = vadd.f32 %v1450, %v1562
      %v1564 = vpop.f32.mrb[0].mxu0
      %v1565 = vadd.f32 %v1452, %v1564
      %v1566 = vpop.f32.mrb[0].mxu0
      %v1567 = vadd.f32 %v1454, %v1566
      %v1568 = vpop.f32.mrb[0].mxu0
      %v1569 = vadd.f32 %v1456, %v1568
      %1570 = vmatprep.mubr.bf16.mxu0 0
      %1571 = vmatmul.mubr.bf16.gmra.mrb[0].mxu0 %v1132
      %v1572 = vpop.f32.mrb[0].mxu0
      %v1573 = vadd.f32 %v1460, %v1572
      %v1574 = vpop.f32.mrb[0].mxu0
      %v1575 = vadd.f32 %v1462, %v1574
      %v1576 = vpop.f32.mrb[0].mxu0
      %v1577 = vadd.f32 %v1464, %v1576
      %v1578 = vpop.f32.mrb[0].mxu0
      %v1579 = vadd.f32 %v1466, %v1578
      %1580 = vmatprep.mubr.bf16.mxu0 0
      %1581 = vmatmul.mubr.bf16.gmra.mrb[0].mxu0 %v1135
      %v1582 = vpop.f32.mrb[0].mxu0
      %v1583 = vadd.f32 %v1470, %v1582
      %v1584 = vpop.f32.mrb[0].mxu0
      %v1585 = vadd.f32 %v1472, %v1584
      %v1586 = vpop.f32.mrb[0].mxu0
      %v1587 = vadd.f32 %v1474, %v1586
      %v1588 = vpop.f32.mrb[0].mxu0
      %v1589 = vadd.f32 %v1476, %v1588
      %1590 = vmatprep.mubr.bf16.mxu0 0
      %1591 = vmatmul.mubr.bf16.gmra.mrb[0].mxu0 %v1138
      %v1592 = vpop.f32.mrb[0].mxu0
      %v1593 = vadd.f32 %v1480, %v1592
      %v1594 = vpop.f32.mrb[0].mxu0
      %v1595 = vadd.f32 %v1482, %v1594
      %v1596 = vpop.f32.mrb[0].mxu0
      %v1597 = vadd.f32 %v1484, %v1596
      %v1598 = vpop.f32.mrb[0].mxu0
      %v1599 = vadd.f32 %v1486, %v1598
      %1600 = vmatprep.mubr.bf16.mxu0 0
      %1601 = vmatmul.mubr.bf16.gmra.mrb[0].mxu0 %v1141
      %v1602 = vpop.f32.mrb[0].mxu0
      %v1603 = vadd.f32 %v1490, %v1602
      %v1604 = vpop.f32.mrb[0].mxu0
      %v1605 = vadd.f32 %v1492, %v1604
      %v1606 = vpop.f32.mrb[0].mxu0
      %v1607 = vadd.f32 %v1494, %v1606
      %v1608 = vpop.f32.mrb[0].mxu0
      %v1609 = vadd.f32 %v1496, %v1608
      %1610 = vmatprep.mubr.bf16.mxu0 0
      %1611 = vmatmul.mubr.bf16.gmra.mrb[0].mxu0 %v1144
      %v1612 = vpop.f32.mrb[0].mxu0
      %v1613 = vadd.f32 %v1500, %v1612
      %v1614 = vpop.f32.mrb[0].mxu0
      %v1615 = vadd.f32 %v1502, %v1614
      %v1616 = vpop.f32.mrb[0].mxu0
      %v1617 = vadd.f32 %v1504, %v1616
      %v1618 = vpop.f32.mrb[0].mxu0
      %v1619 = vadd.f32 %v1506, %v1618
      %1620 = vmatprep.mubr.bf16.mxu0 0
      %1621 = vmatmul.mubr.bf16.gmra.mrb[0].mxu0 %v1147
      %v1622 = vpop.f32.mrb[0].mxu0
      %v1623 = vadd.f32 %v1510, %v1622
      %v1624 = vpop.f32.mrb[0].mxu0
      %v1625 = vadd.f32 %v1512, %v1624
      %v1626 = vpop.f32.mrb[0].mxu0
      %v1627 = vadd.f32 %v1514, %v1626
      %v1628 = vpop.f32.mrb[0].mxu0
      %v1629 = vadd.f32 %v1516, %v1628
      %1630 = vmatprep.mubr.bf16.mxu0 0
      %1631 = vmatmul.mubr.bf16.gmra.mrb[0].mxu0 %v1150
      %v1632 = vpop.f32.mrb[0].mxu0
      %v1633 = vadd.f32 %v1520, %v1632
      %v1634 = vpop.f32.mrb[0].mxu0
      %v1635 = vadd.f32 %v1522, %v1634
      %v1636 = vpop.f32.mrb[0].mxu0
      %v1637 = vadd.f32 %v1524, %v1636
      %v1638 = vpop.f32.mrb[0].mxu0
      %v1639 = vadd.f32 %v1526, %v1638
      %1640 = vdwg.mxu0
      %v1641 = vtanh.pop %v1563
      %v1642 = vtanh.pop %v1565
      %v1643 = vtanh.pop %v1567
      %v1644 = vtanh.pop %v1569
      %v1645 = vtanh.pop %v1573
      %v1646 = vtanh.pop %v1575
      %v1647 = vtanh.pop %v1577
      %v1648 = vtanh.pop %v1579
      %v1649 = vtanh.pop %v1583
      %v1650 = vtanh.pop %v1585
      %v1651 = vtanh.pop %v1587
      %v1652 = vtanh.pop %v1589
      %v1653 = vtanh.pop %v1593
      %v1654 = vtanh.pop %v1595
      %v1655 = vtanh.pop %v1597
      %v1656 = vtanh.pop %v1599
      %v1657 = vtanh.pop %v1603
      %v1658 = vtanh.pop %v1605
      %v1659 = vtanh.pop %v1607
      %v1660 = vtanh.pop %v1609
      %v1661 = vtanh.pop %v1613
      %v1662 = vtanh.pop %v1615
      %v1663 = vtanh.pop %v1617
      %v1664 = vtanh.pop %v1619
      %v1665 = vtanh.pop %v1623
      %v1666 = vtanh.pop %v1625
      %v1667 = vtanh.pop %v1627
      %v1668 = vtanh.pop %v1629
      %v1669 = vtanh.pop %v1633
      %v1670 = vtanh.pop %v1635
      %v1671 = vtanh.pop %v1637
      %v1672 = vtanh.pop %v1639
      %1673 = vst [vmem:[%s225 + $0x10] sm:$0xff] %v1641
      %1674 = vst [vmem:[%s225 + $0x18] sm:$0xff] %v1642
      %1675 = vst [vmem:[%s225 + $0x30] sm:$0xff] %v1643
      %1676 = vst [vmem:[%s225 + $0x38] sm:$0xff] %v1644
      %1677 = vst [vmem:[%s225 + $0x50] sm:$0xff] %v1645
      %1678 = vst [vmem:[%s225 + $0x58] sm:$0xff] %v1646
      %1679 = vst [vmem:[%s225 + $0x70] sm:$0xff] %v1647
      %1680 = vst [vmem:[%s225 + $0x78] sm:$0xff] %v1648
      %1681 = vst [vmem:[%s225 + $0x90] sm:$0xff] %v1649
      %1682 = vst [vmem:[%s225 + $0x98] sm:$0xff] %v1650
      %1683 = vst [vmem:[%s225 + $0xb0] sm:$0xff] %v1651
      %1684 = vst [vmem:[%s225 + $0xb8] sm:$0xff] %v1652
      %1685 = vst [vmem:[%s225 + $0xd0] sm:$0xff] %v1653
      %1686 = vst [vmem:[%s225 + $0xd8] sm:$0xff] %v1654
      %1687 = vst [vmem:[%s225 + $0xf0] sm:$0xff] %v1655
      %1688 = vst [vmem:[%s225 + $0xf8] sm:$0xff] %v1656
      %1689 = vst [vmem:[%s225 + $0x110] sm:$0xff] %v1657
      %1690 = vst [vmem:[%s225 + $0x118] sm:$0xff] %v1658
      %1691 = vst [vmem:[%s225 + $0x130] sm:$0xff] %v1659
      %1692 = vst [vmem:[%s225 + $0x138] sm:$0xff] %v1660
      %1693 = vst [vmem:[%s225 + $0x150] sm:$0xff] %v1661
      %1694 = vst [vmem:[%s225 + $0x158] sm:$0xff] %v1662
      %1695 = vst [vmem:[%s225 + $0x170] sm:$0xff] %v1663
      %1696 = vst [vmem:[%s225 + $0x178] sm:$0xff] %v1664
      %1697 = vst [vmem:[%s225 + $0x190] sm:$0xff] %v1665
      %1698 = vst [vmem:[%s225 + $0x198] sm:$0xff] %v1666
      %1699 = vst [vmem:[%s225 + $0x1b0] sm:$0xff] %v1667
      %1700 = vst [vmem:[%s225 + $0x1b8] sm:$0xff] %v1668
      %1701 = vst [vmem:[%s225 + $0x1d0] sm:$0xff] %v1669
      %1702 = vst [vmem:[%s225 + $0x1d8] sm:$0xff] %v1670
      %1703 = vst [vmem:[%s225 + $0x1f0] sm:$0xff] %v1671
      %1704 = vst [vmem:[%s225 + $0x1f8] sm:$0xff] %v1672
      %s1705 = smul.u32 16, %s20
      %s1706 = smul.u32 4, %s18
      %p1707 = scmp.lt.s32.totalorder %s19, 1
      %s1708 = scalar_select %p1707, %s19, 1
      %p1709 = scmp.lt.s32.totalorder %s1705, 143
      %s1710 = scalar_select %p1709, %s1705, 143
      %p1711 = scmp.lt.s32.totalorder %s1706, 3
      %s1712 = scalar_select %p1711, %s1706, 3
      %s1713 = smul.addr %s1710, 4
      %s1714 = sadd.s32 %s1712, %s1713
      %s1715 = smul.addr %s1708, 576
      %s1716 = sadd.s32 %s1714, %s1715
      %s1717 = smul.addr %s1716, 8
      %s1718 = scalar_lea.vmem %s2, %s1717
      // Predicated region
      $region29: #{generator_forward.5} parent=27 // pred_check
        %p1719 = pneg %p108
      $region30: #{generator_forward.5} parent=27 // pred_check_branch
        %1721 = sbr.rel (%p1719) target = $region32
      $region31: #{generator_forward.5} parent=27 // pred_region
        %s1722 = smul.u32 16, %s20
        %s1723 = smul.u32 4, %s18
      $region32: #{generator_forward.5} parent=27 // pred_fallthru
        _
    $region28: #{generator_forward.5} parent=5 // pred_fallthru
      _
    %p1724 = scmp.le.s32.totalorder 2, %s8
    // Predicated region
    $region33: #{generator_forward.5} parent=5 // pred_check
      %p1725 = pneg %p1724
    $region34: #{generator_forward.5} parent=5 // pred_check_branch
      %1727 = sbr.rel (%p1725) target = $region36
    $region35: #{generator_forward.5} parent=5 // pred_region
      %s1728 = ssub.s32 %s8, 2
      // Predicated region
      $region37: #{generator_forward.5} parent=35 // pred_check
        %p1729 = pneg %p114
      $region38: #{generator_forward.5} parent=35 // pred_check_branch
        %1731 = sbr.rel (%p1729) target = $region40
      $region39: #{generator_forward.5} parent=35 // pred_region
        %s1732 = smul.u32 16, %s23
        %s1733 = smul.u32 4, %s21
        %p1734 = scmp.lt.s32.totalorder %s22, 1
        %s1735 = scalar_select %p1734, %s22, 1
        %p1736 = scmp.lt.s32.totalorder %s1732, 143
        %s1737 = scalar_select %p1736, %s1732, 143
        %p1738 = scmp.lt.s32.totalorder %s1733, 3
        %s1739 = scalar_select %p1738, %s1733, 3
        %s1740 = smul.addr %s1737, 4
        %s1741 = sadd.s32 %s1739, %s1740
        %s1742 = smul.addr %s1735, 576
        %s1743 = sadd.s32 %s1741, %s1742
        %s1744 = smul.addr %s1743, 8
        %s1745 = scalar_lea.vmem %s2, %s1744
      $region40: #{generator_forward.5} parent=35 // pred_fallthru
        _
    $region36: #{generator_forward.5} parent=5 // pred_fallthru
      _
  $region6: #{generator_forward.5} parent=0 // loop_footer
    %s12 = sadd.s32 1, %s8
  $region7: #{generator_forward.5} parent=0 // loop_footer_branch
    %7 = sbr.rel target = $region3
  $region8: #{generator_forward.5} parent=0 // loop_exit
    _

</llo_original>
